<compile_context>
chip_gen: v7x
topology: tpu7x:2x2x1
jax: 0.10.0
libtpu: 0.0.40
codegen_flags: <defaults>
</compile_context>

<pallas_src>
import functools
import math
from itertools import combinations

import jax
import jax.numpy as jnp
from jax.experimental import pallas as pl
from jax.experimental.pallas import tpu as pltpu


_VMEM = pl.BlockSpec(memory_space=pltpu.MemorySpace.VMEM)
_SMEM = pl.BlockSpec(memory_space=pltpu.MemorySpace.SMEM)


# ----------------------------- helpers ------------------------------

def _ln(x, g, b):
    # two-pass variance (numerically safer than E[x^2]-E[x]^2 for unnormalized acts)
    m = jnp.mean(x, axis=-1, keepdims=True)
    c = x - m
    var = jnp.mean(c * c, axis=-1, keepdims=True)
    return c * jax.lax.rsqrt(var + 1e-5) * g + b


def _pick_seq_block(n_seq, seq_len):
    """Sequences per grid step: batch rows toward the MXU (bb*S large) while keeping
    >=2 balanced grid steps when possible so both v7x TensorCores get work."""
    max_rows = 256
    cands = [d for d in range(1, n_seq + 1) if n_seq % d == 0 and d * seq_len <= max_rows]
    multi = [d for d in cands if n_seq // d >= 2]
    if multi:
        return max(multi)
    return max(cands) if cands else 1


# ----------------------------- Pallas kernels ------------------------------

def _block_kernel(x_ref,
                  ln1_g_ref, ln1_b_ref, wqkv_ref, bqkv_ref, wo_ref, bo_ref,
                  ln2_g_ref, ln2_b_ref, fc_w_ref, fc_b_ref, proj_w_ref, proj_b_ref,
                  o_ref, attn_scr, *, heads, causal):
    # x_ref block: (Bb, S, D). Entire residual block fused; intermediates live in VMEM.
    Bb, S, D = x_ref.shape
    Dh = D // heads
    scale = 1.0 / math.sqrt(Dh)

    x = x_ref[...].astype(jnp.float32)                     # (Bb, S, D)
    x2 = x.reshape(Bb * S, D)                              # flatten for big-M matmuls

    # --- attention branch ---
    h = _ln(x2, ln1_g_ref[...], ln1_b_ref[...])
    qkv = jnp.dot(h.astype(jnp.bfloat16), wqkv_ref[...],
                  preferred_element_type=jnp.float32) + bqkv_ref[...]     # (Bb*S, 3D)
    qkv = qkv.reshape(Bb, S, 3 * D)

    if causal:
        # head/batch-invariant mask, built once per kernel invocation
        row = jax.lax.broadcasted_iota(jnp.int32, (S, S), 0)
        col = jax.lax.broadcasted_iota(jnp.int32, (S, S), 1)
        mask = col <= row

    for hh in range(heads):                                # static unroll; lane slices only
        q = qkv[:, :, hh * Dh:(hh + 1) * Dh]
        k = qkv[:, :, D + hh * Dh:D + (hh + 1) * Dh]
        v = qkv[:, :, 2 * D + hh * Dh:2 * D + (hh + 1) * Dh]
        s = jax.lax.dot_general(q, k, (((2,), (2,)), ((0,), (0,))),
                                preferred_element_type=jnp.float32) * scale   # (Bb, S, S)
        if causal:
            s = jnp.where(mask[None], s, -1e9)
        s = s - jnp.max(s, axis=-1, keepdims=True)
        p = jnp.exp(s)
        p = p * pl.reciprocal(jnp.sum(p, axis=-1, keepdims=True), approx=True)
        o = jax.lax.dot_general(p.astype(jnp.bfloat16), v.astype(jnp.bfloat16),
                                (((2,), (1,)), ((0,), (0,))),
                                preferred_element_type=jnp.float32)            # (Bb, S, Dh)
        # store each head at its static lane offset -> no concatenate, low vreg pressure
        attn_scr[:, :, hh * Dh:(hh + 1) * Dh] = o

    attn = attn_scr[...].reshape(Bb * S, D)
    attn = jnp.dot(attn.astype(jnp.bfloat16), wo_ref[...],
                   preferred_element_type=jnp.float32) + bo_ref[...]
    x2 = x2 + attn

    # --- MLP branch ---
    h = _ln(x2, ln2_g_ref[...], ln2_b_ref[...])
    h = jnp.dot(h.astype(jnp.bfloat16), fc_w_ref[...],
                preferred_element_type=jnp.float32) + fc_b_ref[...]
    h = h * jax.nn.sigmoid(1.702 * h)                      # CLIP QuickGELU
    h = jnp.dot(h.astype(jnp.bfloat16), proj_w_ref[...],
                preferred_element_type=jnp.float32) + proj_b_ref[...]
    o_ref[...] = (x2 + h).reshape(Bb, S, D).astype(o_ref.dtype)   # bf16 residual stream


def _matmul_kernel(x_ref, w_ref, o_ref):
    # bias-free matmul (CLIP conv1 / projections have no bias)
    o_ref[...] = jnp.dot(x_ref[...].astype(jnp.bfloat16), w_ref[...],
                         preferred_element_type=jnp.float32).astype(o_ref.dtype)


def _layernorm_kernel(x_ref, g_ref, b_ref, o_ref):
    o_ref[...] = _ln(x_ref[...].astype(jnp.float32),
                     g_ref[...], b_ref[...]).astype(o_ref.dtype)


def _feature_head_kernel(x_ref, g_ref, b_ref, w_ref, o_ref):
    # fused: LayerNorm -> projection -> eps-protected l2 normalization
    h = _ln(x_ref[...].astype(jnp.float32), g_ref[...], b_ref[...])
    f = jnp.dot(h.astype(jnp.bfloat16), w_ref[...], preferred_element_type=jnp.float32)
    inv = jax.lax.rsqrt(jnp.maximum(jnp.sum(f * f, axis=-1, keepdims=True), 1e-24))
    o_ref[...] = f * inv


def _clip_head_kernel(scale_ref, img_ref, txt_ref, logits_ref, sim_ref, *, nc, n_cls):
    # fused: per-centroid logits matmul + mean over centroids + logit_scale (applied to
    # the f32 accumulator) + pairwise centroid cosine similarity.
    scale = scale_ref[0, 0]
    img = img_ref[...].astype(jnp.bfloat16)                               # (B, E)
    txt = txt_ref[...]                                                     # (nc*n_cls, E) f32

    acc = jnp.zeros((img.shape[0], n_cls), jnp.float32)
    for c in range(nc):
        t = txt[c * n_cls:(c + 1) * n_cls, :].astype(jnp.bfloat16)
        acc = acc + jax.lax.dot_general(img, t, (((1,), (1,)), ((), ())),
                                        preferred_element_type=jnp.float32)
    logits_ref[...] = acc * (scale / nc)                   # mean over centroids, then scale

    if nc > 1:
        sims = jnp.zeros((1, n_cls), jnp.float32)
        pairs = list(combinations(range(nc), 2))
        for a, b in pairs:                                 # static unroll (nc is tiny)
            ta = txt[a * n_cls:(a + 1) * n_cls, :]
            tb = txt[b * n_cls:(b + 1) * n_cls, :]
            dot = jnp.sum(ta * tb, axis=-1)
            sa = jnp.sum(ta * ta, axis=-1)
            sb = jnp.sum(tb * tb, axis=-1)
            sims = sims + (dot * jax.lax.rsqrt(jnp.maximum(sa * sb, 1e-12)))[None, :]
        sim_ref[...] = sims / len(pairs)
    else:
        sim_ref[...] = jnp.ones((1, n_cls), jnp.float32)


# ---------------------------- kernel wrappers -------------------------------

def residual_block(x, p, heads, causal):
    B, S, D = x.shape
    bb = _pick_seq_block(B, S)
    nblk = B // bb
    weights = [p["ln1_g"], p["ln1_b"], p["wqkv"], p["bqkv"], p["wo"], p["bo"],
               p["ln2_g"], p["ln2_b"], p["fc_w"], p["fc_b"], p["proj_w"], p["proj_b"]]
    in_specs = [pl.BlockSpec((bb, S, D), lambda i: (i, 0, 0))]
    # grid-invariant weights: constant block index (they stay resident across the grid).
    in_specs += [pl.BlockSpec(w.shape, lambda i: (0, 0)) for w in weights]
    # TODO(synk): cross-pallas_call weight prefetch (P10) for v5e not implemented.
    return pl.pallas_call(
        functools.partial(_block_kernel, heads=heads, causal=causal),
        out_shape=jax.ShapeDtypeStruct((B, S, D), jnp.bfloat16),   # bf16 residual stream
        grid=(nblk,),
        in_specs=in_specs,
        out_specs=pl.BlockSpec((bb, S, D), lambda i: (i, 0, 0)),
        scratch_shapes=[pltpu.VMEM((bb, S, D), jnp.float32)],      # per-head attn scatter
        compiler_params=pltpu.CompilerParams(
            dimension_semantics=("parallel",),
            vmem_limit_bytes=64 * 1024 * 1024),
    )(x, *weights)


def patch_embed(x2d, w_bf16):
    # bias-free, row-tiled matmul for the conv1 patch embedding
    M, K = x2d.shape
    N = w_bf16.shape[1]
    tm = M
    if M > 256:
        for cand in (256, 128, 64, 32, 16, 8):
            if M % cand == 0:
                tm = cand
                break
    return pl.pallas_call(
        _matmul_kernel,
        out_shape=jax.ShapeDtypeStruct((M, N), jnp.float32),
        grid=(M // tm,),
        in_specs=[pl.BlockSpec((tm, K), lambda i: (i, 0)),
                  pl.BlockSpec((K, N), lambda i: (0, 0))],
        out_specs=pl.BlockSpec((tm, N), lambda i: (i, 0)),
        compiler_params=pltpu.CompilerParams(dimension_semantics=("parallel",)),
    )(x2d, w_bf16)


def layernorm(x2d, g, b, out_dtype=jnp.float32):
    M, D = x2d.shape
    return pl.pallas_call(
        _layernorm_kernel,
        out_shape=jax.ShapeDtypeStruct((M, D), out_dtype),
        in_specs=[_VMEM, _VMEM, _VMEM],
        out_specs=_VMEM,
    )(x2d, g, b)


def feature_head(x2d, g, b, proj_w):
    # fused LN + projection + l2norm tail (used by both towers)
    M = x2d.shape[0]
    E = proj_w.shape[1]
    return pl.pallas_call(
        _feature_head_kernel,
        out_shape=jax.ShapeDtypeStruct((M, E), jnp.float32),
        in_specs=[_VMEM, _VMEM, _VMEM, _VMEM],
        out_specs=_VMEM,
    )(x2d, g, b, proj_w)


def clip_head(img_f, txt_f, logit_scale_exp, nc, n_cls):
    B = img_f.shape[0]
    return pl.pallas_call(
        functools.partial(_clip_head_kernel, nc=nc, n_cls=n_cls),
        out_shape=(jax.ShapeDtypeStruct((B, n_cls), jnp.float32),
                   jax.ShapeDtypeStruct((1, n_cls), jnp.float32)),
        in_specs=[_SMEM, _VMEM, _VMEM],
        out_specs=(_VMEM, _VMEM),
    )(jnp.reshape(logit_scale_exp, (1, 1)).astype(jnp.float32), img_f, txt_f)


# ------------------------------ model pieces --------------------------------

def image_encoder(image, vp, cfg):
    # image: NCHW (B, C, R, R)
    B, C, _, _ = image.shape
    P, G, D = cfg["patch"], cfg["grid"], cfg["width"]
    # conv1 with stride=kernel=patch == patch-extract + matmul (bias=False in CLIP)
    patches = image.reshape(B, C, G, P, G, P).transpose(0, 2, 4, 1, 3, 5)
    patches = patches.reshape(B * G * G, C * P * P)
    x = patch_embed(patches, vp["conv_w"]).reshape(B, G * G, D)
    cls = jnp.broadcast_to(vp["class_emb"].reshape(1, 1, D), (B, 1, D))
    x = jnp.concatenate([cls, x], axis=1) + vp["pos_emb"][None]          # (B, S, D)
    S = x.shape[1]
    # ln_pre, emitting the bf16 residual stream consumed by the fused blocks
    x = layernorm(x.reshape(B * S, D), vp["ln_pre_g"], vp["ln_pre_b"],
                  out_dtype=jnp.bfloat16).reshape(B, S, D)
    for blk in vp["blocks"]:
        x = residual_block(x, blk, cfg["heads"], causal=False)
    # fused tail: ln_post + visual projection + l2norm on the CLS token
    return feature_head(x[:, 0, :], vp["ln_post_g"], vp["ln_post_b"], vp["proj"])


def text_encoder(prompts_all, eot_all, tp, cfg):
    # prompts_all: (NC*n_cls, S, D); eot_all: (NC*n_cls,) int32 EOT positions
    n, S, D = prompts_all.shape
    x = (prompts_all + tp["pos_emb"][None]).astype(jnp.bfloat16)
    for blk in tp["blocks"]:
        x = residual_block(x, blk, cfg["heads"], causal=True)
    # EOT gather first (LayerNorm is per-row, so gather-then-LN == LN-then-gather);
    # fused tail: ln_final + text_projection + l2norm
    x_eot = x[jnp.arange(n), eot_all]                      # (n, D)
    return feature_head(x_eot, tp["ln_final_g"], tp["ln_final_b"], tp["text_proj"])


def prompt_learner(params):
    # torch.cat([prefix, ctx, suffix], dim=2) after expanding prefix/suffix over centroids
    nc = params["ctx"].shape[0]
    prefix = jnp.broadcast_to(params["token_prefix"][None], (nc,) + params["token_prefix"].shape)
    suffix = jnp.broadcast_to(params["token_suffix"][None], (nc,) + params["token_suffix"].shape)
    return jnp.concatenate([prefix, params["ctx"], suffix], axis=2)


def custom_clip_forward(image, params, cfg):
    image_features = image_encoder(image, params["visual"], cfg)         # (B, E), normalized

    prompts = prompt_learner(params)                                      # (NC, n_cls, S, D)
    NC, n_cls, S, D = prompts.shape
    prompts_all = prompts.reshape(NC * n_cls, S, D)                       # all centroids batched
    eot = jnp.argmax(params["tokenized_prompts"], axis=-1)
    eot_all = jnp.tile(eot, NC)

    text_features = text_encoder(prompts_all, eot_all, params["text"], cfg)  # (NC*n_cls, E), normalized

    logit_scale = jnp.exp(params["logit_scale"])
    logits, sims = clip_head(image_features, text_features, logit_scale, NC, n_cls)

    if NC > 1:
        centroids_similarity = sims[0]                                    # (n_cls,)
        # Faithful to the PyTorch MSELoss(sim - 0.1, sim): constant 0.01 by construction.
        centroids_margin_loss = jnp.mean(((centroids_similarity - 0.1) - centroids_similarity) ** 2)
    else:
        centroids_similarity = jnp.ones((10,), jnp.float32)               # PyTorch: torch.ones(10)
        centroids_margin_loss = jnp.float32(0.0)

    return logits, centroids_similarity, centroids_margin_loss


# ------------------------------ parameter init -------------------------------

def init_params(key, cfg):
    keys = iter(jax.random.split(key, 256))

    def nrm(shape, std=0.02, dtype=jnp.float32):
        return (std * jax.random.normal(next(keys), shape)).astype(dtype)

    def block(D):
        # nn.MultiheadAttention's fused in_proj == single (D, 3D) weight (q|k|v).
        return dict(
            ln1_g=jnp.ones((1, D), jnp.float32), ln1_b=jnp.zeros((1, D), jnp.float32),
            wqkv=nrm((D, 3 * D), dtype=jnp.bfloat16), bqkv=jnp.zeros((1, 3 * D), jnp.float32),
            wo=nrm((D, D), dtype=jnp.bfloat16), bo=jnp.zeros((1, D), jnp.float32),
            ln2_g=jnp.ones((1, D), jnp.float32), ln2_b=jnp.zeros((1, D), jnp.float32),
            fc_w=nrm((D, 4 * D), dtype=jnp.bfloat16), fc_b=jnp.zeros((1, 4 * D), jnp.float32),
            proj_w=nrm((4 * D, D), dtype=jnp.bfloat16), proj_b=jnp.zeros((1, D), jnp.float32),
        )

    D, E = cfg["width"], cfg["embed_dim"]
    S_vis = cfg["grid"] ** 2 + 1
    S_txt = 1 + cfg["n_ctx"] + cfg["n_suffix"]

    visual = dict(
        conv_w=nrm((cfg["channels"] * cfg["patch"] ** 2, D), dtype=jnp.bfloat16),
        class_emb=nrm((D,)),
        pos_emb=nrm((S_vis, D)),
        ln_pre_g=jnp.ones((1, D), jnp.float32), ln_pre_b=jnp.zeros((1, D), jnp.float32),
        blocks=[block(D) for _ in range(cfg["vision_layers"])],
        ln_post_g=jnp.ones((1, D), jnp.float32), ln_post_b=jnp.zeros((1, D), jnp.float32),
        proj=nrm((D, E), dtype=jnp.bfloat16),
    )
    text = dict(
        pos_emb=nrm((S_txt, D)),
        blocks=[block(D) for _ in range(cfg["text_layers"])],
        ln_final_g=jnp.ones((1, D), jnp.float32), ln_final_b=jnp.zeros((1, D), jnp.float32),
        text_proj=nrm((D, E), dtype=jnp.bfloat16),
    )

    # PromptLearner buffers (token_embedding(tokenize(...)) replaced by synthetic embeddings)
    ctx = nrm((cfg["num_centroids"], cfg["n_cls"], cfg["n_ctx"], D))
    token_prefix = nrm((cfg["n_cls"], 1, D))
    token_suffix = nrm((cfg["n_cls"], cfg["n_suffix"], D))

    # tokenized prompts: [SOT, X..X, '.', EOT, pad] -- argmax(dim=-1) picks the EOT slot.
    row = jnp.array([49406] + [343] * cfg["n_ctx"] + [269, 49407]
                    + [0] * (S_txt - cfg["n_ctx"] - 3), dtype=jnp.int32)
    tokenized_prompts = jnp.tile(row[None, :], (cfg["n_cls"], 1))

    return dict(
        visual=visual, text=text,
        ctx=ctx, token_prefix=token_prefix, token_suffix=token_suffix,
        tokenized_prompts=tokenized_prompts,
        logit_scale=jnp.float32(math.log(1.0 / 0.07)),
    )
    # TODO(synk): maximum_similarity buffer (0.9*ones(10)) is unused in forward; omitted.


# ---------------------------------- main -------------------------------------

if __name__ == "__main__":
    cfg = dict(
        batch=2, channels=3, image_res=16, patch=8, grid=2,
        width=64, embed_dim=64, heads=4, vision_layers=2, text_layers=2,
        n_cls=6, n_ctx=4, n_suffix=3, num_centroids=2,
    )
    key = jax.random.PRNGKey(0)
    pkey, ikey = jax.random.split(key)
    params = init_params(pkey, cfg)

    image = jax.random.normal(
        ikey, (cfg["batch"], cfg["channels"], cfg["image_res"], cfg["image_res"]),
        dtype=jnp.float32)

    fwd = jax.jit(functools.partial(custom_clip_forward, cfg=cfg))
    logits, centroids_similarity, centroids_margin_loss = fwd(image, params)
    jax.block_until_ready((logits, centroids_similarity, centroids_margin_loss))

    assert logits.shape == (cfg["batch"], cfg["n_cls"])
    assert centroids_similarity.shape == (cfg["n_cls"],)
    print("KERNEL_OK")
</pallas_src>

<mosaic_0001>
module attributes {stable_mosaic.version = 11 : i64} {
  func.func @_layernorm_kernel(%arg0: memref<10x64xf32, #tpu.memory_space<vmem>>, %arg1: memref<1x64xf32, #tpu.memory_space<vmem>>, %arg2: memref<1x64xf32, #tpu.memory_space<vmem>>, %arg3: memref<10x64xbf16, #tpu.memory_space<vmem>>) attributes {dimension_semantics = [], scalar_prefetch = 0 : i64, scratch_operands = 0 : i64, tpu.core_type = #tpu.core_type<tc>} {
    %c0 = arith.constant 0 : index
    %c0_0 = arith.constant 0 : index
    %0 = vector.load %arg0[%c0, %c0_0] : memref<10x64xf32, #tpu.memory_space<vmem>>, vector<10x64xf32>
    %c0_1 = arith.constant 0 : index
    %c0_2 = arith.constant 0 : index
    %1 = vector.load %arg1[%c0_1, %c0_2] : memref<1x64xf32, #tpu.memory_space<vmem>>, vector<1x64xf32>
    %c0_3 = arith.constant 0 : index
    %c0_4 = arith.constant 0 : index
    %2 = vector.load %arg2[%c0_3, %c0_4] : memref<1x64xf32, #tpu.memory_space<vmem>>, vector<1x64xf32>
    %cst = arith.constant dense<0.000000e+00> : vector<10xf32>
    %3 = vector.multi_reduction <add>, %0, %cst [1] : vector<10x64xf32> to vector<10xf32>
    %4 = vector.shape_cast %3 : vector<10xf32> to vector<10x1xf32>
    %cst_5 = arith.constant 6.400000e+01 : f32
    %5 = vector.broadcast %cst_5 : f32 to vector<10x1xf32>
    %6 = arith.divf %4, %5 : vector<10x1xf32>
    %7 = vector.broadcast %6 : vector<10x1xf32> to vector<10x64xf32>
    %8 = arith.subf %0, %7 : vector<10x64xf32>
    %9 = arith.mulf %8, %8 : vector<10x64xf32>
    %cst_6 = arith.constant dense<0.000000e+00> : vector<10xf32>
    %10 = vector.multi_reduction <add>, %9, %cst_6 [1] : vector<10x64xf32> to vector<10xf32>
    %11 = vector.shape_cast %10 : vector<10xf32> to vector<10x1xf32>
    %cst_7 = arith.constant 6.400000e+01 : f32
    %12 = vector.broadcast %cst_7 : f32 to vector<10x1xf32>
    %13 = arith.divf %11, %12 : vector<10x1xf32>
    %cst_8 = arith.constant 9.99999974E-6 : f32
    %14 = vector.broadcast %cst_8 : f32 to vector<10x1xf32>
    %15 = arith.addf %13, %14 : vector<10x1xf32>
    %16 = math.rsqrt %15 : vector<10x1xf32>
    %17 = vector.broadcast %16 : vector<10x1xf32> to vector<10x64xf32>
    %18 = arith.mulf %8, %17 : vector<10x64xf32>
    %19 = vector.broadcast %1 : vector<1x64xf32> to vector<10x64xf32>
    %20 = arith.mulf %18, %19 : vector<10x64xf32>
    %21 = vector.broadcast %2 : vector<1x64xf32> to vector<10x64xf32>
    %22 = arith.addf %20, %21 : vector<10x64xf32>
    %23 = arith.truncf %22 : vector<10x64xf32> to vector<10x64xbf16>
    %c0_9 = arith.constant 0 : index
    %c0_10 = arith.constant 0 : index
    %24 = vector.load %arg3[%c0_9, %c0_10] : memref<10x64xbf16, #tpu.memory_space<vmem>>, vector<10x64xbf16>
    tpu.vector_store %arg3[%c0_9, %c0_10], %23 {strides = array<i32>} : memref<10x64xbf16, #tpu.memory_space<vmem>>, vector<10x64xbf16>,
    return
  }
}

module attributes {stable_mosaic.version = 11 : i64} {
  func.func @_matmul_kernel(%arg0: i32, %arg1: memref<8x192xf32, #tpu.memory_space<vmem>>, %arg2: memref<192x64xbf16, #tpu.memory_space<vmem>>, %arg3: memref<8x64xf32, #tpu.memory_space<vmem>>) attributes {dimension_semantics = [#tpu.dimension_semantics<parallel>], iteration_bounds = array<i64: 1>, scalar_prefetch = 0 : i64, scratch_operands = 0 : i64, tpu.core_type = #tpu.core_type<tc>, window_params = [{transform_indices = @transform_0, window_bounds = array<i64: 8, 192>}, {pipeline_mode = #tpu.pipeline_mode<synchronous>, transform_indices = @transform_1, window_bounds = array<i64: 192, 64>}, {transform_indices = @transform_2, window_bounds = array<i64: 8, 64>}]} {
    %c0 = arith.constant 0 : index
    %c0_0 = arith.constant 0 : index
    %0 = vector.load %arg1[%c0, %c0_0] : memref<8x192xf32, #tpu.memory_space<vmem>>, vector<8x192xf32>
    %1 = arith.truncf %0 : vector<8x192xf32> to vector<8x192xbf16>
    %c0_1 = arith.constant 0 : index
    %c0_2 = arith.constant 0 : index
    %2 = vector.load %arg2[%c0_1, %c0_2] : memref<192x64xbf16, #tpu.memory_space<vmem>>, vector<192x64xbf16>
    %cst = arith.constant dense<0.000000e+00> : vector<8x64xf32>
    %3 = tpu.matmul %1, %2, %cst {dimension_numbers = #tpu.dot_dimension_numbers<[1], [0], [0], [1], [0, 0, 1, 1], [], []>} : vector<8x192xbf16>, vector<192x64xbf16>, vector<8x64xf32> -> vector<8x64xf32>
    %c0_3 = arith.constant 0 : index
    %c0_4 = arith.constant 0 : index
    %4 = vector.load %arg3[%c0_3, %c0_4] : memref<8x64xf32, #tpu.memory_space<vmem>>, vector<8x64xf32>
    tpu.vector_store %arg3[%c0_3, %c0_4], %3 {strides = array<i32>} : memref<8x64xf32, #tpu.memory_space<vmem>>, vector<8x64xf32>,
    return
  }
  func.func @transform_0(%arg0: i32) -> (i32, i32) {
    %c0_i32 = arith.constant 0 : i32
    %c0_i32_0 = arith.constant 0 : i32
    return %arg0, %c0_i32 : i32, i32
  }
  func.func @transform_1(%arg0: i32) -> (i32, i32) {
    %c0_i32 = arith.constant 0 : i32
    %c0_i32_0 = arith.constant 0 : i32
    %c0_i32_1 = arith.constant 0 : i32
    return %c0_i32, %c0_i32_0 : i32, i32
  }
  func.func @transform_2(%arg0: i32) -> (i32, i32) {
    %c0_i32 = arith.constant 0 : i32
    %c0_i32_0 = arith.constant 0 : i32
    return %arg0, %c0_i32 : i32, i32
  }
}

module attributes {stable_mosaic.version = 11 : i64} {
  func.func @_block_kernel(%arg0: i32, %arg1: memref<1x5x64xbf16, #tpu.memory_space<vmem>>, %arg2: memref<1x64xf32, #tpu.memory_space<vmem>>, %arg3: memref<1x64xf32, #tpu.memory_space<vmem>>, %arg4: memref<64x192xbf16, #tpu.memory_space<vmem>>, %arg5: memref<1x192xf32, #tpu.memory_space<vmem>>, %arg6: memref<64x64xbf16, #tpu.memory_space<vmem>>, %arg7: memref<1x64xf32, #tpu.memory_space<vmem>>, %arg8: memref<1x64xf32, #tpu.memory_space<vmem>>, %arg9: memref<1x64xf32, #tpu.memory_space<vmem>>, %arg10: memref<64x256xbf16, #tpu.memory_space<vmem>>, %arg11: memref<1x256xf32, #tpu.memory_space<vmem>>, %arg12: memref<256x64xbf16, #tpu.memory_space<vmem>>, %arg13: memref<1x64xf32, #tpu.memory_space<vmem>>, %arg14: memref<1x5x64xbf16, #tpu.memory_space<vmem>>, %arg15: memref<1x5x64xf32, #tpu.memory_space<vmem>>) attributes {dimension_semantics = [#tpu.dimension_semantics<parallel>], iteration_bounds = array<i64: 2>, scalar_prefetch = 0 : i64, scratch_operands = 1 : i64, tpu.core_type = #tpu.core_type<tc>, window_params = [{transform_indices = @transform_0, window_bounds = array<i64: 1, 5, 64>}, {pipeline_mode = #tpu.pipeline_mode<synchronous>, transform_indices = @transform_1, window_bounds = array<i64: 1, 64>}, {pipeline_mode = #tpu.pipeline_mode<synchronous>, transform_indices = @transform_2, window_bounds = array<i64: 1, 64>}, {pipeline_mode = #tpu.pipeline_mode<synchronous>, transform_indices = @transform_3, window_bounds = array<i64: 64, 192>}, {pipeline_mode = #tpu.pipeline_mode<synchronous>, transform_indices = @transform_4, window_bounds = array<i64: 1, 192>}, {pipeline_mode = #tpu.pipeline_mode<synchronous>, transform_indices = @transform_5, window_bounds = array<i64: 64, 64>}, {pipeline_mode = #tpu.pipeline_mode<synchronous>, transform_indices = @transform_6, window_bounds = array<i64: 1, 64>}, {pipeline_mode = #tpu.pipeline_mode<synchronous>, transform_indices = @transform_7, window_bounds = array<i64: 1, 64>}, {pipeline_mode = #tpu.pipeline_mode<synchronous>, transform_indices = @transform_8, window_bounds = array<i64: 1, 64>}, {pipeline_mode = #tpu.pipeline_mode<synchronous>, transform_indices = @transform_9, window_bounds = array<i64: 64, 256>}, {pipeline_mode = #tpu.pipeline_mode<synchronous>, transform_indices = @transform_10, window_bounds = array<i64: 1, 256>}, {pipeline_mode = #tpu.pipeline_mode<synchronous>, transform_indices = @transform_11, window_bounds = array<i64: 256, 64>}, {pipeline_mode = #tpu.pipeline_mode<synchronous>, transform_indices = @transform_12, window_bounds = array<i64: 1, 64>}, {transform_indices = @transform_13, window_bounds = array<i64: 1, 5, 64>}]} {
    %c0 = arith.constant 0 : index
    %c0_0 = arith.constant 0 : index
    %c0_1 = arith.constant 0 : index
    %0 = vector.load %arg1[%c0, %c0_0, %c0_1] : memref<1x5x64xbf16, #tpu.memory_space<vmem>>, vector<1x5x64xbf16>
    %1 = arith.extf %0 : vector<1x5x64xbf16> to vector<1x5x64xf32>
    %2 = vector.shape_cast %1 : vector<1x5x64xf32> to vector<5x64xf32>
    %c0_2 = arith.constant 0 : index
    %c0_3 = arith.constant 0 : index
    %3 = vector.load %arg2[%c0_2, %c0_3] : memref<1x64xf32, #tpu.memory_space<vmem>>, vector<1x64xf32>
    %c0_4 = arith.constant 0 : index
    %c0_5 = arith.constant 0 : index
    %4 = vector.load %arg3[%c0_4, %c0_5] : memref<1x64xf32, #tpu.memory_space<vmem>>, vector<1x64xf32>
    %cst = arith.constant dense<0.000000e+00> : vector<5xf32>
    %5 = vector.multi_reduction <add>, %2, %cst [1] : vector<5x64xf32> to vector<5xf32>
    %6 = vector.shape_cast %5 : vector<5xf32> to vector<5x1xf32>
    %cst_6 = arith.constant 6.400000e+01 : f32
    %7 = vector.broadcast %cst_6 : f32 to vector<5x1xf32>
    %8 = arith.divf %6, %7 : vector<5x1xf32>
    %9 = vector.broadcast %8 : vector<5x1xf32> to vector<5x64xf32>
    %10 = arith.subf %2, %9 : vector<5x64xf32>
    %11 = arith.mulf %10, %10 : vector<5x64xf32>
    %cst_7 = arith.constant dense<0.000000e+00> : vector<5xf32>
    %12 = vector.multi_reduction <add>, %11, %cst_7 [1] : vector<5x64xf32> to vector<5xf32>
    %13 = vector.shape_cast %12 : vector<5xf32> to vector<5x1xf32>
    %cst_8 = arith.constant 6.400000e+01 : f32
    %14 = vector.broadcast %cst_8 : f32 to vector<5x1xf32>
    %15 = arith.divf %13, %14 : vector<5x1xf32>
    %cst_9 = arith.constant 9.99999974E-6 : f32
    %16 = vector.broadcast %cst_9 : f32 to vector<5x1xf32>
    %17 = arith.addf %15, %16 : vector<5x1xf32>
    %18 = math.rsqrt %17 : vector<5x1xf32>
    %19 = vector.broadcast %18 : vector<5x1xf32> to vector<5x64xf32>
    %20 = arith.mulf %10, %19 : vector<5x64xf32>
    %21 = vector.broadcast %3 : vector<1x64xf32> to vector<5x64xf32>
    %22 = arith.mulf %20, %21 : vector<5x64xf32>
    %23 = vector.broadcast %4 : vector<1x64xf32> to vector<5x64xf32>
    %24 = arith.addf %22, %23 : vector<5x64xf32>
    %25 = arith.truncf %24 : vector<5x64xf32> to vector<5x64xbf16>
    %c0_10 = arith.constant 0 : index
    %c0_11 = arith.constant 0 : index
    %26 = vector.load %arg4[%c0_10, %c0_11] : memref<64x192xbf16, #tpu.memory_space<vmem>>, vector<64x192xbf16>
    %cst_12 = arith.constant dense<0.000000e+00> : vector<5x192xf32>
    %27 = tpu.matmul %25, %26, %cst_12 {dimension_numbers = #tpu.dot_dimension_numbers<[1], [0], [0], [1], [0, 0, 1, 1], [], []>} : vector<5x64xbf16>, vector<64x192xbf16>, vector<5x192xf32> -> vector<5x192xf32>
    %c0_13 = arith.constant 0 : index
    %c0_14 = arith.constant 0 : index
    %28 = vector.load %arg5[%c0_13, %c0_14] : memref<1x192xf32, #tpu.memory_space<vmem>>, vector<1x192xf32>
    %29 = vector.broadcast %28 : vector<1x192xf32> to vector<5x192xf32>
    %30 = arith.addf %27, %29 : vector<5x192xf32>
    %31 = vector.shape_cast %30 : vector<5x192xf32> to vector<1x5x192xf32>
    %32 = vector.extract_strided_slice %31 {offsets = [0, 0, 0], sizes = [1, 5, 16], strides = [1, 1, 1]} : vector<1x5x192xf32> to vector<1x5x16xf32>
    %33 = vector.extract_strided_slice %31 {offsets = [0, 0, 64], sizes = [1, 5, 16], strides = [1, 1, 1]} : vector<1x5x192xf32> to vector<1x5x16xf32>
    %34 = vector.extract_strided_slice %31 {offsets = [0, 0, 128], sizes = [1, 5, 16], strides = [1, 1, 1]} : vector<1x5x192xf32> to vector<1x5x16xf32>
    %cst_15 = arith.constant dense<0.000000e+00> : vector<1x5x5xf32>
    %35 = tpu.matmul %32, %33, %cst_15 {dimension_numbers = #tpu.dot_dimension_numbers<[2], [2], [1], [1], [0, 0, 0, 1, 1, 1], [0], [0]>} : vector<1x5x16xf32>, vector<1x5x16xf32>, vector<1x5x5xf32> -> vector<1x5x5xf32>
    %cst_16 = arith.constant 2.500000e-01 : f32
    %36 = vector.broadcast %cst_16 : f32 to vector<1x5x5xf32>
    %37 = arith.mulf %35, %36 : vector<1x5x5xf32>
    %cst_17 = arith.constant dense<0xFF800000> : vector<1x5xf32>
    %38 = vector.multi_reduction <maximumf>, %37, %cst_17 [2] : vector<1x5x5xf32> to vector<1x5xf32>
    %39 = vector.shape_cast %38 : vector<1x5xf32> to vector<1x5x1xf32>
    %40 = vector.broadcast %39 : vector<1x5x1xf32> to vector<1x5x5xf32>
    %41 = arith.subf %37, %40 : vector<1x5x5xf32>
    %42 = math.exp %41 : vector<1x5x5xf32>
    %cst_18 = arith.constant dense<0.000000e+00> : vector<1x5xf32>
    %43 = vector.multi_reduction <add>, %42, %cst_18 [2] : vector<1x5x5xf32> to vector<1x5xf32>
    %44 = vector.shape_cast %43 : vector<1x5xf32> to vector<1x5x1xf32>
    %45 = tpu.reciprocal %44 {approx = true} : vector<1x5x1xf32> -> vector<1x5x1xf32>
    %46 = vector.broadcast %45 : vector<1x5x1xf32> to vector<1x5x5xf32>
    %47 = arith.mulf %42, %46 : vector<1x5x5xf32>
    %48 = arith.truncf %47 : vector<1x5x5xf32> to vector<1x5x5xbf16>
    %49 = arith.truncf %34 : vector<1x5x16xf32> to vector<1x5x16xbf16>
    %cst_19 = arith.constant dense<0.000000e+00> : vector<1x5x16xf32>
    %50 = tpu.matmul %48, %49, %cst_19 {dimension_numbers = #tpu.dot_dimension_numbers<[2], [1], [1], [2], [0, 0, 0, 1, 1, 2], [0], [0]>} : vector<1x5x5xbf16>, vector<1x5x16xbf16>, vector<1x5x16xf32> -> vector<1x5x16xf32>
    %c0_20 = arith.constant 0 : index
    %c0_21 = arith.constant 0 : index
    %c0_22 = arith.constant 0 : index
    %51 = vector.load %arg15[%c0_20, %c0_21, %c0_22] : memref<1x5x64xf32, #tpu.memory_space<vmem>>, vector<1x5x16xf32>
    tpu.vector_store %arg15[%c0_20, %c0_21, %c0_22], %50 {strides = array<i32>} : memref<1x5x64xf32, #tpu.memory_space<vmem>>, vector<1x5x16xf32>,
    %52 = vector.extract_strided_slice %31 {offsets = [0, 0, 16], sizes = [1, 5, 16], strides = [1, 1, 1]} : vector<1x5x192xf32> to vector<1x5x16xf32>
    %53 = vector.extract_strided_slice %31 {offsets = [0, 0, 80], sizes = [1, 5, 16], strides = [1, 1, 1]} : vector<1x5x192xf32> to vector<1x5x16xf32>
    %54 = vector.extract_strided_slice %31 {offsets = [0, 0, 144], sizes = [1, 5, 16], strides = [1, 1, 1]} : vector<1x5x192xf32> to vector<1x5x16xf32>
    %cst_23 = arith.constant dense<0.000000e+00> : vector<1x5x5xf32>
    %55 = tpu.matmul %52, %53, %cst_23 {dimension_numbers = #tpu.dot_dimension_numbers<[2], [2], [1], [1], [0, 0, 0, 1, 1, 1], [0], [0]>} : vector<1x5x16xf32>, vector<1x5x16xf32>, vector<1x5x5xf32> -> vector<1x5x5xf32>
    %cst_24 = arith.constant 2.500000e-01 : f32
    %56 = vector.broadcast %cst_24 : f32 to vector<1x5x5xf32>
    %57 = arith.mulf %55, %56 : vector<1x5x5xf32>
    %cst_25 = arith.constant dense<0xFF800000> : vector<1x5xf32>
    %58 = vector.multi_reduction <maximumf>, %57, %cst_25 [2] : vector<1x5x5xf32> to vector<1x5xf32>
    %59 = vector.shape_cast %58 : vector<1x5xf32> to vector<1x5x1xf32>
    %60 = vector.broadcast %59 : vector<1x5x1xf32> to vector<1x5x5xf32>
    %61 = arith.subf %57, %60 : vector<1x5x5xf32>
    %62 = math.exp %61 : vector<1x5x5xf32>
    %cst_26 = arith.constant dense<0.000000e+00> : vector<1x5xf32>
    %63 = vector.multi_reduction <add>, %62, %cst_26 [2] : vector<1x5x5xf32> to vector<1x5xf32>
    %64 = vector.shape_cast %63 : vector<1x5xf32> to vector<1x5x1xf32>
    %65 = tpu.reciprocal %64 {approx = true} : vector<1x5x1xf32> -> vector<1x5x1xf32>
    %66 = vector.broadcast %65 : vector<1x5x1xf32> to vector<1x5x5xf32>
    %67 = arith.mulf %62, %66 : vector<1x5x5xf32>
    %68 = arith.truncf %67 : vector<1x5x5xf32> to vector<1x5x5xbf16>
    %69 = arith.truncf %54 : vector<1x5x16xf32> to vector<1x5x16xbf16>
    %cst_27 = arith.constant dense<0.000000e+00> : vector<1x5x16xf32>
    %70 = tpu.matmul %68, %69, %cst_27 {dimension_numbers = #tpu.dot_dimension_numbers<[2], [1], [1], [2], [0, 0, 0, 1, 1, 2], [0], [0]>} : vector<1x5x5xbf16>, vector<1x5x16xbf16>, vector<1x5x16xf32> -> vector<1x5x16xf32>
    %c0_28 = arith.constant 0 : index
    %c0_29 = arith.constant 0 : index
    %c16 = arith.constant 16 : index
    %71 = vector.load %arg15[%c0_28, %c0_29, %c16] : memref<1x5x64xf32, #tpu.memory_space<vmem>>, vector<1x5x16xf32>
    tpu.vector_store %arg15[%c0_28, %c0_29, %c16], %70 {strides = array<i32>} : memref<1x5x64xf32, #tpu.memory_space<vmem>>, vector<1x5x16xf32>,
    %72 = vector.extract_strided_slice %31 {offsets = [0, 0, 32], sizes = [1, 5, 16], strides = [1, 1, 1]} : vector<1x5x192xf32> to vector<1x5x16xf32>
    %73 = vector.extract_strided_slice %31 {offsets = [0, 0, 96], sizes = [1, 5, 16], strides = [1, 1, 1]} : vector<1x5x192xf32> to vector<1x5x16xf32>
    %74 = vector.extract_strided_slice %31 {offsets = [0, 0, 160], sizes = [1, 5, 16], strides = [1, 1, 1]} : vector<1x5x192xf32> to vector<1x5x16xf32>
    %cst_30 = arith.constant dense<0.000000e+00> : vector<1x5x5xf32>
    %75 = tpu.matmul %72, %73, %cst_30 {dimension_numbers = #tpu.dot_dimension_numbers<[2], [2], [1], [1], [0, 0, 0, 1, 1, 1], [0], [0]>} : vector<1x5x16xf32>, vector<1x5x16xf32>, vector<1x5x5xf32> -> vector<1x5x5xf32>
    %cst_31 = arith.constant 2.500000e-01 : f32
    %76 = vector.broadcast %cst_31 : f32 to vector<1x5x5xf32>
    %77 = arith.mulf %75, %76 : vector<1x5x5xf32>
    %cst_32 = arith.constant dense<0xFF800000> : vector<1x5xf32>
    %78 = vector.multi_reduction <maximumf>, %77, %cst_32 [2] : vector<1x5x5xf32> to vector<1x5xf32>
    %79 = vector.shape_cast %78 : vector<1x5xf32> to vector<1x5x1xf32>
    %80 = vector.broadcast %79 : vector<1x5x1xf32> to vector<1x5x5xf32>
    %81 = arith.subf %77, %80 : vector<1x5x5xf32>
    %82 = math.exp %81 : vector<1x5x5xf32>
    %cst_33 = arith.constant dense<0.000000e+00> : vector<1x5xf32>
    %83 = vector.multi_reduction <add>, %82, %cst_33 [2] : vector<1x5x5xf32> to vector<1x5xf32>
    %84 = vector.shape_cast %83 : vector<1x5xf32> to vector<1x5x1xf32>
    %85 = tpu.reciprocal %84 {approx = true} : vector<1x5x1xf32> -> vector<1x5x1xf32>
    %86 = vector.broadcast %85 : vector<1x5x1xf32> to vector<1x5x5xf32>
    %87 = arith.mulf %82, %86 : vector<1x5x5xf32>
    %88 = arith.truncf %87 : vector<1x5x5xf32> to vector<1x5x5xbf16>
    %89 = arith.truncf %74 : vector<1x5x16xf32> to vector<1x5x16xbf16>
    %cst_34 = arith.constant dense<0.000000e+00> : vector<1x5x16xf32>
    %90 = tpu.matmul %88, %89, %cst_34 {dimension_numbers = #tpu.dot_dimension_numbers<[2], [1], [1], [2], [0, 0, 0, 1, 1, 2], [0], [0]>} : vector<1x5x5xbf16>, vector<1x5x16xbf16>, vector<1x5x16xf32> -> vector<1x5x16xf32>
    %c0_35 = arith.constant 0 : index
    %c0_36 = arith.constant 0 : index
    %c32 = arith.constant 32 : index
    %91 = vector.load %arg15[%c0_35, %c0_36, %c32] : memref<1x5x64xf32, #tpu.memory_space<vmem>>, vector<1x5x16xf32>
    tpu.vector_store %arg15[%c0_35, %c0_36, %c32], %90 {strides = array<i32>} : memref<1x5x64xf32, #tpu.memory_space<vmem>>, vector<1x5x16xf32>,
    %92 = vector.extract_strided_slice %31 {offsets = [0, 0, 48], sizes = [1, 5, 16], strides = [1, 1, 1]} : vector<1x5x192xf32> to vector<1x5x16xf32>
    %93 = vector.extract_strided_slice %31 {offsets = [0, 0, 112], sizes = [1, 5, 16], strides = [1, 1, 1]} : vector<1x5x192xf32> to vector<1x5x16xf32>
    %94 = vector.extract_strided_slice %31 {offsets = [0, 0, 176], sizes = [1, 5, 16], strides = [1, 1, 1]} : vector<1x5x192xf32> to vector<1x5x16xf32>
    %cst_37 = arith.constant dense<0.000000e+00> : vector<1x5x5xf32>
    %95 = tpu.matmul %92, %93, %cst_37 {dimension_numbers = #tpu.dot_dimension_numbers<[2], [2], [1], [1], [0, 0, 0, 1, 1, 1], [0], [0]>} : vector<1x5x16xf32>, vector<1x5x16xf32>, vector<1x5x5xf32> -> vector<1x5x5xf32>
    %cst_38 = arith.constant 2.500000e-01 : f32
    %96 = vector.broadcast %cst_38 : f32 to vector<1x5x5xf32>
    %97 = arith.mulf %95, %96 : vector<1x5x5xf32>
    %cst_39 = arith.constant dense<0xFF800000> : vector<1x5xf32>
    %98 = vector.multi_reduction <maximumf>, %97, %cst_39 [2] : vector<1x5x5xf32> to vector<1x5xf32>
    %99 = vector.shape_cast %98 : vector<1x5xf32> to vector<1x5x1xf32>
    %100 = vector.broadcast %99 : vector<1x5x1xf32> to vector<1x5x5xf32>
    %101 = arith.subf %97, %100 : vector<1x5x5xf32>
    %102 = math.exp %101 : vector<1x5x5xf32>
    %cst_40 = arith.constant dense<0.000000e+00> : vector<1x5xf32>
    %103 = vector.multi_reduction <add>, %102, %cst_40 [2] : vector<1x5x5xf32> to vector<1x5xf32>
    %104 = vector.shape_cast %103 : vector<1x5xf32> to vector<1x5x1xf32>
    %105 = tpu.reciprocal %104 {approx = true} : vector<1x5x1xf32> -> vector<1x5x1xf32>
    %106 = vector.broadcast %105 : vector<1x5x1xf32> to vector<1x5x5xf32>
    %107 = arith.mulf %102, %106 : vector<1x5x5xf32>
    %108 = arith.truncf %107 : vector<1x5x5xf32> to vector<1x5x5xbf16>
    %109 = arith.truncf %94 : vector<1x5x16xf32> to vector<1x5x16xbf16>
    %cst_41 = arith.constant dense<0.000000e+00> : vector<1x5x16xf32>
    %110 = tpu.matmul %108, %109, %cst_41 {dimension_numbers = #tpu.dot_dimension_numbers<[2], [1], [1], [2], [0, 0, 0, 1, 1, 2], [0], [0]>} : vector<1x5x5xbf16>, vector<1x5x16xbf16>, vector<1x5x16xf32> -> vector<1x5x16xf32>
    %c0_42 = arith.constant 0 : index
    %c0_43 = arith.constant 0 : index
    %c48 = arith.constant 48 : index
    %111 = vector.load %arg15[%c0_42, %c0_43, %c48] : memref<1x5x64xf32, #tpu.memory_space<vmem>>, vector<1x5x16xf32>
    tpu.vector_store %arg15[%c0_42, %c0_43, %c48], %110 {strides = array<i32>} : memref<1x5x64xf32, #tpu.memory_space<vmem>>, vector<1x5x16xf32>,
    %c0_44 = arith.constant 0 : index
    %c0_45 = arith.constant 0 : index
    %c0_46 = arith.constant 0 : index
    %112 = vector.load %arg15[%c0_44, %c0_45, %c0_46] : memref<1x5x64xf32, #tpu.memory_space<vmem>>, vector<1x5x64xf32>
    %113 = vector.shape_cast %112 : vector<1x5x64xf32> to vector<5x64xf32>
    %114 = arith.truncf %113 : vector<5x64xf32> to vector<5x64xbf16>
    %c0_47 = arith.constant 0 : index
    %c0_48 = arith.constant 0 : index
    %115 = vector.load %arg6[%c0_47, %c0_48] : memref<64x64xbf16, #tpu.memory_space<vmem>>, vector<64x64xbf16>
    %cst_49 = arith.constant dense<0.000000e+00> : vector<5x64xf32>
    %116 = tpu.matmul %114, %115, %cst_49 {dimension_numbers = #tpu.dot_dimension_numbers<[1], [0], [0], [1], [0, 0, 1, 1], [], []>} : vector<5x64xbf16>, vector<64x64xbf16>, vector<5x64xf32> -> vector<5x64xf32>
    %c0_50 = arith.constant 0 : index
    %c0_51 = arith.constant 0 : index
    %117 = vector.load %arg7[%c0_50, %c0_51] : memref<1x64xf32, #tpu.memory_space<vmem>>, vector<1x64xf32>
    %118 = vector.broadcast %117 : vector<1x64xf32> to vector<5x64xf32>
    %119 = arith.addf %116, %118 : vector<5x64xf32>
    %120 = arith.addf %2, %119 : vector<5x64xf32>
    %c0_52 = arith.constant 0 : index
    %c0_53 = arith.constant 0 : index
    %121 = vector.load %arg8[%c0_52, %c0_53] : memref<1x64xf32, #tpu.memory_space<vmem>>, vector<1x64xf32>
    %c0_54 = arith.constant 0 : index
    %c0_55 = arith.constant 0 : index
    %122 = vector.load %arg9[%c0_54, %c0_55] : memref<1x64xf32, #tpu.memory_space<vmem>>, vector<1x64xf32>
    %cst_56 = arith.constant dense<0.000000e+00> : vector<5xf32>
    %123 = vector.multi_reduction <add>, %120, %cst_56 [1] : vector<5x64xf32> to vector<5xf32>
    %124 = vector.shape_cast %123 : vector<5xf32> to vector<5x1xf32>
    %cst_57 = arith.constant 6.400000e+01 : f32
    %125 = vector.broadcast %cst_57 : f32 to vector<5x1xf32>
    %126 = arith.divf %124, %125 : vector<5x1xf32>
    %127 = vector.broadcast %126 : vector<5x1xf32> to vector<5x64xf32>
    %128 = arith.subf %120, %127 : vector<5x64xf32>
    %129 = arith.mulf %128, %128 : vector<5x64xf32>
    %cst_58 = arith.constant dense<0.000000e+00> : vector<5xf32>
    %130 = vector.multi_reduction <add>, %129, %cst_58 [1] : vector<5x64xf32> to vector<5xf32>
    %131 = vector.shape_cast %130 : vector<5xf32> to vector<5x1xf32>
    %cst_59 = arith.constant 6.400000e+01 : f32
    %132 = vector.broadcast %cst_59 : f32 to vector<5x1xf32>
    %133 = arith.divf %131, %132 : vector<5x1xf32>
    %cst_60 = arith.constant 9.99999974E-6 : f32
    %134 = vector.broadcast %cst_60 : f32 to vector<5x1xf32>
    %135 = arith.addf %133, %134 : vector<5x1xf32>
    %136 = math.rsqrt %135 : vector<5x1xf32>
    %137 = vector.broadcast %136 : vector<5x1xf32> to vector<5x64xf32>
    %138 = arith.mulf %128, %137 : vector<5x64xf32>
    %139 = vector.broadcast %121 : vector<1x64xf32> to vector<5x64xf32>
    %140 = arith.mulf %138, %139 : vector<5x64xf32>
    %141 = vector.broadcast %122 : vector<1x64xf32> to vector<5x64xf32>
    %142 = arith.addf %140, %141 : vector<5x64xf32>
    %143 = arith.truncf %142 : vector<5x64xf32> to vector<5x64xbf16>
    %c0_61 = arith.constant 0 : index
    %c0_62 = arith.constant 0 : index
    %144 = vector.load %arg10[%c0_61, %c0_62] : memref<64x256xbf16, #tpu.memory_space<vmem>>, vector<64x256xbf16>
    %cst_63 = arith.constant dense<0.000000e+00> : vector<5x256xf32>
    %145 = tpu.matmul %143, %144, %cst_63 {dimension_numbers = #tpu.dot_dimension_numbers<[1], [0], [0], [1], [0, 0, 1, 1], [], []>} : vector<5x64xbf16>, vector<64x256xbf16>, vector<5x256xf32> -> vector<5x256xf32>
    %c0_64 = arith.constant 0 : index
    %c0_65 = arith.constant 0 : index
    %146 = vector.load %arg11[%c0_64, %c0_65] : memref<1x256xf32, #tpu.memory_space<vmem>>, vector<1x256xf32>
    %147 = vector.broadcast %146 : vector<1x256xf32> to vector<5x256xf32>
    %148 = arith.addf %145, %147 : vector<5x256xf32>
    %cst_66 = arith.constant 1.702000e+00 : f32
    %149 = vector.broadcast %cst_66 : f32 to vector<5x256xf32>
    %150 = arith.mulf %149, %148 : vector<5x256xf32>
    %151 = arith.negf %150 : vector<5x256xf32>
    %152 = math.exp %151 : vector<5x256xf32>
    %cst_67 = arith.constant 1.000000e+00 : f32
    %153 = vector.broadcast %cst_67 : f32 to vector<5x256xf32>
    %154 = arith.addf %153, %152 : vector<5x256xf32>
    %155 = arith.divf %153, %154 : vector<5x256xf32>
    %156 = arith.mulf %148, %155 : vector<5x256xf32>
    %157 = arith.truncf %156 : vector<5x256xf32> to vector<5x256xbf16>
    %c0_68 = arith.constant 0 : index
    %c0_69 = arith.constant 0 : index
    %158 = vector.load %arg12[%c0_68, %c0_69] : memref<256x64xbf16, #tpu.memory_space<vmem>>, vector<256x64xbf16>
    %cst_70 = arith.constant dense<0.000000e+00> : vector<5x64xf32>
    %159 = tpu.matmul %157, %158, %cst_70 {dimension_numbers = #tpu.dot_dimension_numbers<[1], [0], [0], [1], [0, 0, 1, 1], [], []>} : vector<5x256xbf16>, vector<256x64xbf16>, vector<5x64xf32> -> vector<5x64xf32>
    %c0_71 = arith.constant 0 : index
    %c0_72 = arith.constant 0 : index
    %160 = vector.load %arg13[%c0_71, %c0_72] : memref<1x64xf32, #tpu.memory_space<vmem>>, vector<1x64xf32>
    %161 = vector.broadcast %160 : vector<1x64xf32> to vector<5x64xf32>
    %162 = arith.addf %159, %161 : vector<5x64xf32>
    %163 = arith.addf %120, %162 : vector<5x64xf32>
    %164 = vector.shape_cast %163 : vector<5x64xf32> to vector<1x5x64xf32>
    %165 = arith.truncf %164 : vector<1x5x64xf32> to vector<1x5x64xbf16>
    %c0_73 = arith.constant 0 : index
    %c0_74 = arith.constant 0 : index
    %c0_75 = arith.constant 0 : index
    %166 = vector.load %arg14[%c0_73, %c0_74, %c0_75] : memref<1x5x64xbf16, #tpu.memory_space<vmem>>, vector<1x5x64xbf16>
    tpu.vector_store %arg14[%c0_73, %c0_74, %c0_75], %165 {strides = array<i32>} : memref<1x5x64xbf16, #tpu.memory_space<vmem>>, vector<1x5x64xbf16>,
    return
  }
  func.func @transform_0(%arg0: i32) -> (i32, i32, i32) {
    %c0_i32 = arith.constant 0 : i32
    %c0_i32_0 = arith.constant 0 : i32
    %c0_i32_1 = arith.constant 0 : i32
    return %arg0, %c0_i32, %c0_i32_0 : i32, i32, i32
  }
  func.func @transform_1(%arg0: i32) -> (i32, i32) {
    %c0_i32 = arith.constant 0 : i32
    %c0_i32_0 = arith.constant 0 : i32
    %c0_i32_1 = arith.constant 0 : i32
    return %c0_i32, %c0_i32_0 : i32, i32
  }
  func.func @transform_2(%arg0: i32) -> (i32, i32) {
    %c0_i32 = arith.constant 0 : i32
    %c0_i32_0 = arith.constant 0 : i32
    %c0_i32_1 = arith.constant 0 : i32
    return %c0_i32, %c0_i32_0 : i32, i32
  }
  func.func @transform_3(%arg0: i32) -> (i32, i32) {
    %c0_i32 = arith.constant 0 : i32
    %c0_i32_0 = arith.constant 0 : i32
    %c0_i32_1 = arith.constant 0 : i32
    return %c0_i32, %c0_i32_0 : i32, i32
  }
  func.func @transform_4(%arg0: i32) -> (i32, i32) {
    %c0_i32 = arith.constant 0 : i32
    %c0_i32_0 = arith.constant 0 : i32
    %c0_i32_1 = arith.constant 0 : i32
    return %c0_i32, %c0_i32_0 : i32, i32
  }
  func.func @transform_5(%arg0: i32) -> (i32, i32) {
    %c0_i32 = arith.constant 0 : i32
    %c0_i32_0 = arith.constant 0 : i32
    %c0_i32_1 = arith.constant 0 : i32
    return %c0_i32, %c0_i32_0 : i32, i32
  }
  func.func @transform_6(%arg0: i32) -> (i32, i32) {
    %c0_i32 = arith.constant 0 : i32
    %c0_i32_0 = arith.constant 0 : i32
    %c0_i32_1 = arith.constant 0 : i32
    return %c0_i32, %c0_i32_0 : i32, i32
  }
  func.func @transform_7(%arg0: i32) -> (i32, i32) {
    %c0_i32 = arith.constant 0 : i32
    %c0_i32_0 = arith.constant 0 : i32
    %c0_i32_1 = arith.constant 0 : i32
    return %c0_i32, %c0_i32_0 : i32, i32
  }
  func.func @transform_8(%arg0: i32) -> (i32, i32) {
    %c0_i32 = arith.constant 0 : i32
    %c0_i32_0 = arith.constant 0 : i32
    %c0_i32_1 = arith.constant 0 : i32
    return %c0_i32, %c0_i32_0 : i32, i32
  }
  func.func @transform_9(%arg0: i32) -> (i32, i32) {
    %c0_i32 = arith.constant 0 : i32
    %c0_i32_0 = arith.constant 0 : i32
    %c0_i32_1 = arith.constant 0 : i32
    return %c0_i32, %c0_i32_0 : i32, i32
  }
  func.func @transform_10(%arg0: i32) -> (i32, i32) {
    %c0_i32 = arith.constant 0 : i32
    %c0_i32_0 = arith.constant 0 : i32
    %c0_i32_1 = arith.constant 0 : i32
    return %c0_i32, %c0_i32_0 : i32, i32
  }
  func.func @transform_11(%arg0: i32) -> (i32, i32) {
    %c0_i32 = arith.constant 0 : i32
    %c0_i32_0 = arith.constant 0 : i32
    %c0_i32_1 = arith.constant 0 : i32
    return %c0_i32, %c0_i32_0 : i32, i32
  }
  func.func @transform_12(%arg0: i32) -> (i32, i32) {
    %c0_i32 = arith.constant 0 : i32
    %c0_i32_0 = arith.constant 0 : i32
    %c0_i32_1 = arith.constant 0 : i32
    return %c0_i32, %c0_i32_0 : i32, i32
  }
  func.func @transform_13(%arg0: i32) -> (i32, i32, i32) {
    %c0_i32 = arith.constant 0 : i32
    %c0_i32_0 = arith.constant 0 : i32
    %c0_i32_1 = arith.constant 0 : i32
    return %arg0, %c0_i32, %c0_i32_0 : i32, i32, i32
  }
}

module attributes {stable_mosaic.version = 11 : i64} {
  func.func @_feature_head_kernel(%arg0: memref<2x64xbf16, #tpu.memory_space<vmem>>, %arg1: memref<1x64xf32, #tpu.memory_space<vmem>>, %arg2: memref<1x64xf32, #tpu.memory_space<vmem>>, %arg3: memref<64x64xbf16, #tpu.memory_space<vmem>>, %arg4: memref<2x64xf32, #tpu.memory_space<vmem>>) attributes {dimension_semantics = [], scalar_prefetch = 0 : i64, scratch_operands = 0 : i64, tpu.core_type = #tpu.core_type<tc>} {
    %c0 = arith.constant 0 : index
    %c0_0 = arith.constant 0 : index
    %0 = vector.load %arg0[%c0, %c0_0] : memref<2x64xbf16, #tpu.memory_space<vmem>>, vector<2x64xbf16>
    %1 = arith.extf %0 : vector<2x64xbf16> to vector<2x64xf32>
    %c0_1 = arith.constant 0 : index
    %c0_2 = arith.constant 0 : index
    %2 = vector.load %arg1[%c0_1, %c0_2] : memref<1x64xf32, #tpu.memory_space<vmem>>, vector<1x64xf32>
    %c0_3 = arith.constant 0 : index
    %c0_4 = arith.constant 0 : index
    %3 = vector.load %arg2[%c0_3, %c0_4] : memref<1x64xf32, #tpu.memory_space<vmem>>, vector<1x64xf32>
    %cst = arith.constant dense<0.000000e+00> : vector<2xf32>
    %4 = vector.multi_reduction <add>, %1, %cst [1] : vector<2x64xf32> to vector<2xf32>
    %5 = vector.shape_cast %4 : vector<2xf32> to vector<2x1xf32>
    %cst_5 = arith.constant 6.400000e+01 : f32
    %6 = vector.broadcast %cst_5 : f32 to vector<2x1xf32>
    %7 = arith.divf %5, %6 : vector<2x1xf32>
    %8 = vector.broadcast %7 : vector<2x1xf32> to vector<2x64xf32>
    %9 = arith.subf %1, %8 : vector<2x64xf32>
    %10 = arith.mulf %9, %9 : vector<2x64xf32>
    %cst_6 = arith.constant dense<0.000000e+00> : vector<2xf32>
    %11 = vector.multi_reduction <add>, %10, %cst_6 [1] : vector<2x64xf32> to vector<2xf32>
    %12 = vector.shape_cast %11 : vector<2xf32> to vector<2x1xf32>
    %cst_7 = arith.constant 6.400000e+01 : f32
    %13 = vector.broadcast %cst_7 : f32 to vector<2x1xf32>
    %14 = arith.divf %12, %13 : vector<2x1xf32>
    %cst_8 = arith.constant 9.99999974E-6 : f32
    %15 = vector.broadcast %cst_8 : f32 to vector<2x1xf32>
    %16 = arith.addf %14, %15 : vector<2x1xf32>
    %17 = math.rsqrt %16 : vector<2x1xf32>
    %18 = vector.broadcast %17 : vector<2x1xf32> to vector<2x64xf32>
    %19 = arith.mulf %9, %18 : vector<2x64xf32>
    %20 = vector.broadcast %2 : vector<1x64xf32> to vector<2x64xf32>
    %21 = arith.mulf %19, %20 : vector<2x64xf32>
    %22 = vector.broadcast %3 : vector<1x64xf32> to vector<2x64xf32>
    %23 = arith.addf %21, %22 : vector<2x64xf32>
    %24 = arith.truncf %23 : vector<2x64xf32> to vector<2x64xbf16>
    %c0_9 = arith.constant 0 : index
    %c0_10 = arith.constant 0 : index
    %25 = vector.load %arg3[%c0_9, %c0_10] : memref<64x64xbf16, #tpu.memory_space<vmem>>, vector<64x64xbf16>
    %cst_11 = arith.constant dense<0.000000e+00> : vector<2x64xf32>
    %26 = tpu.matmul %24, %25, %cst_11 {dimension_numbers = #tpu.dot_dimension_numbers<[1], [0], [0], [1], [0, 0, 1, 1], [], []>} : vector<2x64xbf16>, vector<64x64xbf16>, vector<2x64xf32> -> vector<2x64xf32>
    %27 = arith.mulf %26, %26 : vector<2x64xf32>
    %cst_12 = arith.constant dense<0.000000e+00> : vector<2xf32>
    %28 = vector.multi_reduction <add>, %27, %cst_12 [1] : vector<2x64xf32> to vector<2xf32>
    %29 = vector.shape_cast %28 : vector<2xf32> to vector<2x1xf32>
    %cst_13 = arith.constant 1.000000e-24 : f32
    %30 = vector.broadcast %cst_13 : f32 to vector<2x1xf32>
    %31 = arith.maximumf %29, %30 : vector<2x1xf32>
    %32 = math.rsqrt %31 : vector<2x1xf32>
    %33 = vector.broadcast %32 : vector<2x1xf32> to vector<2x64xf32>
    %34 = arith.mulf %26, %33 : vector<2x64xf32>
    %c0_14 = arith.constant 0 : index
    %c0_15 = arith.constant 0 : index
    %35 = vector.load %arg4[%c0_14, %c0_15] : memref<2x64xf32, #tpu.memory_space<vmem>>, vector<2x64xf32>
    tpu.vector_store %arg4[%c0_14, %c0_15], %34 {strides = array<i32>} : memref<2x64xf32, #tpu.memory_space<vmem>>, vector<2x64xf32>,
    return
  }
}

module attributes {stable_mosaic.version = 11 : i64} {
  func.func @_block_kernel(%arg0: i32, %arg1: memref<6x8x64xbf16, #tpu.memory_space<vmem>>, %arg2: memref<1x64xf32, #tpu.memory_space<vmem>>, %arg3: memref<1x64xf32, #tpu.memory_space<vmem>>, %arg4: memref<64x192xbf16, #tpu.memory_space<vmem>>, %arg5: memref<1x192xf32, #tpu.memory_space<vmem>>, %arg6: memref<64x64xbf16, #tpu.memory_space<vmem>>, %arg7: memref<1x64xf32, #tpu.memory_space<vmem>>, %arg8: memref<1x64xf32, #tpu.memory_space<vmem>>, %arg9: memref<1x64xf32, #tpu.memory_space<vmem>>, %arg10: memref<64x256xbf16, #tpu.memory_space<vmem>>, %arg11: memref<1x256xf32, #tpu.memory_space<vmem>>, %arg12: memref<256x64xbf16, #tpu.memory_space<vmem>>, %arg13: memref<1x64xf32, #tpu.memory_space<vmem>>, %arg14: memref<6x8x64xbf16, #tpu.memory_space<vmem>>, %arg15: memref<6x8x64xf32, #tpu.memory_space<vmem>>) attributes {dimension_semantics = [#tpu.dimension_semantics<parallel>], iteration_bounds = array<i64: 2>, scalar_prefetch = 0 : i64, scratch_operands = 1 : i64, tpu.core_type = #tpu.core_type<tc>, window_params = [{transform_indices = @transform_0, window_bounds = array<i64: 6, 8, 64>}, {pipeline_mode = #tpu.pipeline_mode<synchronous>, transform_indices = @transform_1, window_bounds = array<i64: 1, 64>}, {pipeline_mode = #tpu.pipeline_mode<synchronous>, transform_indices = @transform_2, window_bounds = array<i64: 1, 64>}, {pipeline_mode = #tpu.pipeline_mode<synchronous>, transform_indices = @transform_3, window_bounds = array<i64: 64, 192>}, {pipeline_mode = #tpu.pipeline_mode<synchronous>, transform_indices = @transform_4, window_bounds = array<i64: 1, 192>}, {pipeline_mode = #tpu.pipeline_mode<synchronous>, transform_indices = @transform_5, window_bounds = array<i64: 64, 64>}, {pipeline_mode = #tpu.pipeline_mode<synchronous>, transform_indices = @transform_6, window_bounds = array<i64: 1, 64>}, {pipeline_mode = #tpu.pipeline_mode<synchronous>, transform_indices = @transform_7, window_bounds = array<i64: 1, 64>}, {pipeline_mode = #tpu.pipeline_mode<synchronous>, transform_indices = @transform_8, window_bounds = array<i64: 1, 64>}, {pipeline_mode = #tpu.pipeline_mode<synchronous>, transform_indices = @transform_9, window_bounds = array<i64: 64, 256>}, {pipeline_mode = #tpu.pipeline_mode<synchronous>, transform_indices = @transform_10, window_bounds = array<i64: 1, 256>}, {pipeline_mode = #tpu.pipeline_mode<synchronous>, transform_indices = @transform_11, window_bounds = array<i64: 256, 64>}, {pipeline_mode = #tpu.pipeline_mode<synchronous>, transform_indices = @transform_12, window_bounds = array<i64: 1, 64>}, {transform_indices = @transform_13, window_bounds = array<i64: 6, 8, 64>}]} {
    %c0 = arith.constant 0 : index
    %c0_0 = arith.constant 0 : index
    %c0_1 = arith.constant 0 : index
    %0 = vector.load %arg1[%c0, %c0_0, %c0_1] : memref<6x8x64xbf16, #tpu.memory_space<vmem>>, vector<6x8x64xbf16>
    %1 = arith.extf %0 : vector<6x8x64xbf16> to vector<6x8x64xf32>
    %2 = vector.shape_cast %1 : vector<6x8x64xf32> to vector<48x64xf32>
    %c0_2 = arith.constant 0 : index
    %c0_3 = arith.constant 0 : index
    %3 = vector.load %arg2[%c0_2, %c0_3] : memref<1x64xf32, #tpu.memory_space<vmem>>, vector<1x64xf32>
    %c0_4 = arith.constant 0 : index
    %c0_5 = arith.constant 0 : index
    %4 = vector.load %arg3[%c0_4, %c0_5] : memref<1x64xf32, #tpu.memory_space<vmem>>, vector<1x64xf32>
    %cst = arith.constant dense<0.000000e+00> : vector<48xf32>
    %5 = vector.multi_reduction <add>, %2, %cst [1] : vector<48x64xf32> to vector<48xf32>
    %6 = vector.shape_cast %5 : vector<48xf32> to vector<48x1xf32>
    %cst_6 = arith.constant 6.400000e+01 : f32
    %7 = vector.broadcast %cst_6 : f32 to vector<48x1xf32>
    %8 = arith.divf %6, %7 : vector<48x1xf32>
    %9 = vector.broadcast %8 : vector<48x1xf32> to vector<48x64xf32>
    %10 = arith.subf %2, %9 : vector<48x64xf32>
    %11 = arith.mulf %10, %10 : vector<48x64xf32>
    %cst_7 = arith.constant dense<0.000000e+00> : vector<48xf32>
    %12 = vector.multi_reduction <add>, %11, %cst_7 [1] : vector<48x64xf32> to vector<48xf32>
    %13 = vector.shape_cast %12 : vector<48xf32> to vector<48x1xf32>
    %cst_8 = arith.constant 6.400000e+01 : f32
    %14 = vector.broadcast %cst_8 : f32 to vector<48x1xf32>
    %15 = arith.divf %13, %14 : vector<48x1xf32>
    %cst_9 = arith.constant 9.99999974E-6 : f32
    %16 = vector.broadcast %cst_9 : f32 to vector<48x1xf32>
    %17 = arith.addf %15, %16 : vector<48x1xf32>
    %18 = math.rsqrt %17 : vector<48x1xf32>
    %19 = vector.broadcast %18 : vector<48x1xf32> to vector<48x64xf32>
    %20 = arith.mulf %10, %19 : vector<48x64xf32>
    %21 = vector.broadcast %3 : vector<1x64xf32> to vector<48x64xf32>
    %22 = arith.mulf %20, %21 : vector<48x64xf32>
    %23 = vector.broadcast %4 : vector<1x64xf32> to vector<48x64xf32>
    %24 = arith.addf %22, %23 : vector<48x64xf32>
    %25 = arith.truncf %24 : vector<48x64xf32> to vector<48x64xbf16>
    %c0_10 = arith.constant 0 : index
    %c0_11 = arith.constant 0 : index
    %26 = vector.load %arg4[%c0_10, %c0_11] : memref<64x192xbf16, #tpu.memory_space<vmem>>, vector<64x192xbf16>
    %cst_12 = arith.constant dense<0.000000e+00> : vector<48x192xf32>
    %27 = tpu.matmul %25, %26, %cst_12 {dimension_numbers = #tpu.dot_dimension_numbers<[1], [0], [0], [1], [0, 0, 1, 1], [], []>} : vector<48x64xbf16>, vector<64x192xbf16>, vector<48x192xf32> -> vector<48x192xf32>
    %c0_13 = arith.constant 0 : index
    %c0_14 = arith.constant 0 : index
    %28 = vector.load %arg5[%c0_13, %c0_14] : memref<1x192xf32, #tpu.memory_space<vmem>>, vector<1x192xf32>
    %29 = vector.broadcast %28 : vector<1x192xf32> to vector<48x192xf32>
    %30 = arith.addf %27, %29 : vector<48x192xf32>
    %31 = vector.shape_cast %30 : vector<48x192xf32> to vector<6x8x192xf32>
    %32 = tpu.iota {dimensions = array<i32: 0>} : vector<8x8xi32>
    %33 = tpu.iota {dimensions = array<i32: 1>} : vector<8x8xi32>
    %34 = arith.cmpi sle, %33, %32 : vector<8x8xi32>
    %35 = vector.extract_strided_slice %31 {offsets = [0, 0, 0], sizes = [6, 8, 16], strides = [1, 1, 1]} : vector<6x8x192xf32> to vector<6x8x16xf32>
    %36 = vector.extract_strided_slice %31 {offsets = [0, 0, 64], sizes = [6, 8, 16], strides = [1, 1, 1]} : vector<6x8x192xf32> to vector<6x8x16xf32>
    %37 = vector.extract_strided_slice %31 {offsets = [0, 0, 128], sizes = [6, 8, 16], strides = [1, 1, 1]} : vector<6x8x192xf32> to vector<6x8x16xf32>
    %cst_15 = arith.constant dense<0.000000e+00> : vector<6x8x8xf32>
    %38 = tpu.matmul %35, %36, %cst_15 {dimension_numbers = #tpu.dot_dimension_numbers<[2], [2], [1], [1], [0, 0, 0, 1, 1, 1], [0], [0]>} : vector<6x8x16xf32>, vector<6x8x16xf32>, vector<6x8x8xf32> -> vector<6x8x8xf32>
    %cst_16 = arith.constant 2.500000e-01 : f32
    %39 = vector.broadcast %cst_16 : f32 to vector<6x8x8xf32>
    %40 = arith.mulf %38, %39 : vector<6x8x8xf32>
    %41 = vector.shape_cast %34 : vector<8x8xi1> to vector<1x8x8xi1>
    %cst_17 = arith.constant -1.000000e+09 : f32
    %42 = vector.shape_cast %41 : vector<1x8x8xi1> to vector<1x8x8xi1>
    %43 = vector.broadcast %42 : vector<1x8x8xi1> to vector<6x8x8xi1>
    %44 = vector.broadcast %cst_17 : f32 to vector<6x8x8xf32>
    %45 = arith.select %43, %40, %44 : vector<6x8x8xi1>, vector<6x8x8xf32>
    %cst_18 = arith.constant dense<0xFF800000> : vector<6x8xf32>
    %46 = vector.multi_reduction <maximumf>, %45, %cst_18 [2] : vector<6x8x8xf32> to vector<6x8xf32>
    %47 = vector.shape_cast %46 : vector<6x8xf32> to vector<6x8x1xf32>
    %48 = vector.broadcast %47 : vector<6x8x1xf32> to vector<6x8x8xf32>
    %49 = arith.subf %45, %48 : vector<6x8x8xf32>
    %50 = math.exp %49 : vector<6x8x8xf32>
    %cst_19 = arith.constant dense<0.000000e+00> : vector<6x8xf32>
    %51 = vector.multi_reduction <add>, %50, %cst_19 [2] : vector<6x8x8xf32> to vector<6x8xf32>
    %52 = vector.shape_cast %51 : vector<6x8xf32> to vector<6x8x1xf32>
    %53 = tpu.reciprocal %52 {approx = true} : vector<6x8x1xf32> -> vector<6x8x1xf32>
    %54 = vector.broadcast %53 : vector<6x8x1xf32> to vector<6x8x8xf32>
    %55 = arith.mulf %50, %54 : vector<6x8x8xf32>
    %56 = arith.truncf %55 : vector<6x8x8xf32> to vector<6x8x8xbf16>
    %57 = arith.truncf %37 : vector<6x8x16xf32> to vector<6x8x16xbf16>
    %cst_20 = arith.constant dense<0.000000e+00> : vector<6x8x16xf32>
    %58 = tpu.matmul %56, %57, %cst_20 {dimension_numbers = #tpu.dot_dimension_numbers<[2], [1], [1], [2], [0, 0, 0, 1, 1, 2], [0], [0]>} : vector<6x8x8xbf16>, vector<6x8x16xbf16>, vector<6x8x16xf32> -> vector<6x8x16xf32>
    %c0_21 = arith.constant 0 : index
    %c0_22 = arith.constant 0 : index
    %c0_23 = arith.constant 0 : index
    %59 = vector.load %arg15[%c0_21, %c0_22, %c0_23] : memref<6x8x64xf32, #tpu.memory_space<vmem>>, vector<6x8x16xf32>
    tpu.vector_store %arg15[%c0_21, %c0_22, %c0_23], %58 {strides = array<i32>} : memref<6x8x64xf32, #tpu.memory_space<vmem>>, vector<6x8x16xf32>,
    %60 = vector.extract_strided_slice %31 {offsets = [0, 0, 16], sizes = [6, 8, 16], strides = [1, 1, 1]} : vector<6x8x192xf32> to vector<6x8x16xf32>
    %61 = vector.extract_strided_slice %31 {offsets = [0, 0, 80], sizes = [6, 8, 16], strides = [1, 1, 1]} : vector<6x8x192xf32> to vector<6x8x16xf32>
    %62 = vector.extract_strided_slice %31 {offsets = [0, 0, 144], sizes = [6, 8, 16], strides = [1, 1, 1]} : vector<6x8x192xf32> to vector<6x8x16xf32>
    %cst_24 = arith.constant dense<0.000000e+00> : vector<6x8x8xf32>
    %63 = tpu.matmul %60, %61, %cst_24 {dimension_numbers = #tpu.dot_dimension_numbers<[2], [2], [1], [1], [0, 0, 0, 1, 1, 1], [0], [0]>} : vector<6x8x16xf32>, vector<6x8x16xf32>, vector<6x8x8xf32> -> vector<6x8x8xf32>
    %cst_25 = arith.constant 2.500000e-01 : f32
    %64 = vector.broadcast %cst_25 : f32 to vector<6x8x8xf32>
    %65 = arith.mulf %63, %64 : vector<6x8x8xf32>
    %66 = vector.shape_cast %34 : vector<8x8xi1> to vector<1x8x8xi1>
    %cst_26 = arith.constant -1.000000e+09 : f32
    %67 = vector.shape_cast %66 : vector<1x8x8xi1> to vector<1x8x8xi1>
    %68 = vector.broadcast %67 : vector<1x8x8xi1> to vector<6x8x8xi1>
    %69 = vector.broadcast %cst_26 : f32 to vector<6x8x8xf32>
    %70 = arith.select %68, %65, %69 : vector<6x8x8xi1>, vector<6x8x8xf32>
    %cst_27 = arith.constant dense<0xFF800000> : vector<6x8xf32>
    %71 = vector.multi_reduction <maximumf>, %70, %cst_27 [2] : vector<6x8x8xf32> to vector<6x8xf32>
    %72 = vector.shape_cast %71 : vector<6x8xf32> to vector<6x8x1xf32>
    %73 = vector.broadcast %72 : vector<6x8x1xf32> to vector<6x8x8xf32>
    %74 = arith.subf %70, %73 : vector<6x8x8xf32>
    %75 = math.exp %74 : vector<6x8x8xf32>
    %cst_28 = arith.constant dense<0.000000e+00> : vector<6x8xf32>
    %76 = vector.multi_reduction <add>, %75, %cst_28 [2] : vector<6x8x8xf32> to vector<6x8xf32>
    %77 = vector.shape_cast %76 : vector<6x8xf32> to vector<6x8x1xf32>
    %78 = tpu.reciprocal %77 {approx = true} : vector<6x8x1xf32> -> vector<6x8x1xf32>
    %79 = vector.broadcast %78 : vector<6x8x1xf32> to vector<6x8x8xf32>
    %80 = arith.mulf %75, %79 : vector<6x8x8xf32>
    %81 = arith.truncf %80 : vector<6x8x8xf32> to vector<6x8x8xbf16>
    %82 = arith.truncf %62 : vector<6x8x16xf32> to vector<6x8x16xbf16>
    %cst_29 = arith.constant dense<0.000000e+00> : vector<6x8x16xf32>
    %83 = tpu.matmul %81, %82, %cst_29 {dimension_numbers = #tpu.dot_dimension_numbers<[2], [1], [1], [2], [0, 0, 0, 1, 1, 2], [0], [0]>} : vector<6x8x8xbf16>, vector<6x8x16xbf16>, vector<6x8x16xf32> -> vector<6x8x16xf32>
    %c0_30 = arith.constant 0 : index
    %c0_31 = arith.constant 0 : index
    %c16 = arith.constant 16 : index
    %84 = vector.load %arg15[%c0_30, %c0_31, %c16] : memref<6x8x64xf32, #tpu.memory_space<vmem>>, vector<6x8x16xf32>
    tpu.vector_store %arg15[%c0_30, %c0_31, %c16], %83 {strides = array<i32>} : memref<6x8x64xf32, #tpu.memory_space<vmem>>, vector<6x8x16xf32>,
    %85 = vector.extract_strided_slice %31 {offsets = [0, 0, 32], sizes = [6, 8, 16], strides = [1, 1, 1]} : vector<6x8x192xf32> to vector<6x8x16xf32>
    %86 = vector.extract_strided_slice %31 {offsets = [0, 0, 96], sizes = [6, 8, 16], strides = [1, 1, 1]} : vector<6x8x192xf32> to vector<6x8x16xf32>
    %87 = vector.extract_strided_slice %31 {offsets = [0, 0, 160], sizes = [6, 8, 16], strides = [1, 1, 1]} : vector<6x8x192xf32> to vector<6x8x16xf32>
    %cst_32 = arith.constant dense<0.000000e+00> : vector<6x8x8xf32>
    %88 = tpu.matmul %85, %86, %cst_32 {dimension_numbers = #tpu.dot_dimension_numbers<[2], [2], [1], [1], [0, 0, 0, 1, 1, 1], [0], [0]>} : vector<6x8x16xf32>, vector<6x8x16xf32>, vector<6x8x8xf32> -> vector<6x8x8xf32>
    %cst_33 = arith.constant 2.500000e-01 : f32
    %89 = vector.broadcast %cst_33 : f32 to vector<6x8x8xf32>
    %90 = arith.mulf %88, %89 : vector<6x8x8xf32>
    %91 = vector.shape_cast %34 : vector<8x8xi1> to vector<1x8x8xi1>
    %cst_34 = arith.constant -1.000000e+09 : f32
    %92 = vector.shape_cast %91 : vector<1x8x8xi1> to vector<1x8x8xi1>
    %93 = vector.broadcast %92 : vector<1x8x8xi1> to vector<6x8x8xi1>
    %94 = vector.broadcast %cst_34 : f32 to vector<6x8x8xf32>
    %95 = arith.select %93, %90, %94 : vector<6x8x8xi1>, vector<6x8x8xf32>
    %cst_35 = arith.constant dense<0xFF800000> : vector<6x8xf32>
    %96 = vector.multi_reduction <maximumf>, %95, %cst_35 [2] : vector<6x8x8xf32> to vector<6x8xf32>
    %97 = vector.shape_cast %96 : vector<6x8xf32> to vector<6x8x1xf32>
    %98 = vector.broadcast %97 : vector<6x8x1xf32> to vector<6x8x8xf32>
    %99 = arith.subf %95, %98 : vector<6x8x8xf32>
    %100 = math.exp %99 : vector<6x8x8xf32>
    %cst_36 = arith.constant dense<0.000000e+00> : vector<6x8xf32>
    %101 = vector.multi_reduction <add>, %100, %cst_36 [2] : vector<6x8x8xf32> to vector<6x8xf32>
    %102 = vector.shape_cast %101 : vector<6x8xf32> to vector<6x8x1xf32>
    %103 = tpu.reciprocal %102 {approx = true} : vector<6x8x1xf32> -> vector<6x8x1xf32>
    %104 = vector.broadcast %103 : vector<6x8x1xf32> to vector<6x8x8xf32>
    %105 = arith.mulf %100, %104 : vector<6x8x8xf32>
    %106 = arith.truncf %105 : vector<6x8x8xf32> to vector<6x8x8xbf16>
    %107 = arith.truncf %87 : vector<6x8x16xf32> to vector<6x8x16xbf16>
    %cst_37 = arith.constant dense<0.000000e+00> : vector<6x8x16xf32>
    %108 = tpu.matmul %106, %107, %cst_37 {dimension_numbers = #tpu.dot_dimension_numbers<[2], [1], [1], [2], [0, 0, 0, 1, 1, 2], [0], [0]>} : vector<6x8x8xbf16>, vector<6x8x16xbf16>, vector<6x8x16xf32> -> vector<6x8x16xf32>
    %c0_38 = arith.constant 0 : index
    %c0_39 = arith.constant 0 : index
    %c32 = arith.constant 32 : index
    %109 = vector.load %arg15[%c0_38, %c0_39, %c32] : memref<6x8x64xf32, #tpu.memory_space<vmem>>, vector<6x8x16xf32>
    tpu.vector_store %arg15[%c0_38, %c0_39, %c32], %108 {strides = array<i32>} : memref<6x8x64xf32, #tpu.memory_space<vmem>>, vector<6x8x16xf32>,
    %110 = vector.extract_strided_slice %31 {offsets = [0, 0, 48], sizes = [6, 8, 16], strides = [1, 1, 1]} : vector<6x8x192xf32> to vector<6x8x16xf32>
    %111 = vector.extract_strided_slice %31 {offsets = [0, 0, 112], sizes = [6, 8, 16], strides = [1, 1, 1]} : vector<6x8x192xf32> to vector<6x8x16xf32>
    %112 = vector.extract_strided_slice %31 {offsets = [0, 0, 176], sizes = [6, 8, 16], strides = [1, 1, 1]} : vector<6x8x192xf32> to vector<6x8x16xf32>
    %cst_40 = arith.constant dense<0.000000e+00> : vector<6x8x8xf32>
    %113 = tpu.matmul %110, %111, %cst_40 {dimension_numbers = #tpu.dot_dimension_numbers<[2], [2], [1], [1], [0, 0, 0, 1, 1, 1], [0], [0]>} : vector<6x8x16xf32>, vector<6x8x16xf32>, vector<6x8x8xf32> -> vector<6x8x8xf32>
    %cst_41 = arith.constant 2.500000e-01 : f32
    %114 = vector.broadcast %cst_41 : f32 to vector<6x8x8xf32>
    %115 = arith.mulf %113, %114 : vector<6x8x8xf32>
    %116 = vector.shape_cast %34 : vector<8x8xi1> to vector<1x8x8xi1>
    %cst_42 = arith.constant -1.000000e+09 : f32
    %117 = vector.shape_cast %116 : vector<1x8x8xi1> to vector<1x8x8xi1>
    %118 = vector.broadcast %117 : vector<1x8x8xi1> to vector<6x8x8xi1>
    %119 = vector.broadcast %cst_42 : f32 to vector<6x8x8xf32>
    %120 = arith.select %118, %115, %119 : vector<6x8x8xi1>, vector<6x8x8xf32>
    %cst_43 = arith.constant dense<0xFF800000> : vector<6x8xf32>
    %121 = vector.multi_reduction <maximumf>, %120, %cst_43 [2] : vector<6x8x8xf32> to vector<6x8xf32>
    %122 = vector.shape_cast %121 : vector<6x8xf32> to vector<6x8x1xf32>
    %123 = vector.broadcast %122 : vector<6x8x1xf32> to vector<6x8x8xf32>
    %124 = arith.subf %120, %123 : vector<6x8x8xf32>
    %125 = math.exp %124 : vector<6x8x8xf32>
    %cst_44 = arith.constant dense<0.000000e+00> : vector<6x8xf32>
    %126 = vector.multi_reduction <add>, %125, %cst_44 [2] : vector<6x8x8xf32> to vector<6x8xf32>
    %127 = vector.shape_cast %126 : vector<6x8xf32> to vector<6x8x1xf32>
    %128 = tpu.reciprocal %127 {approx = true} : vector<6x8x1xf32> -> vector<6x8x1xf32>
    %129 = vector.broadcast %128 : vector<6x8x1xf32> to vector<6x8x8xf32>
    %130 = arith.mulf %125, %129 : vector<6x8x8xf32>
    %131 = arith.truncf %130 : vector<6x8x8xf32> to vector<6x8x8xbf16>
    %132 = arith.truncf %112 : vector<6x8x16xf32> to vector<6x8x16xbf16>
    %cst_45 = arith.constant dense<0.000000e+00> : vector<6x8x16xf32>
    %133 = tpu.matmul %131, %132, %cst_45 {dimension_numbers = #tpu.dot_dimension_numbers<[2], [1], [1], [2], [0, 0, 0, 1, 1, 2], [0], [0]>} : vector<6x8x8xbf16>, vector<6x8x16xbf16>, vector<6x8x16xf32> -> vector<6x8x16xf32>
    %c0_46 = arith.constant 0 : index
    %c0_47 = arith.constant 0 : index
    %c48 = arith.constant 48 : index
    %134 = vector.load %arg15[%c0_46, %c0_47, %c48] : memref<6x8x64xf32, #tpu.memory_space<vmem>>, vector<6x8x16xf32>
    tpu.vector_store %arg15[%c0_46, %c0_47, %c48], %133 {strides = array<i32>} : memref<6x8x64xf32, #tpu.memory_space<vmem>>, vector<6x8x16xf32>,
    %c0_48 = arith.constant 0 : index
    %c0_49 = arith.constant 0 : index
    %c0_50 = arith.constant 0 : index
    %135 = vector.load %arg15[%c0_48, %c0_49, %c0_50] : memref<6x8x64xf32, #tpu.memory_space<vmem>>, vector<6x8x64xf32>
    %136 = vector.shape_cast %135 : vector<6x8x64xf32> to vector<48x64xf32>
    %137 = arith.truncf %136 : vector<48x64xf32> to vector<48x64xbf16>
    %c0_51 = arith.constant 0 : index
    %c0_52 = arith.constant 0 : index
    %138 = vector.load %arg6[%c0_51, %c0_52] : memref<64x64xbf16, #tpu.memory_space<vmem>>, vector<64x64xbf16>
    %cst_53 = arith.constant dense<0.000000e+00> : vector<48x64xf32>
    %139 = tpu.matmul %137, %138, %cst_53 {dimension_numbers = #tpu.dot_dimension_numbers<[1], [0], [0], [1], [0, 0, 1, 1], [], []>} : vector<48x64xbf16>, vector<64x64xbf16>, vector<48x64xf32> -> vector<48x64xf32>
    %c0_54 = arith.constant 0 : index
    %c0_55 = arith.constant 0 : index
    %140 = vector.load %arg7[%c0_54, %c0_55] : memref<1x64xf32, #tpu.memory_space<vmem>>, vector<1x64xf32>
    %141 = vector.broadcast %140 : vector<1x64xf32> to vector<48x64xf32>
    %142 = arith.addf %139, %141 : vector<48x64xf32>
    %143 = arith.addf %2, %142 : vector<48x64xf32>
    %c0_56 = arith.constant 0 : index
    %c0_57 = arith.constant 0 : index
    %144 = vector.load %arg8[%c0_56, %c0_57] : memref<1x64xf32, #tpu.memory_space<vmem>>, vector<1x64xf32>
    %c0_58 = arith.constant 0 : index
    %c0_59 = arith.constant 0 : index
    %145 = vector.load %arg9[%c0_58, %c0_59] : memref<1x64xf32, #tpu.memory_space<vmem>>, vector<1x64xf32>
    %cst_60 = arith.constant dense<0.000000e+00> : vector<48xf32>
    %146 = vector.multi_reduction <add>, %143, %cst_60 [1] : vector<48x64xf32> to vector<48xf32>
    %147 = vector.shape_cast %146 : vector<48xf32> to vector<48x1xf32>
    %cst_61 = arith.constant 6.400000e+01 : f32
    %148 = vector.broadcast %cst_61 : f32 to vector<48x1xf32>
    %149 = arith.divf %147, %148 : vector<48x1xf32>
    %150 = vector.broadcast %149 : vector<48x1xf32> to vector<48x64xf32>
    %151 = arith.subf %143, %150 : vector<48x64xf32>
    %152 = arith.mulf %151, %151 : vector<48x64xf32>
    %cst_62 = arith.constant dense<0.000000e+00> : vector<48xf32>
    %153 = vector.multi_reduction <add>, %152, %cst_62 [1] : vector<48x64xf32> to vector<48xf32>
    %154 = vector.shape_cast %153 : vector<48xf32> to vector<48x1xf32>
    %cst_63 = arith.constant 6.400000e+01 : f32
    %155 = vector.broadcast %cst_63 : f32 to vector<48x1xf32>
    %156 = arith.divf %154, %155 : vector<48x1xf32>
    %cst_64 = arith.constant 9.99999974E-6 : f32
    %157 = vector.broadcast %cst_64 : f32 to vector<48x1xf32>
    %158 = arith.addf %156, %157 : vector<48x1xf32>
    %159 = math.rsqrt %158 : vector<48x1xf32>
    %160 = vector.broadcast %159 : vector<48x1xf32> to vector<48x64xf32>
    %161 = arith.mulf %151, %160 : vector<48x64xf32>
    %162 = vector.broadcast %144 : vector<1x64xf32> to vector<48x64xf32>
    %163 = arith.mulf %161, %162 : vector<48x64xf32>
    %164 = vector.broadcast %145 : vector<1x64xf32> to vector<48x64xf32>
    %165 = arith.addf %163, %164 : vector<48x64xf32>
    %166 = arith.truncf %165 : vector<48x64xf32> to vector<48x64xbf16>
    %c0_65 = arith.constant 0 : index
    %c0_66 = arith.constant 0 : index
    %167 = vector.load %arg10[%c0_65, %c0_66] : memref<64x256xbf16, #tpu.memory_space<vmem>>, vector<64x256xbf16>
    %cst_67 = arith.constant dense<0.000000e+00> : vector<48x256xf32>
    %168 = tpu.matmul %166, %167, %cst_67 {dimension_numbers = #tpu.dot_dimension_numbers<[1], [0], [0], [1], [0, 0, 1, 1], [], []>} : vector<48x64xbf16>, vector<64x256xbf16>, vector<48x256xf32> -> vector<48x256xf32>
    %c0_68 = arith.constant 0 : index
    %c0_69 = arith.constant 0 : index
    %169 = vector.load %arg11[%c0_68, %c0_69] : memref<1x256xf32, #tpu.memory_space<vmem>>, vector<1x256xf32>
    %170 = vector.broadcast %169 : vector<1x256xf32> to vector<48x256xf32>
    %171 = arith.addf %168, %170 : vector<48x256xf32>
    %cst_70 = arith.constant 1.702000e+00 : f32
    %172 = vector.broadcast %cst_70 : f32 to vector<48x256xf32>
    %173 = arith.mulf %172, %171 : vector<48x256xf32>
    %174 = arith.negf %173 : vector<48x256xf32>
    %175 = math.exp %174 : vector<48x256xf32>
    %cst_71 = arith.constant 1.000000e+00 : f32
    %176 = vector.broadcast %cst_71 : f32 to vector<48x256xf32>
    %177 = arith.addf %176, %175 : vector<48x256xf32>
    %178 = arith.divf %176, %177 : vector<48x256xf32>
    %179 = arith.mulf %171, %178 : vector<48x256xf32>
    %180 = arith.truncf %179 : vector<48x256xf32> to vector<48x256xbf16>
    %c0_72 = arith.constant 0 : index
    %c0_73 = arith.constant 0 : index
    %181 = vector.load %arg12[%c0_72, %c0_73] : memref<256x64xbf16, #tpu.memory_space<vmem>>, vector<256x64xbf16>
    %cst_74 = arith.constant dense<0.000000e+00> : vector<48x64xf32>
    %182 = tpu.matmul %180, %181, %cst_74 {dimension_numbers = #tpu.dot_dimension_numbers<[1], [0], [0], [1], [0, 0, 1, 1], [], []>} : vector<48x256xbf16>, vector<256x64xbf16>, vector<48x64xf32> -> vector<48x64xf32>
    %c0_75 = arith.constant 0 : index
    %c0_76 = arith.constant 0 : index
    %183 = vector.load %arg13[%c0_75, %c0_76] : memref<1x64xf32, #tpu.memory_space<vmem>>, vector<1x64xf32>
    %184 = vector.broadcast %183 : vector<1x64xf32> to vector<48x64xf32>
    %185 = arith.addf %182, %184 : vector<48x64xf32>
    %186 = arith.addf %143, %185 : vector<48x64xf32>
    %187 = vector.shape_cast %186 : vector<48x64xf32> to vector<6x8x64xf32>
    %188 = arith.truncf %187 : vector<6x8x64xf32> to vector<6x8x64xbf16>
    %c0_77 = arith.constant 0 : index
    %c0_78 = arith.constant 0 : index
    %c0_79 = arith.constant 0 : index
    %189 = vector.load %arg14[%c0_77, %c0_78, %c0_79] : memref<6x8x64xbf16, #tpu.memory_space<vmem>>, vector<6x8x64xbf16>
    tpu.vector_store %arg14[%c0_77, %c0_78, %c0_79], %188 {strides = array<i32>} : memref<6x8x64xbf16, #tpu.memory_space<vmem>>, vector<6x8x64xbf16>,
    return
  }
  func.func @transform_0(%arg0: i32) -> (i32, i32, i32) {
    %c0_i32 = arith.constant 0 : i32
    %c0_i32_0 = arith.constant 0 : i32
    %c0_i32_1 = arith.constant 0 : i32
    return %arg0, %c0_i32, %c0_i32_0 : i32, i32, i32
  }
  func.func @transform_1(%arg0: i32) -> (i32, i32) {
    %c0_i32 = arith.constant 0 : i32
    %c0_i32_0 = arith.constant 0 : i32
    %c0_i32_1 = arith.constant 0 : i32
    return %c0_i32, %c0_i32_0 : i32, i32
  }
  func.func @transform_2(%arg0: i32) -> (i32, i32) {
    %c0_i32 = arith.constant 0 : i32
    %c0_i32_0 = arith.constant 0 : i32
    %c0_i32_1 = arith.constant 0 : i32
    return %c0_i32, %c0_i32_0 : i32, i32
  }
  func.func @transform_3(%arg0: i32) -> (i32, i32) {
    %c0_i32 = arith.constant 0 : i32
    %c0_i32_0 = arith.constant 0 : i32
    %c0_i32_1 = arith.constant 0 : i32
    return %c0_i32, %c0_i32_0 : i32, i32
  }
  func.func @transform_4(%arg0: i32) -> (i32, i32) {
    %c0_i32 = arith.constant 0 : i32
    %c0_i32_0 = arith.constant 0 : i32
    %c0_i32_1 = arith.constant 0 : i32
    return %c0_i32, %c0_i32_0 : i32, i32
  }
  func.func @transform_5(%arg0: i32) -> (i32, i32) {
    %c0_i32 = arith.constant 0 : i32
    %c0_i32_0 = arith.constant 0 : i32
    %c0_i32_1 = arith.constant 0 : i32
    return %c0_i32, %c0_i32_0 : i32, i32
  }
  func.func @transform_6(%arg0: i32) -> (i32, i32) {
    %c0_i32 = arith.constant 0 : i32
    %c0_i32_0 = arith.constant 0 : i32
    %c0_i32_1 = arith.constant 0 : i32
    return %c0_i32, %c0_i32_0 : i32, i32
  }
  func.func @transform_7(%arg0: i32) -> (i32, i32) {
    %c0_i32 = arith.constant 0 : i32
    %c0_i32_0 = arith.constant 0 : i32
    %c0_i32_1 = arith.constant 0 : i32
    return %c0_i32, %c0_i32_0 : i32, i32
  }
  func.func @transform_8(%arg0: i32) -> (i32, i32) {
    %c0_i32 = arith.constant 0 : i32
    %c0_i32_0 = arith.constant 0 : i32
    %c0_i32_1 = arith.constant 0 : i32
    return %c0_i32, %c0_i32_0 : i32, i32
  }
  func.func @transform_9(%arg0: i32) -> (i32, i32) {
    %c0_i32 = arith.constant 0 : i32
    %c0_i32_0 = arith.constant 0 : i32
    %c0_i32_1 = arith.constant 0 : i32
    return %c0_i32, %c0_i32_0 : i32, i32
  }
  func.func @transform_10(%arg0: i32) -> (i32, i32) {
    %c0_i32 = arith.constant 0 : i32
    %c0_i32_0 = arith.constant 0 : i32
    %c0_i32_1 = arith.constant 0 : i32
    return %c0_i32, %c0_i32_0 : i32, i32
  }
  func.func @transform_11(%arg0: i32) -> (i32, i32) {
    %c0_i32 = arith.constant 0 : i32
    %c0_i32_0 = arith.constant 0 : i32
    %c0_i32_1 = arith.constant 0 : i32
    return %c0_i32, %c0_i32_0 : i32, i32
  }
  func.func @transform_12(%arg0: i32) -> (i32, i32) {
    %c0_i32 = arith.constant 0 : i32
    %c0_i32_0 = arith.constant 0 : i32
    %c0_i32_1 = arith.constant 0 : i32
    return %c0_i32, %c0_i32_0 : i32, i32
  }
  func.func @transform_13(%arg0: i32) -> (i32, i32, i32) {
    %c0_i32 = arith.constant 0 : i32
    %c0_i32_0 = arith.constant 0 : i32
    %c0_i32_1 = arith.constant 0 : i32
    return %arg0, %c0_i32, %c0_i32_0 : i32, i32, i32
  }
}

module attributes {stable_mosaic.version = 11 : i64} {
  func.func @_clip_head_kernel(%arg0: memref<1x1xf32, #tpu.memory_space<smem>>, %arg1: memref<2x64xf32, #tpu.memory_space<vmem>>, %arg2: memref<12x64xf32, #tpu.memory_space<vmem>>, %arg3: memref<2x6xf32, #tpu.memory_space<vmem>>, %arg4: memref<1x6xf32, #tpu.memory_space<vmem>>) attributes {dimension_semantics = [], scalar_prefetch = 0 : i64, scratch_operands = 0 : i64, tpu.core_type = #tpu.core_type<tc>} {
    %c0 = arith.constant 0 : index
    %c0_0 = arith.constant 0 : index
    %0 = memref.load %arg0[%c0, %c0_0] : memref<1x1xf32, #tpu.memory_space<smem>>
    %c0_1 = arith.constant 0 : index
    %c0_2 = arith.constant 0 : index
    %1 = vector.load %arg1[%c0_1, %c0_2] : memref<2x64xf32, #tpu.memory_space<vmem>>, vector<2x64xf32>
    %2 = arith.truncf %1 : vector<2x64xf32> to vector<2x64xbf16>
    %c0_3 = arith.constant 0 : index
    %c0_4 = arith.constant 0 : index
    %3 = vector.load %arg2[%c0_3, %c0_4] : memref<12x64xf32, #tpu.memory_space<vmem>>, vector<12x64xf32>
    %cst = arith.constant 0.000000e+00 : f32
    %4 = vector.broadcast %cst : f32 to vector<2x6xf32>
    %5 = vector.extract_strided_slice %3 {offsets = [0, 0], sizes = [6, 64], strides = [1, 1]} : vector<12x64xf32> to vector<6x64xf32>
    %6 = arith.truncf %5 : vector<6x64xf32> to vector<6x64xbf16>
    %cst_5 = arith.constant dense<0.000000e+00> : vector<2x6xf32>
    %7 = tpu.matmul %2, %6, %cst_5 {dimension_numbers = #tpu.dot_dimension_numbers<[1], [1], [0], [0], [0, 0, 1, 0], [], []>} : vector<2x64xbf16>, vector<6x64xbf16>, vector<2x6xf32> -> vector<2x6xf32>
    %8 = arith.addf %4, %7 : vector<2x6xf32>
    %9 = vector.extract_strided_slice %3 {offsets = [6, 0], sizes = [6, 64], strides = [1, 1]} : vector<12x64xf32> to vector<6x64xf32>
    %10 = arith.truncf %9 : vector<6x64xf32> to vector<6x64xbf16>
    %cst_6 = arith.constant dense<0.000000e+00> : vector<2x6xf32>
    %11 = tpu.matmul %2, %10, %cst_6 {dimension_numbers = #tpu.dot_dimension_numbers<[1], [1], [0], [0], [0, 0, 1, 0], [], []>} : vector<2x64xbf16>, vector<6x64xbf16>, vector<2x6xf32> -> vector<2x6xf32>
    %12 = arith.addf %8, %11 : vector<2x6xf32>
    %cst_7 = arith.constant 2.000000e+00 : f32
    %13 = arith.divf %0, %cst_7 : f32
    %14 = vector.broadcast %13 : f32 to vector<2x6xf32>
    %15 = arith.mulf %12, %14 : vector<2x6xf32>
    %c0_8 = arith.constant 0 : index
    %c0_9 = arith.constant 0 : index
    %16 = vector.load %arg3[%c0_8, %c0_9] : memref<2x6xf32, #tpu.memory_space<vmem>>, vector<2x6xf32>
    tpu.vector_store %arg3[%c0_8, %c0_9], %15 {strides = array<i32>} : memref<2x6xf32, #tpu.memory_space<vmem>>, vector<2x6xf32>,
    %cst_10 = arith.constant 0.000000e+00 : f32
    %17 = vector.broadcast %cst_10 : f32 to vector<1x6xf32>
    %18 = vector.extract_strided_slice %3 {offsets = [0, 0], sizes = [6, 64], strides = [1, 1]} : vector<12x64xf32> to vector<6x64xf32>
    %19 = vector.extract_strided_slice %3 {offsets = [6, 0], sizes = [6, 64], strides = [1, 1]} : vector<12x64xf32> to vector<6x64xf32>
    %20 = arith.mulf %18, %19 : vector<6x64xf32>
    %cst_11 = arith.constant dense<0.000000e+00> : vector<6xf32>
    %21 = vector.multi_reduction <add>, %20, %cst_11 [1] : vector<6x64xf32> to vector<6xf32>
    %22 = arith.mulf %18, %18 : vector<6x64xf32>
    %cst_12 = arith.constant dense<0.000000e+00> : vector<6xf32>
    %23 = vector.multi_reduction <add>, %22, %cst_12 [1] : vector<6x64xf32> to vector<6xf32>
    %24 = arith.mulf %19, %19 : vector<6x64xf32>
    %cst_13 = arith.constant dense<0.000000e+00> : vector<6xf32>
    %25 = vector.multi_reduction <add>, %24, %cst_13 [1] : vector<6x64xf32> to vector<6xf32>
    %26 = arith.mulf %23, %25 : vector<6xf32>
    %cst_14 = arith.constant 9.99999996E-13 : f32
    %27 = vector.broadcast %cst_14 : f32 to vector<6xf32>
    %28 = arith.maximumf %26, %27 : vector<6xf32>
    %29 = math.rsqrt %28 : vector<6xf32>
    %30 = arith.mulf %21, %29 : vector<6xf32>
    %31 = vector.shape_cast %30 : vector<6xf32> to vector<1x6xf32>
    %32 = arith.addf %17, %31 : vector<1x6xf32>
    %cst_15 = arith.constant 1.000000e+00 : f32
    %33 = vector.broadcast %cst_15 : f32 to vector<1x6xf32>
    %34 = arith.divf %32, %33 : vector<1x6xf32>
    %c0_16 = arith.constant 0 : index
    %c0_17 = arith.constant 0 : index
    %35 = vector.load %arg4[%c0_16, %c0_17] : memref<1x6xf32, #tpu.memory_space<vmem>>, vector<1x6xf32>
    tpu.vector_store %arg4[%c0_16, %c0_17], %34 {strides = array<i32>} : memref<1x6xf32, #tpu.memory_space<vmem>>, vector<1x6xf32>,
    return
  }
}

module attributes {stable_mosaic.version = 11 : i64} {
  func.func @_feature_head_kernel(%arg0: memref<12x64xbf16, #tpu.memory_space<vmem>>, %arg1: memref<1x64xf32, #tpu.memory_space<vmem>>, %arg2: memref<1x64xf32, #tpu.memory_space<vmem>>, %arg3: memref<64x64xbf16, #tpu.memory_space<vmem>>, %arg4: memref<12x64xf32, #tpu.memory_space<vmem>>) attributes {dimension_semantics = [], scalar_prefetch = 0 : i64, scratch_operands = 0 : i64, tpu.core_type = #tpu.core_type<tc>} {
    %c0 = arith.constant 0 : index
    %c0_0 = arith.constant 0 : index
    %0 = vector.load %arg0[%c0, %c0_0] : memref<12x64xbf16, #tpu.memory_space<vmem>>, vector<12x64xbf16>
    %1 = arith.extf %0 : vector<12x64xbf16> to vector<12x64xf32>
    %c0_1 = arith.constant 0 : index
    %c0_2 = arith.constant 0 : index
    %2 = vector.load %arg1[%c0_1, %c0_2] : memref<1x64xf32, #tpu.memory_space<vmem>>, vector<1x64xf32>
    %c0_3 = arith.constant 0 : index
    %c0_4 = arith.constant 0 : index
    %3 = vector.load %arg2[%c0_3, %c0_4] : memref<1x64xf32, #tpu.memory_space<vmem>>, vector<1x64xf32>
    %cst = arith.constant dense<0.000000e+00> : vector<12xf32>
    %4 = vector.multi_reduction <add>, %1, %cst [1] : vector<12x64xf32> to vector<12xf32>
    %5 = vector.shape_cast %4 : vector<12xf32> to vector<12x1xf32>
    %cst_5 = arith.constant 6.400000e+01 : f32
    %6 = vector.broadcast %cst_5 : f32 to vector<12x1xf32>
    %7 = arith.divf %5, %6 : vector<12x1xf32>
    %8 = vector.broadcast %7 : vector<12x1xf32> to vector<12x64xf32>
    %9 = arith.subf %1, %8 : vector<12x64xf32>
    %10 = arith.mulf %9, %9 : vector<12x64xf32>
    %cst_6 = arith.constant dense<0.000000e+00> : vector<12xf32>
    %11 = vector.multi_reduction <add>, %10, %cst_6 [1] : vector<12x64xf32> to vector<12xf32>
    %12 = vector.shape_cast %11 : vector<12xf32> to vector<12x1xf32>
    %cst_7 = arith.constant 6.400000e+01 : f32
    %13 = vector.broadcast %cst_7 : f32 to vector<12x1xf32>
    %14 = arith.divf %12, %13 : vector<12x1xf32>
    %cst_8 = arith.constant 9.99999974E-6 : f32
    %15 = vector.broadcast %cst_8 : f32 to vector<12x1xf32>
    %16 = arith.addf %14, %15 : vector<12x1xf32>
    %17 = math.rsqrt %16 : vector<12x1xf32>
    %18 = vector.broadcast %17 : vector<12x1xf32> to vector<12x64xf32>
    %19 = arith.mulf %9, %18 : vector<12x64xf32>
    %20 = vector.broadcast %2 : vector<1x64xf32> to vector<12x64xf32>
    %21 = arith.mulf %19, %20 : vector<12x64xf32>
    %22 = vector.broadcast %3 : vector<1x64xf32> to vector<12x64xf32>
    %23 = arith.addf %21, %22 : vector<12x64xf32>
    %24 = arith.truncf %23 : vector<12x64xf32> to vector<12x64xbf16>
    %c0_9 = arith.constant 0 : index
    %c0_10 = arith.constant 0 : index
    %25 = vector.load %arg3[%c0_9, %c0_10] : memref<64x64xbf16, #tpu.memory_space<vmem>>, vector<64x64xbf16>
    %cst_11 = arith.constant dense<0.000000e+00> : vector<12x64xf32>
    %26 = tpu.matmul %24, %25, %cst_11 {dimension_numbers = #tpu.dot_dimension_numbers<[1], [0], [0], [1], [0, 0, 1, 1], [], []>} : vector<12x64xbf16>, vector<64x64xbf16>, vector<12x64xf32> -> vector<12x64xf32>
    %27 = arith.mulf %26, %26 : vector<12x64xf32>
    %cst_12 = arith.constant dense<0.000000e+00> : vector<12xf32>
    %28 = vector.multi_reduction <add>, %27, %cst_12 [1] : vector<12x64xf32> to vector<12xf32>
    %29 = vector.shape_cast %28 : vector<12xf32> to vector<12x1xf32>
    %cst_13 = arith.constant 1.000000e-24 : f32
    %30 = vector.broadcast %cst_13 : f32 to vector<12x1xf32>
    %31 = arith.maximumf %29, %30 : vector<12x1xf32>
    %32 = math.rsqrt %31 : vector<12x1xf32>
    %33 = vector.broadcast %32 : vector<12x1xf32> to vector<12x64xf32>
    %34 = arith.mulf %26, %33 : vector<12x64xf32>
    %c0_14 = arith.constant 0 : index
    %c0_15 = arith.constant 0 : index
    %35 = vector.load %arg4[%c0_14, %c0_15] : memref<12x64xf32, #tpu.memory_space<vmem>>, vector<12x64xf32>
    tpu.vector_store %arg4[%c0_14, %c0_15], %34 {strides = array<i32>} : memref<12x64xf32, #tpu.memory_space<vmem>>, vector<12x64xf32>,
    return
  }
}

</mosaic_0001>

<llo_original>
// kernel: custom_clip_forward.10
$region0: #{custom_clip_forward.10}
  #allocation0 [shape = 'u32[]', space=smem, size = 0x4, offset = 0x4, fixed_abs, tag = 'smem constant byte address 0x4 - core index']
  #allocation1 [shape = 'u32[144,128]{1,0:T(1,128)}', space=vmem, size = 0x12000, scoped, tag = 'internal scratch']
  %s0 = inlined_call_operand.vmem [shape: f32[10,64], index: 0, kind: input, shape index: {}]
  %s1 = inlined_call_operand.vmem [shape: f32[1,64], index: 1, kind: input, shape index: {}]
  %s2 = inlined_call_operand.vmem [shape: f32[1,64], index: 2, kind: input, shape index: {}]
  %s3 = inlined_call_operand.vmem [shape: bf16[10,64], index: 3, kind: output, shape index: {}]
  %s4 = sld [smem:[#allocation0]]
  $region22: #{custom_clip_forward.10} parent=0
    _
  %s6 = ssub.s32 1, %s4
  %s7 = scalar_select 0, %s6, %s4
  // Predicated region
  $region2: #{custom_clip_forward.10} parent=0 // pred_check
    _
  $region3: #{custom_clip_forward.10} parent=0 // pred_check_branch
    %9 = sbr.rel (0) target = $region5
  $region4: #{custom_clip_forward.10} parent=0 // pred_region
    _
  $region5: #{custom_clip_forward.10} parent=0 // pred_fallthru
    _
  // Predicated region
  $region6: #{custom_clip_forward.10} parent=0 // pred_check
    _
  $region7: #{custom_clip_forward.10} parent=0 // pred_check_branch
    %11 = sbr.rel (0) target = $region9
  $region8: #{custom_clip_forward.10} parent=0 // pred_region
    _
  $region9: #{custom_clip_forward.10} parent=0 // pred_fallthru
    _
  // Predicated region
  $region10: #{custom_clip_forward.10} parent=0 // pred_check
    _
  $region11: #{custom_clip_forward.10} parent=0 // pred_check_branch
    %13 = sbr.rel (0) target = $region13
  $region12: #{custom_clip_forward.10} parent=0 // pred_region
    _
  $region13: #{custom_clip_forward.10} parent=0 // pred_fallthru
    _
  %v14 = vld [vmem:[%s0] sm:$0xff]
  %v15 = vld [vmem:[%s0 + $0x8] sm:$0x3]
  %v16 = vld [vmem:[%s1] sm:$0x1]
  %v17 = vld [vmem:[%s2] sm:$0x1]
  %vm18 = vcmask 523264
  %v19 = vsel %vm18, %v14, 0.0
  %20 = vadd.xlane.f32.xlu0 %v19
  %v21 = vpop.xlane.xlu0 %20
  %vm22 = vcmask 517120
  %v23 = vsel %vm22, %v15, 0.0
  %24 = vadd.xlane.f32.xlu0 %v23
  %v25 = vpop.xlane.xlu0 %24
  %v26 = vrcp.pop 64.0
  %v27 = vmul.f32 %v21, %v26
  %v28 = vmul.f32 %v25, %v26
  %v29 = vsub.f32 %v14, %v27
  %v30 = vsub.f32 %v15, %v28
  %v31 = vmul.f32 %v29, %v29
  %v32 = vmul.f32 %v30, %v30
  %v33 = vsel %vm18, %v31, 0.0
  %34 = vadd.xlane.f32.xlu0 %v33
  %v35 = vpop.xlane.xlu0 %34
  %v36 = vsel %vm22, %v32, 0.0
  %37 = vadd.xlane.f32.xlu0 %v36
  %v38 = vpop.xlane.xlu0 %37
  %v39 = vmul.f32 %v35, %v26
  %v40 = vmul.f32 %v38, %v26
  %v41 = vadd.f32 %v39, 1e-05
  %v42 = vadd.f32 %v40, 1e-05
  %v43 = vrsqrt.pop %v41
  %v44 = vrsqrt.pop %v42
  %v45 = vmul.f32 %v29, %v43
  %v46 = vmul.f32 %v30, %v44
  %v48 = vlaneseq
  %v49 = vshrl.u32 %v48, 7
  %v50 = vsub.s32 0, %v49
  %v51 = vrot.slane %v16, %v50
  %v53 = vmul.f32 %v45, %v51
  %v54 = vmul.f32 %v46, %v51
  %v56 = vlaneseq
  %v57 = vshrl.u32 %v56, 7
  %v58 = vsub.s32 0, %v57
  %v59 = vrot.slane %v17, %v58
  %v61 = vadd.f32 %v53, %v59
  %v62 = vadd.f32 %v54, %v59
  %v63 = vpack.c.bf16 %v62, %v61
  %v65 = vunpack.c.l.b16 %v63
  %v66 = vunpack.c.h.b16 %v63
  %v67 = vpack.c.b16 %v65, %v65
  %v68 = vpack.c.b16 %v66, %v66
  %vm71 = vcmask 519168
  %72 = vst.msk [vmem:[%s3] sm:$0xf] %vm71, %v67
  %vm73 = vcmask 516096
  %74 = vst.msk [vmem:[%s3 + $0x4] sm:$0x1] %vm73, %v68
  // Predicated region
  $region14: #{custom_clip_forward.10} parent=0 // pred_check
    _
  $region15: #{custom_clip_forward.10} parent=0 // pred_check_branch
    %76 = sbr.rel (0) target = $region17
  $region16: #{custom_clip_forward.10} parent=0 // pred_region
    _
  $region17: #{custom_clip_forward.10} parent=0 // pred_fallthru
    _
  // Predicated region
  $region18: #{custom_clip_forward.10} parent=0 // pred_check
    _
  $region19: #{custom_clip_forward.10} parent=0 // pred_check_branch
    %78 = sbr.rel (0) target = $region21
  $region20: #{custom_clip_forward.10} parent=0 // pred_region
    _
  $region21: #{custom_clip_forward.10} parent=0 // pred_fallthru
    _

// kernel: custom_clip_forward.13
$region0: #{custom_clip_forward.13}
  #allocation0 [shape = 'u32[]', space=smem, size = 0x4, offset = 0x4, fixed_abs, tag = 'smem constant byte address 0x4 - core index']
  #allocation1 [shape = 'u32[144,128]{1,0:T(1,128)}', space=vmem, size = 0x12000, scoped, tag = 'internal scratch']
  %s0 = inlined_call_operand.vmem [shape: bf16[2,64], index: 0, kind: input, shape index: {}]
  %s1 = inlined_call_operand.hbm [shape: f32[1,64], index: 1, kind: input, shape index: {}]
  %s2 = inlined_call_operand.hbm [shape: f32[1,64], index: 2, kind: input, shape index: {}]
  %s3 = inlined_call_operand.hbm [shape: bf16[64,64], index: 3, kind: input, shape index: {}]
  %s4 = inlined_call_operand.hbm [shape: f32[2,64], index: 4, kind: output, shape index: {}]
  %s5 = sld [smem:[#allocation0]]
  $region38: #{custom_clip_forward.13} parent=0
    _
  %s7 = ssub.s32 1, %s5
  %s8 = scalar_select 0, %s7, %s5
  $region1: #{custom_clip_forward.13} parent=0
    #allocation2 [shape = 'u8[512]{0}', space=vmem, size = 0x400, scoped, tag = 'input window, operand 1, single buffered']
    #allocation3 [shape = 's32[1]{0}', space=sflag, size = 0x4, scoped, tag = 'scoped memory for custom_clip_forward.13']
    #allocation4 [shape = 's32[1]{0}', space=sflag, size = 0x4, scoped, tag = 'scoped memory for custom_clip_forward.13']
    #allocation5 [shape = 'u8[512]{0}', space=vmem, size = 0x400, scoped, tag = 'input window, operand 2, single buffered']
    #allocation6 [shape = 's32[1]{0}', space=sflag, size = 0x4, scoped, tag = 'scoped memory for custom_clip_forward.13']
    #allocation7 [shape = 'u8[16384]{0}', space=vmem, size = 0x4000, scoped, tag = 'input window, operand 3, single buffered']
    #allocation8 [shape = 'u8[1024]{0}', space=vmem, size = 0x400, scoped, tag = 'output window, operand 0, single buffered']
    %9 = vsyncpa [#allocation3], 0
    %10 = vsyncpa [#allocation6], 0
    %11 = vsyncpa [#allocation4], 0
    // Predicated region
    $region2: #{custom_clip_forward.13} parent=1 // pred_check
      _
    $region3: #{custom_clip_forward.13} parent=1 // pred_check_branch
      %13 = sbr.rel (0) target = $region5
    $region4: #{custom_clip_forward.13} parent=1 // pred_region
      _
    $region5: #{custom_clip_forward.13} parent=1 // pred_fallthru
      _
    // Predicated region
    $region6: #{custom_clip_forward.13} parent=1 // pred_check
      _
    $region7: #{custom_clip_forward.13} parent=1 // pred_check_branch
      %15 = sbr.rel (0) target = $region9
    $region8: #{custom_clip_forward.13} parent=1 // pred_region
      %s17 = ssub.s32 16, 16
      %18 = vsyncadd [#allocation3], %s17
      %s20 = sshll.u32 [#allocation2], 4
      %s21 = int_to_ptr.vmem [resolvable:$true] %s20
      %23 = dma.hbm_to_vmem [thread:$0]  %s1, 16, %s21, [#allocation3]
    $region9: #{custom_clip_forward.13} parent=1 // pred_fallthru
      _
    // Predicated region
    $region10: #{custom_clip_forward.13} parent=1 // pred_check
      _
    $region11: #{custom_clip_forward.13} parent=1 // pred_check_branch
      %25 = sbr.rel (0) target = $region13
    $region12: #{custom_clip_forward.13} parent=1 // pred_region
      %s27 = ssub.s32 16, 16
      %28 = vsyncadd [#allocation6], %s27
      %s30 = sshll.u32 [#allocation5], 4
      %s31 = int_to_ptr.vmem [resolvable:$true] %s30
      %33 = dma.hbm_to_vmem [thread:$0]  %s2, 16, %s31, [#allocation6]
    $region13: #{custom_clip_forward.13} parent=1 // pred_fallthru
      _
    // Predicated region
    $region14: #{custom_clip_forward.13} parent=1 // pred_check
      _
    $region15: #{custom_clip_forward.13} parent=1 // pred_check_branch
      %35 = sbr.rel (0) target = $region17
    $region16: #{custom_clip_forward.13} parent=1 // pred_region
      %s37 = ssub.s32 512, 512
      %38 = vsyncadd [#allocation6], %s37
      %s39 = sshll.u32 [#allocation7], 4
      %s40 = int_to_ptr.vmem [resolvable:$true] %s39
      %45 = dma.hbm_to_vmem [thread:$0]  %s3, 512, %s40, [#allocation6], 64, 64, 4
    $region17: #{custom_clip_forward.13} parent=1 // pred_fallthru
      _
    // Predicated region
    $region18: #{custom_clip_forward.13} parent=1 // pred_check
      _
    $region19: #{custom_clip_forward.13} parent=1 // pred_check_branch
      %47 = sbr.rel (0) target = $region21
    $region20: #{custom_clip_forward.13} parent=1 // pred_region
      %48 = dma.done [#allocation3], 16
    $region21: #{custom_clip_forward.13} parent=1 // pred_fallthru
      _
    // Predicated region
    $region22: #{custom_clip_forward.13} parent=1 // pred_check
      _
    $region23: #{custom_clip_forward.13} parent=1 // pred_check_branch
      %50 = sbr.rel (0) target = $region25
    $region24: #{custom_clip_forward.13} parent=1 // pred_region
      %51 = dma.done [#allocation6], 16
    $region25: #{custom_clip_forward.13} parent=1 // pred_fallthru
      _
    // Predicated region
    $region26: #{custom_clip_forward.13} parent=1 // pred_check
      _
    $region27: #{custom_clip_forward.13} parent=1 // pred_check_branch
      %53 = sbr.rel (0) target = $region29
    $region28: #{custom_clip_forward.13} parent=1 // pred_region
      %54 = dma.done [#allocation6], 512
    $region29: #{custom_clip_forward.13} parent=1 // pred_fallthru
      _
    %v56 = vld [vmem:[%s0] sm:$0x1]
    %v57 = vunpack.c.l.bf16 %v56
    %v58 = vld [vmem:[#allocation2] sm:$0x1]
    %v59 = vld [vmem:[#allocation5] sm:$0x1]
    %vm60 = vcmask 517120
    %v61 = vsel %vm60, %v57, 0.0
    %62 = vadd.xlane.f32.xlu0 %v61
    %v63 = vpop.xlane.xlu0 %62
    %v64 = vrcp.pop 64.0
    %v65 = vmul.f32 %v63, %v64
    %v66 = vsub.f32 %v57, %v65
    %v67 = vmul.f32 %v66, %v66
    %v68 = vsel %vm60, %v67, 0.0
    %69 = vadd.xlane.f32.xlu0 %v68
    %v70 = vpop.xlane.xlu0 %69
    %v71 = vmul.f32 %v70, %v64
    %v72 = vadd.f32 %v71, 1e-05
    %v73 = vrsqrt.pop %v72
    %v74 = vmul.f32 %v66, %v73
    %v76 = vlaneseq
    %v77 = vshrl.u32 %v76, 7
    %v78 = vsub.s32 0, %v77
    %v79 = vrot.slane %v58, %v78
    %v81 = vmul.f32 %v74, %v79
    %v83 = vlaneseq
    %v84 = vshrl.u32 %v83, 7
    %v85 = vsub.s32 0, %v84
    %v86 = vrot.slane %v59, %v85
    %v88 = vadd.f32 %v81, %v86
    %v89 = vpack.c.bf16 %v88, %v88
    %v90 = vld [vmem:[#allocation7] sm:$0xf]
    %v91 = vld [vmem:[#allocation7 + $0x4] sm:$0xf]
    %v92 = vld [vmem:[#allocation7 + $0x8] sm:$0xf]
    %v93 = vld [vmem:[#allocation7 + $0xc] sm:$0xf]
    %v94 = vld [vmem:[#allocation7 + $0x10] sm:$0xf]
    %v95 = vld [vmem:[#allocation7 + $0x14] sm:$0xf]
    %v96 = vld [vmem:[#allocation7 + $0x18] sm:$0xf]
    %v97 = vld [vmem:[#allocation7 + $0x1c] sm:$0xf]
    %v106 = vunpack.c.l.b16 %v90
    %v107 = vunpack.c.l.b16 %v91
    %v108 = vunpack.c.l.b16 %v92
    %v109 = vunpack.c.l.b16 %v93
    %v110 = vunpack.c.l.b16 %v94
    %v111 = vunpack.c.l.b16 %v95
    %v112 = vunpack.c.l.b16 %v96
    %v113 = vunpack.c.l.b16 %v97
    %v114 = vpack.c.b16 %v107, %v106
    %v115 = vpack.c.b16 %v109, %v108
    %v116 = vpack.c.b16 %v111, %v110
    %v117 = vpack.c.b16 %v113, %v112
    %vm122 = vcmask 523264
    %v124 = vsel %vm122, %v89, 0
    %126 = vmatprep.subr.bf16.mxu0 0
    %127 = vmatpush1.bf16.msra.mxu0 %v114
    %128 = vmatprep.subr.bf16.mxu0 0
    %129 = vmatpush1.bf16.msra.mxu0 %v115
    %130 = vmatprep.subr.bf16.mxu0 0
    %131 = vmatpush1.bf16.msra.mxu0 %v116
    %132 = vmatprep.subr.bf16.mxu0 0
    %133 = vmatpush1.bf16.msra.mxu0 %v117
    %134 = vmatprep.subr.bf16.mxu0 0
    %135 = vmatpush1.bf16.msra.mxu0 0
    %136 = vmatprep.subr.bf16.mxu0 0
    %137 = vmatpush1.bf16.msra.mxu0 0
    %138 = vmatprep.subr.bf16.mxu0 0
    %139 = vmatpush1.bf16.msra.mxu0 0
    %140 = vmatprep.subr.bf16.mxu0 0
    %141 = vmatpush1.bf16.msra.mxu0 0
    %142 = vmatprep.subr.bf16.mxu0 0
    %143 = vmatpush1.bf16.msra.mxu0 0
    %144 = vmatprep.subr.bf16.mxu0 0
    %145 = vmatpush1.bf16.msra.mxu0 0
    %146 = vmatprep.subr.bf16.mxu0 0
    %147 = vmatpush1.bf16.msra.mxu0 0
    %148 = vmatprep.subr.bf16.mxu0 0
    %149 = vmatpush1.bf16.msra.mxu0 0
    %150 = vmatprep.subr.bf16.mxu0 0
    %151 = vmatpush1.bf16.msra.mxu0 0
    %152 = vmatprep.subr.bf16.mxu0 0
    %153 = vmatpush1.bf16.msra.mxu0 0
    %154 = vmatprep.subr.bf16.mxu0 0
    %155 = vmatpush1.bf16.msra.mxu0 0
    %156 = vmatprep.subr.bf16.mxu0 0
    %157 = vmatpush1.bf16.msra.mxu0 0
    %158 = vmatprep.mubr.bf16.mxu0 0
    %159 = vmatmul.mubr.bf16.gmra.mrb[0].mxu0 %v124
    %v160 = vpop.f32.mrb[0].mxu0
    %v161 = vadd.f32 0.0, %v160
    %v162 = vpop.f32.mrb[0].mxu0
    %v163 = vpop.f32.mrb[0].mxu0
    %v164 = vpop.f32.mrb[0].mxu0
    %165 = vdwg.mxu0
    %v166 = vmul.f32 %v161, %v161
    %v167 = vsel %vm60, %v166, 0.0
    %168 = vadd.xlane.f32.xlu0 %v167
    %v169 = vpop.xlane.xlu0 %168
    %v170 = vmax.f32 %v169, 1e-24
    %v171 = vrsqrt.pop %v170
    %v172 = vmul.f32 %v161, %v171
    %173 = vst.msk [vmem:[#allocation8] sm:$0x3] %vm60, %v172
    // Predicated region
    $region30: #{custom_clip_forward.13} parent=1 // pred_check
      _
    $region31: #{custom_clip_forward.13} parent=1 // pred_check_branch
      %175 = sbr.rel (0) target = $region33
    $region32: #{custom_clip_forward.13} parent=1 // pred_region
      %s177 = ssub.s32 32, 32
      %178 = vsyncadd [#allocation4], %s177
      %s180 = sshll.u32 [#allocation8], 4
      %s181 = int_to_ptr.vmem [resolvable:$true] %s180
      %183 = dma.vmem_to_hbm [thread:$0]  %s181, 32, %s4, [#allocation4]
    $region33: #{custom_clip_forward.13} parent=1 // pred_fallthru
      _
    // Predicated region
    $region34: #{custom_clip_forward.13} parent=1 // pred_check
      _
    $region35: #{custom_clip_forward.13} parent=1 // pred_check_branch
      %185 = sbr.rel (0) target = $region37
    $region36: #{custom_clip_forward.13} parent=1 // pred_region
      %186 = dma.done [#allocation4], 32
    $region37: #{custom_clip_forward.13} parent=1 // pred_fallthru
      _
    %187 = vsyncpa [#allocation3], 1
    %188 = vsyncpa [#allocation6], 1
    %189 = vsyncpa [#allocation4], 1

// kernel: custom_clip_forward.9
$region0: #{custom_clip_forward.9}
  #allocation0 [shape = 'u32[]', space=smem, size = 0x4, offset = 0x4, fixed_abs, tag = 'smem constant byte address 0x4 - core index']
  #allocation1 [shape = 'u32[144,128]{1,0:T(1,128)}', space=vmem, size = 0x12000, scoped, tag = 'internal scratch']
  %s0 = inlined_call_operand.vmem [shape: f32[8,192], index: 0, kind: input, shape index: {}]
  %s1 = inlined_call_operand.vmem [shape: bf16[192,64], index: 1, kind: input, shape index: {}]
  %s2 = inlined_call_operand.vmem [shape: f32[8,64], index: 2, kind: output, shape index: {}]
  %s3 = sld [smem:[#allocation0]]
  $region18: #{custom_clip_forward.9} parent=0
    _
  %s5 = ssub.s32 1, %s3
  %s6 = scalar_select 0, %s5, %s3
  // Predicated region
  $region2: #{custom_clip_forward.9} parent=0 // pred_check
    _
  $region3: #{custom_clip_forward.9} parent=0 // pred_check_branch
    %8 = sbr.rel (0) target = $region5
  $region4: #{custom_clip_forward.9} parent=0 // pred_region
    _
  $region5: #{custom_clip_forward.9} parent=0 // pred_fallthru
    _
  // Predicated region
  $region6: #{custom_clip_forward.9} parent=0 // pred_check
    _
  $region7: #{custom_clip_forward.9} parent=0 // pred_check_branch
    %10 = sbr.rel (0) target = $region9
  $region8: #{custom_clip_forward.9} parent=0 // pred_region
    _
  $region9: #{custom_clip_forward.9} parent=0 // pred_fallthru
    _
  %v12 = vld [vmem:[%s0] sm:$0xff]
  %v13 = vld [vmem:[%s0 + $0x8] sm:$0xff]
  %v14 = vpack.c.bf16 %v12, %v12
  %v15 = vpack.c.bf16 %v13, %v13
  %v16 = vld [vmem:[%s1] sm:$0xf]
  %v17 = vld [vmem:[%s1 + $0x4] sm:$0xf]
  %v18 = vld [vmem:[%s1 + $0x8] sm:$0xf]
  %v19 = vld [vmem:[%s1 + $0xc] sm:$0xf]
  %v20 = vld [vmem:[%s1 + $0x10] sm:$0xf]
  %v21 = vld [vmem:[%s1 + $0x14] sm:$0xf]
  %v22 = vld [vmem:[%s1 + $0x18] sm:$0xf]
  %v23 = vld [vmem:[%s1 + $0x1c] sm:$0xf]
  %v24 = vld [vmem:[%s1 + $0x20] sm:$0xf]
  %v25 = vld [vmem:[%s1 + $0x24] sm:$0xf]
  %v26 = vld [vmem:[%s1 + $0x28] sm:$0xf]
  %v27 = vld [vmem:[%s1 + $0x2c] sm:$0xf]
  %v28 = vld [vmem:[%s1 + $0x30] sm:$0xf]
  %v29 = vld [vmem:[%s1 + $0x34] sm:$0xf]
  %v30 = vld [vmem:[%s1 + $0x38] sm:$0xf]
  %v31 = vld [vmem:[%s1 + $0x3c] sm:$0xf]
  %v32 = vld [vmem:[%s1 + $0x40] sm:$0xf]
  %v33 = vld [vmem:[%s1 + $0x44] sm:$0xf]
  %v34 = vld [vmem:[%s1 + $0x48] sm:$0xf]
  %v35 = vld [vmem:[%s1 + $0x4c] sm:$0xf]
  %v36 = vld [vmem:[%s1 + $0x50] sm:$0xf]
  %v37 = vld [vmem:[%s1 + $0x54] sm:$0xf]
  %v38 = vld [vmem:[%s1 + $0x58] sm:$0xf]
  %v39 = vld [vmem:[%s1 + $0x5c] sm:$0xf]
  %v64 = vunpack.c.l.b16 %v16
  %v65 = vunpack.c.l.b16 %v17
  %v66 = vunpack.c.l.b16 %v18
  %v67 = vunpack.c.l.b16 %v19
  %v68 = vunpack.c.l.b16 %v20
  %v69 = vunpack.c.l.b16 %v21
  %v70 = vunpack.c.l.b16 %v22
  %v71 = vunpack.c.l.b16 %v23
  %v72 = vunpack.c.l.b16 %v24
  %v73 = vunpack.c.l.b16 %v25
  %v74 = vunpack.c.l.b16 %v26
  %v75 = vunpack.c.l.b16 %v27
  %v76 = vunpack.c.l.b16 %v28
  %v77 = vunpack.c.l.b16 %v29
  %v78 = vunpack.c.l.b16 %v30
  %v79 = vunpack.c.l.b16 %v31
  %v80 = vunpack.c.l.b16 %v32
  %v81 = vunpack.c.l.b16 %v33
  %v82 = vunpack.c.l.b16 %v34
  %v83 = vunpack.c.l.b16 %v35
  %v84 = vunpack.c.l.b16 %v36
  %v85 = vunpack.c.l.b16 %v37
  %v86 = vunpack.c.l.b16 %v38
  %v87 = vunpack.c.l.b16 %v39
  %v88 = vpack.c.b16 %v65, %v64
  %v89 = vpack.c.b16 %v67, %v66
  %v90 = vpack.c.b16 %v69, %v68
  %v91 = vpack.c.b16 %v71, %v70
  %v92 = vpack.c.b16 %v73, %v72
  %v93 = vpack.c.b16 %v75, %v74
  %v94 = vpack.c.b16 %v77, %v76
  %v95 = vpack.c.b16 %v79, %v78
  %v96 = vpack.c.b16 %v81, %v80
  %v97 = vpack.c.b16 %v83, %v82
  %v98 = vpack.c.b16 %v85, %v84
  %v99 = vpack.c.b16 %v87, %v86
  %vm112 = vcmask 523264
  %v114 = vsel %vm112, %v15, 0
  %116 = vmatprep.subr.bf16.mxu0 0
  %117 = vmatpush1.bf16.msra.mxu0 %v88
  %118 = vmatprep.subr.bf16.mxu0 0
  %119 = vmatpush1.bf16.msra.mxu0 %v89
  %120 = vmatprep.subr.bf16.mxu0 0
  %121 = vmatpush1.bf16.msra.mxu0 %v90
  %122 = vmatprep.subr.bf16.mxu0 0
  %123 = vmatpush1.bf16.msra.mxu0 %v91
  %124 = vmatprep.subr.bf16.mxu0 0
  %125 = vmatpush1.bf16.msra.mxu0 %v92
  %126 = vmatprep.subr.bf16.mxu0 0
  %127 = vmatpush1.bf16.msra.mxu0 %v93
  %128 = vmatprep.subr.bf16.mxu0 0
  %129 = vmatpush1.bf16.msra.mxu0 %v94
  %130 = vmatprep.subr.bf16.mxu0 0
  %131 = vmatpush1.bf16.msra.mxu0 %v95
  %132 = vmatprep.subr.bf16.mxu0 0
  %133 = vmatpush1.bf16.msra.mxu0 %v96
  %134 = vmatprep.subr.bf16.mxu0 0
  %135 = vmatpush1.bf16.msra.mxu0 %v97
  %136 = vmatprep.subr.bf16.mxu0 0
  %137 = vmatpush1.bf16.msra.mxu0 %v98
  %138 = vmatprep.subr.bf16.mxu0 0
  %139 = vmatpush1.bf16.msra.mxu0 %v99
  %140 = vmatprep.subr.bf16.mxu0 0
  %141 = vmatpush1.bf16.msra.mxu0 0
  %142 = vmatprep.subr.bf16.mxu0 0
  %143 = vmatpush1.bf16.msra.mxu0 0
  %144 = vmatprep.subr.bf16.mxu0 0
  %145 = vmatpush1.bf16.msra.mxu0 0
  %146 = vmatprep.subr.bf16.mxu0 0
  %147 = vmatpush1.bf16.msra.mxu0 0
  %148 = vmatprep.mubr.bf16.mxu0 %v114
  %149 = vmatmul.mubr.bf16.gmra.mrb[0].mxu0 %v14
  %v150 = vpop.f32.mrb[0].mxu0
  %v151 = vadd.f32 0.0, %v150
  %v152 = vpop.f32.mrb[0].mxu0
  %v153 = vpop.f32.mrb[0].mxu0
  %v154 = vpop.f32.mrb[0].mxu0
  %155 = vdwg.mxu0
  %156 = vst.msk [vmem:[%s2] sm:$0xff] %vm112, %v151
  // Predicated region
  $region10: #{custom_clip_forward.9} parent=0 // pred_check
    _
  $region11: #{custom_clip_forward.9} parent=0 // pred_check_branch
    %158 = sbr.rel (0) target = $region13
  $region12: #{custom_clip_forward.9} parent=0 // pred_region
    _
  $region13: #{custom_clip_forward.9} parent=0 // pred_fallthru
    _
  // Predicated region
  $region14: #{custom_clip_forward.9} parent=0 // pred_check
    _
  $region15: #{custom_clip_forward.9} parent=0 // pred_check_branch
    %160 = sbr.rel (0) target = $region17
  $region16: #{custom_clip_forward.9} parent=0 // pred_region
    _
  $region17: #{custom_clip_forward.9} parent=0 // pred_fallthru
    _

// kernel: tile.8
$region0: #{tile.8}
  #allocation0 [shape = 's32[1]{0}', space=sflag, size = 0x4, scoped, tag = 'scoped memory for tile.8']
  %s0 = inlined_call_operand.vmem [shape: s32[6], index: 0, kind: input, shape index: {}]
  %s1 = inlined_call_operand.vmem [shape: s32[2,6], index: 1, kind: output, shape index: {}]
  // Predicated region
  $region2: #{tile.8} parent=0 // pred_check
    _
  $region3: #{tile.8} parent=0 // pred_check_branch
    %3 = sbr.rel (0) target = $region5
  $region4: #{tile.8} parent=0 // pred_region
    _
  $region5: #{tile.8} parent=0 // pred_fallthru
    _
  %v4 = vld [vmem:[%s0] ss:$0 sm:$0xff]
  %5 = vst [vmem:[%s1] sm:$0x3] %v4

// kernel: custom_clip_forward.11
$region0: #{custom_clip_forward.11}
  #allocation0 [shape = 'u32[]', space=smem, size = 0x4, offset = 0x4, fixed_abs, tag = 'smem constant byte address 0x4 - core index']
  #allocation1 [shape = 'u32[144,128]{1,0:T(1,128)}', space=vmem, size = 0x12000, scoped, tag = 'internal scratch']
  #allocation2 [shape = 'f32[1,5,64]{2,1,0:T(8,128)}', space=vmem, size = 0x1000, scoped, tag = 'scratch operand']
  %s0 = inlined_call_operand.hbm [shape: bf16[2,5,64], index: 0, kind: input, shape index: {}]
  %s1 = inlined_call_operand.hbm [shape: f32[1,64], index: 1, kind: input, shape index: {}]
  %s2 = inlined_call_operand.hbm [shape: f32[1,64], index: 2, kind: input, shape index: {}]
  %s3 = inlined_call_operand.hbm [shape: bf16[64,192], index: 3, kind: input, shape index: {}]
  %s4 = inlined_call_operand.hbm [shape: f32[1,192], index: 4, kind: input, shape index: {}]
  %s5 = inlined_call_operand.hbm [shape: bf16[64,64], index: 5, kind: input, shape index: {}]
  %s6 = inlined_call_operand.hbm [shape: f32[1,64], index: 6, kind: input, shape index: {}]
  %s7 = inlined_call_operand.hbm [shape: f32[1,64], index: 7, kind: input, shape index: {}]
  %s8 = inlined_call_operand.hbm [shape: f32[1,64], index: 8, kind: input, shape index: {}]
  %s9 = inlined_call_operand.hbm [shape: bf16[64,256], index: 9, kind: input, shape index: {}]
  %s10 = inlined_call_operand.hbm [shape: f32[1,256], index: 10, kind: input, shape index: {}]
  %s11 = inlined_call_operand.hbm [shape: bf16[256,64], index: 11, kind: input, shape index: {}]
  %s12 = inlined_call_operand.hbm [shape: f32[1,64], index: 12, kind: input, shape index: {}]
  %s13 = inlined_call_operand.hbm [shape: bf16[2,5,64], index: 13, kind: output, shape index: {}]
  %s14 = sld [smem:[#allocation0]]
  $region137: #{custom_clip_forward.11} parent=0
    _
  %s16 = ssub.s32 1, %s14
  %s17 = scalar_select 0, %s16, %s14
  $region1: #{custom_clip_forward.11} parent=0
    #allocation3 [shape = 'u8[4096]{0}', space=vmem, size = 0x1000, scoped, tag = 'input window, operand 0']
    #allocation4 [shape = 's32[2]{0}', space=sflag, size = 0x8, scoped, tag = 'scoped memory for custom_clip_forward.11']
    #allocation5 [shape = 's32[2]{0}', space=sflag, size = 0x8, scoped, tag = 'scoped memory for custom_clip_forward.11']
    #allocation6 [shape = 'u8[512]{0}', space=vmem, size = 0x400, scoped, tag = 'input window, operand 1, single buffered']
    #allocation7 [shape = 's32[1]{0}', space=sflag, size = 0x4, scoped, tag = 'scoped memory for custom_clip_forward.11']
    #allocation8 [shape = 'u8[512]{0}', space=vmem, size = 0x400, scoped, tag = 'input window, operand 2, single buffered']
    #allocation9 [shape = 'u8[32768]{0}', space=vmem, size = 0x8000, scoped, tag = 'input window, operand 3, single buffered']
    #allocation10 [shape = 's32[1]{0}', space=sflag, size = 0x4, scoped, tag = 'scoped memory for custom_clip_forward.11']
    #allocation11 [shape = 'u8[1024]{0}', space=vmem, size = 0x400, scoped, tag = 'input window, operand 4, single buffered']
    #allocation12 [shape = 'u8[16384]{0}', space=vmem, size = 0x4000, scoped, tag = 'input window, operand 5, single buffered']
    #allocation13 [shape = 's32[1]{0}', space=sflag, size = 0x4, scoped, tag = 'scoped memory for custom_clip_forward.11']
    #allocation14 [shape = 'u8[512]{0}', space=vmem, size = 0x400, scoped, tag = 'input window, operand 6, single buffered']
    #allocation15 [shape = 'u8[512]{0}', space=vmem, size = 0x400, scoped, tag = 'input window, operand 7, single buffered']
    #allocation16 [shape = 's32[1]{0}', space=sflag, size = 0x4, scoped, tag = 'scoped memory for custom_clip_forward.11']
    #allocation17 [shape = 'u8[512]{0}', space=vmem, size = 0x400, scoped, tag = 'input window, operand 8, single buffered']
    #allocation18 [shape = 'u8[32768]{0}', space=vmem, size = 0x8000, scoped, tag = 'input window, operand 9, single buffered']
    #allocation19 [shape = 's32[1]{0}', space=sflag, size = 0x4, scoped, tag = 'scoped memory for custom_clip_forward.11']
    #allocation20 [shape = 'u8[1024]{0}', space=vmem, size = 0x400, scoped, tag = 'input window, operand 10, single buffered']
    #allocation21 [shape = 'u8[65536]{0}', space=vmem, size = 0x10000, scoped, tag = 'input window, operand 11, single buffered']
    #allocation22 [shape = 's32[1]{0}', space=sflag, size = 0x4, scoped, tag = 'scoped memory for custom_clip_forward.11']
    #allocation23 [shape = 'u8[512]{0}', space=vmem, size = 0x400, scoped, tag = 'input window, operand 12, single buffered']
    #allocation24 [shape = 'u8[4096]{0}', space=vmem, size = 0x1000, scoped, tag = 'output window, operand 0']
    %18 = vsyncpa [#allocation4], 0
    %s19 = scalar_lea.sflag [#allocation4], 1
    %20 = vsyncpa %s19, 0
    %21 = vsyncpa [#allocation7], 0
    %22 = vsyncpa [#allocation10], 0
    %23 = vsyncpa [#allocation13], 0
    %24 = vsyncpa [#allocation16], 0
    %25 = vsyncpa [#allocation19], 0
    %26 = vsyncpa [#allocation22], 0
    %27 = vsyncpa [#allocation5], 0
    %s28 = scalar_lea.sflag [#allocation5], 1
    %29 = vsyncpa %s28, 0
    loop: start=0, step=1, limit=4
    $region2: #{custom_clip_forward.11} parent=1 // loop_pre_header
      _
    $region3: #{custom_clip_forward.11} parent=1 // loop_header
      %s31 = sphi 0, %s35
      %p32 = scmp.ge.s32.totalorder %s31, 4
      %s41 = sphi 0, %s43
      %s44 = sphi 0, %s41
      %s45 = sphi 0, %s44
      %s61 = sphi 0, %s45
      %s65 = sphi 0, %s65
      %s67 = sphi 0, %s65
      %s68 = sphi 0, %s67
      %s82 = sphi 0, %s68
      %s86 = sphi 0, %s86
      %s88 = sphi 0, %s86
      %s89 = sphi 0, %s88
      %s103 = sphi 0, %s89
      %s107 = sphi 0, %s107
      %s109 = sphi 0, %s107
      %s110 = sphi 0, %s109
      %s124 = sphi 0, %s110
      %s128 = sphi 0, %s128
      %s130 = sphi 0, %s128
      %s131 = sphi 0, %s130
      %s145 = sphi 0, %s131
      %s149 = sphi 0, %s149
      %s151 = sphi 0, %s149
      %s152 = sphi 0, %s151
      %s166 = sphi 0, %s152
      %s170 = sphi 0, %s170
      %s172 = sphi 0, %s170
      %s173 = sphi 0, %s172
      %s187 = sphi 0, %s173
      %s191 = sphi 0, %s191
      %s193 = sphi 0, %s191
      %s194 = sphi 0, %s193
      %s208 = sphi 0, %s194
      %s212 = sphi 0, %s212
      %s214 = sphi 0, %s212
      %s215 = sphi 0, %s214
      %s229 = sphi 0, %s215
      %s233 = sphi 0, %s233
      %s235 = sphi 0, %s233
      %s236 = sphi 0, %s235
      %s250 = sphi 0, %s236
      %s254 = sphi 0, %s254
      %s256 = sphi 0, %s254
      %s257 = sphi 0, %s256
      %s271 = sphi 0, %s257
      %s275 = sphi 0, %s275
      %s277 = sphi 0, %s275
      %s278 = sphi 0, %s277
      %s292 = sphi 0, %s278
      %s296 = sphi 0, %s296
      %s298 = sphi 0, %s296
      %s299 = sphi 0, %s298
      %s313 = sphi 0, %s299
      %s319 = sphi 0, %s321
      %s322 = sphi 0, %s319
      %s323 = sphi 0, %s322
      %s339 = sphi 0, %s323
    $region4: #{custom_clip_forward.11} parent=1 // loop_header_branch
      %34 = sbr.rel (%p32) target = $region8
    $region5: #{custom_clip_forward.11} parent=1 // loop_body
      %s36 = ssub.s32 %s31, 1
      %s37 = ssub.s32 %s31, 2
      %s38 = sadd.s32 %s31, 1
      %s39 = ssub.s32 %s31, %s38
      %p40 = scmp.eq.s32.totalorder %s39, 0
      %s42 = sadd.s32 %s41, 1
      %s43 = scalar_select %p40, %s41, %s42
      %p46 = pneg %p40
      %p47 = scmp.eq.s32.totalorder %s31, 1
      %p48 = por %p46, %p47
      %p49 = scmp.ne.s32.totalorder %s41, %s44
      %p50 = scmp.eq.s32.totalorder %s31, 0
      %p51 = por %p49, %p50
      %p52 = scmp.ne.s32.totalorder %s41, %s44
      %p53 = scmp.eq.s32.totalorder %s36, 1
      %p54 = por %p52, %p53
      %p55 = scmp.ne.s32.totalorder %s44, %s45
      %p56 = scmp.eq.s32.totalorder %s36, 0
      %p57 = por %p55, %p56
      %p58 = scmp.ne.s32.totalorder %s44, %s45
      %p59 = scmp.eq.s32.totalorder %s37, 1
      %p60 = por %p58, %p59
      %p62 = scmp.ne.s32.totalorder %s45, %s61
      %p63 = scmp.eq.s32.totalorder %s37, 0
      %p64 = por %p62, %p63
      %s66 = sadd.s32 %s65, 1
      %p69 = scmp.eq.s32.totalorder %s31, 1
      %p70 = scmp.ne.s32.totalorder %s65, %s67
      %p71 = scmp.eq.s32.totalorder %s31, 0
      %p72 = por %p70, %p71
      %p73 = scmp.ne.s32.totalorder %s65, %s67
      %p74 = scmp.eq.s32.totalorder %s36, 1
      %p75 = por %p73, %p74
      %p76 = scmp.ne.s32.totalorder %s67, %s68
      %p77 = scmp.eq.s32.totalorder %s36, 0
      %p78 = por %p76, %p77
      %p79 = scmp.ne.s32.totalorder %s67, %s68
      %p80 = scmp.eq.s32.totalorder %s37, 1
      %p81 = por %p79, %p80
      %p83 = scmp.ne.s32.totalorder %s68, %s82
      %p84 = scmp.eq.s32.totalorder %s37, 0
      %p85 = por %p83, %p84
      %s87 = sadd.s32 %s86, 1
      %p90 = scmp.eq.s32.totalorder %s31, 1
      %p91 = scmp.ne.s32.totalorder %s86, %s88
      %p92 = scmp.eq.s32.totalorder %s31, 0
      %p93 = por %p91, %p92
      %p94 = scmp.ne.s32.totalorder %s86, %s88
      %p95 = scmp.eq.s32.totalorder %s36, 1
      %p96 = por %p94, %p95
      %p97 = scmp.ne.s32.totalorder %s88, %s89
      %p98 = scmp.eq.s32.totalorder %s36, 0
      %p99 = por %p97, %p98
      %p100 = scmp.ne.s32.totalorder %s88, %s89
      %p101 = scmp.eq.s32.totalorder %s37, 1
      %p102 = por %p100, %p101
      %p104 = scmp.ne.s32.totalorder %s89, %s103
      %p105 = scmp.eq.s32.totalorder %s37, 0
      %p106 = por %p104, %p105
      %s108 = sadd.s32 %s107, 1
      %p111 = scmp.eq.s32.totalorder %s31, 1
      %p112 = scmp.ne.s32.totalorder %s107, %s109
      %p113 = scmp.eq.s32.totalorder %s31, 0
      %p114 = por %p112, %p113
      %p115 = scmp.ne.s32.totalorder %s107, %s109
      %p116 = scmp.eq.s32.totalorder %s36, 1
      %p117 = por %p115, %p116
      %p118 = scmp.ne.s32.totalorder %s109, %s110
      %p119 = scmp.eq.s32.totalorder %s36, 0
      %p120 = por %p118, %p119
      %p121 = scmp.ne.s32.totalorder %s109, %s110
      %p122 = scmp.eq.s32.totalorder %s37, 1
      %p123 = por %p121, %p122
      %p125 = scmp.ne.s32.totalorder %s110, %s124
      %p126 = scmp.eq.s32.totalorder %s37, 0
      %p127 = por %p125, %p126
      %s129 = sadd.s32 %s128, 1
      %p132 = scmp.eq.s32.totalorder %s31, 1
      %p133 = scmp.ne.s32.totalorder %s128, %s130
      %p134 = scmp.eq.s32.totalorder %s31, 0
      %p135 = por %p133, %p134
      %p136 = scmp.ne.s32.totalorder %s128, %s130
      %p137 = scmp.eq.s32.totalorder %s36, 1
      %p138 = por %p136, %p137
      %p139 = scmp.ne.s32.totalorder %s130, %s131
      %p140 = scmp.eq.s32.totalorder %s36, 0
      %p141 = por %p139, %p140
      %p142 = scmp.ne.s32.totalorder %s130, %s131
      %p143 = scmp.eq.s32.totalorder %s37, 1
      %p144 = por %p142, %p143
      %p146 = scmp.ne.s32.totalorder %s131, %s145
      %p147 = scmp.eq.s32.totalorder %s37, 0
      %p148 = por %p146, %p147
      %s150 = sadd.s32 %s149, 1
      %p153 = scmp.eq.s32.totalorder %s31, 1
      %p154 = scmp.ne.s32.totalorder %s149, %s151
      %p155 = scmp.eq.s32.totalorder %s31, 0
      %p156 = por %p154, %p155
      %p157 = scmp.ne.s32.totalorder %s149, %s151
      %p158 = scmp.eq.s32.totalorder %s36, 1
      %p159 = por %p157, %p158
      %p160 = scmp.ne.s32.totalorder %s151, %s152
      %p161 = scmp.eq.s32.totalorder %s36, 0
      %p162 = por %p160, %p161
      %p163 = scmp.ne.s32.totalorder %s151, %s152
      %p164 = scmp.eq.s32.totalorder %s37, 1
      %p165 = por %p163, %p164
      %p167 = scmp.ne.s32.totalorder %s152, %s166
      %p168 = scmp.eq.s32.totalorder %s37, 0
      %p169 = por %p167, %p168
      %s171 = sadd.s32 %s170, 1
      %p174 = scmp.eq.s32.totalorder %s31, 1
      %p175 = scmp.ne.s32.totalorder %s170, %s172
      %p176 = scmp.eq.s32.totalorder %s31, 0
      %p177 = por %p175, %p176
      %p178 = scmp.ne.s32.totalorder %s170, %s172
      %p179 = scmp.eq.s32.totalorder %s36, 1
      %p180 = por %p178, %p179
      %p181 = scmp.ne.s32.totalorder %s172, %s173
      %p182 = scmp.eq.s32.totalorder %s36, 0
      %p183 = por %p181, %p182
      %p184 = scmp.ne.s32.totalorder %s172, %s173
      %p185 = scmp.eq.s32.totalorder %s37, 1
      %p186 = por %p184, %p185
      %p188 = scmp.ne.s32.totalorder %s173, %s187
      %p189 = scmp.eq.s32.totalorder %s37, 0
      %p190 = por %p188, %p189
      %s192 = sadd.s32 %s191, 1
      %p195 = scmp.eq.s32.totalorder %s31, 1
      %p196 = scmp.ne.s32.totalorder %s191, %s193
      %p197 = scmp.eq.s32.totalorder %s31, 0
      %p198 = por %p196, %p197
      %p199 = scmp.ne.s32.totalorder %s191, %s193
      %p200 = scmp.eq.s32.totalorder %s36, 1
      %p201 = por %p199, %p200
      %p202 = scmp.ne.s32.totalorder %s193, %s194
      %p203 = scmp.eq.s32.totalorder %s36, 0
      %p204 = por %p202, %p203
      %p205 = scmp.ne.s32.totalorder %s193, %s194
      %p206 = scmp.eq.s32.totalorder %s37, 1
      %p207 = por %p205, %p206
      %p209 = scmp.ne.s32.totalorder %s194, %s208
      %p210 = scmp.eq.s32.totalorder %s37, 0
      %p211 = por %p209, %p210
      %s213 = sadd.s32 %s212, 1
      %p216 = scmp.eq.s32.totalorder %s31, 1
      %p217 = scmp.ne.s32.totalorder %s212, %s214
      %p218 = scmp.eq.s32.totalorder %s31, 0
      %p219 = por %p217, %p218
      %p220 = scmp.ne.s32.totalorder %s212, %s214
      %p221 = scmp.eq.s32.totalorder %s36, 1
      %p222 = por %p220, %p221
      %p223 = scmp.ne.s32.totalorder %s214, %s215
      %p224 = scmp.eq.s32.totalorder %s36, 0
      %p225 = por %p223, %p224
      %p226 = scmp.ne.s32.totalorder %s214, %s215
      %p227 = scmp.eq.s32.totalorder %s37, 1
      %p228 = por %p226, %p227
      %p230 = scmp.ne.s32.totalorder %s215, %s229
      %p231 = scmp.eq.s32.totalorder %s37, 0
      %p232 = por %p230, %p231
      %s234 = sadd.s32 %s233, 1
      %p237 = scmp.eq.s32.totalorder %s31, 1
      %p238 = scmp.ne.s32.totalorder %s233, %s235
      %p239 = scmp.eq.s32.totalorder %s31, 0
      %p240 = por %p238, %p239
      %p241 = scmp.ne.s32.totalorder %s233, %s235
      %p242 = scmp.eq.s32.totalorder %s36, 1
      %p243 = por %p241, %p242
      %p244 = scmp.ne.s32.totalorder %s235, %s236
      %p245 = scmp.eq.s32.totalorder %s36, 0
      %p246 = por %p244, %p245
      %p247 = scmp.ne.s32.totalorder %s235, %s236
      %p248 = scmp.eq.s32.totalorder %s37, 1
      %p249 = por %p247, %p248
      %p251 = scmp.ne.s32.totalorder %s236, %s250
      %p252 = scmp.eq.s32.totalorder %s37, 0
      %p253 = por %p251, %p252
      %s255 = sadd.s32 %s254, 1
      %p258 = scmp.eq.s32.totalorder %s31, 1
      %p259 = scmp.ne.s32.totalorder %s254, %s256
      %p260 = scmp.eq.s32.totalorder %s31, 0
      %p261 = por %p259, %p260
      %p262 = scmp.ne.s32.totalorder %s254, %s256
      %p263 = scmp.eq.s32.totalorder %s36, 1
      %p264 = por %p262, %p263
      %p265 = scmp.ne.s32.totalorder %s256, %s257
      %p266 = scmp.eq.s32.totalorder %s36, 0
      %p267 = por %p265, %p266
      %p268 = scmp.ne.s32.totalorder %s256, %s257
      %p269 = scmp.eq.s32.totalorder %s37, 1
      %p270 = por %p268, %p269
      %p272 = scmp.ne.s32.totalorder %s257, %s271
      %p273 = scmp.eq.s32.totalorder %s37, 0
      %p274 = por %p272, %p273
      %s276 = sadd.s32 %s275, 1
      %p279 = scmp.eq.s32.totalorder %s31, 1
      %p280 = scmp.ne.s32.totalorder %s275, %s277
      %p281 = scmp.eq.s32.totalorder %s31, 0
      %p282 = por %p280, %p281
      %p283 = scmp.ne.s32.totalorder %s275, %s277
      %p284 = scmp.eq.s32.totalorder %s36, 1
      %p285 = por %p283, %p284
      %p286 = scmp.ne.s32.totalorder %s277, %s278
      %p287 = scmp.eq.s32.totalorder %s36, 0
      %p288 = por %p286, %p287
      %p289 = scmp.ne.s32.totalorder %s277, %s278
      %p290 = scmp.eq.s32.totalorder %s37, 1
      %p291 = por %p289, %p290
      %p293 = scmp.ne.s32.totalorder %s278, %s292
      %p294 = scmp.eq.s32.totalorder %s37, 0
      %p295 = por %p293, %p294
      %s297 = sadd.s32 %s296, 1
      %p300 = scmp.eq.s32.totalorder %s31, 1
      %p301 = scmp.ne.s32.totalorder %s296, %s298
      %p302 = scmp.eq.s32.totalorder %s31, 0
      %p303 = por %p301, %p302
      %p304 = scmp.ne.s32.totalorder %s296, %s298
      %p305 = scmp.eq.s32.totalorder %s36, 1
      %p306 = por %p304, %p305
      %p307 = scmp.ne.s32.totalorder %s298, %s299
      %p308 = scmp.eq.s32.totalorder %s36, 0
      %p309 = por %p307, %p308
      %p310 = scmp.ne.s32.totalorder %s298, %s299
      %p311 = scmp.eq.s32.totalorder %s37, 1
      %p312 = por %p310, %p311
      %p314 = scmp.ne.s32.totalorder %s299, %s313
      %p315 = scmp.eq.s32.totalorder %s37, 0
      %p316 = por %p314, %p315
      %s317 = ssub.s32 %s31, %s38
      %p318 = scmp.eq.s32.totalorder %s317, 0
      %s320 = sadd.s32 %s319, 1
      %s321 = scalar_select %p318, %s319, %s320
      %p324 = pneg %p318
      %p325 = scmp.eq.s32.totalorder %s31, 1
      %p326 = por %p324, %p325
      %p327 = scmp.ne.s32.totalorder %s319, %s322
      %p328 = scmp.eq.s32.totalorder %s31, 0
      %p329 = por %p327, %p328
      %p330 = scmp.ne.s32.totalorder %s319, %s322
      %p331 = scmp.eq.s32.totalorder %s36, 1
      %p332 = por %p330, %p331
      %p333 = scmp.ne.s32.totalorder %s322, %s323
      %p334 = scmp.eq.s32.totalorder %s36, 0
      %p335 = por %p333, %p334
      %p336 = scmp.ne.s32.totalorder %s322, %s323
      %p337 = scmp.eq.s32.totalorder %s37, 1
      %p338 = por %p336, %p337
      %p340 = scmp.ne.s32.totalorder %s323, %s339
      %p341 = scmp.eq.s32.totalorder %s37, 0
      %p342 = por %p340, %p341
      %p343 = scmp.le.s32.totalorder 1, %s31
      %p344 = scmp.lt.s32.totalorder %s31, 3
      %p345 = pnand %p343, %p344
      %p346 = pneg %p345
      // Predicated region
      $region9: #{custom_clip_forward.11} parent=5 // pred_check
        _
      $region10: #{custom_clip_forward.11} parent=5 // pred_check_branch
        %348 = sbr.rel (%p345) target = $region12
      $region11: #{custom_clip_forward.11} parent=5 // pred_region
        %s349 = ssub.s32 %s31, 1
        // Predicated region
        $region13: #{custom_clip_forward.11} parent=11 // pred_check
          %p350 = pneg %p78
        $region14: #{custom_clip_forward.11} parent=11 // pred_check_branch
          %352 = sbr.rel (%p350) target = $region16
        $region15: #{custom_clip_forward.11} parent=11 // pred_region
          %s354 = ssub.s32 16, 16
          %355 = vsyncadd [#allocation7], %s354
          %s357 = sshll.u32 [#allocation6], 4
          %s358 = int_to_ptr.vmem [resolvable:$true] %s357
          %360 = dma.hbm_to_vmem [thread:$0]  %s1, 16, %s358, [#allocation7]
        $region16: #{custom_clip_forward.11} parent=11 // pred_fallthru
          _
        // Predicated region
        $region17: #{custom_clip_forward.11} parent=11 // pred_check
          %p361 = pneg %p99
        $region18: #{custom_clip_forward.11} parent=11 // pred_check_branch
          %363 = sbr.rel (%p361) target = $region20
        $region19: #{custom_clip_forward.11} parent=11 // pred_region
          %s365 = ssub.s32 16, 16
          %366 = vsyncadd [#allocation7], %s365
          %s368 = sshll.u32 [#allocation8], 4
          %s369 = int_to_ptr.vmem [resolvable:$true] %s368
          %371 = dma.hbm_to_vmem [thread:$0]  %s2, 16, %s369, [#allocation7]
        $region20: #{custom_clip_forward.11} parent=11 // pred_fallthru
          _
        // Predicated region
        $region21: #{custom_clip_forward.11} parent=11 // pred_check
          %p372 = pneg %p120
        $region22: #{custom_clip_forward.11} parent=11 // pred_check_branch
          %374 = sbr.rel (%p372) target = $region24
        $region23: #{custom_clip_forward.11} parent=11 // pred_region
          %s376 = ssub.s32 1024, 1024
          %377 = vsyncadd [#allocation10], %s376
          %s378 = sshll.u32 [#allocation9], 4
          %s379 = int_to_ptr.vmem [resolvable:$true] %s378
          %384 = dma.hbm_to_vmem [thread:$0]  %s3, 1024, %s379, [#allocation10], 128, 128, 8
        $region24: #{custom_clip_forward.11} parent=11 // pred_fallthru
          _
        // Predicated region
        $region25: #{custom_clip_forward.11} parent=11 // pred_check
          %p385 = pneg %p141
        $region26: #{custom_clip_forward.11} parent=11 // pred_check_branch
          %387 = sbr.rel (%p385) target = $region28
        $region27: #{custom_clip_forward.11} parent=11 // pred_region
          %s389 = ssub.s32 32, 32
          %390 = vsyncadd [#allocation10], %s389
          %s392 = sshll.u32 [#allocation11], 4
          %s393 = int_to_ptr.vmem [resolvable:$true] %s392
          %395 = dma.hbm_to_vmem [thread:$0]  %s4, 32, %s393, [#allocation10]
        $region28: #{custom_clip_forward.11} parent=11 // pred_fallthru
          _
        // Predicated region
        $region29: #{custom_clip_forward.11} parent=11 // pred_check
          %p396 = pneg %p162
        $region30: #{custom_clip_forward.11} parent=11 // pred_check_branch
          %398 = sbr.rel (%p396) target = $region32
        $region31: #{custom_clip_forward.11} parent=11 // pred_region
          %s400 = ssub.s32 512, 512
          %401 = vsyncadd [#allocation13], %s400
          %s402 = sshll.u32 [#allocation12], 4
          %s403 = int_to_ptr.vmem [resolvable:$true] %s402
          %408 = dma.hbm_to_vmem [thread:$0]  %s5, 512, %s403, [#allocation13], 64, 64, 4
        $region32: #{custom_clip_forward.11} parent=11 // pred_fallthru
          _
        // Predicated region
        $region33: #{custom_clip_forward.11} parent=11 // pred_check
          %p409 = pneg %p183
        $region34: #{custom_clip_forward.11} parent=11 // pred_check_branch
          %411 = sbr.rel (%p409) target = $region36
        $region35: #{custom_clip_forward.11} parent=11 // pred_region
          %s413 = ssub.s32 16, 16
          %414 = vsyncadd [#allocation13], %s413
          %s416 = sshll.u32 [#allocation14], 4
          %s417 = int_to_ptr.vmem [resolvable:$true] %s416
          %419 = dma.hbm_to_vmem [thread:$0]  %s6, 16, %s417, [#allocation13]
        $region36: #{custom_clip_forward.11} parent=11 // pred_fallthru
          _
        // Predicated region
        $region37: #{custom_clip_forward.11} parent=11 // pred_check
          %p420 = pneg %p204
        $region38: #{custom_clip_forward.11} parent=11 // pred_check_branch
          %422 = sbr.rel (%p420) target = $region40
        $region39: #{custom_clip_forward.11} parent=11 // pred_region
          %s424 = ssub.s32 16, 16
          %425 = vsyncadd [#allocation16], %s424
          %s427 = sshll.u32 [#allocation15], 4
          %s428 = int_to_ptr.vmem [resolvable:$true] %s427
          %430 = dma.hbm_to_vmem [thread:$0]  %s7, 16, %s428, [#allocation16]
        $region40: #{custom_clip_forward.11} parent=11 // pred_fallthru
          _
        // Predicated region
        $region41: #{custom_clip_forward.11} parent=11 // pred_check
          %p431 = pneg %p225
        $region42: #{custom_clip_forward.11} parent=11 // pred_check_branch
          %433 = sbr.rel (%p431) target = $region44
        $region43: #{custom_clip_forward.11} parent=11 // pred_region
          %s435 = ssub.s32 16, 16
          %436 = vsyncadd [#allocation16], %s435
          %s438 = sshll.u32 [#allocation17], 4
          %s439 = int_to_ptr.vmem [resolvable:$true] %s438
          %441 = dma.hbm_to_vmem [thread:$0]  %s8, 16, %s439, [#allocation16]
        $region44: #{custom_clip_forward.11} parent=11 // pred_fallthru
          _
        // Predicated region
        $region45: #{custom_clip_forward.11} parent=11 // pred_check
          %p442 = pneg %p246
        $region46: #{custom_clip_forward.11} parent=11 // pred_check_branch
          %444 = sbr.rel (%p442) target = $region48
        $region47: #{custom_clip_forward.11} parent=11 // pred_region
          %s446 = ssub.s32 1024, 1024
          %447 = vsyncadd [#allocation19], %s446
          %s448 = sshll.u32 [#allocation18], 4
          %s449 = int_to_ptr.vmem [resolvable:$true] %s448
          %454 = dma.hbm_to_vmem [thread:$0]  %s9, 1024, %s449, [#allocation19], 128, 128, 8
        $region48: #{custom_clip_forward.11} parent=11 // pred_fallthru
          _
        // Predicated region
        $region49: #{custom_clip_forward.11} parent=11 // pred_check
          %p455 = pneg %p267
        $region50: #{custom_clip_forward.11} parent=11 // pred_check_branch
          %457 = sbr.rel (%p455) target = $region52
        $region51: #{custom_clip_forward.11} parent=11 // pred_region
          %s459 = ssub.s32 32, 32
          %460 = vsyncadd [#allocation19], %s459
          %s462 = sshll.u32 [#allocation20], 4
          %s463 = int_to_ptr.vmem [resolvable:$true] %s462
          %465 = dma.hbm_to_vmem [thread:$0]  %s10, 32, %s463, [#allocation19]
        $region52: #{custom_clip_forward.11} parent=11 // pred_fallthru
          _
        // Predicated region
        $region53: #{custom_clip_forward.11} parent=11 // pred_check
          %p466 = pneg %p288
        $region54: #{custom_clip_forward.11} parent=11 // pred_check_branch
          %468 = sbr.rel (%p466) target = $region56
        $region55: #{custom_clip_forward.11} parent=11 // pred_region
          %s470 = ssub.s32 2048, 2048
          %471 = vsyncadd [#allocation22], %s470
          %s472 = sshll.u32 [#allocation21], 4
          %s473 = int_to_ptr.vmem [resolvable:$true] %s472
          %478 = dma.hbm_to_vmem [thread:$0]  %s11, 2048, %s473, [#allocation22], 64, 64, 4
        $region56: #{custom_clip_forward.11} parent=11 // pred_fallthru
          _
        // Predicated region
        $region57: #{custom_clip_forward.11} parent=11 // pred_check
          %p479 = pneg %p309
        $region58: #{custom_clip_forward.11} parent=11 // pred_check_branch
          %481 = sbr.rel (%p479) target = $region60
        $region59: #{custom_clip_forward.11} parent=11 // pred_region
          %s483 = ssub.s32 16, 16
          %484 = vsyncadd [#allocation22], %s483
          %s486 = sshll.u32 [#allocation23], 4
          %s487 = int_to_ptr.vmem [resolvable:$true] %s486
          %489 = dma.hbm_to_vmem [thread:$0]  %s12, 16, %s487, [#allocation22]
        $region60: #{custom_clip_forward.11} parent=11 // pred_fallthru
          _
      $region12: #{custom_clip_forward.11} parent=5 // pred_fallthru
        _
      %p490 = scmp.lt.s32.totalorder %s31, 2
      // Predicated region
      $region61: #{custom_clip_forward.11} parent=5 // pred_check
        %p491 = pneg %p490
      $region62: #{custom_clip_forward.11} parent=5 // pred_check_branch
        %493 = sbr.rel (%p491) target = $region64
      $region63: #{custom_clip_forward.11} parent=5 // pred_region
        // Predicated region
        $region65: #{custom_clip_forward.11} parent=63 // pred_check
          %p494 = pneg %p51
        $region66: #{custom_clip_forward.11} parent=63 // pred_check_branch
          %496 = sbr.rel (%p494) target = $region68
        $region67: #{custom_clip_forward.11} parent=63 // pred_region
          %s497 = sand.u32 %s41, 1
          %s498 = scalar_lea.sflag [#allocation4], %s497
          %s499 = sand.u32 %s41, 1
          %s500 = smul.addr %s499, 4
          %s501 = scalar_lea.vmem [#allocation3], %s500
          %s503 = ssub.s32 64, 64
          %504 = vsyncadd %s498, %s503
          %s505 = smul.addr %s31, 64
          %s506 = scalar_lea.hbm %s0, %s505
          %s508 = sshll.u32 %s501, 4
          %s509 = int_to_ptr.vmem [resolvable:$true] %s508
          %511 = dma.hbm_to_vmem [thread:$0]  %s506, 64, %s509, %s498
        $region68: #{custom_clip_forward.11} parent=63 // pred_fallthru
          _
      $region64: #{custom_clip_forward.11} parent=5 // pred_fallthru
        _
      %p512 = scmp.le.s32.totalorder 1, %s31
      %p513 = scmp.lt.s32.totalorder %s31, 3
      %p514 = pnand %p512, %p513
      %p515 = pneg %p514
      // Predicated region
      $region69: #{custom_clip_forward.11} parent=5 // pred_check
        _
      $region70: #{custom_clip_forward.11} parent=5 // pred_check_branch
        %517 = sbr.rel (%p514) target = $region72
      $region71: #{custom_clip_forward.11} parent=5 // pred_region
        %s518 = ssub.s32 %s31, 1
        %s519 = sand.u32 %s44, 1
        %s520 = scalar_lea.sflag [#allocation4], %s519
        %s521 = sand.u32 %s44, 1
        %s522 = smul.addr %s521, 4
        %s523 = scalar_lea.vmem [#allocation3], %s522
        // Predicated region
        $region73: #{custom_clip_forward.11} parent=71 // pred_check
          %p524 = pneg %p57
        $region74: #{custom_clip_forward.11} parent=71 // pred_check_branch
          %526 = sbr.rel (%p524) target = $region76
        $region75: #{custom_clip_forward.11} parent=71 // pred_region
          %527 = dma.done %s520, 64
        $region76: #{custom_clip_forward.11} parent=71 // pred_fallthru
          _
        // Predicated region
        $region77: #{custom_clip_forward.11} parent=71 // pred_check
          %p528 = pneg %p78
        $region78: #{custom_clip_forward.11} parent=71 // pred_check_branch
          %530 = sbr.rel (%p528) target = $region80
        $region79: #{custom_clip_forward.11} parent=71 // pred_region
          %531 = dma.done [#allocation7], 16
        $region80: #{custom_clip_forward.11} parent=71 // pred_fallthru
          _
        // Predicated region
        $region81: #{custom_clip_forward.11} parent=71 // pred_check
          %p532 = pneg %p99
        $region82: #{custom_clip_forward.11} parent=71 // pred_check_branch
          %534 = sbr.rel (%p532) target = $region84
        $region83: #{custom_clip_forward.11} parent=71 // pred_region
          %535 = dma.done [#allocation7], 16
        $region84: #{custom_clip_forward.11} parent=71 // pred_fallthru
          _
        // Predicated region
        $region85: #{custom_clip_forward.11} parent=71 // pred_check
          %p536 = pneg %p120
        $region86: #{custom_clip_forward.11} parent=71 // pred_check_branch
          %538 = sbr.rel (%p536) target = $region88
        $region87: #{custom_clip_forward.11} parent=71 // pred_region
          %539 = dma.done [#allocation10], 1024
        $region88: #{custom_clip_forward.11} parent=71 // pred_fallthru
          _
        // Predicated region
        $region89: #{custom_clip_forward.11} parent=71 // pred_check
          %p540 = pneg %p141
        $region90: #{custom_clip_forward.11} parent=71 // pred_check_branch
          %542 = sbr.rel (%p540) target = $region92
        $region91: #{custom_clip_forward.11} parent=71 // pred_region
          %543 = dma.done [#allocation10], 32
        $region92: #{custom_clip_forward.11} parent=71 // pred_fallthru
          _
        // Predicated region
        $region93: #{custom_clip_forward.11} parent=71 // pred_check
          %p544 = pneg %p162
        $region94: #{custom_clip_forward.11} parent=71 // pred_check_branch
          %546 = sbr.rel (%p544) target = $region96
        $region95: #{custom_clip_forward.11} parent=71 // pred_region
          %547 = dma.done [#allocation13], 512
        $region96: #{custom_clip_forward.11} parent=71 // pred_fallthru
          _
        // Predicated region
        $region97: #{custom_clip_forward.11} parent=71 // pred_check
          %p548 = pneg %p183
        $region98: #{custom_clip_forward.11} parent=71 // pred_check_branch
          %550 = sbr.rel (%p548) target = $region100
        $region99: #{custom_clip_forward.11} parent=71 // pred_region
          %551 = dma.done [#allocation13], 16
        $region100: #{custom_clip_forward.11} parent=71 // pred_fallthru
          _
        // Predicated region
        $region101: #{custom_clip_forward.11} parent=71 // pred_check
          %p552 = pneg %p204
        $region102: #{custom_clip_forward.11} parent=71 // pred_check_branch
          %554 = sbr.rel (%p552) target = $region104
        $region103: #{custom_clip_forward.11} parent=71 // pred_region
          %555 = dma.done [#allocation16], 16
        $region104: #{custom_clip_forward.11} parent=71 // pred_fallthru
          _
        // Predicated region
        $region105: #{custom_clip_forward.11} parent=71 // pred_check
          %p556 = pneg %p225
        $region106: #{custom_clip_forward.11} parent=71 // pred_check_branch
          %558 = sbr.rel (%p556) target = $region108
        $region107: #{custom_clip_forward.11} parent=71 // pred_region
          %559 = dma.done [#allocation16], 16
        $region108: #{custom_clip_forward.11} parent=71 // pred_fallthru
          _
        // Predicated region
        $region109: #{custom_clip_forward.11} parent=71 // pred_check
          %p560 = pneg %p246
        $region110: #{custom_clip_forward.11} parent=71 // pred_check_branch
          %562 = sbr.rel (%p560) target = $region112
        $region111: #{custom_clip_forward.11} parent=71 // pred_region
          %563 = dma.done [#allocation19], 1024
        $region112: #{custom_clip_forward.11} parent=71 // pred_fallthru
          _
        // Predicated region
        $region113: #{custom_clip_forward.11} parent=71 // pred_check
          %p564 = pneg %p267
        $region114: #{custom_clip_forward.11} parent=71 // pred_check_branch
          %566 = sbr.rel (%p564) target = $region116
        $region115: #{custom_clip_forward.11} parent=71 // pred_region
          %567 = dma.done [#allocation19], 32
        $region116: #{custom_clip_forward.11} parent=71 // pred_fallthru
          _
        // Predicated region
        $region117: #{custom_clip_forward.11} parent=71 // pred_check
          %p568 = pneg %p288
        $region118: #{custom_clip_forward.11} parent=71 // pred_check_branch
          %570 = sbr.rel (%p568) target = $region120
        $region119: #{custom_clip_forward.11} parent=71 // pred_region
          %571 = dma.done [#allocation22], 2048
        $region120: #{custom_clip_forward.11} parent=71 // pred_fallthru
          _
        // Predicated region
        $region121: #{custom_clip_forward.11} parent=71 // pred_check
          %p572 = pneg %p309
        $region122: #{custom_clip_forward.11} parent=71 // pred_check_branch
          %574 = sbr.rel (%p572) target = $region124
        $region123: #{custom_clip_forward.11} parent=71 // pred_region
          %575 = dma.done [#allocation22], 16
        $region124: #{custom_clip_forward.11} parent=71 // pred_fallthru
          _
        %s576 = sand.u32 %s44, 1
        %s577 = scalar_lea.sflag [#allocation4], %s576
        %s578 = sand.u32 %s44, 1
        %s579 = smul.addr %s578, 4
        %s580 = scalar_lea.vmem [#allocation3], %s579
        %p581 = pneg %p57
        %p582 = pneg %p54
        %p583 = pneg %p78
        %p584 = pneg %p75
        %p585 = pneg %p99
        %p586 = pneg %p96
        %p587 = pneg %p120
        %p588 = pneg %p117
        %p589 = pneg %p141
        %p590 = pneg %p138
        %p591 = pneg %p162
        %p592 = pneg %p159
        %p593 = pneg %p183
        %p594 = pneg %p180
        %p595 = pneg %p204
        %p596 = pneg %p201
        %p597 = pneg %p225
        %p598 = pneg %p222
        %p599 = pneg %p246
        %p600 = pneg %p243
        %p601 = pneg %p267
        %p602 = pneg %p264
        %p603 = pneg %p288
        %p604 = pneg %p285
        %p605 = pneg %p309
        %p606 = pneg %p306
        %p607 = pneg %p335
        %p608 = pneg %p332
        %s609 = sand.u32 %s322, 1
        %s610 = scalar_lea.sflag [#allocation5], %s609
        %s611 = sand.u32 %s322, 1
        %s612 = smul.addr %s611, 4
        %s613 = scalar_lea.vmem [#allocation24], %s612
        %v615 = vld [vmem:[%s523] sm:$0x7]
        %v616 = vunpack.c.l.bf16 %v615
        %v617 = vld [vmem:[#allocation6] sm:$0x1]
        %v618 = vld [vmem:[#allocation8] sm:$0x1]
        %vm619 = vcmask 520192
        %v620 = vsel %vm619, %v616, 0.0
        %621 = vadd.xlane.f32.xlu0 %v620
        %v622 = vpop.xlane.xlu0 %621
        %v623 = vrcp.pop 64.0
        %v624 = vmul.f32 %v622, %v623
        %v625 = vsub.f32 %v616, %v624
        %v626 = vmul.f32 %v625, %v625
        %v627 = vsel %vm619, %v626, 0.0
        %628 = vadd.xlane.f32.xlu0 %v627
        %v629 = vpop.xlane.xlu0 %628
        %v630 = vmul.f32 %v629, %v623
        %v631 = vadd.f32 %v630, 1e-05
        %v632 = vrsqrt.pop %v631
        %v633 = vmul.f32 %v625, %v632
        %v635 = vlaneseq
        %v636 = vshrl.u32 %v635, 7
        %v637 = vsub.s32 0, %v636
        %v638 = vrot.slane %v617, %v637
        %v640 = vmul.f32 %v633, %v638
        %v642 = vlaneseq
        %v643 = vshrl.u32 %v642, 7
        %v644 = vsub.s32 0, %v643
        %v645 = vrot.slane %v618, %v644
        %v647 = vadd.f32 %v640, %v645
        %v648 = vpack.c.bf16 %v647, %v647
        %v649 = vld [vmem:[#allocation9] sm:$0xff]
        %v650 = vld [vmem:[#allocation9 + $0x8] sm:$0xff]
        %v651 = vld [vmem:[#allocation9 + $0x10] sm:$0xff]
        %v652 = vld [vmem:[#allocation9 + $0x18] sm:$0xff]
        %v653 = vld [vmem:[#allocation9 + $0x20] sm:$0xff]
        %v654 = vld [vmem:[#allocation9 + $0x28] sm:$0xff]
        %v655 = vld [vmem:[#allocation9 + $0x30] sm:$0xff]
        %v656 = vld [vmem:[#allocation9 + $0x38] sm:$0xff]
        %v657 = vld [vmem:[#allocation11] sm:$0x3]
        %v659 = vlaneseq
        %v660 = vshrl.u32 %v659, 7
        %v661 = vsub.s32 0, %v660
        %v662 = vrot.slane %v657, %v661
        %v663 = vlaneseq
        %v664 = vshrl.u32 %v663, 7
        %v665 = vsub.s32 1, %v664
        %v666 = vrot.slane %v657, %v665
        %v677 = vunpack.c.l.b16 %v649
        %v678 = vunpack.c.h.b16 %v649
        %v679 = vunpack.c.l.b16 %v650
        %v680 = vunpack.c.h.b16 %v650
        %v681 = vunpack.c.l.b16 %v651
        %v682 = vunpack.c.h.b16 %v651
        %v683 = vunpack.c.l.b16 %v652
        %v684 = vunpack.c.h.b16 %v652
        %v685 = vunpack.c.l.b16 %v653
        %v686 = vunpack.c.h.b16 %v653
        %v687 = vunpack.c.l.b16 %v654
        %v688 = vunpack.c.h.b16 %v654
        %v689 = vunpack.c.l.b16 %v655
        %v690 = vunpack.c.h.b16 %v655
        %v691 = vunpack.c.l.b16 %v656
        %v692 = vunpack.c.h.b16 %v656
        %v693 = vpack.c.b16 %v679, %v677
        %v694 = vpack.c.b16 %v680, %v678
        %v695 = vpack.c.b16 %v683, %v681
        %v696 = vpack.c.b16 %v684, %v682
        %v697 = vpack.c.b16 %v687, %v685
        %v698 = vpack.c.b16 %v688, %v686
        %v699 = vpack.c.b16 %v691, %v689
        %v700 = vpack.c.b16 %v692, %v690
        %vm709 = vcmask 523264
        %v711 = vsel %vm709, %v648, 0
        %713 = vmatprep.subr.bf16.mxu0 %v694
        %714 = vmatpush1.bf16.msra.mxu0 %v693
        %715 = vmatprep.subr.bf16.mxu0 %v696
        %716 = vmatpush1.bf16.msra.mxu0 %v695
        %717 = vmatprep.subr.bf16.mxu0 %v698
        %718 = vmatpush1.bf16.msra.mxu0 %v697
        %719 = vmatprep.subr.bf16.mxu0 %v700
        %720 = vmatpush1.bf16.msra.mxu0 %v699
        %721 = vmatprep.subr.bf16.mxu0 0
        %722 = vmatpush1.bf16.msra.mxu0 0
        %723 = vmatprep.subr.bf16.mxu0 0
        %724 = vmatpush1.bf16.msra.mxu0 0
        %725 = vmatprep.subr.bf16.mxu0 0
        %726 = vmatpush1.bf16.msra.mxu0 0
        %727 = vmatprep.subr.bf16.mxu0 0
        %728 = vmatpush1.bf16.msra.mxu0 0
        %729 = vmatprep.subr.bf16.mxu0 0
        %730 = vmatpush1.bf16.msra.mxu0 0
        %731 = vmatprep.subr.bf16.mxu0 0
        %732 = vmatpush1.bf16.msra.mxu0 0
        %733 = vmatprep.subr.bf16.mxu0 0
        %734 = vmatpush1.bf16.msra.mxu0 0
        %735 = vmatprep.subr.bf16.mxu0 0
        %736 = vmatpush1.bf16.msra.mxu0 0
        %737 = vmatprep.subr.bf16.mxu0 0
        %738 = vmatpush1.bf16.msra.mxu0 0
        %739 = vmatprep.subr.bf16.mxu0 0
        %740 = vmatpush1.bf16.msra.mxu0 0
        %741 = vmatprep.subr.bf16.mxu0 0
        %742 = vmatpush1.bf16.msra.mxu0 0
        %743 = vmatprep.subr.bf16.mxu0 0
        %744 = vmatpush1.bf16.msra.mxu0 0
        %745 = vmatprep.mubr.bf16.mxu0 0
        %746 = vmatmul.mubr.bf16.gmra.mrb[0].mxu0 %v711
        %v747 = vpop.f32.mrb[0].mxu0
        %v748 = vadd.f32 %v662, %v747
        %v749 = vpop.f32.mrb[0].mxu0
        %v750 = vadd.f32 %v666, %v749
        %v751 = vpop.f32.mrb[0].mxu0
        %v752 = vpop.f32.mrb[0].mxu0
        %753 = vdwg.mxu0
        %755 = vrot.lane.b32.xlu0 %v748, 64
        %v756 = vpop.permute.xlu0 %755
        %vm757 = vcmask 130048
        %v758 = vsel %vm757, %v748, 0
        %v760 = vsel %vm757, %v756, 0
        %762 = vmatprep.subr.mxu0 0.0
        %763 = vmatpush1.xpose.msra.mxu0 %v760
        %764 = vmatprep.subr.mxu0 0.0
        %765 = vmatpush1.xpose.msra.mxu0 0.0
        %766 = vmatprep.subr.mxu0 0.0
        %767 = vmatpush1.xpose.msra.mxu0 0.0
        %768 = vmatprep.subr.mxu0 0.0
        %769 = vmatpush1.xpose.msra.mxu0 0.0
        %770 = vmatprep.subr.mxu0 0.0
        %771 = vmatpush1.xpose.msra.mxu0 0.0
        %772 = vmatprep.subr.mxu0 0.0
        %773 = vmatpush1.xpose.msra.mxu0 0.0
        %774 = vmatprep.subr.mxu0 0.0
        %775 = vmatpush1.xpose.msra.mxu0 0.0
        %776 = vmatprep.subr.mxu0 0.0
        %777 = vmatpush1.xpose.msra.mxu0 0.0
        %778 = vmatprep.subr.mxu0 0.0
        %779 = vmatpush1.xpose.msra.mxu0 0.0
        %780 = vmatprep.subr.mxu0 0.0
        %781 = vmatpush1.xpose.msra.mxu0 0.0
        %782 = vmatprep.subr.mxu0 0.0
        %783 = vmatpush1.xpose.msra.mxu0 0.0
        %784 = vmatprep.subr.mxu0 0.0
        %785 = vmatpush1.xpose.msra.mxu0 0.0
        %786 = vmatprep.subr.mxu0 0.0
        %787 = vmatpush1.xpose.msra.mxu0 0.0
        %788 = vmatprep.subr.mxu0 0.0
        %789 = vmatpush1.xpose.msra.mxu0 0.0
        %790 = vmatprep.subr.mxu0 0.0
        %791 = vmatpush1.xpose.msra.mxu0 0.0
        %792 = vmatprep.subr.mxu0 0.0
        %793 = vmatpush1.xpose.msra.mxu0 0.0
        %794 = vmatprep.subr.mxu0 0.0
        %795 = vmatpush1.xpose.msra.mxu0 0.0
        %796 = vmatprep.subr.mxu0 0.0
        %797 = vmatpush1.xpose.msra.mxu0 0.0
        %798 = vmatprep.subr.mxu0 0.0
        %799 = vmatpush1.xpose.msra.mxu0 0.0
        %800 = vmatprep.subr.mxu0 0.0
        %801 = vmatpush1.xpose.msra.mxu0 0.0
        %802 = vmatprep.subr.mxu0 0.0
        %803 = vmatpush1.xpose.msra.mxu0 0.0
        %804 = vmatprep.subr.mxu0 0.0
        %805 = vmatpush1.xpose.msra.mxu0 0.0
        %806 = vmatprep.subr.mxu0 0.0
        %807 = vmatpush1.xpose.msra.mxu0 0.0
        %808 = vmatprep.subr.mxu0 0.0
        %809 = vmatpush1.xpose.msra.mxu0 0.0
        %810 = vmatprep.subr.mxu0 0.0
        %811 = vmatpush1.xpose.msra.mxu0 0.0
        %812 = vmatprep.subr.mxu0 0.0
        %813 = vmatpush1.xpose.msra.mxu0 0.0
        %814 = vmatprep.subr.mxu0 0.0
        %815 = vmatpush1.xpose.msra.mxu0 0.0
        %816 = vmatprep.subr.mxu0 0.0
        %817 = vmatpush1.xpose.msra.mxu0 0.0
        %818 = vmatprep.subr.mxu0 0.0
        %819 = vmatpush1.xpose.msra.mxu0 0.0
        %820 = vmatprep.subr.mxu0 0.0
        %821 = vmatpush1.xpose.msra.mxu0 0.0
        %822 = vmatprep.subr.mxu0 0.0
        %823 = vmatpush1.xpose.msra.mxu0 0.0
        %824 = vmatprep.subr.mxu0 0.0
        %825 = vmatpush1.xpose.msra.mxu0 0.0
        %826 = vmatprep.mubr.f32.mxu0 0.0
        %827 = vmatmul.mubr.f32.gmra.mrb[0].mxu0 %v758
        %v828 = vpop.f32.mrb[0].mxu0
        %v829 = vadd.f32 0.0, %v828
        %v830 = vpop.f32.mrb[0].mxu0
        %831 = vdwg.mxu0
        %v832 = vmul.f32 %v829, 0.25
        %vm833 = vcmask 36864
        %v834 = vsel %vm833, %v832, -inf
        %835 = vmax.xlane.f32.xlu0 %v834
        %v836 = vpop.xlane.xlu0 %835
        %v837 = vsub.f32 %v832, %v836
        %v838 = vmul.f32 %v837, 1.442695
        %v839 = vpow.pop %v838
        %v840 = vsel %vm833, %v839, 0.0
        %841 = vadd.xlane.f32.xlu0 %v840
        %v842 = vpop.xlane.xlu0 %841
        %v843 = vrcp.pop %v842
        %v844 = vmul.f32 %v839, %v843
        %v845 = vpack.c.bf16 %v844, %v844
        %v846 = vpack.c.bf16 %v750, %v750
        %vm847 = vcmask 39936
        %v849 = vsel %vm847, %v845, 0
        %vm851 = vcmask 1041408
        %vm852 = vcmask 1042432
        %v853 = vsel %vm851, 4294967295, 65535
        %v854 = vsel %vm852, %v853, 0
        %v856 = vand.u32 %v846, %v854
        %858 = vmatprep.subr.bf16.mxu0 0
        %859 = vmatpush1.bf16.msra.mxu0 %v856
        %860 = vmatprep.subr.bf16.mxu0 0
        %861 = vmatpush1.bf16.msra.mxu0 0
        %862 = vmatprep.subr.bf16.mxu0 0
        %863 = vmatpush1.bf16.msra.mxu0 0
        %864 = vmatprep.subr.bf16.mxu0 0
        %865 = vmatpush1.bf16.msra.mxu0 0
        %866 = vmatprep.subr.bf16.mxu0 0
        %867 = vmatpush1.bf16.msra.mxu0 0
        %868 = vmatprep.subr.bf16.mxu0 0
        %869 = vmatpush1.bf16.msra.mxu0 0
        %870 = vmatprep.subr.bf16.mxu0 0
        %871 = vmatpush1.bf16.msra.mxu0 0
        %872 = vmatprep.subr.bf16.mxu0 0
        %873 = vmatpush1.bf16.msra.mxu0 0
        %874 = vmatprep.subr.bf16.mxu0 0
        %875 = vmatpush1.bf16.msra.mxu0 0
        %876 = vmatprep.subr.bf16.mxu0 0
        %877 = vmatpush1.bf16.msra.mxu0 0
        %878 = vmatprep.subr.bf16.mxu0 0
        %879 = vmatpush1.bf16.msra.mxu0 0
        %880 = vmatprep.subr.bf16.mxu0 0
        %881 = vmatpush1.bf16.msra.mxu0 0
        %882 = vmatprep.subr.bf16.mxu0 0
        %883 = vmatpush1.bf16.msra.mxu0 0
        %884 = vmatprep.subr.bf16.mxu0 0
        %885 = vmatpush1.bf16.msra.mxu0 0
        %886 = vmatprep.subr.bf16.mxu0 0
        %887 = vmatpush1.bf16.msra.mxu0 0
        %888 = vmatprep.subr.bf16.mxu0 0
        %889 = vmatpush1.bf16.msra.mxu0 0
        %890 = vmatprep.mubr.bf16.mxu0 0
        %891 = vmatmul.mubr.bf16.gmra.mrb[0].mxu0 %v849
        %v892 = vpop.f32.mrb[0].mxu0
        %v893 = vadd.f32 0.0, %v892
        %v894 = vpop.f32.mrb[0].mxu0
        %v895 = vpop.f32.mrb[0].mxu0
        %v896 = vpop.f32.mrb[0].mxu0
        %897 = vdwg.mxu0
        %vm898 = vcmask 126976
        %899 = vst.msk [vmem:[#allocation2] sm:$0x1f] %vm898, %v893
        %900 = vrot.lane.b32.xlu0 %v748, 112
        %v901 = vpop.permute.xlu0 %900
        %902 = vrot.lane.b32.xlu0 %v748, 48
        %v903 = vpop.permute.xlu0 %902
        %v904 = vsel %vm757, %v901, 0
        %v906 = vsel %vm757, %v903, 0
        %908 = vmatprep.subr.mxu0 0.0
        %909 = vmatpush1.xpose.msra.mxu0 %v906
        %910 = vmatprep.subr.mxu0 0.0
        %911 = vmatpush1.xpose.msra.mxu0 0.0
        %912 = vmatprep.subr.mxu0 0.0
        %913 = vmatpush1.xpose.msra.mxu0 0.0
        %914 = vmatprep.subr.mxu0 0.0
        %915 = vmatpush1.xpose.msra.mxu0 0.0
        %916 = vmatprep.subr.mxu0 0.0
        %917 = vmatpush1.xpose.msra.mxu0 0.0
        %918 = vmatprep.subr.mxu0 0.0
        %919 = vmatpush1.xpose.msra.mxu0 0.0
        %920 = vmatprep.subr.mxu0 0.0
        %921 = vmatpush1.xpose.msra.mxu0 0.0
        %922 = vmatprep.subr.mxu0 0.0
        %923 = vmatpush1.xpose.msra.mxu0 0.0
        %924 = vmatprep.subr.mxu0 0.0
        %925 = vmatpush1.xpose.msra.mxu0 0.0
        %926 = vmatprep.subr.mxu0 0.0
        %927 = vmatpush1.xpose.msra.mxu0 0.0
        %928 = vmatprep.subr.mxu0 0.0
        %929 = vmatpush1.xpose.msra.mxu0 0.0
        %930 = vmatprep.subr.mxu0 0.0
        %931 = vmatpush1.xpose.msra.mxu0 0.0
        %932 = vmatprep.subr.mxu0 0.0
        %933 = vmatpush1.xpose.msra.mxu0 0.0
        %934 = vmatprep.subr.mxu0 0.0
        %935 = vmatpush1.xpose.msra.mxu0 0.0
        %936 = vmatprep.subr.mxu0 0.0
        %937 = vmatpush1.xpose.msra.mxu0 0.0
        %938 = vmatprep.subr.mxu0 0.0
        %939 = vmatpush1.xpose.msra.mxu0 0.0
        %940 = vmatprep.subr.mxu0 0.0
        %941 = vmatpush1.xpose.msra.mxu0 0.0
        %942 = vmatprep.subr.mxu0 0.0
        %943 = vmatpush1.xpose.msra.mxu0 0.0
        %944 = vmatprep.subr.mxu0 0.0
        %945 = vmatpush1.xpose.msra.mxu0 0.0
        %946 = vmatprep.subr.mxu0 0.0
        %947 = vmatpush1.xpose.msra.mxu0 0.0
        %948 = vmatprep.subr.mxu0 0.0
        %949 = vmatpush1.xpose.msra.mxu0 0.0
        %950 = vmatprep.subr.mxu0 0.0
        %951 = vmatpush1.xpose.msra.mxu0 0.0
        %952 = vmatprep.subr.mxu0 0.0
        %953 = vmatpush1.xpose.msra.mxu0 0.0
        %954 = vmatprep.subr.mxu0 0.0
        %955 = vmatpush1.xpose.msra.mxu0 0.0
        %956 = vmatprep.subr.mxu0 0.0
        %957 = vmatpush1.xpose.msra.mxu0 0.0
        %958 = vmatprep.subr.mxu0 0.0
        %959 = vmatpush1.xpose.msra.mxu0 0.0
        %960 = vmatprep.subr.mxu0 0.0
        %961 = vmatpush1.xpose.msra.mxu0 0.0
        %962 = vmatprep.subr.mxu0 0.0
        %963 = vmatpush1.xpose.msra.mxu0 0.0
        %964 = vmatprep.subr.mxu0 0.0
        %965 = vmatpush1.xpose.msra.mxu0 0.0
        %966 = vmatprep.subr.mxu0 0.0
        %967 = vmatpush1.xpose.msra.mxu0 0.0
        %968 = vmatprep.subr.mxu0 0.0
        %969 = vmatpush1.xpose.msra.mxu0 0.0
        %970 = vmatprep.subr.mxu0 0.0
        %971 = vmatpush1.xpose.msra.mxu0 0.0
        %972 = vmatprep.mubr.f32.mxu0 0.0
        %973 = vmatmul.mubr.f32.gmra.mrb[0].mxu0 %v904
        %v974 = vpop.f32.mrb[0].mxu0
        %v975 = vadd.f32 0.0, %v974
        %v976 = vpop.f32.mrb[0].mxu0
        %977 = vdwg.mxu0
        %v978 = vmul.f32 %v975, 0.25
        %v979 = vsel %vm833, %v978, -inf
        %980 = vmax.xlane.f32.xlu0 %v979
        %v981 = vpop.xlane.xlu0 %980
        %v982 = vsub.f32 %v978, %v981
        %v983 = vmul.f32 %v982, 1.442695
        %v984 = vpow.pop %v983
        %v985 = vsel %vm833, %v984, 0.0
        %986 = vadd.xlane.f32.xlu0 %v985
        %v987 = vpop.xlane.xlu0 %986
        %v988 = vrcp.pop %v987
        %v989 = vmul.f32 %v984, %v988
        %v990 = vpack.c.bf16 %v989, %v989
        %992 = vrot.lane.b32.xlu0 %v846, 112
        %v993 = vpop.permute.xlu0 %992
        %v995 = vsel %vm847, %v990, 0
        %v998 = vand.u32 %v993, %v854
        %1000 = vmatprep.subr.bf16.mxu0 0
        %1001 = vmatpush1.bf16.msra.mxu0 %v998
        %1002 = vmatprep.subr.bf16.mxu0 0
        %1003 = vmatpush1.bf16.msra.mxu0 0
        %1004 = vmatprep.subr.bf16.mxu0 0
        %1005 = vmatpush1.bf16.msra.mxu0 0
        %1006 = vmatprep.subr.bf16.mxu0 0
        %1007 = vmatpush1.bf16.msra.mxu0 0
        %1008 = vmatprep.subr.bf16.mxu0 0
        %1009 = vmatpush1.bf16.msra.mxu0 0
        %1010 = vmatprep.subr.bf16.mxu0 0
        %1011 = vmatpush1.bf16.msra.mxu0 0
        %1012 = vmatprep.subr.bf16.mxu0 0
        %1013 = vmatpush1.bf16.msra.mxu0 0
        %1014 = vmatprep.subr.bf16.mxu0 0
        %1015 = vmatpush1.bf16.msra.mxu0 0
        %1016 = vmatprep.subr.bf16.mxu0 0
        %1017 = vmatpush1.bf16.msra.mxu0 0
        %1018 = vmatprep.subr.bf16.mxu0 0
        %1019 = vmatpush1.bf16.msra.mxu0 0
        %1020 = vmatprep.subr.bf16.mxu0 0
        %1021 = vmatpush1.bf16.msra.mxu0 0
        %1022 = vmatprep.subr.bf16.mxu0 0
        %1023 = vmatpush1.bf16.msra.mxu0 0
        %1024 = vmatprep.subr.bf16.mxu0 0
        %1025 = vmatpush1.bf16.msra.mxu0 0
        %1026 = vmatprep.subr.bf16.mxu0 0
        %1027 = vmatpush1.bf16.msra.mxu0 0
        %1028 = vmatprep.subr.bf16.mxu0 0
        %1029 = vmatpush1.bf16.msra.mxu0 0
        %1030 = vmatprep.subr.bf16.mxu0 0
        %1031 = vmatpush1.bf16.msra.mxu0 0
        %1032 = vmatprep.mubr.bf16.mxu0 0
        %1033 = vmatmul.mubr.bf16.gmra.mrb[0].mxu0 %v995
        %v1034 = vpop.f32.mrb[0].mxu0
        %v1035 = vadd.f32 0.0, %v1034
        %v1036 = vpop.f32.mrb[0].mxu0
        %v1037 = vpop.f32.mrb[0].mxu0
        %v1038 = vpop.f32.mrb[0].mxu0
        %1039 = vdwg.mxu0
        %1041 = vrot.lane.b32.xlu0 %v1035, 16
        %v1042 = vpop.permute.xlu0 %1041
        %vm1044 = vcmask 258176
        %1045 = vst.msk [vmem:[#allocation2] sm:$0x1f] %vm1044, %v1042
        %1046 = vrot.lane.b32.xlu0 %v748, 96
        %v1047 = vpop.permute.xlu0 %1046
        %1048 = vrot.lane.b32.xlu0 %v748, 32
        %v1049 = vpop.permute.xlu0 %1048
        %v1050 = vsel %vm757, %v1047, 0
        %v1052 = vsel %vm757, %v1049, 0
        %1054 = vmatprep.subr.mxu0 0.0
        %1055 = vmatpush1.xpose.msra.mxu0 %v1052
        %1056 = vmatprep.subr.mxu0 0.0
        %1057 = vmatpush1.xpose.msra.mxu0 0.0
        %1058 = vmatprep.subr.mxu0 0.0
        %1059 = vmatpush1.xpose.msra.mxu0 0.0
        %1060 = vmatprep.subr.mxu0 0.0
        %1061 = vmatpush1.xpose.msra.mxu0 0.0
        %1062 = vmatprep.subr.mxu0 0.0
        %1063 = vmatpush1.xpose.msra.mxu0 0.0
        %1064 = vmatprep.subr.mxu0 0.0
        %1065 = vmatpush1.xpose.msra.mxu0 0.0
        %1066 = vmatprep.subr.mxu0 0.0
        %1067 = vmatpush1.xpose.msra.mxu0 0.0
        %1068 = vmatprep.subr.mxu0 0.0
        %1069 = vmatpush1.xpose.msra.mxu0 0.0
        %1070 = vmatprep.subr.mxu0 0.0
        %1071 = vmatpush1.xpose.msra.mxu0 0.0
        %1072 = vmatprep.subr.mxu0 0.0
        %1073 = vmatpush1.xpose.msra.mxu0 0.0
        %1074 = vmatprep.subr.mxu0 0.0
        %1075 = vmatpush1.xpose.msra.mxu0 0.0
        %1076 = vmatprep.subr.mxu0 0.0
        %1077 = vmatpush1.xpose.msra.mxu0 0.0
        %1078 = vmatprep.subr.mxu0 0.0
        %1079 = vmatpush1.xpose.msra.mxu0 0.0
        %1080 = vmatprep.subr.mxu0 0.0
        %1081 = vmatpush1.xpose.msra.mxu0 0.0
        %1082 = vmatprep.subr.mxu0 0.0
        %1083 = vmatpush1.xpose.msra.mxu0 0.0
        %1084 = vmatprep.subr.mxu0 0.0
        %1085 = vmatpush1.xpose.msra.mxu0 0.0
        %1086 = vmatprep.subr.mxu0 0.0
        %1087 = vmatpush1.xpose.msra.mxu0 0.0
        %1088 = vmatprep.subr.mxu0 0.0
        %1089 = vmatpush1.xpose.msra.mxu0 0.0
        %1090 = vmatprep.subr.mxu0 0.0
        %1091 = vmatpush1.xpose.msra.mxu0 0.0
        %1092 = vmatprep.subr.mxu0 0.0
        %1093 = vmatpush1.xpose.msra.mxu0 0.0
        %1094 = vmatprep.subr.mxu0 0.0
        %1095 = vmatpush1.xpose.msra.mxu0 0.0
        %1096 = vmatprep.subr.mxu0 0.0
        %1097 = vmatpush1.xpose.msra.mxu0 0.0
        %1098 = vmatprep.subr.mxu0 0.0
        %1099 = vmatpush1.xpose.msra.mxu0 0.0
        %1100 = vmatprep.subr.mxu0 0.0
        %1101 = vmatpush1.xpose.msra.mxu0 0.0
        %1102 = vmatprep.subr.mxu0 0.0
        %1103 = vmatpush1.xpose.msra.mxu0 0.0
        %1104 = vmatprep.subr.mxu0 0.0
        %1105 = vmatpush1.xpose.msra.mxu0 0.0
        %1106 = vmatprep.subr.mxu0 0.0
        %1107 = vmatpush1.xpose.msra.mxu0 0.0
        %1108 = vmatprep.subr.mxu0 0.0
        %1109 = vmatpush1.xpose.msra.mxu0 0.0
        %1110 = vmatprep.subr.mxu0 0.0
        %1111 = vmatpush1.xpose.msra.mxu0 0.0
        %1112 = vmatprep.subr.mxu0 0.0
        %1113 = vmatpush1.xpose.msra.mxu0 0.0
        %1114 = vmatprep.subr.mxu0 0.0
        %1115 = vmatpush1.xpose.msra.mxu0 0.0
        %1116 = vmatprep.subr.mxu0 0.0
        %1117 = vmatpush1.xpose.msra.mxu0 0.0
        %1118 = vmatprep.mubr.f32.mxu0 0.0
        %1119 = vmatmul.mubr.f32.gmra.mrb[0].mxu0 %v1050
        %v1120 = vpop.f32.mrb[0].mxu0
        %v1121 = vadd.f32 0.0, %v1120
        %v1122 = vpop.f32.mrb[0].mxu0
        %1123 = vdwg.mxu0
        %v1124 = vmul.f32 %v1121, 0.25
        %v1125 = vsel %vm833, %v1124, -inf
        %1126 = vmax.xlane.f32.xlu0 %v1125
        %v1127 = vpop.xlane.xlu0 %1126
        %v1128 = vsub.f32 %v1124, %v1127
        %v1129 = vmul.f32 %v1128, 1.442695
        %v1130 = vpow.pop %v1129
        %v1131 = vsel %vm833, %v1130, 0.0
        %1132 = vadd.xlane.f32.xlu0 %v1131
        %v1133 = vpop.xlane.xlu0 %1132
        %v1134 = vrcp.pop %v1133
        %v1135 = vmul.f32 %v1130, %v1134
        %v1136 = vpack.c.bf16 %v1135, %v1135
        %1137 = vrot.lane.b32.xlu0 %v846, 96
        %v1138 = vpop.permute.xlu0 %1137
        %v1140 = vsel %vm847, %v1136, 0
        %v1143 = vand.u32 %v1138, %v854
        %1145 = vmatprep.subr.bf16.mxu0 0
        %1146 = vmatpush1.bf16.msra.mxu0 %v1143
        %1147 = vmatprep.subr.bf16.mxu0 0
        %1148 = vmatpush1.bf16.msra.mxu0 0
        %1149 = vmatprep.subr.bf16.mxu0 0
        %1150 = vmatpush1.bf16.msra.mxu0 0
        %1151 = vmatprep.subr.bf16.mxu0 0
        %1152 = vmatpush1.bf16.msra.mxu0 0
        %1153 = vmatprep.subr.bf16.mxu0 0
        %1154 = vmatpush1.bf16.msra.mxu0 0
        %1155 = vmatprep.subr.bf16.mxu0 0
        %1156 = vmatpush1.bf16.msra.mxu0 0
        %1157 = vmatprep.subr.bf16.mxu0 0
        %1158 = vmatpush1.bf16.msra.mxu0 0
        %1159 = vmatprep.subr.bf16.mxu0 0
        %1160 = vmatpush1.bf16.msra.mxu0 0
        %1161 = vmatprep.subr.bf16.mxu0 0
        %1162 = vmatpush1.bf16.msra.mxu0 0
        %1163 = vmatprep.subr.bf16.mxu0 0
        %1164 = vmatpush1.bf16.msra.mxu0 0
        %1165 = vmatprep.subr.bf16.mxu0 0
        %1166 = vmatpush1.bf16.msra.mxu0 0
        %1167 = vmatprep.subr.bf16.mxu0 0
        %1168 = vmatpush1.bf16.msra.mxu0 0
        %1169 = vmatprep.subr.bf16.mxu0 0
        %1170 = vmatpush1.bf16.msra.mxu0 0
        %1171 = vmatprep.subr.bf16.mxu0 0
        %1172 = vmatpush1.bf16.msra.mxu0 0
        %1173 = vmatprep.subr.bf16.mxu0 0
        %1174 = vmatpush1.bf16.msra.mxu0 0
        %1175 = vmatprep.subr.bf16.mxu0 0
        %1176 = vmatpush1.bf16.msra.mxu0 0
        %1177 = vmatprep.mubr.bf16.mxu0 0
        %1178 = vmatmul.mubr.bf16.gmra.mrb[0].mxu0 %v1140
        %v1179 = vpop.f32.mrb[0].mxu0
        %v1180 = vadd.f32 0.0, %v1179
        %v1181 = vpop.f32.mrb[0].mxu0
        %v1182 = vpop.f32.mrb[0].mxu0
        %v1183 = vpop.f32.mrb[0].mxu0
        %1184 = vdwg.mxu0
        %1186 = vrot.lane.b32.xlu0 %v1180, 32
        %v1187 = vpop.permute.xlu0 %1186
        %vm1189 = vcmask 389376
        %1190 = vst.msk [vmem:[#allocation2] sm:$0x1f] %vm1189, %v1187
        %1191 = vrot.lane.b32.xlu0 %v748, 80
        %v1192 = vpop.permute.xlu0 %1191
        %1193 = vrot.lane.b32.xlu0 %v748, 16
        %v1194 = vpop.permute.xlu0 %1193
        %v1195 = vsel %vm757, %v1192, 0
        %v1197 = vsel %vm757, %v1194, 0
        %1199 = vmatprep.subr.mxu0 0.0
        %1200 = vmatpush1.xpose.msra.mxu0 %v1197
        %1201 = vmatprep.subr.mxu0 0.0
        %1202 = vmatpush1.xpose.msra.mxu0 0.0
        %1203 = vmatprep.subr.mxu0 0.0
        %1204 = vmatpush1.xpose.msra.mxu0 0.0
        %1205 = vmatprep.subr.mxu0 0.0
        %1206 = vmatpush1.xpose.msra.mxu0 0.0
        %1207 = vmatprep.subr.mxu0 0.0
        %1208 = vmatpush1.xpose.msra.mxu0 0.0
        %1209 = vmatprep.subr.mxu0 0.0
        %1210 = vmatpush1.xpose.msra.mxu0 0.0
        %1211 = vmatprep.subr.mxu0 0.0
        %1212 = vmatpush1.xpose.msra.mxu0 0.0
        %1213 = vmatprep.subr.mxu0 0.0
        %1214 = vmatpush1.xpose.msra.mxu0 0.0
        %1215 = vmatprep.subr.mxu0 0.0
        %1216 = vmatpush1.xpose.msra.mxu0 0.0
        %1217 = vmatprep.subr.mxu0 0.0
        %1218 = vmatpush1.xpose.msra.mxu0 0.0
        %1219 = vmatprep.subr.mxu0 0.0
        %1220 = vmatpush1.xpose.msra.mxu0 0.0
        %1221 = vmatprep.subr.mxu0 0.0
        %1222 = vmatpush1.xpose.msra.mxu0 0.0
        %1223 = vmatprep.subr.mxu0 0.0
        %1224 = vmatpush1.xpose.msra.mxu0 0.0
        %1225 = vmatprep.subr.mxu0 0.0
        %1226 = vmatpush1.xpose.msra.mxu0 0.0
        %1227 = vmatprep.subr.mxu0 0.0
        %1228 = vmatpush1.xpose.msra.mxu0 0.0
        %1229 = vmatprep.subr.mxu0 0.0
        %1230 = vmatpush1.xpose.msra.mxu0 0.0
        %1231 = vmatprep.subr.mxu0 0.0
        %1232 = vmatpush1.xpose.msra.mxu0 0.0
        %1233 = vmatprep.subr.mxu0 0.0
        %1234 = vmatpush1.xpose.msra.mxu0 0.0
        %1235 = vmatprep.subr.mxu0 0.0
        %1236 = vmatpush1.xpose.msra.mxu0 0.0
        %1237 = vmatprep.subr.mxu0 0.0
        %1238 = vmatpush1.xpose.msra.mxu0 0.0
        %1239 = vmatprep.subr.mxu0 0.0
        %1240 = vmatpush1.xpose.msra.mxu0 0.0
        %1241 = vmatprep.subr.mxu0 0.0
        %1242 = vmatpush1.xpose.msra.mxu0 0.0
        %1243 = vmatprep.subr.mxu0 0.0
        %1244 = vmatpush1.xpose.msra.mxu0 0.0
        %1245 = vmatprep.subr.mxu0 0.0
        %1246 = vmatpush1.xpose.msra.mxu0 0.0
        %1247 = vmatprep.subr.mxu0 0.0
        %1248 = vmatpush1.xpose.msra.mxu0 0.0
        %1249 = vmatprep.subr.mxu0 0.0
        %1250 = vmatpush1.xpose.msra.mxu0 0.0
        %1251 = vmatprep.subr.mxu0 0.0
        %1252 = vmatpush1.xpose.msra.mxu0 0.0
        %1253 = vmatprep.subr.mxu0 0.0
        %1254 = vmatpush1.xpose.msra.mxu0 0.0
        %1255 = vmatprep.subr.mxu0 0.0
        %1256 = vmatpush1.xpose.msra.mxu0 0.0
        %1257 = vmatprep.subr.mxu0 0.0
        %1258 = vmatpush1.xpose.msra.mxu0 0.0
        %1259 = vmatprep.subr.mxu0 0.0
        %1260 = vmatpush1.xpose.msra.mxu0 0.0
        %1261 = vmatprep.subr.mxu0 0.0
        %1262 = vmatpush1.xpose.msra.mxu0 0.0
        %1263 = vmatprep.mubr.f32.mxu0 0.0
        %1264 = vmatmul.mubr.f32.gmra.mrb[0].mxu0 %v1195
        %v1265 = vpop.f32.mrb[0].mxu0
        %v1266 = vadd.f32 0.0, %v1265
        %v1267 = vpop.f32.mrb[0].mxu0
        %1268 = vdwg.mxu0
        %v1269 = vmul.f32 %v1266, 0.25
        %v1270 = vsel %vm833, %v1269, -inf
        %1271 = vmax.xlane.f32.xlu0 %v1270
        %v1272 = vpop.xlane.xlu0 %1271
        %v1273 = vsub.f32 %v1269, %v1272
        %v1274 = vmul.f32 %v1273, 1.442695
        %v1275 = vpow.pop %v1274
        %v1276 = vsel %vm833, %v1275, 0.0
        %1277 = vadd.xlane.f32.xlu0 %v1276
        %v1278 = vpop.xlane.xlu0 %1277
        %v1279 = vrcp.pop %v1278
        %v1280 = vmul.f32 %v1275, %v1279
        %v1281 = vpack.c.bf16 %v1280, %v1280
        %1282 = vrot.lane.b32.xlu0 %v846, 80
        %v1283 = vpop.permute.xlu0 %1282
        %v1285 = vsel %vm847, %v1281, 0
        %v1288 = vand.u32 %v1283, %v854
        %1290 = vmatprep.subr.bf16.mxu0 0
        %1291 = vmatpush1.bf16.msra.mxu0 %v1288
        %1292 = vmatprep.subr.bf16.mxu0 0
        %1293 = vmatpush1.bf16.msra.mxu0 0
        %1294 = vmatprep.subr.bf16.mxu0 0
        %1295 = vmatpush1.bf16.msra.mxu0 0
        %1296 = vmatprep.subr.bf16.mxu0 0
        %1297 = vmatpush1.bf16.msra.mxu0 0
        %1298 = vmatprep.subr.bf16.mxu0 0
        %1299 = vmatpush1.bf16.msra.mxu0 0
        %1300 = vmatprep.subr.bf16.mxu0 0
        %1301 = vmatpush1.bf16.msra.mxu0 0
        %1302 = vmatprep.subr.bf16.mxu0 0
        %1303 = vmatpush1.bf16.msra.mxu0 0
        %1304 = vmatprep.subr.bf16.mxu0 0
        %1305 = vmatpush1.bf16.msra.mxu0 0
        %1306 = vmatprep.subr.bf16.mxu0 0
        %1307 = vmatpush1.bf16.msra.mxu0 0
        %1308 = vmatprep.subr.bf16.mxu0 0
        %1309 = vmatpush1.bf16.msra.mxu0 0
        %1310 = vmatprep.subr.bf16.mxu0 0
        %1311 = vmatpush1.bf16.msra.mxu0 0
        %1312 = vmatprep.subr.bf16.mxu0 0
        %1313 = vmatpush1.bf16.msra.mxu0 0
        %1314 = vmatprep.subr.bf16.mxu0 0
        %1315 = vmatpush1.bf16.msra.mxu0 0
        %1316 = vmatprep.subr.bf16.mxu0 0
        %1317 = vmatpush1.bf16.msra.mxu0 0
        %1318 = vmatprep.subr.bf16.mxu0 0
        %1319 = vmatpush1.bf16.msra.mxu0 0
        %1320 = vmatprep.subr.bf16.mxu0 0
        %1321 = vmatpush1.bf16.msra.mxu0 0
        %1322 = vmatprep.mubr.bf16.mxu0 0
        %1323 = vmatmul.mubr.bf16.gmra.mrb[0].mxu0 %v1285
        %v1324 = vpop.f32.mrb[0].mxu0
        %v1325 = vadd.f32 0.0, %v1324
        %v1326 = vpop.f32.mrb[0].mxu0
        %v1327 = vpop.f32.mrb[0].mxu0
        %v1328 = vpop.f32.mrb[0].mxu0
        %1329 = vdwg.mxu0
        %1331 = vrot.lane.b32.xlu0 %v1325, 48
        %v1332 = vpop.permute.xlu0 %1331
        %vm1334 = vcmask 520576
        %1335 = vst.msk [vmem:[#allocation2] sm:$0x1f] %vm1334, %v1332
        %v1336 = vld [vmem:[#allocation2] sm:$0x1f]
        %v1337 = vpack.c.bf16 %v1336, %v1336
        %v1338 = vld [vmem:[#allocation12] sm:$0xf]
        %v1339 = vld [vmem:[#allocation12 + $0x4] sm:$0xf]
        %v1340 = vld [vmem:[#allocation12 + $0x8] sm:$0xf]
        %v1341 = vld [vmem:[#allocation12 + $0xc] sm:$0xf]
        %v1342 = vld [vmem:[#allocation12 + $0x10] sm:$0xf]
        %v1343 = vld [vmem:[#allocation12 + $0x14] sm:$0xf]
        %v1344 = vld [vmem:[#allocation12 + $0x18] sm:$0xf]
        %v1345 = vld [vmem:[#allocation12 + $0x1c] sm:$0xf]
        %v1346 = vld [vmem:[#allocation14] sm:$0x1]
        %v1348 = vlaneseq
        %v1349 = vshrl.u32 %v1348, 7
        %v1350 = vsub.s32 0, %v1349
        %v1351 = vrot.slane %v1346, %v1350
        %v1361 = vunpack.c.l.b16 %v1338
        %v1362 = vunpack.c.l.b16 %v1339
        %v1363 = vunpack.c.l.b16 %v1340
        %v1364 = vunpack.c.l.b16 %v1341
        %v1365 = vunpack.c.l.b16 %v1342
        %v1366 = vunpack.c.l.b16 %v1343
        %v1367 = vunpack.c.l.b16 %v1344
        %v1368 = vunpack.c.l.b16 %v1345
        %v1369 = vpack.c.b16 %v1362, %v1361
        %v1370 = vpack.c.b16 %v1364, %v1363
        %v1371 = vpack.c.b16 %v1366, %v1365
        %v1372 = vpack.c.b16 %v1368, %v1367
        %v1378 = vsel %vm709, %v1337, 0
        %1380 = vmatprep.subr.bf16.mxu0 0
        %1381 = vmatpush1.bf16.msra.mxu0 %v1369
        %1382 = vmatprep.subr.bf16.mxu0 0
        %1383 = vmatpush1.bf16.msra.mxu0 %v1370
        %1384 = vmatprep.subr.bf16.mxu0 0
        %1385 = vmatpush1.bf16.msra.mxu0 %v1371
        %1386 = vmatprep.subr.bf16.mxu0 0
        %1387 = vmatpush1.bf16.msra.mxu0 %v1372
        %1388 = vmatprep.subr.bf16.mxu0 0
        %1389 = vmatpush1.bf16.msra.mxu0 0
        %1390 = vmatprep.subr.bf16.mxu0 0
        %1391 = vmatpush1.bf16.msra.mxu0 0
        %1392 = vmatprep.subr.bf16.mxu0 0
        %1393 = vmatpush1.bf16.msra.mxu0 0
        %1394 = vmatprep.subr.bf16.mxu0 0
        %1395 = vmatpush1.bf16.msra.mxu0 0
        %1396 = vmatprep.subr.bf16.mxu0 0
        %1397 = vmatpush1.bf16.msra.mxu0 0
        %1398 = vmatprep.subr.bf16.mxu0 0
        %1399 = vmatpush1.bf16.msra.mxu0 0
        %1400 = vmatprep.subr.bf16.mxu0 0
        %1401 = vmatpush1.bf16.msra.mxu0 0
        %1402 = vmatprep.subr.bf16.mxu0 0
        %1403 = vmatpush1.bf16.msra.mxu0 0
        %1404 = vmatprep.subr.bf16.mxu0 0
        %1405 = vmatpush1.bf16.msra.mxu0 0
        %1406 = vmatprep.subr.bf16.mxu0 0
        %1407 = vmatpush1.bf16.msra.mxu0 0
        %1408 = vmatprep.subr.bf16.mxu0 0
        %1409 = vmatpush1.bf16.msra.mxu0 0
        %1410 = vmatprep.subr.bf16.mxu0 0
        %1411 = vmatpush1.bf16.msra.mxu0 0
        %1412 = vmatprep.mubr.bf16.mxu0 0
        %1413 = vmatmul.mubr.bf16.gmra.mrb[0].mxu0 %v1378
        %v1414 = vpop.f32.mrb[0].mxu0
        %v1415 = vadd.f32 %v1351, %v1414
        %v1416 = vpop.f32.mrb[0].mxu0
        %v1417 = vpop.f32.mrb[0].mxu0
        %v1418 = vpop.f32.mrb[0].mxu0
        %1419 = vdwg.mxu0
        %v1420 = vadd.f32 %v616, %v1415
        %v1421 = vld [vmem:[#allocation15] sm:$0x1]
        %v1422 = vld [vmem:[#allocation17] sm:$0x1]
        %v1423 = vsel %vm619, %v1420, 0.0
        %1424 = vadd.xlane.f32.xlu0 %v1423
        %v1425 = vpop.xlane.xlu0 %1424
        %v1426 = vmul.f32 %v1425, %v623
        %v1427 = vsub.f32 %v1420, %v1426
        %v1428 = vmul.f32 %v1427, %v1427
        %v1429 = vsel %vm619, %v1428, 0.0
        %1430 = vadd.xlane.f32.xlu0 %v1429
        %v1431 = vpop.xlane.xlu0 %1430
        %v1432 = vmul.f32 %v1431, %v623
        %v1433 = vadd.f32 %v1432, 1e-05
        %v1434 = vrsqrt.pop %v1433
        %v1435 = vmul.f32 %v1427, %v1434
        %v1437 = vlaneseq
        %v1438 = vshrl.u32 %v1437, 7
        %v1439 = vsub.s32 0, %v1438
        %v1440 = vrot.slane %v1421, %v1439
        %v1442 = vmul.f32 %v1435, %v1440
        %v1444 = vlaneseq
        %v1445 = vshrl.u32 %v1444, 7
        %v1446 = vsub.s32 0, %v1445
        %v1447 = vrot.slane %v1422, %v1446
        %v1449 = vadd.f32 %v1442, %v1447
        %v1450 = vpack.c.bf16 %v1449, %v1449
        %v1451 = vld [vmem:[#allocation18] sm:$0xff]
        %v1452 = vld [vmem:[#allocation18 + $0x8] sm:$0xff]
        %v1453 = vld [vmem:[#allocation18 + $0x10] sm:$0xff]
        %v1454 = vld [vmem:[#allocation18 + $0x18] sm:$0xff]
        %v1455 = vld [vmem:[#allocation18 + $0x20] sm:$0xff]
        %v1456 = vld [vmem:[#allocation18 + $0x28] sm:$0xff]
        %v1457 = vld [vmem:[#allocation18 + $0x30] sm:$0xff]
        %v1458 = vld [vmem:[#allocation18 + $0x38] sm:$0xff]
        %v1459 = vld [vmem:[#allocation20] sm:$0x3]
        %v1461 = vlaneseq
        %v1462 = vshrl.u32 %v1461, 7
        %v1463 = vsub.s32 0, %v1462
        %v1464 = vrot.slane %v1459, %v1463
        %v1465 = vlaneseq
        %v1466 = vshrl.u32 %v1465, 7
        %v1467 = vsub.s32 1, %v1466
        %v1468 = vrot.slane %v1459, %v1467
        %v1479 = vunpack.c.l.b16 %v1451
        %v1480 = vunpack.c.h.b16 %v1451
        %v1481 = vunpack.c.l.b16 %v1452
        %v1482 = vunpack.c.h.b16 %v1452
        %v1483 = vunpack.c.l.b16 %v1453
        %v1484 = vunpack.c.h.b16 %v1453
        %v1485 = vunpack.c.l.b16 %v1454
        %v1486 = vunpack.c.h.b16 %v1454
        %v1487 = vunpack.c.l.b16 %v1455
        %v1488 = vunpack.c.h.b16 %v1455
        %v1489 = vunpack.c.l.b16 %v1456
        %v1490 = vunpack.c.h.b16 %v1456
        %v1491 = vunpack.c.l.b16 %v1457
        %v1492 = vunpack.c.h.b16 %v1457
        %v1493 = vunpack.c.l.b16 %v1458
        %v1494 = vunpack.c.h.b16 %v1458
        %v1495 = vpack.c.b16 %v1481, %v1479
        %v1496 = vpack.c.b16 %v1482, %v1480
        %v1497 = vpack.c.b16 %v1485, %v1483
        %v1498 = vpack.c.b16 %v1486, %v1484
        %v1499 = vpack.c.b16 %v1489, %v1487
        %v1500 = vpack.c.b16 %v1490, %v1488
        %v1501 = vpack.c.b16 %v1493, %v1491
        %v1502 = vpack.c.b16 %v1494, %v1492
        %v1512 = vsel %vm709, %v1450, 0
        %1514 = vmatprep.subr.bf16.mxu0 %v1496
        %1515 = vmatpush1.bf16.msra.mxu0 %v1495
        %1516 = vmatprep.subr.bf16.mxu0 %v1498
        %1517 = vmatpush1.bf16.msra.mxu0 %v1497
        %1518 = vmatprep.subr.bf16.mxu0 %v1500
        %1519 = vmatpush1.bf16.msra.mxu0 %v1499
        %1520 = vmatprep.subr.bf16.mxu0 %v1502
        %1521 = vmatpush1.bf16.msra.mxu0 %v1501
        %1522 = vmatprep.subr.bf16.mxu0 0
        %1523 = vmatpush1.bf16.msra.mxu0 0
        %1524 = vmatprep.subr.bf16.mxu0 0
        %1525 = vmatpush1.bf16.msra.mxu0 0
        %1526 = vmatprep.subr.bf16.mxu0 0
        %1527 = vmatpush1.bf16.msra.mxu0 0
        %1528 = vmatprep.subr.bf16.mxu0 0
        %1529 = vmatpush1.bf16.msra.mxu0 0
        %1530 = vmatprep.subr.bf16.mxu0 0
        %1531 = vmatpush1.bf16.msra.mxu0 0
        %1532 = vmatprep.subr.bf16.mxu0 0
        %1533 = vmatpush1.bf16.msra.mxu0 0
        %1534 = vmatprep.subr.bf16.mxu0 0
        %1535 = vmatpush1.bf16.msra.mxu0 0
        %1536 = vmatprep.subr.bf16.mxu0 0
        %1537 = vmatpush1.bf16.msra.mxu0 0
        %1538 = vmatprep.subr.bf16.mxu0 0
        %1539 = vmatpush1.bf16.msra.mxu0 0
        %1540 = vmatprep.subr.bf16.mxu0 0
        %1541 = vmatpush1.bf16.msra.mxu0 0
        %1542 = vmatprep.subr.bf16.mxu0 0
        %1543 = vmatpush1.bf16.msra.mxu0 0
        %1544 = vmatprep.subr.bf16.mxu0 0
        %1545 = vmatpush1.bf16.msra.mxu0 0
        %1546 = vmatprep.mubr.bf16.mxu0 0
        %1547 = vmatmul.mubr.bf16.gmra.mrb[0].mxu0 %v1512
        %v1548 = vpop.f32.mrb[0].mxu0
        %v1549 = vadd.f32 %v1464, %v1548
        %v1550 = vpop.f32.mrb[0].mxu0
        %v1551 = vadd.f32 %v1468, %v1550
        %v1552 = vpop.f32.mrb[0].mxu0
        %v1553 = vpop.f32.mrb[0].mxu0
        %1554 = vdwg.mxu0
        %v1555 = vmul.f32 %v1549, 1.702
        %v1556 = vmul.f32 %v1551, 1.702
        %v1557 = vxor.u32 %v1555, 2147483648
        %v1558 = vxor.u32 %v1556, 2147483648
        %v1559 = vmul.f32 %v1557, 1.442695
        %v1560 = vpow.pop %v1559
        %v1561 = vmul.f32 %v1558, 1.442695
        %v1562 = vpow.pop %v1561
        %v1563 = vadd.f32 %v1560, 1.0
        %v1564 = vadd.f32 %v1562, 1.0
        %v1565 = vrcp.pop %v1563
        %v1566 = vmul.f32 1.0, %v1565
        %v1567 = vrcp.pop %v1564
        %v1568 = vmul.f32 1.0, %v1567
        %v1569 = vmul.f32 %v1549, %v1566
        %v1570 = vmul.f32 %v1551, %v1568
        %v1571 = vpack.c.bf16 %v1569, %v1569
        %v1572 = vpack.c.bf16 %v1570, %v1570
        %v1573 = vld [vmem:[#allocation21] sm:$0xf]
        %v1574 = vld [vmem:[#allocation21 + $0x4] sm:$0xf]
        %v1575 = vld [vmem:[#allocation21 + $0x8] sm:$0xf]
        %v1576 = vld [vmem:[#allocation21 + $0xc] sm:$0xf]
        %v1577 = vld [vmem:[#allocation21 + $0x10] sm:$0xf]
        %v1578 = vld [vmem:[#allocation21 + $0x14] sm:$0xf]
        %v1579 = vld [vmem:[#allocation21 + $0x18] sm:$0xf]
        %v1580 = vld [vmem:[#allocation21 + $0x1c] sm:$0xf]
        %v1581 = vld [vmem:[#allocation21 + $0x20] sm:$0xf]
        %v1582 = vld [vmem:[#allocation21 + $0x24] sm:$0xf]
        %v1583 = vld [vmem:[#allocation21 + $0x28] sm:$0xf]
        %v1584 = vld [vmem:[#allocation21 + $0x2c] sm:$0xf]
        %v1585 = vld [vmem:[#allocation21 + $0x30] sm:$0xf]
        %v1586 = vld [vmem:[#allocation21 + $0x34] sm:$0xf]
        %v1587 = vld [vmem:[#allocation21 + $0x38] sm:$0xf]
        %v1588 = vld [vmem:[#allocation21 + $0x3c] sm:$0xf]
        %v1589 = vld [vmem:[#allocation21 + $0x40] sm:$0xf]
        %v1590 = vld [vmem:[#allocation21 + $0x44] sm:$0xf]
        %v1591 = vld [vmem:[#allocation21 + $0x48] sm:$0xf]
        %v1592 = vld [vmem:[#allocation21 + $0x4c] sm:$0xf]
        %v1593 = vld [vmem:[#allocation21 + $0x50] sm:$0xf]
        %v1594 = vld [vmem:[#allocation21 + $0x54] sm:$0xf]
        %v1595 = vld [vmem:[#allocation21 + $0x58] sm:$0xf]
        %v1596 = vld [vmem:[#allocation21 + $0x5c] sm:$0xf]
        %v1597 = vld [vmem:[#allocation21 + $0x60] sm:$0xf]
        %v1598 = vld [vmem:[#allocation21 + $0x64] sm:$0xf]
        %v1599 = vld [vmem:[#allocation21 + $0x68] sm:$0xf]
        %v1600 = vld [vmem:[#allocation21 + $0x6c] sm:$0xf]
        %v1601 = vld [vmem:[#allocation21 + $0x70] sm:$0xf]
        %v1602 = vld [vmem:[#allocation21 + $0x74] sm:$0xf]
        %v1603 = vld [vmem:[#allocation21 + $0x78] sm:$0xf]
        %v1604 = vld [vmem:[#allocation21 + $0x7c] sm:$0xf]
        %v1605 = vld [vmem:[#allocation23] sm:$0x1]
        %v1607 = vlaneseq
        %v1608 = vshrl.u32 %v1607, 7
        %v1609 = vsub.s32 0, %v1608
        %v1610 = vrot.slane %v1605, %v1609
        %v1644 = vunpack.c.l.b16 %v1573
        %v1645 = vunpack.c.l.b16 %v1574
        %v1646 = vunpack.c.l.b16 %v1575
        %v1647 = vunpack.c.l.b16 %v1576
        %v1648 = vunpack.c.l.b16 %v1577
        %v1649 = vunpack.c.l.b16 %v1578
        %v1650 = vunpack.c.l.b16 %v1579
        %v1651 = vunpack.c.l.b16 %v1580
        %v1652 = vunpack.c.l.b16 %v1581
        %v1653 = vunpack.c.l.b16 %v1582
        %v1654 = vunpack.c.l.b16 %v1583
        %v1655 = vunpack.c.l.b16 %v1584
        %v1656 = vunpack.c.l.b16 %v1585
        %v1657 = vunpack.c.l.b16 %v1586
        %v1658 = vunpack.c.l.b16 %v1587
        %v1659 = vunpack.c.l.b16 %v1588
        %v1660 = vunpack.c.l.b16 %v1589
        %v1661 = vunpack.c.l.b16 %v1590
        %v1662 = vunpack.c.l.b16 %v1591
        %v1663 = vunpack.c.l.b16 %v1592
        %v1664 = vunpack.c.l.b16 %v1593
        %v1665 = vunpack.c.l.b16 %v1594
        %v1666 = vunpack.c.l.b16 %v1595
        %v1667 = vunpack.c.l.b16 %v1596
        %v1668 = vunpack.c.l.b16 %v1597
        %v1669 = vunpack.c.l.b16 %v1598
        %v1670 = vunpack.c.l.b16 %v1599
        %v1671 = vunpack.c.l.b16 %v1600
        %v1672 = vunpack.c.l.b16 %v1601
        %v1673 = vunpack.c.l.b16 %v1602
        %v1674 = vunpack.c.l.b16 %v1603
        %v1675 = vunpack.c.l.b16 %v1604
        %v1676 = vpack.c.b16 %v1645, %v1644
        %v1677 = vpack.c.b16 %v1647, %v1646
        %v1678 = vpack.c.b16 %v1649, %v1648
        %v1679 = vpack.c.b16 %v1651, %v1650
        %v1680 = vpack.c.b16 %v1653, %v1652
        %v1681 = vpack.c.b16 %v1655, %v1654
        %v1682 = vpack.c.b16 %v1657, %v1656
        %v1683 = vpack.c.b16 %v1659, %v1658
        %v1684 = vpack.c.b16 %v1661, %v1660
        %v1685 = vpack.c.b16 %v1663, %v1662
        %v1686 = vpack.c.b16 %v1665, %v1664
        %v1687 = vpack.c.b16 %v1667, %v1666
        %v1688 = vpack.c.b16 %v1669, %v1668
        %v1689 = vpack.c.b16 %v1671, %v1670
        %v1690 = vpack.c.b16 %v1673, %v1672
        %v1691 = vpack.c.b16 %v1675, %v1674
        %1708 = vmatprep.subr.bf16.mxu0 0
        %1709 = vmatpush1.bf16.msra.mxu0 %v1676
        %1710 = vmatprep.subr.bf16.mxu0 0
        %1711 = vmatpush1.bf16.msra.mxu0 %v1677
        %1712 = vmatprep.subr.bf16.mxu0 0
        %1713 = vmatpush1.bf16.msra.mxu0 %v1678
        %1714 = vmatprep.subr.bf16.mxu0 0
        %1715 = vmatpush1.bf16.msra.mxu0 %v1679
        %1716 = vmatprep.subr.bf16.mxu0 0
        %1717 = vmatpush1.bf16.msra.mxu0 %v1680
        %1718 = vmatprep.subr.bf16.mxu0 0
        %1719 = vmatpush1.bf16.msra.mxu0 %v1681
        %1720 = vmatprep.subr.bf16.mxu0 0
        %1721 = vmatpush1.bf16.msra.mxu0 %v1682
        %1722 = vmatprep.subr.bf16.mxu0 0
        %1723 = vmatpush1.bf16.msra.mxu0 %v1683
        %1724 = vmatprep.subr.bf16.mxu0 0
        %1725 = vmatpush1.bf16.msra.mxu0 %v1684
        %1726 = vmatprep.subr.bf16.mxu0 0
        %1727 = vmatpush1.bf16.msra.mxu0 %v1685
        %1728 = vmatprep.subr.bf16.mxu0 0
        %1729 = vmatpush1.bf16.msra.mxu0 %v1686
        %1730 = vmatprep.subr.bf16.mxu0 0
        %1731 = vmatpush1.bf16.msra.mxu0 %v1687
        %1732 = vmatprep.subr.bf16.mxu0 0
        %1733 = vmatpush1.bf16.msra.mxu0 %v1688
        %1734 = vmatprep.subr.bf16.mxu0 0
        %1735 = vmatpush1.bf16.msra.mxu0 %v1689
        %1736 = vmatprep.subr.bf16.mxu0 0
        %1737 = vmatpush1.bf16.msra.mxu0 %v1690
        %1738 = vmatprep.subr.bf16.mxu0 0
        %1739 = vmatpush1.bf16.msra.mxu0 %v1691
        %1740 = vmatprep.mubr.bf16.mxu0 %v1572
        %1741 = vmatmul.mubr.bf16.gmra.mrb[0].mxu0 %v1571
        %v1742 = vpop.f32.mrb[0].mxu0
        %v1743 = vadd.f32 %v1610, %v1742
        %v1744 = vpop.f32.mrb[0].mxu0
        %v1745 = vpop.f32.mrb[0].mxu0
        %v1746 = vpop.f32.mrb[0].mxu0
        %1747 = vdwg.mxu0
        %v1748 = vadd.f32 %v1420, %v1743
        %v1749 = vpack.c.bf16 %v1748, %v1748
        %vm1750 = vcmask 518144
        %vm1751 = vsmask.f32 2304
        %vm1752 = vmand %vm1750, %vm1751
        %v1753 = vld [vmem:[%s613] sm:$0x7]
        %v1754 = vsel %vm1752, %v1749, %v1753
        %1755 = vst [vmem:[%s613] sm:$0x7] %v1754
        %s1756 = sand.u32 %s322, 1
        %s1757 = scalar_lea.sflag [#allocation5], %s1756
        %s1758 = sand.u32 %s322, 1
        %s1759 = smul.addr %s1758, 4
        %s1760 = scalar_lea.vmem [#allocation24], %s1759
        // Predicated region
        $region125: #{custom_clip_forward.11} parent=71 // pred_check
          %p1761 = pneg %p332
        $region126: #{custom_clip_forward.11} parent=71 // pred_check_branch
          %1763 = sbr.rel (%p1761) target = $region128
        $region127: #{custom_clip_forward.11} parent=71 // pred_region
          %s1765 = ssub.s32 64, 64
          %1766 = vsyncadd %s1757, %s1765
          %s1767 = smul.addr %s36, 64
          %s1768 = scalar_lea.hbm %s13, %s1767
          %s1770 = sshll.u32 %s1760, 4
          %s1771 = int_to_ptr.vmem [resolvable:$true] %s1770
          %1773 = dma.vmem_to_hbm [thread:$0]  %s1771, 64, %s1768, %s1757
        $region128: #{custom_clip_forward.11} parent=71 // pred_fallthru
          _
      $region72: #{custom_clip_forward.11} parent=5 // pred_fallthru
        _
      %p1774 = scmp.le.s32.totalorder 2, %s31
      // Predicated region
      $region129: #{custom_clip_forward.11} parent=5 // pred_check
        %p1775 = pneg %p1774
      $region130: #{custom_clip_forward.11} parent=5 // pred_check_branch
        %1777 = sbr.rel (%p1775) target = $region132
      $region131: #{custom_clip_forward.11} parent=5 // pred_region
        %s1778 = ssub.s32 %s31, 2
        // Predicated region
        $region133: #{custom_clip_forward.11} parent=131 // pred_check
          %p1779 = pneg %p338
        $region134: #{custom_clip_forward.11} parent=131 // pred_check_branch
          %1781 = sbr.rel (%p1779) target = $region136
        $region135: #{custom_clip_forward.11} parent=131 // pred_region
          %s1782 = sand.u32 %s323, 1
          %s1783 = scalar_lea.sflag [#allocation5], %s1782
          %s1784 = sand.u32 %s323, 1
          %s1785 = smul.addr %s1784, 4
          %s1786 = scalar_lea.vmem [#allocation24], %s1785
          %1787 = dma.done %s1783, 64
        $region136: #{custom_clip_forward.11} parent=131 // pred_fallthru
          _
      $region132: #{custom_clip_forward.11} parent=5 // pred_fallthru
        _
    $region6: #{custom_clip_forward.11} parent=1 // loop_footer
      %s35 = sadd.s32 1, %s31
    $region7: #{custom_clip_forward.11} parent=1 // loop_footer_branch
      %30 = sbr.rel target = $region3
    $region8: #{custom_clip_forward.11} parent=1 // loop_exit
      _
    %1788 = vsyncpa [#allocation4], 1
    %s1789 = scalar_lea.sflag [#allocation4], 1
    %1790 = vsyncpa %s1789, 1
    %1791 = vsyncpa [#allocation7], 1
    %1792 = vsyncpa [#allocation10], 1
    %1793 = vsyncpa [#allocation13], 1
    %1794 = vsyncpa [#allocation16], 1
    %1795 = vsyncpa [#allocation19], 1
    %1796 = vsyncpa [#allocation22], 1
    %1797 = vsyncpa [#allocation5], 1
    %s1798 = scalar_lea.sflag [#allocation5], 1
    %1799 = vsyncpa %s1798, 1

// kernel: custom_clip_forward.17
$region0: #{custom_clip_forward.17}
  #allocation0 [shape = 'u32[]', space=smem, size = 0x4, offset = 0x4, fixed_abs, tag = 'smem constant byte address 0x4 - core index']
  #allocation1 [shape = 'u32[144,128]{1,0:T(1,128)}', space=vmem, size = 0x12000, scoped, tag = 'internal scratch']
  #allocation2 [shape = 'f32[1,1]{1,0:T(1,128)S(6)}', space=smem, size = 0x200, scoped, tag = 'scoped memory for custom_clip_forward.17']
  %s0 = inlined_call_operand.<no memory space> [shape: f32[1,1], index: 0, kind: input, shape index: {}]
  %s1 = inlined_call_operand.vmem [shape: f32[2,64], index: 1, kind: input, shape index: {}]
  %s2 = inlined_call_operand.vmem [shape: f32[12,64], index: 2, kind: input, shape index: {}]
  %s3 = inlined_call_operand.hbm [shape: f32[2,6], index: 3, kind: output, shape index: {0}]
  %s4 = inlined_call_operand.vmem [shape: f32[1,6], index: 4, kind: output, shape index: {1}]
  %5 = xla_tuple %s3, %s4
  %s6 = sld [smem:[#allocation0]]
  $region30: #{custom_clip_forward.17} parent=0
    _
  %s8 = ssub.s32 1, %s6
  %s9 = scalar_select 0, %s8, %s6
  %10 = sst [smem:[#allocation2]] %s0
  $region1: #{custom_clip_forward.17} parent=0
    #allocation3 [shape = 'u8[1024]{0}', space=vmem, size = 0x400, scoped, tag = 'output window, operand 0, single buffered']
    #allocation4 [shape = 's32[1]{0}', space=sflag, size = 0x4, scoped, tag = 'scoped memory for custom_clip_forward.17']
    %11 = vsyncpa [#allocation4], 0
    // Predicated region
    $region2: #{custom_clip_forward.17} parent=1 // pred_check
      _
    $region3: #{custom_clip_forward.17} parent=1 // pred_check_branch
      %13 = sbr.rel (0) target = $region5
    $region4: #{custom_clip_forward.17} parent=1 // pred_region
      _
    $region5: #{custom_clip_forward.17} parent=1 // pred_fallthru
      _
    // Predicated region
    $region6: #{custom_clip_forward.17} parent=1 // pred_check
      _
    $region7: #{custom_clip_forward.17} parent=1 // pred_check_branch
      %15 = sbr.rel (0) target = $region9
    $region8: #{custom_clip_forward.17} parent=1 // pred_region
      _
    $region9: #{custom_clip_forward.17} parent=1 // pred_fallthru
      _
    // Predicated region
    $region10: #{custom_clip_forward.17} parent=1 // pred_check
      _
    $region11: #{custom_clip_forward.17} parent=1 // pred_check_branch
      %17 = sbr.rel (0) target = $region13
    $region12: #{custom_clip_forward.17} parent=1 // pred_region
      _
    $region13: #{custom_clip_forward.17} parent=1 // pred_fallthru
      _
    %s19 = sld [smem:[#allocation2]]
    %v20 = vld [vmem:[%s1] sm:$0x3]
    %v21 = vpack.c.bf16 %v20, %v20
    %v22 = vld [vmem:[%s2] sm:$0xff]
    %v23 = vld [vmem:[%s2 + $0x8] sm:$0xf]
    %v24 = vpack.c.bf16 %v22, %v22
    %v25 = vpack.c.bf16 %v23, %v22
    %v27 = vrot.slane %v25, 3
    %vm28 = vcmask 523264
    %v30 = vsel %vm28, %v21, 0
    %v33 = vsel %vm28, %v27, 0
    %35 = vmatprep.subr.bf16.mxu0 0
    %36 = vmatpush1.bf16.xpose.msra.mxu0 %v33
    %37 = vmatprep.subr.bf16.mxu0 0
    %38 = vmatpush1.bf16.xpose.msra.mxu0 0
    %39 = vmatprep.subr.bf16.mxu0 0
    %40 = vmatpush1.bf16.xpose.msra.mxu0 0
    %41 = vmatprep.subr.bf16.mxu0 0
    %42 = vmatpush1.bf16.xpose.msra.mxu0 0
    %43 = vmatprep.subr.bf16.mxu0 0
    %44 = vmatpush1.bf16.xpose.msra.mxu0 0
    %45 = vmatprep.subr.bf16.mxu0 0
    %46 = vmatpush1.bf16.xpose.msra.mxu0 0
    %47 = vmatprep.subr.bf16.mxu0 0
    %48 = vmatpush1.bf16.xpose.msra.mxu0 0
    %49 = vmatprep.subr.bf16.mxu0 0
    %50 = vmatpush1.bf16.xpose.msra.mxu0 0
    %51 = vmatprep.subr.bf16.mxu0 0
    %52 = vmatpush1.bf16.xpose.msra.mxu0 0
    %53 = vmatprep.subr.bf16.mxu0 0
    %54 = vmatpush1.bf16.xpose.msra.mxu0 0
    %55 = vmatprep.subr.bf16.mxu0 0
    %56 = vmatpush1.bf16.xpose.msra.mxu0 0
    %57 = vmatprep.subr.bf16.mxu0 0
    %58 = vmatpush1.bf16.xpose.msra.mxu0 0
    %59 = vmatprep.subr.bf16.mxu0 0
    %60 = vmatpush1.bf16.xpose.msra.mxu0 0
    %61 = vmatprep.subr.bf16.mxu0 0
    %62 = vmatpush1.bf16.xpose.msra.mxu0 0
    %63 = vmatprep.subr.bf16.mxu0 0
    %64 = vmatpush1.bf16.xpose.msra.mxu0 0
    %65 = vmatprep.subr.bf16.mxu0 0
    %66 = vmatpush1.bf16.xpose.msra.mxu0 0
    %67 = vmatprep.mubr.bf16.mxu0 0
    %68 = vmatmul.mubr.bf16.gmra.mrb[0].mxu0 %v30
    %v69 = vpop.f32.mrb[0].mxu0
    %v70 = vadd.f32 0.0, %v69
    %v71 = vpop.f32.mrb[0].mxu0
    %v72 = vpop.f32.mrb[0].mxu0
    %v73 = vpop.f32.mrb[0].mxu0
    %74 = vdwg.mxu0
    %v76 = vsel %vm28, %v24, 0
    %78 = vmatprep.subr.bf16.mxu0 0
    %79 = vmatpush1.bf16.xpose.msra.mxu0 %v76
    %80 = vmatprep.subr.bf16.mxu0 0
    %81 = vmatpush1.bf16.xpose.msra.mxu0 0
    %82 = vmatprep.subr.bf16.mxu0 0
    %83 = vmatpush1.bf16.xpose.msra.mxu0 0
    %84 = vmatprep.subr.bf16.mxu0 0
    %85 = vmatpush1.bf16.xpose.msra.mxu0 0
    %86 = vmatprep.subr.bf16.mxu0 0
    %87 = vmatpush1.bf16.xpose.msra.mxu0 0
    %88 = vmatprep.subr.bf16.mxu0 0
    %89 = vmatpush1.bf16.xpose.msra.mxu0 0
    %90 = vmatprep.subr.bf16.mxu0 0
    %91 = vmatpush1.bf16.xpose.msra.mxu0 0
    %92 = vmatprep.subr.bf16.mxu0 0
    %93 = vmatpush1.bf16.xpose.msra.mxu0 0
    %94 = vmatprep.subr.bf16.mxu0 0
    %95 = vmatpush1.bf16.xpose.msra.mxu0 0
    %96 = vmatprep.subr.bf16.mxu0 0
    %97 = vmatpush1.bf16.xpose.msra.mxu0 0
    %98 = vmatprep.subr.bf16.mxu0 0
    %99 = vmatpush1.bf16.xpose.msra.mxu0 0
    %100 = vmatprep.subr.bf16.mxu0 0
    %101 = vmatpush1.bf16.xpose.msra.mxu0 0
    %102 = vmatprep.subr.bf16.mxu0 0
    %103 = vmatpush1.bf16.xpose.msra.mxu0 0
    %104 = vmatprep.subr.bf16.mxu0 0
    %105 = vmatpush1.bf16.xpose.msra.mxu0 0
    %106 = vmatprep.subr.bf16.mxu0 0
    %107 = vmatpush1.bf16.xpose.msra.mxu0 0
    %108 = vmatprep.subr.bf16.mxu0 0
    %109 = vmatpush1.bf16.xpose.msra.mxu0 0
    %110 = vmatprep.mubr.bf16.mxu0 0
    %111 = vmatmul.mubr.bf16.gmra.mrb[0].mxu0 %v30
    %v112 = vpop.f32.mrb[0].mxu0
    %v113 = vadd.f32 %v70, %v112
    %v114 = vpop.f32.mrb[0].mxu0
    %v115 = vpop.f32.mrb[0].mxu0
    %v116 = vpop.f32.mrb[0].mxu0
    %117 = vdwg.mxu0
    %v118 = vrcp.pop 2.0
    %s119 = vtos %v118
    %s120 = smul.f32 %s19, %s119
    %v121 = vstv %s120
    %v122 = vmul.f32 %v113, %v121
    %vm123 = vcmask 41984
    %124 = vst.msk [vmem:[#allocation3] sm:$0x3] %vm123, %v122
    %vm127 = vcmask 1041408
    %v128 = vrot.slane %v22, 6
    %v129 = vrot.slane %v23, 6
    %v130 = vsel %vm127, %v128, %v129
    %v132 = vmul.f32 %v22, %v130
    %vm133 = vcmask 521216
    %v134 = vsel %vm133, %v132, 0.0
    %135 = vadd.xlane.f32.xlu0 %v134
    %v136 = vpop.xlane.xlu0 %135
    %v137 = vmul.f32 %v22, %v22
    %v138 = vsel %vm133, %v137, 0.0
    %139 = vadd.xlane.f32.xlu0 %v138
    %v140 = vpop.xlane.xlu0 %139
    %v141 = vmul.f32 %v23, %v23
    %vm142 = vcmask 523270
    %v143 = vsel %vm142, %v137, 0.0
    %144 = vadd.xlane.f32.xlu0 %v143
    %v145 = vpop.xlane.xlu0 %144
    %vm146 = vcmask 519168
    %v147 = vsel %vm146, %v141, 0.0
    %148 = vadd.xlane.f32.xlu0 %v147
    %v149 = vpop.xlane.xlu0 %148
    %v152 = vrot.slane %v145, 6
    %v153 = vrot.slane %v149, 6
    %v154 = vsel %vm127, %v152, %v153
    %v156 = vmul.f32 %v140, %v154
    %v157 = vmax.f32 %v156, 1e-12
    %v158 = vrsqrt.pop %v157
    %v159 = vmul.f32 %v136, %v158
    %v160 = vadd.f32 %v159, 0.0
    %162 = vset.pattern.permute.xlu0 0
    %163 = vperm.xlu0 %162, %v160
    %v164 = vpop.permute.xlu0 %163
    %v165 = vlaneseq
    %v166 = vand.u32 %v165, 127
    %v167 = vlaneseq
    %v168 = vshrl.u32 %v167, 7
    %v169 = vsub.s32 %v166, %v168
    %v170 = vrot.slane %v164, %v169
    %vm172 = vcmask 40960
    %173 = vst.msk [vmem:[%s4] sm:$0x1] %vm172, %v170
    // Predicated region
    $region14: #{custom_clip_forward.17} parent=1 // pred_check
      _
    $region15: #{custom_clip_forward.17} parent=1 // pred_check_branch
      %175 = sbr.rel (0) target = $region17
    $region16: #{custom_clip_forward.17} parent=1 // pred_region
      %s177 = ssub.s32 32, 32
      %178 = vsyncadd [#allocation4], %s177
      %s180 = sshll.u32 [#allocation3], 4
      %s181 = int_to_ptr.vmem [resolvable:$true] %s180
      %183 = dma.vmem_to_hbm [thread:$0]  %s181, 32, %s3, [#allocation4]
    $region17: #{custom_clip_forward.17} parent=1 // pred_fallthru
      _
    // Predicated region
    $region18: #{custom_clip_forward.17} parent=1 // pred_check
      _
    $region19: #{custom_clip_forward.17} parent=1 // pred_check_branch
      %185 = sbr.rel (0) target = $region21
    $region20: #{custom_clip_forward.17} parent=1 // pred_region
      _
    $region21: #{custom_clip_forward.17} parent=1 // pred_fallthru
      _
    // Predicated region
    $region22: #{custom_clip_forward.17} parent=1 // pred_check
      _
    $region23: #{custom_clip_forward.17} parent=1 // pred_check_branch
      %187 = sbr.rel (0) target = $region25
    $region24: #{custom_clip_forward.17} parent=1 // pred_region
      %188 = dma.done [#allocation4], 32
    $region25: #{custom_clip_forward.17} parent=1 // pred_fallthru
      _
    // Predicated region
    $region26: #{custom_clip_forward.17} parent=1 // pred_check
      _
    $region27: #{custom_clip_forward.17} parent=1 // pred_check_branch
      %190 = sbr.rel (0) target = $region29
    $region28: #{custom_clip_forward.17} parent=1 // pred_region
      _
    $region29: #{custom_clip_forward.17} parent=1 // pred_fallthru
      _
    %191 = vsyncpa [#allocation4], 1

// kernel: custom_clip_forward.16
$region0: #{custom_clip_forward.16}
  #allocation0 [shape = 'u32[]', space=smem, size = 0x4, offset = 0x4, fixed_abs, tag = 'smem constant byte address 0x4 - core index']
  #allocation1 [shape = 'u32[144,128]{1,0:T(1,128)}', space=vmem, size = 0x12000, scoped, tag = 'internal scratch']
  %s0 = inlined_call_operand.vmem [shape: bf16[12,64], index: 0, kind: input, shape index: {}]
  %s1 = inlined_call_operand.vmem [shape: f32[1,64], index: 1, kind: input, shape index: {}]
  %s2 = inlined_call_operand.vmem [shape: f32[1,64], index: 2, kind: input, shape index: {}]
  %s3 = inlined_call_operand.vmem [shape: bf16[64,64], index: 3, kind: input, shape index: {}]
  %s4 = inlined_call_operand.vmem [shape: f32[12,64], index: 4, kind: output, shape index: {}]
  %s5 = sld [smem:[#allocation0]]
  $region26: #{custom_clip_forward.16} parent=0
    _
  %s7 = ssub.s32 1, %s5
  %s8 = scalar_select 0, %s7, %s5
  // Predicated region
  $region2: #{custom_clip_forward.16} parent=0 // pred_check
    _
  $region3: #{custom_clip_forward.16} parent=0 // pred_check_branch
    %10 = sbr.rel (0) target = $region5
  $region4: #{custom_clip_forward.16} parent=0 // pred_region
    _
  $region5: #{custom_clip_forward.16} parent=0 // pred_fallthru
    _
  // Predicated region
  $region6: #{custom_clip_forward.16} parent=0 // pred_check
    _
  $region7: #{custom_clip_forward.16} parent=0 // pred_check_branch
    %12 = sbr.rel (0) target = $region9
  $region8: #{custom_clip_forward.16} parent=0 // pred_region
    _
  $region9: #{custom_clip_forward.16} parent=0 // pred_fallthru
    _
  // Predicated region
  $region10: #{custom_clip_forward.16} parent=0 // pred_check
    _
  $region11: #{custom_clip_forward.16} parent=0 // pred_check_branch
    %14 = sbr.rel (0) target = $region13
  $region12: #{custom_clip_forward.16} parent=0 // pred_region
    _
  $region13: #{custom_clip_forward.16} parent=0 // pred_fallthru
    _
  // Predicated region
  $region14: #{custom_clip_forward.16} parent=0 // pred_check
    _
  $region15: #{custom_clip_forward.16} parent=0 // pred_check_branch
    %16 = sbr.rel (0) target = $region17
  $region16: #{custom_clip_forward.16} parent=0 // pred_region
    _
  $region17: #{custom_clip_forward.16} parent=0 // pred_fallthru
    _
  %v18 = vld [vmem:[%s0] sm:$0xf]
  %v19 = vld [vmem:[%s0 + $0x4] sm:$0x3]
  %v20 = vunpack.c.l.bf16 %v18
  %v21 = vunpack.c.l.bf16 %v19
  %v22 = vld [vmem:[%s1] sm:$0x1]
  %v23 = vld [vmem:[%s2] sm:$0x1]
  %vm24 = vcmask 523264
  %v25 = vsel %vm24, %v20, 0.0
  %26 = vadd.xlane.f32.xlu0 %v25
  %v27 = vpop.xlane.xlu0 %26
  %vm28 = vcmask 519168
  %v29 = vsel %vm28, %v21, 0.0
  %30 = vadd.xlane.f32.xlu0 %v29
  %v31 = vpop.xlane.xlu0 %30
  %v32 = vrcp.pop 64.0
  %v33 = vmul.f32 %v27, %v32
  %v34 = vmul.f32 %v31, %v32
  %v35 = vsub.f32 %v20, %v33
  %v36 = vsub.f32 %v21, %v34
  %v37 = vmul.f32 %v35, %v35
  %v38 = vmul.f32 %v36, %v36
  %v39 = vsel %vm24, %v37, 0.0
  %40 = vadd.xlane.f32.xlu0 %v39
  %v41 = vpop.xlane.xlu0 %40
  %v42 = vsel %vm28, %v38, 0.0
  %43 = vadd.xlane.f32.xlu0 %v42
  %v44 = vpop.xlane.xlu0 %43
  %v45 = vmul.f32 %v41, %v32
  %v46 = vmul.f32 %v44, %v32
  %v47 = vadd.f32 %v45, 1e-05
  %v48 = vadd.f32 %v46, 1e-05
  %v49 = vrsqrt.pop %v47
  %v50 = vrsqrt.pop %v48
  %v51 = vmul.f32 %v35, %v49
  %v52 = vmul.f32 %v36, %v50
  %v54 = vlaneseq
  %v55 = vshrl.u32 %v54, 7
  %v56 = vsub.s32 0, %v55
  %v57 = vrot.slane %v22, %v56
  %v59 = vmul.f32 %v51, %v57
  %v60 = vmul.f32 %v52, %v57
  %v62 = vlaneseq
  %v63 = vshrl.u32 %v62, 7
  %v64 = vsub.s32 0, %v63
  %v65 = vrot.slane %v23, %v64
  %v67 = vadd.f32 %v59, %v65
  %v68 = vadd.f32 %v60, %v65
  %v69 = vpack.c.bf16 %v68, %v67
  %v70 = vld [vmem:[%s3] sm:$0xf]
  %v71 = vld [vmem:[%s3 + $0x4] sm:$0xf]
  %v72 = vld [vmem:[%s3 + $0x8] sm:$0xf]
  %v73 = vld [vmem:[%s3 + $0xc] sm:$0xf]
  %v74 = vld [vmem:[%s3 + $0x10] sm:$0xf]
  %v75 = vld [vmem:[%s3 + $0x14] sm:$0xf]
  %v76 = vld [vmem:[%s3 + $0x18] sm:$0xf]
  %v77 = vld [vmem:[%s3 + $0x1c] sm:$0xf]
  %v86 = vunpack.c.l.b16 %v70
  %v87 = vunpack.c.l.b16 %v71
  %v88 = vunpack.c.l.b16 %v72
  %v89 = vunpack.c.l.b16 %v73
  %v90 = vunpack.c.l.b16 %v74
  %v91 = vunpack.c.l.b16 %v75
  %v92 = vunpack.c.l.b16 %v76
  %v93 = vunpack.c.l.b16 %v77
  %v94 = vpack.c.b16 %v87, %v86
  %v95 = vpack.c.b16 %v89, %v88
  %v96 = vpack.c.b16 %v91, %v90
  %v97 = vpack.c.b16 %v93, %v92
  %v103 = vsel %vm24, %v69, 0
  %105 = vmatprep.subr.bf16.mxu0 0
  %106 = vmatpush1.bf16.msra.mxu0 %v94
  %107 = vmatprep.subr.bf16.mxu0 0
  %108 = vmatpush1.bf16.msra.mxu0 %v95
  %109 = vmatprep.subr.bf16.mxu0 0
  %110 = vmatpush1.bf16.msra.mxu0 %v96
  %111 = vmatprep.subr.bf16.mxu0 0
  %112 = vmatpush1.bf16.msra.mxu0 %v97
  %113 = vmatprep.subr.bf16.mxu0 0
  %114 = vmatpush1.bf16.msra.mxu0 0
  %115 = vmatprep.subr.bf16.mxu0 0
  %116 = vmatpush1.bf16.msra.mxu0 0
  %117 = vmatprep.subr.bf16.mxu0 0
  %118 = vmatpush1.bf16.msra.mxu0 0
  %119 = vmatprep.subr.bf16.mxu0 0
  %120 = vmatpush1.bf16.msra.mxu0 0
  %121 = vmatprep.subr.bf16.mxu0 0
  %122 = vmatpush1.bf16.msra.mxu0 0
  %123 = vmatprep.subr.bf16.mxu0 0
  %124 = vmatpush1.bf16.msra.mxu0 0
  %125 = vmatprep.subr.bf16.mxu0 0
  %126 = vmatpush1.bf16.msra.mxu0 0
  %127 = vmatprep.subr.bf16.mxu0 0
  %128 = vmatpush1.bf16.msra.mxu0 0
  %129 = vmatprep.subr.bf16.mxu0 0
  %130 = vmatpush1.bf16.msra.mxu0 0
  %131 = vmatprep.subr.bf16.mxu0 0
  %132 = vmatpush1.bf16.msra.mxu0 0
  %133 = vmatprep.subr.bf16.mxu0 0
  %134 = vmatpush1.bf16.msra.mxu0 0
  %135 = vmatprep.subr.bf16.mxu0 0
  %136 = vmatpush1.bf16.msra.mxu0 0
  %137 = vmatprep.mubr.bf16.mxu0 0
  %138 = vmatmul.mubr.bf16.gmra.mrb[0].mxu0 %v103
  %v139 = vpop.f32.mrb[0].mxu0
  %v140 = vadd.f32 0.0, %v139
  %v141 = vpop.f32.mrb[0].mxu0
  %v142 = vpop.f32.mrb[0].mxu0
  %v143 = vadd.f32 0.0, %v142
  %v144 = vpop.f32.mrb[0].mxu0
  %145 = vdwg.mxu0
  %v146 = vmul.f32 %v140, %v140
  %v147 = vmul.f32 %v143, %v143
  %v148 = vsel %vm24, %v146, 0.0
  %149 = vadd.xlane.f32.xlu0 %v148
  %v150 = vpop.xlane.xlu0 %149
  %v151 = vsel %vm28, %v147, 0.0
  %152 = vadd.xlane.f32.xlu0 %v151
  %v153 = vpop.xlane.xlu0 %152
  %v154 = vmax.f32 %v150, 1e-24
  %v155 = vmax.f32 %v153, 1e-24
  %v156 = vrsqrt.pop %v154
  %v157 = vrsqrt.pop %v155
  %v158 = vmul.f32 %v140, %v156
  %v159 = vmul.f32 %v143, %v157
  %160 = vst.msk [vmem:[%s4] sm:$0xff] %vm24, %v158
  %161 = vst.msk [vmem:[%s4 + $0x8] sm:$0xf] %vm28, %v159
  // Predicated region
  $region18: #{custom_clip_forward.16} parent=0 // pred_check
    _
  $region19: #{custom_clip_forward.16} parent=0 // pred_check_branch
    %163 = sbr.rel (0) target = $region21
  $region20: #{custom_clip_forward.16} parent=0 // pred_region
    _
  $region21: #{custom_clip_forward.16} parent=0 // pred_fallthru
    _
  // Predicated region
  $region22: #{custom_clip_forward.16} parent=0 // pred_check
    _
  $region23: #{custom_clip_forward.16} parent=0 // pred_check_branch
    %165 = sbr.rel (0) target = $region25
  $region24: #{custom_clip_forward.16} parent=0 // pred_region
    _
  $region25: #{custom_clip_forward.16} parent=0 // pred_fallthru
    _

// kernel: custom_clip_forward.14
$region0: #{custom_clip_forward.14}
  #allocation0 [shape = 'u32[]', space=smem, size = 0x4, offset = 0x4, fixed_abs, tag = 'smem constant byte address 0x4 - core index']
  #allocation1 [shape = 'u32[144,128]{1,0:T(1,128)}', space=vmem, size = 0x12000, scoped, tag = 'internal scratch']
  #allocation2 [shape = 'f32[6,8,64]{2,1,0:T(8,128)}', space=vmem, size = 0x6000, scoped, tag = 'scratch operand']
  %s0 = inlined_call_operand.hbm [shape: bf16[12,8,64], index: 0, kind: input, shape index: {}]
  %s1 = inlined_call_operand.hbm [shape: f32[1,64], index: 1, kind: input, shape index: {}]
  %s2 = inlined_call_operand.hbm [shape: f32[1,64], index: 2, kind: input, shape index: {}]
  %s3 = inlined_call_operand.hbm [shape: bf16[64,192], index: 3, kind: input, shape index: {}]
  %s4 = inlined_call_operand.hbm [shape: f32[1,192], index: 4, kind: input, shape index: {}]
  %s5 = inlined_call_operand.hbm [shape: bf16[64,64], index: 5, kind: input, shape index: {}]
  %s6 = inlined_call_operand.hbm [shape: f32[1,64], index: 6, kind: input, shape index: {}]
  %s7 = inlined_call_operand.hbm [shape: f32[1,64], index: 7, kind: input, shape index: {}]
  %s8 = inlined_call_operand.hbm [shape: f32[1,64], index: 8, kind: input, shape index: {}]
  %s9 = inlined_call_operand.hbm [shape: bf16[64,256], index: 9, kind: input, shape index: {}]
  %s10 = inlined_call_operand.hbm [shape: f32[1,256], index: 10, kind: input, shape index: {}]
  %s11 = inlined_call_operand.hbm [shape: bf16[256,64], index: 11, kind: input, shape index: {}]
  %s12 = inlined_call_operand.hbm [shape: f32[1,64], index: 12, kind: input, shape index: {}]
  %s13 = inlined_call_operand.hbm [shape: bf16[12,8,64], index: 13, kind: output, shape index: {}]
  %s14 = sld [smem:[#allocation0]]
  $region137: #{custom_clip_forward.14} parent=0
    _
  %s16 = ssub.s32 1, %s14
  %s17 = scalar_select 0, %s16, %s14
  $region1: #{custom_clip_forward.14} parent=0
    #allocation3 [shape = 'u8[24576]{0}', space=vmem, size = 0x6000, scoped, tag = 'input window, operand 0']
    #allocation4 [shape = 's32[2]{0}', space=sflag, size = 0x8, scoped, tag = 'scoped memory for custom_clip_forward.14']
    #allocation5 [shape = 's32[2]{0}', space=sflag, size = 0x8, scoped, tag = 'scoped memory for custom_clip_forward.14']
    #allocation6 [shape = 'u8[512]{0}', space=vmem, size = 0x400, scoped, tag = 'input window, operand 1, single buffered']
    #allocation7 [shape = 's32[1]{0}', space=sflag, size = 0x4, scoped, tag = 'scoped memory for custom_clip_forward.14']
    #allocation8 [shape = 'u8[512]{0}', space=vmem, size = 0x400, scoped, tag = 'input window, operand 2, single buffered']
    #allocation9 [shape = 'u8[32768]{0}', space=vmem, size = 0x8000, scoped, tag = 'input window, operand 3, single buffered']
    #allocation10 [shape = 's32[1]{0}', space=sflag, size = 0x4, scoped, tag = 'scoped memory for custom_clip_forward.14']
    #allocation11 [shape = 'u8[1024]{0}', space=vmem, size = 0x400, scoped, tag = 'input window, operand 4, single buffered']
    #allocation12 [shape = 'u8[16384]{0}', space=vmem, size = 0x4000, scoped, tag = 'input window, operand 5, single buffered']
    #allocation13 [shape = 's32[1]{0}', space=sflag, size = 0x4, scoped, tag = 'scoped memory for custom_clip_forward.14']
    #allocation14 [shape = 'u8[512]{0}', space=vmem, size = 0x400, scoped, tag = 'input window, operand 6, single buffered']
    #allocation15 [shape = 'u8[512]{0}', space=vmem, size = 0x400, scoped, tag = 'input window, operand 7, single buffered']
    #allocation16 [shape = 's32[1]{0}', space=sflag, size = 0x4, scoped, tag = 'scoped memory for custom_clip_forward.14']
    #allocation17 [shape = 'u8[512]{0}', space=vmem, size = 0x400, scoped, tag = 'input window, operand 8, single buffered']
    #allocation18 [shape = 'u8[32768]{0}', space=vmem, size = 0x8000, scoped, tag = 'input window, operand 9, single buffered']
    #allocation19 [shape = 's32[1]{0}', space=sflag, size = 0x4, scoped, tag = 'scoped memory for custom_clip_forward.14']
    #allocation20 [shape = 'u8[1024]{0}', space=vmem, size = 0x400, scoped, tag = 'input window, operand 10, single buffered']
    #allocation21 [shape = 'u8[65536]{0}', space=vmem, size = 0x10000, scoped, tag = 'input window, operand 11, single buffered']
    #allocation22 [shape = 's32[1]{0}', space=sflag, size = 0x4, scoped, tag = 'scoped memory for custom_clip_forward.14']
    #allocation23 [shape = 'u8[512]{0}', space=vmem, size = 0x400, scoped, tag = 'input window, operand 12, single buffered']
    #allocation24 [shape = 'u8[24576]{0}', space=vmem, size = 0x6000, scoped, tag = 'output window, operand 0']
    %18 = vsyncpa [#allocation4], 0
    %s19 = scalar_lea.sflag [#allocation4], 1
    %20 = vsyncpa %s19, 0
    %21 = vsyncpa [#allocation7], 0
    %22 = vsyncpa [#allocation10], 0
    %23 = vsyncpa [#allocation13], 0
    %24 = vsyncpa [#allocation16], 0
    %25 = vsyncpa [#allocation19], 0
    %26 = vsyncpa [#allocation22], 0
    %27 = vsyncpa [#allocation5], 0
    %s28 = scalar_lea.sflag [#allocation5], 1
    %29 = vsyncpa %s28, 0
    loop: start=0, step=1, limit=4
    $region2: #{custom_clip_forward.14} parent=1 // loop_pre_header
      _
    $region3: #{custom_clip_forward.14} parent=1 // loop_header
      %s31 = sphi 0, %s35
      %p32 = scmp.ge.s32.totalorder %s31, 4
      %s41 = sphi 0, %s43
      %s44 = sphi 0, %s41
      %s45 = sphi 0, %s44
      %s61 = sphi 0, %s45
      %s65 = sphi 0, %s65
      %s67 = sphi 0, %s65
      %s68 = sphi 0, %s67
      %s82 = sphi 0, %s68
      %s86 = sphi 0, %s86
      %s88 = sphi 0, %s86
      %s89 = sphi 0, %s88
      %s103 = sphi 0, %s89
      %s107 = sphi 0, %s107
      %s109 = sphi 0, %s107
      %s110 = sphi 0, %s109
      %s124 = sphi 0, %s110
      %s128 = sphi 0, %s128
      %s130 = sphi 0, %s128
      %s131 = sphi 0, %s130
      %s145 = sphi 0, %s131
      %s149 = sphi 0, %s149
      %s151 = sphi 0, %s149
      %s152 = sphi 0, %s151
      %s166 = sphi 0, %s152
      %s170 = sphi 0, %s170
      %s172 = sphi 0, %s170
      %s173 = sphi 0, %s172
      %s187 = sphi 0, %s173
      %s191 = sphi 0, %s191
      %s193 = sphi 0, %s191
      %s194 = sphi 0, %s193
      %s208 = sphi 0, %s194
      %s212 = sphi 0, %s212
      %s214 = sphi 0, %s212
      %s215 = sphi 0, %s214
      %s229 = sphi 0, %s215
      %s233 = sphi 0, %s233
      %s235 = sphi 0, %s233
      %s236 = sphi 0, %s235
      %s250 = sphi 0, %s236
      %s254 = sphi 0, %s254
      %s256 = sphi 0, %s254
      %s257 = sphi 0, %s256
      %s271 = sphi 0, %s257
      %s275 = sphi 0, %s275
      %s277 = sphi 0, %s275
      %s278 = sphi 0, %s277
      %s292 = sphi 0, %s278
      %s296 = sphi 0, %s296
      %s298 = sphi 0, %s296
      %s299 = sphi 0, %s298
      %s313 = sphi 0, %s299
      %s319 = sphi 0, %s321
      %s322 = sphi 0, %s319
      %s323 = sphi 0, %s322
      %s339 = sphi 0, %s323
    $region4: #{custom_clip_forward.14} parent=1 // loop_header_branch
      %34 = sbr.rel (%p32) target = $region8
    $region5: #{custom_clip_forward.14} parent=1 // loop_body
      %s36 = ssub.s32 %s31, 1
      %s37 = ssub.s32 %s31, 2
      %s38 = sadd.s32 %s31, 1
      %s39 = ssub.s32 %s31, %s38
      %p40 = scmp.eq.s32.totalorder %s39, 0
      %s42 = sadd.s32 %s41, 1
      %s43 = scalar_select %p40, %s41, %s42
      %p46 = pneg %p40
      %p47 = scmp.eq.s32.totalorder %s31, 1
      %p48 = por %p46, %p47
      %p49 = scmp.ne.s32.totalorder %s41, %s44
      %p50 = scmp.eq.s32.totalorder %s31, 0
      %p51 = por %p49, %p50
      %p52 = scmp.ne.s32.totalorder %s41, %s44
      %p53 = scmp.eq.s32.totalorder %s36, 1
      %p54 = por %p52, %p53
      %p55 = scmp.ne.s32.totalorder %s44, %s45
      %p56 = scmp.eq.s32.totalorder %s36, 0
      %p57 = por %p55, %p56
      %p58 = scmp.ne.s32.totalorder %s44, %s45
      %p59 = scmp.eq.s32.totalorder %s37, 1
      %p60 = por %p58, %p59
      %p62 = scmp.ne.s32.totalorder %s45, %s61
      %p63 = scmp.eq.s32.totalorder %s37, 0
      %p64 = por %p62, %p63
      %s66 = sadd.s32 %s65, 1
      %p69 = scmp.eq.s32.totalorder %s31, 1
      %p70 = scmp.ne.s32.totalorder %s65, %s67
      %p71 = scmp.eq.s32.totalorder %s31, 0
      %p72 = por %p70, %p71
      %p73 = scmp.ne.s32.totalorder %s65, %s67
      %p74 = scmp.eq.s32.totalorder %s36, 1
      %p75 = por %p73, %p74
      %p76 = scmp.ne.s32.totalorder %s67, %s68
      %p77 = scmp.eq.s32.totalorder %s36, 0
      %p78 = por %p76, %p77
      %p79 = scmp.ne.s32.totalorder %s67, %s68
      %p80 = scmp.eq.s32.totalorder %s37, 1
      %p81 = por %p79, %p80
      %p83 = scmp.ne.s32.totalorder %s68, %s82
      %p84 = scmp.eq.s32.totalorder %s37, 0
      %p85 = por %p83, %p84
      %s87 = sadd.s32 %s86, 1
      %p90 = scmp.eq.s32.totalorder %s31, 1
      %p91 = scmp.ne.s32.totalorder %s86, %s88
      %p92 = scmp.eq.s32.totalorder %s31, 0
      %p93 = por %p91, %p92
      %p94 = scmp.ne.s32.totalorder %s86, %s88
      %p95 = scmp.eq.s32.totalorder %s36, 1
      %p96 = por %p94, %p95
      %p97 = scmp.ne.s32.totalorder %s88, %s89
      %p98 = scmp.eq.s32.totalorder %s36, 0
      %p99 = por %p97, %p98
      %p100 = scmp.ne.s32.totalorder %s88, %s89
      %p101 = scmp.eq.s32.totalorder %s37, 1
      %p102 = por %p100, %p101
      %p104 = scmp.ne.s32.totalorder %s89, %s103
      %p105 = scmp.eq.s32.totalorder %s37, 0
      %p106 = por %p104, %p105
      %s108 = sadd.s32 %s107, 1
      %p111 = scmp.eq.s32.totalorder %s31, 1
      %p112 = scmp.ne.s32.totalorder %s107, %s109
      %p113 = scmp.eq.s32.totalorder %s31, 0
      %p114 = por %p112, %p113
      %p115 = scmp.ne.s32.totalorder %s107, %s109
      %p116 = scmp.eq.s32.totalorder %s36, 1
      %p117 = por %p115, %p116
      %p118 = scmp.ne.s32.totalorder %s109, %s110
      %p119 = scmp.eq.s32.totalorder %s36, 0
      %p120 = por %p118, %p119
      %p121 = scmp.ne.s32.totalorder %s109, %s110
      %p122 = scmp.eq.s32.totalorder %s37, 1
      %p123 = por %p121, %p122
      %p125 = scmp.ne.s32.totalorder %s110, %s124
      %p126 = scmp.eq.s32.totalorder %s37, 0
      %p127 = por %p125, %p126
      %s129 = sadd.s32 %s128, 1
      %p132 = scmp.eq.s32.totalorder %s31, 1
      %p133 = scmp.ne.s32.totalorder %s128, %s130
      %p134 = scmp.eq.s32.totalorder %s31, 0
      %p135 = por %p133, %p134
      %p136 = scmp.ne.s32.totalorder %s128, %s130
      %p137 = scmp.eq.s32.totalorder %s36, 1
      %p138 = por %p136, %p137
      %p139 = scmp.ne.s32.totalorder %s130, %s131
      %p140 = scmp.eq.s32.totalorder %s36, 0
      %p141 = por %p139, %p140
      %p142 = scmp.ne.s32.totalorder %s130, %s131
      %p143 = scmp.eq.s32.totalorder %s37, 1
      %p144 = por %p142, %p143
      %p146 = scmp.ne.s32.totalorder %s131, %s145
      %p147 = scmp.eq.s32.totalorder %s37, 0
      %p148 = por %p146, %p147
      %s150 = sadd.s32 %s149, 1
      %p153 = scmp.eq.s32.totalorder %s31, 1
      %p154 = scmp.ne.s32.totalorder %s149, %s151
      %p155 = scmp.eq.s32.totalorder %s31, 0
      %p156 = por %p154, %p155
      %p157 = scmp.ne.s32.totalorder %s149, %s151
      %p158 = scmp.eq.s32.totalorder %s36, 1
      %p159 = por %p157, %p158
      %p160 = scmp.ne.s32.totalorder %s151, %s152
      %p161 = scmp.eq.s32.totalorder %s36, 0
      %p162 = por %p160, %p161
      %p163 = scmp.ne.s32.totalorder %s151, %s152
      %p164 = scmp.eq.s32.totalorder %s37, 1
      %p165 = por %p163, %p164
      %p167 = scmp.ne.s32.totalorder %s152, %s166
      %p168 = scmp.eq.s32.totalorder %s37, 0
      %p169 = por %p167, %p168
      %s171 = sadd.s32 %s170, 1
      %p174 = scmp.eq.s32.totalorder %s31, 1
      %p175 = scmp.ne.s32.totalorder %s170, %s172
      %p176 = scmp.eq.s32.totalorder %s31, 0
      %p177 = por %p175, %p176
      %p178 = scmp.ne.s32.totalorder %s170, %s172
      %p179 = scmp.eq.s32.totalorder %s36, 1
      %p180 = por %p178, %p179
      %p181 = scmp.ne.s32.totalorder %s172, %s173
      %p182 = scmp.eq.s32.totalorder %s36, 0
      %p183 = por %p181, %p182
      %p184 = scmp.ne.s32.totalorder %s172, %s173
      %p185 = scmp.eq.s32.totalorder %s37, 1
      %p186 = por %p184, %p185
      %p188 = scmp.ne.s32.totalorder %s173, %s187
      %p189 = scmp.eq.s32.totalorder %s37, 0
      %p190 = por %p188, %p189
      %s192 = sadd.s32 %s191, 1
      %p195 = scmp.eq.s32.totalorder %s31, 1
      %p196 = scmp.ne.s32.totalorder %s191, %s193
      %p197 = scmp.eq.s32.totalorder %s31, 0
      %p198 = por %p196, %p197
      %p199 = scmp.ne.s32.totalorder %s191, %s193
      %p200 = scmp.eq.s32.totalorder %s36, 1
      %p201 = por %p199, %p200
      %p202 = scmp.ne.s32.totalorder %s193, %s194
      %p203 = scmp.eq.s32.totalorder %s36, 0
      %p204 = por %p202, %p203
      %p205 = scmp.ne.s32.totalorder %s193, %s194
      %p206 = scmp.eq.s32.totalorder %s37, 1
      %p207 = por %p205, %p206
      %p209 = scmp.ne.s32.totalorder %s194, %s208
      %p210 = scmp.eq.s32.totalorder %s37, 0
      %p211 = por %p209, %p210
      %s213 = sadd.s32 %s212, 1
      %p216 = scmp.eq.s32.totalorder %s31, 1
      %p217 = scmp.ne.s32.totalorder %s212, %s214
      %p218 = scmp.eq.s32.totalorder %s31, 0
      %p219 = por %p217, %p218
      %p220 = scmp.ne.s32.totalorder %s212, %s214
      %p221 = scmp.eq.s32.totalorder %s36, 1
      %p222 = por %p220, %p221
      %p223 = scmp.ne.s32.totalorder %s214, %s215
      %p224 = scmp.eq.s32.totalorder %s36, 0
      %p225 = por %p223, %p224
      %p226 = scmp.ne.s32.totalorder %s214, %s215
      %p227 = scmp.eq.s32.totalorder %s37, 1
      %p228 = por %p226, %p227
      %p230 = scmp.ne.s32.totalorder %s215, %s229
      %p231 = scmp.eq.s32.totalorder %s37, 0
      %p232 = por %p230, %p231
      %s234 = sadd.s32 %s233, 1
      %p237 = scmp.eq.s32.totalorder %s31, 1
      %p238 = scmp.ne.s32.totalorder %s233, %s235
      %p239 = scmp.eq.s32.totalorder %s31, 0
      %p240 = por %p238, %p239
      %p241 = scmp.ne.s32.totalorder %s233, %s235
      %p242 = scmp.eq.s32.totalorder %s36, 1
      %p243 = por %p241, %p242
      %p244 = scmp.ne.s32.totalorder %s235, %s236
      %p245 = scmp.eq.s32.totalorder %s36, 0
      %p246 = por %p244, %p245
      %p247 = scmp.ne.s32.totalorder %s235, %s236
      %p248 = scmp.eq.s32.totalorder %s37, 1
      %p249 = por %p247, %p248
      %p251 = scmp.ne.s32.totalorder %s236, %s250
      %p252 = scmp.eq.s32.totalorder %s37, 0
      %p253 = por %p251, %p252
      %s255 = sadd.s32 %s254, 1
      %p258 = scmp.eq.s32.totalorder %s31, 1
      %p259 = scmp.ne.s32.totalorder %s254, %s256
      %p260 = scmp.eq.s32.totalorder %s31, 0
      %p261 = por %p259, %p260
      %p262 = scmp.ne.s32.totalorder %s254, %s256
      %p263 = scmp.eq.s32.totalorder %s36, 1
      %p264 = por %p262, %p263
      %p265 = scmp.ne.s32.totalorder %s256, %s257
      %p266 = scmp.eq.s32.totalorder %s36, 0
      %p267 = por %p265, %p266
      %p268 = scmp.ne.s32.totalorder %s256, %s257
      %p269 = scmp.eq.s32.totalorder %s37, 1
      %p270 = por %p268, %p269
      %p272 = scmp.ne.s32.totalorder %s257, %s271
      %p273 = scmp.eq.s32.totalorder %s37, 0
      %p274 = por %p272, %p273
      %s276 = sadd.s32 %s275, 1
      %p279 = scmp.eq.s32.totalorder %s31, 1
      %p280 = scmp.ne.s32.totalorder %s275, %s277
      %p281 = scmp.eq.s32.totalorder %s31, 0
      %p282 = por %p280, %p281
      %p283 = scmp.ne.s32.totalorder %s275, %s277
      %p284 = scmp.eq.s32.totalorder %s36, 1
      %p285 = por %p283, %p284
      %p286 = scmp.ne.s32.totalorder %s277, %s278
      %p287 = scmp.eq.s32.totalorder %s36, 0
      %p288 = por %p286, %p287
      %p289 = scmp.ne.s32.totalorder %s277, %s278
      %p290 = scmp.eq.s32.totalorder %s37, 1
      %p291 = por %p289, %p290
      %p293 = scmp.ne.s32.totalorder %s278, %s292
      %p294 = scmp.eq.s32.totalorder %s37, 0
      %p295 = por %p293, %p294
      %s297 = sadd.s32 %s296, 1
      %p300 = scmp.eq.s32.totalorder %s31, 1
      %p301 = scmp.ne.s32.totalorder %s296, %s298
      %p302 = scmp.eq.s32.totalorder %s31, 0
      %p303 = por %p301, %p302
      %p304 = scmp.ne.s32.totalorder %s296, %s298
      %p305 = scmp.eq.s32.totalorder %s36, 1
      %p306 = por %p304, %p305
      %p307 = scmp.ne.s32.totalorder %s298, %s299
      %p308 = scmp.eq.s32.totalorder %s36, 0
      %p309 = por %p307, %p308
      %p310 = scmp.ne.s32.totalorder %s298, %s299
      %p311 = scmp.eq.s32.totalorder %s37, 1
      %p312 = por %p310, %p311
      %p314 = scmp.ne.s32.totalorder %s299, %s313
      %p315 = scmp.eq.s32.totalorder %s37, 0
      %p316 = por %p314, %p315
      %s317 = ssub.s32 %s31, %s38
      %p318 = scmp.eq.s32.totalorder %s317, 0
      %s320 = sadd.s32 %s319, 1
      %s321 = scalar_select %p318, %s319, %s320
      %p324 = pneg %p318
      %p325 = scmp.eq.s32.totalorder %s31, 1
      %p326 = por %p324, %p325
      %p327 = scmp.ne.s32.totalorder %s319, %s322
      %p328 = scmp.eq.s32.totalorder %s31, 0
      %p329 = por %p327, %p328
      %p330 = scmp.ne.s32.totalorder %s319, %s322
      %p331 = scmp.eq.s32.totalorder %s36, 1
      %p332 = por %p330, %p331
      %p333 = scmp.ne.s32.totalorder %s322, %s323
      %p334 = scmp.eq.s32.totalorder %s36, 0
      %p335 = por %p333, %p334
      %p336 = scmp.ne.s32.totalorder %s322, %s323
      %p337 = scmp.eq.s32.totalorder %s37, 1
      %p338 = por %p336, %p337
      %p340 = scmp.ne.s32.totalorder %s323, %s339
      %p341 = scmp.eq.s32.totalorder %s37, 0
      %p342 = por %p340, %p341
      %p343 = scmp.le.s32.totalorder 1, %s31
      %p344 = scmp.lt.s32.totalorder %s31, 3
      %p345 = pnand %p343, %p344
      %p346 = pneg %p345
      // Predicated region
      $region9: #{custom_clip_forward.14} parent=5 // pred_check
        _
      $region10: #{custom_clip_forward.14} parent=5 // pred_check_branch
        %348 = sbr.rel (%p345) target = $region12
      $region11: #{custom_clip_forward.14} parent=5 // pred_region
        %s349 = ssub.s32 %s31, 1
        // Predicated region
        $region13: #{custom_clip_forward.14} parent=11 // pred_check
          %p350 = pneg %p78
        $region14: #{custom_clip_forward.14} parent=11 // pred_check_branch
          %352 = sbr.rel (%p350) target = $region16
        $region15: #{custom_clip_forward.14} parent=11 // pred_region
          %s354 = ssub.s32 16, 16
          %355 = vsyncadd [#allocation7], %s354
          %s357 = sshll.u32 [#allocation6], 4
          %s358 = int_to_ptr.vmem [resolvable:$true] %s357
          %360 = dma.hbm_to_vmem [thread:$0]  %s1, 16, %s358, [#allocation7]
        $region16: #{custom_clip_forward.14} parent=11 // pred_fallthru
          _
        // Predicated region
        $region17: #{custom_clip_forward.14} parent=11 // pred_check
          %p361 = pneg %p99
        $region18: #{custom_clip_forward.14} parent=11 // pred_check_branch
          %363 = sbr.rel (%p361) target = $region20
        $region19: #{custom_clip_forward.14} parent=11 // pred_region
          %s365 = ssub.s32 16, 16
          %366 = vsyncadd [#allocation7], %s365
          %s368 = sshll.u32 [#allocation8], 4
          %s369 = int_to_ptr.vmem [resolvable:$true] %s368
          %371 = dma.hbm_to_vmem [thread:$0]  %s2, 16, %s369, [#allocation7]
        $region20: #{custom_clip_forward.14} parent=11 // pred_fallthru
          _
        // Predicated region
        $region21: #{custom_clip_forward.14} parent=11 // pred_check
          %p372 = pneg %p120
        $region22: #{custom_clip_forward.14} parent=11 // pred_check_branch
          %374 = sbr.rel (%p372) target = $region24
        $region23: #{custom_clip_forward.14} parent=11 // pred_region
          %s376 = ssub.s32 1024, 1024
          %377 = vsyncadd [#allocation10], %s376
          %s378 = sshll.u32 [#allocation9], 4
          %s379 = int_to_ptr.vmem [resolvable:$true] %s378
          %384 = dma.hbm_to_vmem [thread:$0]  %s3, 1024, %s379, [#allocation10], 128, 128, 8
        $region24: #{custom_clip_forward.14} parent=11 // pred_fallthru
          _
        // Predicated region
        $region25: #{custom_clip_forward.14} parent=11 // pred_check
          %p385 = pneg %p141
        $region26: #{custom_clip_forward.14} parent=11 // pred_check_branch
          %387 = sbr.rel (%p385) target = $region28
        $region27: #{custom_clip_forward.14} parent=11 // pred_region
          %s389 = ssub.s32 32, 32
          %390 = vsyncadd [#allocation10], %s389
          %s392 = sshll.u32 [#allocation11], 4
          %s393 = int_to_ptr.vmem [resolvable:$true] %s392
          %395 = dma.hbm_to_vmem [thread:$0]  %s4, 32, %s393, [#allocation10]
        $region28: #{custom_clip_forward.14} parent=11 // pred_fallthru
          _
        // Predicated region
        $region29: #{custom_clip_forward.14} parent=11 // pred_check
          %p396 = pneg %p162
        $region30: #{custom_clip_forward.14} parent=11 // pred_check_branch
          %398 = sbr.rel (%p396) target = $region32
        $region31: #{custom_clip_forward.14} parent=11 // pred_region
          %s400 = ssub.s32 512, 512
          %401 = vsyncadd [#allocation13], %s400
          %s402 = sshll.u32 [#allocation12], 4
          %s403 = int_to_ptr.vmem [resolvable:$true] %s402
          %408 = dma.hbm_to_vmem [thread:$0]  %s5, 512, %s403, [#allocation13], 64, 64, 4
        $region32: #{custom_clip_forward.14} parent=11 // pred_fallthru
          _
        // Predicated region
        $region33: #{custom_clip_forward.14} parent=11 // pred_check
          %p409 = pneg %p183
        $region34: #{custom_clip_forward.14} parent=11 // pred_check_branch
          %411 = sbr.rel (%p409) target = $region36
        $region35: #{custom_clip_forward.14} parent=11 // pred_region
          %s413 = ssub.s32 16, 16
          %414 = vsyncadd [#allocation13], %s413
          %s416 = sshll.u32 [#allocation14], 4
          %s417 = int_to_ptr.vmem [resolvable:$true] %s416
          %419 = dma.hbm_to_vmem [thread:$0]  %s6, 16, %s417, [#allocation13]
        $region36: #{custom_clip_forward.14} parent=11 // pred_fallthru
          _
        // Predicated region
        $region37: #{custom_clip_forward.14} parent=11 // pred_check
          %p420 = pneg %p204
        $region38: #{custom_clip_forward.14} parent=11 // pred_check_branch
          %422 = sbr.rel (%p420) target = $region40
        $region39: #{custom_clip_forward.14} parent=11 // pred_region
          %s424 = ssub.s32 16, 16
          %425 = vsyncadd [#allocation16], %s424
          %s427 = sshll.u32 [#allocation15], 4
          %s428 = int_to_ptr.vmem [resolvable:$true] %s427
          %430 = dma.hbm_to_vmem [thread:$0]  %s7, 16, %s428, [#allocation16]
        $region40: #{custom_clip_forward.14} parent=11 // pred_fallthru
          _
        // Predicated region
        $region41: #{custom_clip_forward.14} parent=11 // pred_check
          %p431 = pneg %p225
        $region42: #{custom_clip_forward.14} parent=11 // pred_check_branch
          %433 = sbr.rel (%p431) target = $region44
        $region43: #{custom_clip_forward.14} parent=11 // pred_region
          %s435 = ssub.s32 16, 16
          %436 = vsyncadd [#allocation16], %s435
          %s438 = sshll.u32 [#allocation17], 4
          %s439 = int_to_ptr.vmem [resolvable:$true] %s438
          %441 = dma.hbm_to_vmem [thread:$0]  %s8, 16, %s439, [#allocation16]
        $region44: #{custom_clip_forward.14} parent=11 // pred_fallthru
          _
        // Predicated region
        $region45: #{custom_clip_forward.14} parent=11 // pred_check
          %p442 = pneg %p246
        $region46: #{custom_clip_forward.14} parent=11 // pred_check_branch
          %444 = sbr.rel (%p442) target = $region48
        $region47: #{custom_clip_forward.14} parent=11 // pred_region
          %s446 = ssub.s32 1024, 1024
          %447 = vsyncadd [#allocation19], %s446
          %s448 = sshll.u32 [#allocation18], 4
          %s449 = int_to_ptr.vmem [resolvable:$true] %s448
          %454 = dma.hbm_to_vmem [thread:$0]  %s9, 1024, %s449, [#allocation19], 128, 128, 8
        $region48: #{custom_clip_forward.14} parent=11 // pred_fallthru
          _
        // Predicated region
        $region49: #{custom_clip_forward.14} parent=11 // pred_check
          %p455 = pneg %p267
        $region50: #{custom_clip_forward.14} parent=11 // pred_check_branch
          %457 = sbr.rel (%p455) target = $region52
        $region51: #{custom_clip_forward.14} parent=11 // pred_region
          %s459 = ssub.s32 32, 32
          %460 = vsyncadd [#allocation19], %s459
          %s462 = sshll.u32 [#allocation20], 4
          %s463 = int_to_ptr.vmem [resolvable:$true] %s462
          %465 = dma.hbm_to_vmem [thread:$0]  %s10, 32, %s463, [#allocation19]
        $region52: #{custom_clip_forward.14} parent=11 // pred_fallthru
          _
        // Predicated region
        $region53: #{custom_clip_forward.14} parent=11 // pred_check
          %p466 = pneg %p288
        $region54: #{custom_clip_forward.14} parent=11 // pred_check_branch
          %468 = sbr.rel (%p466) target = $region56
        $region55: #{custom_clip_forward.14} parent=11 // pred_region
          %s470 = ssub.s32 2048, 2048
          %471 = vsyncadd [#allocation22], %s470
          %s472 = sshll.u32 [#allocation21], 4
          %s473 = int_to_ptr.vmem [resolvable:$true] %s472
          %478 = dma.hbm_to_vmem [thread:$0]  %s11, 2048, %s473, [#allocation22], 64, 64, 4
        $region56: #{custom_clip_forward.14} parent=11 // pred_fallthru
          _
        // Predicated region
        $region57: #{custom_clip_forward.14} parent=11 // pred_check
          %p479 = pneg %p309
        $region58: #{custom_clip_forward.14} parent=11 // pred_check_branch
          %481 = sbr.rel (%p479) target = $region60
        $region59: #{custom_clip_forward.14} parent=11 // pred_region
          %s483 = ssub.s32 16, 16
          %484 = vsyncadd [#allocation22], %s483
          %s486 = sshll.u32 [#allocation23], 4
          %s487 = int_to_ptr.vmem [resolvable:$true] %s486
          %489 = dma.hbm_to_vmem [thread:$0]  %s12, 16, %s487, [#allocation22]
        $region60: #{custom_clip_forward.14} parent=11 // pred_fallthru
          _
      $region12: #{custom_clip_forward.14} parent=5 // pred_fallthru
        _
      %p490 = scmp.lt.s32.totalorder %s31, 2
      // Predicated region
      $region61: #{custom_clip_forward.14} parent=5 // pred_check
        %p491 = pneg %p490
      $region62: #{custom_clip_forward.14} parent=5 // pred_check_branch
        %493 = sbr.rel (%p491) target = $region64
      $region63: #{custom_clip_forward.14} parent=5 // pred_region
        // Predicated region
        $region65: #{custom_clip_forward.14} parent=63 // pred_check
          %p494 = pneg %p51
        $region66: #{custom_clip_forward.14} parent=63 // pred_check_branch
          %496 = sbr.rel (%p494) target = $region68
        $region67: #{custom_clip_forward.14} parent=63 // pred_region
          %s497 = sand.u32 %s41, 1
          %s498 = scalar_lea.sflag [#allocation4], %s497
          %s499 = sand.u32 %s41, 1
          %s500 = smul.addr %s499, 24
          %s501 = scalar_lea.vmem [#allocation3], %s500
          %s502 = smul.u32 6, %s31
          %s504 = ssub.s32 384, 384
          %505 = vsyncadd %s498, %s504
          %s506 = smul.addr %s502, 64
          %s507 = scalar_lea.hbm %s0, %s506
          %s508 = sshll.u32 %s501, 4
          %s509 = int_to_ptr.vmem [resolvable:$true] %s508
          %514 = dma.hbm_to_vmem [thread:$0]  %s507, 384, %s509, %s498, 64, 64, 4
        $region68: #{custom_clip_forward.14} parent=63 // pred_fallthru
          _
      $region64: #{custom_clip_forward.14} parent=5 // pred_fallthru
        _
      %p515 = scmp.le.s32.totalorder 1, %s31
      %p516 = scmp.lt.s32.totalorder %s31, 3
      %p517 = pnand %p515, %p516
      %p518 = pneg %p517
      // Predicated region
      $region69: #{custom_clip_forward.14} parent=5 // pred_check
        _
      $region70: #{custom_clip_forward.14} parent=5 // pred_check_branch
        %520 = sbr.rel (%p517) target = $region72
      $region71: #{custom_clip_forward.14} parent=5 // pred_region
        %s521 = ssub.s32 %s31, 1
        %s522 = sand.u32 %s44, 1
        %s523 = scalar_lea.sflag [#allocation4], %s522
        %s524 = sand.u32 %s44, 1
        %s525 = smul.addr %s524, 24
        %s526 = scalar_lea.vmem [#allocation3], %s525
        // Predicated region
        $region73: #{custom_clip_forward.14} parent=71 // pred_check
          %p527 = pneg %p57
        $region74: #{custom_clip_forward.14} parent=71 // pred_check_branch
          %529 = sbr.rel (%p527) target = $region76
        $region75: #{custom_clip_forward.14} parent=71 // pred_region
          %530 = dma.done %s523, 384
        $region76: #{custom_clip_forward.14} parent=71 // pred_fallthru
          _
        // Predicated region
        $region77: #{custom_clip_forward.14} parent=71 // pred_check
          %p531 = pneg %p78
        $region78: #{custom_clip_forward.14} parent=71 // pred_check_branch
          %533 = sbr.rel (%p531) target = $region80
        $region79: #{custom_clip_forward.14} parent=71 // pred_region
          %534 = dma.done [#allocation7], 16
        $region80: #{custom_clip_forward.14} parent=71 // pred_fallthru
          _
        // Predicated region
        $region81: #{custom_clip_forward.14} parent=71 // pred_check
          %p535 = pneg %p99
        $region82: #{custom_clip_forward.14} parent=71 // pred_check_branch
          %537 = sbr.rel (%p535) target = $region84
        $region83: #{custom_clip_forward.14} parent=71 // pred_region
          %538 = dma.done [#allocation7], 16
        $region84: #{custom_clip_forward.14} parent=71 // pred_fallthru
          _
        // Predicated region
        $region85: #{custom_clip_forward.14} parent=71 // pred_check
          %p539 = pneg %p120
        $region86: #{custom_clip_forward.14} parent=71 // pred_check_branch
          %541 = sbr.rel (%p539) target = $region88
        $region87: #{custom_clip_forward.14} parent=71 // pred_region
          %542 = dma.done [#allocation10], 1024
        $region88: #{custom_clip_forward.14} parent=71 // pred_fallthru
          _
        // Predicated region
        $region89: #{custom_clip_forward.14} parent=71 // pred_check
          %p543 = pneg %p141
        $region90: #{custom_clip_forward.14} parent=71 // pred_check_branch
          %545 = sbr.rel (%p543) target = $region92
        $region91: #{custom_clip_forward.14} parent=71 // pred_region
          %546 = dma.done [#allocation10], 32
        $region92: #{custom_clip_forward.14} parent=71 // pred_fallthru
          _
        // Predicated region
        $region93: #{custom_clip_forward.14} parent=71 // pred_check
          %p547 = pneg %p162
        $region94: #{custom_clip_forward.14} parent=71 // pred_check_branch
          %549 = sbr.rel (%p547) target = $region96
        $region95: #{custom_clip_forward.14} parent=71 // pred_region
          %550 = dma.done [#allocation13], 512
        $region96: #{custom_clip_forward.14} parent=71 // pred_fallthru
          _
        // Predicated region
        $region97: #{custom_clip_forward.14} parent=71 // pred_check
          %p551 = pneg %p183
        $region98: #{custom_clip_forward.14} parent=71 // pred_check_branch
          %553 = sbr.rel (%p551) target = $region100
        $region99: #{custom_clip_forward.14} parent=71 // pred_region
          %554 = dma.done [#allocation13], 16
        $region100: #{custom_clip_forward.14} parent=71 // pred_fallthru
          _
        // Predicated region
        $region101: #{custom_clip_forward.14} parent=71 // pred_check
          %p555 = pneg %p204
        $region102: #{custom_clip_forward.14} parent=71 // pred_check_branch
          %557 = sbr.rel (%p555) target = $region104
        $region103: #{custom_clip_forward.14} parent=71 // pred_region
          %558 = dma.done [#allocation16], 16
        $region104: #{custom_clip_forward.14} parent=71 // pred_fallthru
          _
        // Predicated region
        $region105: #{custom_clip_forward.14} parent=71 // pred_check
          %p559 = pneg %p225
        $region106: #{custom_clip_forward.14} parent=71 // pred_check_branch
          %561 = sbr.rel (%p559) target = $region108
        $region107: #{custom_clip_forward.14} parent=71 // pred_region
          %562 = dma.done [#allocation16], 16
        $region108: #{custom_clip_forward.14} parent=71 // pred_fallthru
          _
        // Predicated region
        $region109: #{custom_clip_forward.14} parent=71 // pred_check
          %p563 = pneg %p246
        $region110: #{custom_clip_forward.14} parent=71 // pred_check_branch
          %565 = sbr.rel (%p563) target = $region112
        $region111: #{custom_clip_forward.14} parent=71 // pred_region
          %566 = dma.done [#allocation19], 1024
        $region112: #{custom_clip_forward.14} parent=71 // pred_fallthru
          _
        // Predicated region
        $region113: #{custom_clip_forward.14} parent=71 // pred_check
          %p567 = pneg %p267
        $region114: #{custom_clip_forward.14} parent=71 // pred_check_branch
          %569 = sbr.rel (%p567) target = $region116
        $region115: #{custom_clip_forward.14} parent=71 // pred_region
          %570 = dma.done [#allocation19], 32
        $region116: #{custom_clip_forward.14} parent=71 // pred_fallthru
          _
        // Predicated region
        $region117: #{custom_clip_forward.14} parent=71 // pred_check
          %p571 = pneg %p288
        $region118: #{custom_clip_forward.14} parent=71 // pred_check_branch
          %573 = sbr.rel (%p571) target = $region120
        $region119: #{custom_clip_forward.14} parent=71 // pred_region
          %574 = dma.done [#allocation22], 2048
        $region120: #{custom_clip_forward.14} parent=71 // pred_fallthru
          _
        // Predicated region
        $region121: #{custom_clip_forward.14} parent=71 // pred_check
          %p575 = pneg %p309
        $region122: #{custom_clip_forward.14} parent=71 // pred_check_branch
          %577 = sbr.rel (%p575) target = $region124
        $region123: #{custom_clip_forward.14} parent=71 // pred_region
          %578 = dma.done [#allocation22], 16
        $region124: #{custom_clip_forward.14} parent=71 // pred_fallthru
          _
        %s579 = sand.u32 %s44, 1
        %s580 = scalar_lea.sflag [#allocation4], %s579
        %s581 = sand.u32 %s44, 1
        %s582 = smul.addr %s581, 24
        %s583 = scalar_lea.vmem [#allocation3], %s582
        %p584 = pneg %p57
        %p585 = pneg %p54
        %p586 = pneg %p78
        %p587 = pneg %p75
        %p588 = pneg %p99
        %p589 = pneg %p96
        %p590 = pneg %p120
        %p591 = pneg %p117
        %p592 = pneg %p141
        %p593 = pneg %p138
        %p594 = pneg %p162
        %p595 = pneg %p159
        %p596 = pneg %p183
        %p597 = pneg %p180
        %p598 = pneg %p204
        %p599 = pneg %p201
        %p600 = pneg %p225
        %p601 = pneg %p222
        %p602 = pneg %p246
        %p603 = pneg %p243
        %p604 = pneg %p267
        %p605 = pneg %p264
        %p606 = pneg %p288
        %p607 = pneg %p285
        %p608 = pneg %p309
        %p609 = pneg %p306
        %p610 = pneg %p335
        %p611 = pneg %p332
        %s612 = sand.u32 %s322, 1
        %s613 = scalar_lea.sflag [#allocation5], %s612
        %s614 = sand.u32 %s322, 1
        %s615 = smul.addr %s614, 24
        %s616 = scalar_lea.vmem [#allocation24], %s615
        %s617 = smul.u32 6, %s36
        %s618 = smul.u32 6, %s36
        %v620 = vld [vmem:[%s526] sm:$0xf]
        %v621 = vld [vmem:[%s526 + $0x4] sm:$0xf]
        %v622 = vld [vmem:[%s526 + $0x8] sm:$0xf]
        %v623 = vld [vmem:[%s526 + $0xc] sm:$0xf]
        %v624 = vld [vmem:[%s526 + $0x10] sm:$0xf]
        %v625 = vld [vmem:[%s526 + $0x14] sm:$0xf]
        %v626 = vunpack.c.l.bf16 %v620
        %v627 = vunpack.c.l.bf16 %v621
        %v628 = vunpack.c.l.bf16 %v622
        %v629 = vunpack.c.l.bf16 %v623
        %v630 = vunpack.c.l.bf16 %v624
        %v631 = vunpack.c.l.bf16 %v625
        %v632 = vld [vmem:[#allocation6] sm:$0x1]
        %v633 = vld [vmem:[#allocation8] sm:$0x1]
        %vm634 = vcmask 523264
        %v635 = vsel %vm634, %v626, 0.0
        %636 = vadd.xlane.f32.xlu0 %v635
        %v637 = vpop.xlane.xlu0 %636
        %v638 = vsel %vm634, %v627, 0.0
        %639 = vadd.xlane.f32.xlu0 %v638
        %v640 = vpop.xlane.xlu0 %639
        %v641 = vsel %vm634, %v628, 0.0
        %642 = vadd.xlane.f32.xlu0 %v641
        %v643 = vpop.xlane.xlu0 %642
        %v644 = vsel %vm634, %v629, 0.0
        %645 = vadd.xlane.f32.xlu0 %v644
        %v646 = vpop.xlane.xlu0 %645
        %v647 = vsel %vm634, %v630, 0.0
        %648 = vadd.xlane.f32.xlu0 %v647
        %v649 = vpop.xlane.xlu0 %648
        %v650 = vsel %vm634, %v631, 0.0
        %651 = vadd.xlane.f32.xlu0 %v650
        %v652 = vpop.xlane.xlu0 %651
        %v653 = vrcp.pop 64.0
        %v654 = vmul.f32 %v637, %v653
        %v655 = vmul.f32 %v640, %v653
        %v656 = vmul.f32 %v643, %v653
        %v657 = vmul.f32 %v646, %v653
        %v658 = vmul.f32 %v649, %v653
        %v659 = vmul.f32 %v652, %v653
        %v660 = vsub.f32 %v626, %v654
        %v661 = vsub.f32 %v627, %v655
        %v662 = vsub.f32 %v628, %v656
        %v663 = vsub.f32 %v629, %v657
        %v664 = vsub.f32 %v630, %v658
        %v665 = vsub.f32 %v631, %v659
        %v666 = vmul.f32 %v660, %v660
        %v667 = vmul.f32 %v661, %v661
        %v668 = vmul.f32 %v662, %v662
        %v669 = vmul.f32 %v663, %v663
        %v670 = vmul.f32 %v664, %v664
        %v671 = vmul.f32 %v665, %v665
        %v672 = vsel %vm634, %v666, 0.0
        %673 = vadd.xlane.f32.xlu0 %v672
        %v674 = vpop.xlane.xlu0 %673
        %v675 = vsel %vm634, %v667, 0.0
        %676 = vadd.xlane.f32.xlu0 %v675
        %v677 = vpop.xlane.xlu0 %676
        %v678 = vsel %vm634, %v668, 0.0
        %679 = vadd.xlane.f32.xlu0 %v678
        %v680 = vpop.xlane.xlu0 %679
        %v681 = vsel %vm634, %v669, 0.0
        %682 = vadd.xlane.f32.xlu0 %v681
        %v683 = vpop.xlane.xlu0 %682
        %v684 = vsel %vm634, %v670, 0.0
        %685 = vadd.xlane.f32.xlu0 %v684
        %v686 = vpop.xlane.xlu0 %685
        %v687 = vsel %vm634, %v671, 0.0
        %688 = vadd.xlane.f32.xlu0 %v687
        %v689 = vpop.xlane.xlu0 %688
        %v690 = vmul.f32 %v674, %v653
        %v691 = vmul.f32 %v677, %v653
        %v692 = vmul.f32 %v680, %v653
        %v693 = vmul.f32 %v683, %v653
        %v694 = vmul.f32 %v686, %v653
        %v695 = vmul.f32 %v689, %v653
        %v696 = vadd.f32 %v690, 1e-05
        %v697 = vadd.f32 %v691, 1e-05
        %v698 = vadd.f32 %v692, 1e-05
        %v699 = vadd.f32 %v693, 1e-05
        %v700 = vadd.f32 %v694, 1e-05
        %v701 = vadd.f32 %v695, 1e-05
        %v702 = vrsqrt.pop %v696
        %v703 = vrsqrt.pop %v697
        %v704 = vrsqrt.pop %v698
        %v705 = vrsqrt.pop %v699
        %v706 = vrsqrt.pop %v700
        %v707 = vrsqrt.pop %v701
        %v708 = vmul.f32 %v660, %v702
        %v709 = vmul.f32 %v661, %v703
        %v710 = vmul.f32 %v662, %v704
        %v711 = vmul.f32 %v663, %v705
        %v712 = vmul.f32 %v664, %v706
        %v713 = vmul.f32 %v665, %v707
        %v715 = vlaneseq
        %v716 = vshrl.u32 %v715, 7
        %v717 = vsub.s32 0, %v716
        %v718 = vrot.slane %v632, %v717
        %v720 = vmul.f32 %v708, %v718
        %v721 = vmul.f32 %v709, %v718
        %v722 = vmul.f32 %v710, %v718
        %v723 = vmul.f32 %v711, %v718
        %v724 = vmul.f32 %v712, %v718
        %v725 = vmul.f32 %v713, %v718
        %v727 = vlaneseq
        %v728 = vshrl.u32 %v727, 7
        %v729 = vsub.s32 0, %v728
        %v730 = vrot.slane %v633, %v729
        %v732 = vadd.f32 %v720, %v730
        %v733 = vadd.f32 %v721, %v730
        %v734 = vadd.f32 %v722, %v730
        %v735 = vadd.f32 %v723, %v730
        %v736 = vadd.f32 %v724, %v730
        %v737 = vadd.f32 %v725, %v730
        %v738 = vpack.c.bf16 %v733, %v732
        %v739 = vpack.c.bf16 %v735, %v734
        %v740 = vpack.c.bf16 %v737, %v736
        %v741 = vld [vmem:[#allocation9] sm:$0xff]
        %v742 = vld [vmem:[#allocation9 + $0x8] sm:$0xff]
        %v743 = vld [vmem:[#allocation9 + $0x10] sm:$0xff]
        %v744 = vld [vmem:[#allocation9 + $0x18] sm:$0xff]
        %v745 = vld [vmem:[#allocation9 + $0x20] sm:$0xff]
        %v746 = vld [vmem:[#allocation9 + $0x28] sm:$0xff]
        %v747 = vld [vmem:[#allocation9 + $0x30] sm:$0xff]
        %v748 = vld [vmem:[#allocation9 + $0x38] sm:$0xff]
        %v749 = vld [vmem:[#allocation11] sm:$0x3]
        %v751 = vlaneseq
        %v752 = vshrl.u32 %v751, 7
        %v753 = vsub.s32 0, %v752
        %v754 = vrot.slane %v749, %v753
        %v755 = vlaneseq
        %v756 = vshrl.u32 %v755, 7
        %v757 = vsub.s32 1, %v756
        %v758 = vrot.slane %v749, %v757
        %v769 = vunpack.c.l.b16 %v741
        %v770 = vunpack.c.h.b16 %v741
        %v771 = vunpack.c.l.b16 %v742
        %v772 = vunpack.c.h.b16 %v742
        %v773 = vunpack.c.l.b16 %v743
        %v774 = vunpack.c.h.b16 %v743
        %v775 = vunpack.c.l.b16 %v744
        %v776 = vunpack.c.h.b16 %v744
        %v777 = vunpack.c.l.b16 %v745
        %v778 = vunpack.c.h.b16 %v745
        %v779 = vunpack.c.l.b16 %v746
        %v780 = vunpack.c.h.b16 %v746
        %v781 = vunpack.c.l.b16 %v747
        %v782 = vunpack.c.h.b16 %v747
        %v783 = vunpack.c.l.b16 %v748
        %v784 = vunpack.c.h.b16 %v748
        %v785 = vpack.c.b16 %v771, %v769
        %v786 = vpack.c.b16 %v772, %v770
        %v787 = vpack.c.b16 %v775, %v773
        %v788 = vpack.c.b16 %v776, %v774
        %v789 = vpack.c.b16 %v779, %v777
        %v790 = vpack.c.b16 %v780, %v778
        %v791 = vpack.c.b16 %v783, %v781
        %v792 = vpack.c.b16 %v784, %v782
        %v802 = vsel %vm634, %v738, 0
        %v805 = vsel %vm634, %v739, 0
        %v808 = vsel %vm634, %v740, 0
        %810 = vmatprep.subr.bf16.mxu0 %v786
        %811 = vmatpush1.bf16.msra.mxu0 %v785
        %812 = vmatprep.subr.bf16.mxu0 %v788
        %813 = vmatpush1.bf16.msra.mxu0 %v787
        %814 = vmatprep.subr.bf16.mxu0 %v790
        %815 = vmatpush1.bf16.msra.mxu0 %v789
        %816 = vmatprep.subr.bf16.mxu0 %v792
        %817 = vmatpush1.bf16.msra.mxu0 %v791
        %818 = vmatprep.subr.bf16.mxu0 0
        %819 = vmatpush1.bf16.msra.mxu0 0
        %820 = vmatprep.subr.bf16.mxu0 0
        %821 = vmatpush1.bf16.msra.mxu0 0
        %822 = vmatprep.subr.bf16.mxu0 0
        %823 = vmatpush1.bf16.msra.mxu0 0
        %824 = vmatprep.subr.bf16.mxu0 0
        %825 = vmatpush1.bf16.msra.mxu0 0
        %826 = vmatprep.subr.bf16.mxu0 0
        %827 = vmatpush1.bf16.msra.mxu0 0
        %828 = vmatprep.subr.bf16.mxu0 0
        %829 = vmatpush1.bf16.msra.mxu0 0
        %830 = vmatprep.subr.bf16.mxu0 0
        %831 = vmatpush1.bf16.msra.mxu0 0
        %832 = vmatprep.subr.bf16.mxu0 0
        %833 = vmatpush1.bf16.msra.mxu0 0
        %834 = vmatprep.subr.bf16.mxu0 0
        %835 = vmatpush1.bf16.msra.mxu0 0
        %836 = vmatprep.subr.bf16.mxu0 0
        %837 = vmatpush1.bf16.msra.mxu0 0
        %838 = vmatprep.subr.bf16.mxu0 0
        %839 = vmatpush1.bf16.msra.mxu0 0
        %840 = vmatprep.subr.bf16.mxu0 0
        %841 = vmatpush1.bf16.msra.mxu0 0
        %842 = vmatprep.mubr.bf16.mxu0 0
        %843 = vmatmul.mubr.bf16.gmra.mrb[0].mxu0 %v802
        %v844 = vpop.f32.mrb[0].mxu0
        %v845 = vadd.f32 %v754, %v844
        %v846 = vpop.f32.mrb[0].mxu0
        %v847 = vadd.f32 %v758, %v846
        %v848 = vpop.f32.mrb[0].mxu0
        %v849 = vadd.f32 %v754, %v848
        %v850 = vpop.f32.mrb[0].mxu0
        %v851 = vadd.f32 %v758, %v850
        %852 = vmatprep.mubr.bf16.mxu0 0
        %853 = vmatmul.mubr.bf16.gmra.mrb[0].mxu0 %v805
        %v854 = vpop.f32.mrb[0].mxu0
        %v855 = vadd.f32 %v754, %v854
        %v856 = vpop.f32.mrb[0].mxu0
        %v857 = vadd.f32 %v758, %v856
        %v858 = vpop.f32.mrb[0].mxu0
        %v859 = vadd.f32 %v754, %v858
        %v860 = vpop.f32.mrb[0].mxu0
        %v861 = vadd.f32 %v758, %v860
        %862 = vmatprep.mubr.bf16.mxu0 0
        %863 = vmatmul.mubr.bf16.gmra.mrb[0].mxu0 %v808
        %v864 = vpop.f32.mrb[0].mxu0
        %v865 = vadd.f32 %v754, %v864
        %v866 = vpop.f32.mrb[0].mxu0
        %v867 = vadd.f32 %v758, %v866
        %v868 = vpop.f32.mrb[0].mxu0
        %v869 = vadd.f32 %v754, %v868
        %v870 = vpop.f32.mrb[0].mxu0
        %v871 = vadd.f32 %v758, %v870
        %872 = vdwg.mxu0
        %v873 = vlaneseq
        %v874 = vshrl.u32 %v873, 7
        %v875 = vlaneseq
        %v876 = vand.u32 %v875, 127
        %vm877 = vcmp.le.s32.totalorder %v876, %v874
        %879 = vrot.lane.b32.xlu0 %v845, 64
        %v880 = vpop.permute.xlu0 %879
        %vm881 = vcmask 130048
        %v882 = vsel %vm881, %v845, 0
        %v884 = vsel %vm881, %v880, 0
        %886 = vmatprep.subr.mxu0 0.0
        %887 = vmatpush1.xpose.msra.mxu0 %v884
        %888 = vmatprep.subr.mxu0 0.0
        %889 = vmatpush1.xpose.msra.mxu0 0.0
        %890 = vmatprep.subr.mxu0 0.0
        %891 = vmatpush1.xpose.msra.mxu0 0.0
        %892 = vmatprep.subr.mxu0 0.0
        %893 = vmatpush1.xpose.msra.mxu0 0.0
        %894 = vmatprep.subr.mxu0 0.0
        %895 = vmatpush1.xpose.msra.mxu0 0.0
        %896 = vmatprep.subr.mxu0 0.0
        %897 = vmatpush1.xpose.msra.mxu0 0.0
        %898 = vmatprep.subr.mxu0 0.0
        %899 = vmatpush1.xpose.msra.mxu0 0.0
        %900 = vmatprep.subr.mxu0 0.0
        %901 = vmatpush1.xpose.msra.mxu0 0.0
        %902 = vmatprep.subr.mxu0 0.0
        %903 = vmatpush1.xpose.msra.mxu0 0.0
        %904 = vmatprep.subr.mxu0 0.0
        %905 = vmatpush1.xpose.msra.mxu0 0.0
        %906 = vmatprep.subr.mxu0 0.0
        %907 = vmatpush1.xpose.msra.mxu0 0.0
        %908 = vmatprep.subr.mxu0 0.0
        %909 = vmatpush1.xpose.msra.mxu0 0.0
        %910 = vmatprep.subr.mxu0 0.0
        %911 = vmatpush1.xpose.msra.mxu0 0.0
        %912 = vmatprep.subr.mxu0 0.0
        %913 = vmatpush1.xpose.msra.mxu0 0.0
        %914 = vmatprep.subr.mxu0 0.0
        %915 = vmatpush1.xpose.msra.mxu0 0.0
        %916 = vmatprep.subr.mxu0 0.0
        %917 = vmatpush1.xpose.msra.mxu0 0.0
        %918 = vmatprep.subr.mxu0 0.0
        %919 = vmatpush1.xpose.msra.mxu0 0.0
        %920 = vmatprep.subr.mxu0 0.0
        %921 = vmatpush1.xpose.msra.mxu0 0.0
        %922 = vmatprep.subr.mxu0 0.0
        %923 = vmatpush1.xpose.msra.mxu0 0.0
        %924 = vmatprep.subr.mxu0 0.0
        %925 = vmatpush1.xpose.msra.mxu0 0.0
        %926 = vmatprep.subr.mxu0 0.0
        %927 = vmatpush1.xpose.msra.mxu0 0.0
        %928 = vmatprep.subr.mxu0 0.0
        %929 = vmatpush1.xpose.msra.mxu0 0.0
        %930 = vmatprep.subr.mxu0 0.0
        %931 = vmatpush1.xpose.msra.mxu0 0.0
        %932 = vmatprep.subr.mxu0 0.0
        %933 = vmatpush1.xpose.msra.mxu0 0.0
        %934 = vmatprep.subr.mxu0 0.0
        %935 = vmatpush1.xpose.msra.mxu0 0.0
        %936 = vmatprep.subr.mxu0 0.0
        %937 = vmatpush1.xpose.msra.mxu0 0.0
        %938 = vmatprep.subr.mxu0 0.0
        %939 = vmatpush1.xpose.msra.mxu0 0.0
        %940 = vmatprep.subr.mxu0 0.0
        %941 = vmatpush1.xpose.msra.mxu0 0.0
        %942 = vmatprep.subr.mxu0 0.0
        %943 = vmatpush1.xpose.msra.mxu0 0.0
        %944 = vmatprep.subr.mxu0 0.0
        %945 = vmatpush1.xpose.msra.mxu0 0.0
        %946 = vmatprep.subr.mxu0 0.0
        %947 = vmatpush1.xpose.msra.mxu0 0.0
        %948 = vmatprep.subr.mxu0 0.0
        %949 = vmatpush1.xpose.msra.mxu0 0.0
        %950 = vmatprep.mubr.f32.mxu0 0.0
        %951 = vmatmul.mubr.f32.gmra.mrb[0].mxu0 %v882
        %v952 = vpop.f32.mrb[0].mxu0
        %v953 = vadd.f32 0.0, %v952
        %v954 = vpop.f32.mrb[0].mxu0
        %955 = vdwg.mxu0
        %957 = vrot.lane.b32.xlu0 %v849, 64
        %v958 = vpop.permute.xlu0 %957
        %v959 = vsel %vm881, %v849, 0
        %v961 = vsel %vm881, %v958, 0
        %963 = vmatprep.subr.mxu0 0.0
        %964 = vmatpush1.xpose.msra.mxu0 %v961
        %965 = vmatprep.subr.mxu0 0.0
        %966 = vmatpush1.xpose.msra.mxu0 0.0
        %967 = vmatprep.subr.mxu0 0.0
        %968 = vmatpush1.xpose.msra.mxu0 0.0
        %969 = vmatprep.subr.mxu0 0.0
        %970 = vmatpush1.xpose.msra.mxu0 0.0
        %971 = vmatprep.subr.mxu0 0.0
        %972 = vmatpush1.xpose.msra.mxu0 0.0
        %973 = vmatprep.subr.mxu0 0.0
        %974 = vmatpush1.xpose.msra.mxu0 0.0
        %975 = vmatprep.subr.mxu0 0.0
        %976 = vmatpush1.xpose.msra.mxu0 0.0
        %977 = vmatprep.subr.mxu0 0.0
        %978 = vmatpush1.xpose.msra.mxu0 0.0
        %979 = vmatprep.subr.mxu0 0.0
        %980 = vmatpush1.xpose.msra.mxu0 0.0
        %981 = vmatprep.subr.mxu0 0.0
        %982 = vmatpush1.xpose.msra.mxu0 0.0
        %983 = vmatprep.subr.mxu0 0.0
        %984 = vmatpush1.xpose.msra.mxu0 0.0
        %985 = vmatprep.subr.mxu0 0.0
        %986 = vmatpush1.xpose.msra.mxu0 0.0
        %987 = vmatprep.subr.mxu0 0.0
        %988 = vmatpush1.xpose.msra.mxu0 0.0
        %989 = vmatprep.subr.mxu0 0.0
        %990 = vmatpush1.xpose.msra.mxu0 0.0
        %991 = vmatprep.subr.mxu0 0.0
        %992 = vmatpush1.xpose.msra.mxu0 0.0
        %993 = vmatprep.subr.mxu0 0.0
        %994 = vmatpush1.xpose.msra.mxu0 0.0
        %995 = vmatprep.subr.mxu0 0.0
        %996 = vmatpush1.xpose.msra.mxu0 0.0
        %997 = vmatprep.subr.mxu0 0.0
        %998 = vmatpush1.xpose.msra.mxu0 0.0
        %999 = vmatprep.subr.mxu0 0.0
        %1000 = vmatpush1.xpose.msra.mxu0 0.0
        %1001 = vmatprep.subr.mxu0 0.0
        %1002 = vmatpush1.xpose.msra.mxu0 0.0
        %1003 = vmatprep.subr.mxu0 0.0
        %1004 = vmatpush1.xpose.msra.mxu0 0.0
        %1005 = vmatprep.subr.mxu0 0.0
        %1006 = vmatpush1.xpose.msra.mxu0 0.0
        %1007 = vmatprep.subr.mxu0 0.0
        %1008 = vmatpush1.xpose.msra.mxu0 0.0
        %1009 = vmatprep.subr.mxu0 0.0
        %1010 = vmatpush1.xpose.msra.mxu0 0.0
        %1011 = vmatprep.subr.mxu0 0.0
        %1012 = vmatpush1.xpose.msra.mxu0 0.0
        %1013 = vmatprep.subr.mxu0 0.0
        %1014 = vmatpush1.xpose.msra.mxu0 0.0
        %1015 = vmatprep.subr.mxu0 0.0
        %1016 = vmatpush1.xpose.msra.mxu0 0.0
        %1017 = vmatprep.subr.mxu0 0.0
        %1018 = vmatpush1.xpose.msra.mxu0 0.0
        %1019 = vmatprep.subr.mxu0 0.0
        %1020 = vmatpush1.xpose.msra.mxu0 0.0
        %1021 = vmatprep.subr.mxu0 0.0
        %1022 = vmatpush1.xpose.msra.mxu0 0.0
        %1023 = vmatprep.subr.mxu0 0.0
        %1024 = vmatpush1.xpose.msra.mxu0 0.0
        %1025 = vmatprep.subr.mxu0 0.0
        %1026 = vmatpush1.xpose.msra.mxu0 0.0
        %1027 = vmatprep.mubr.f32.mxu0 0.0
        %1028 = vmatmul.mubr.f32.gmra.mrb[0].mxu0 %v959
        %v1029 = vpop.f32.mrb[0].mxu0
        %v1030 = vadd.f32 0.0, %v1029
        %v1031 = vpop.f32.mrb[0].mxu0
        %1032 = vdwg.mxu0
        %1034 = vrot.lane.b32.xlu0 %v855, 64
        %v1035 = vpop.permute.xlu0 %1034
        %v1036 = vsel %vm881, %v855, 0
        %v1038 = vsel %vm881, %v1035, 0
        %1040 = vmatprep.subr.mxu0 0.0
        %1041 = vmatpush1.xpose.msra.mxu0 %v1038
        %1042 = vmatprep.subr.mxu0 0.0
        %1043 = vmatpush1.xpose.msra.mxu0 0.0
        %1044 = vmatprep.subr.mxu0 0.0
        %1045 = vmatpush1.xpose.msra.mxu0 0.0
        %1046 = vmatprep.subr.mxu0 0.0
        %1047 = vmatpush1.xpose.msra.mxu0 0.0
        %1048 = vmatprep.subr.mxu0 0.0
        %1049 = vmatpush1.xpose.msra.mxu0 0.0
        %1050 = vmatprep.subr.mxu0 0.0
        %1051 = vmatpush1.xpose.msra.mxu0 0.0
        %1052 = vmatprep.subr.mxu0 0.0
        %1053 = vmatpush1.xpose.msra.mxu0 0.0
        %1054 = vmatprep.subr.mxu0 0.0
        %1055 = vmatpush1.xpose.msra.mxu0 0.0
        %1056 = vmatprep.subr.mxu0 0.0
        %1057 = vmatpush1.xpose.msra.mxu0 0.0
        %1058 = vmatprep.subr.mxu0 0.0
        %1059 = vmatpush1.xpose.msra.mxu0 0.0
        %1060 = vmatprep.subr.mxu0 0.0
        %1061 = vmatpush1.xpose.msra.mxu0 0.0
        %1062 = vmatprep.subr.mxu0 0.0
        %1063 = vmatpush1.xpose.msra.mxu0 0.0
        %1064 = vmatprep.subr.mxu0 0.0
        %1065 = vmatpush1.xpose.msra.mxu0 0.0
        %1066 = vmatprep.subr.mxu0 0.0
        %1067 = vmatpush1.xpose.msra.mxu0 0.0
        %1068 = vmatprep.subr.mxu0 0.0
        %1069 = vmatpush1.xpose.msra.mxu0 0.0
        %1070 = vmatprep.subr.mxu0 0.0
        %1071 = vmatpush1.xpose.msra.mxu0 0.0
        %1072 = vmatprep.subr.mxu0 0.0
        %1073 = vmatpush1.xpose.msra.mxu0 0.0
        %1074 = vmatprep.subr.mxu0 0.0
        %1075 = vmatpush1.xpose.msra.mxu0 0.0
        %1076 = vmatprep.subr.mxu0 0.0
        %1077 = vmatpush1.xpose.msra.mxu0 0.0
        %1078 = vmatprep.subr.mxu0 0.0
        %1079 = vmatpush1.xpose.msra.mxu0 0.0
        %1080 = vmatprep.subr.mxu0 0.0
        %1081 = vmatpush1.xpose.msra.mxu0 0.0
        %1082 = vmatprep.subr.mxu0 0.0
        %1083 = vmatpush1.xpose.msra.mxu0 0.0
        %1084 = vmatprep.subr.mxu0 0.0
        %1085 = vmatpush1.xpose.msra.mxu0 0.0
        %1086 = vmatprep.subr.mxu0 0.0
        %1087 = vmatpush1.xpose.msra.mxu0 0.0
        %1088 = vmatprep.subr.mxu0 0.0
        %1089 = vmatpush1.xpose.msra.mxu0 0.0
        %1090 = vmatprep.subr.mxu0 0.0
        %1091 = vmatpush1.xpose.msra.mxu0 0.0
        %1092 = vmatprep.subr.mxu0 0.0
        %1093 = vmatpush1.xpose.msra.mxu0 0.0
        %1094 = vmatprep.subr.mxu0 0.0
        %1095 = vmatpush1.xpose.msra.mxu0 0.0
        %1096 = vmatprep.subr.mxu0 0.0
        %1097 = vmatpush1.xpose.msra.mxu0 0.0
        %1098 = vmatprep.subr.mxu0 0.0
        %1099 = vmatpush1.xpose.msra.mxu0 0.0
        %1100 = vmatprep.subr.mxu0 0.0
        %1101 = vmatpush1.xpose.msra.mxu0 0.0
        %1102 = vmatprep.subr.mxu0 0.0
        %1103 = vmatpush1.xpose.msra.mxu0 0.0
        %1104 = vmatprep.mubr.f32.mxu0 0.0
        %1105 = vmatmul.mubr.f32.gmra.mrb[0].mxu0 %v1036
        %v1106 = vpop.f32.mrb[0].mxu0
        %v1107 = vadd.f32 0.0, %v1106
        %v1108 = vpop.f32.mrb[0].mxu0
        %1109 = vdwg.mxu0
        %1111 = vrot.lane.b32.xlu0 %v859, 64
        %v1112 = vpop.permute.xlu0 %1111
        %v1113 = vsel %vm881, %v859, 0
        %v1115 = vsel %vm881, %v1112, 0
        %1117 = vmatprep.subr.mxu0 0.0
        %1118 = vmatpush1.xpose.msra.mxu0 %v1115
        %1119 = vmatprep.subr.mxu0 0.0
        %1120 = vmatpush1.xpose.msra.mxu0 0.0
        %1121 = vmatprep.subr.mxu0 0.0
        %1122 = vmatpush1.xpose.msra.mxu0 0.0
        %1123 = vmatprep.subr.mxu0 0.0
        %1124 = vmatpush1.xpose.msra.mxu0 0.0
        %1125 = vmatprep.subr.mxu0 0.0
        %1126 = vmatpush1.xpose.msra.mxu0 0.0
        %1127 = vmatprep.subr.mxu0 0.0
        %1128 = vmatpush1.xpose.msra.mxu0 0.0
        %1129 = vmatprep.subr.mxu0 0.0
        %1130 = vmatpush1.xpose.msra.mxu0 0.0
        %1131 = vmatprep.subr.mxu0 0.0
        %1132 = vmatpush1.xpose.msra.mxu0 0.0
        %1133 = vmatprep.subr.mxu0 0.0
        %1134 = vmatpush1.xpose.msra.mxu0 0.0
        %1135 = vmatprep.subr.mxu0 0.0
        %1136 = vmatpush1.xpose.msra.mxu0 0.0
        %1137 = vmatprep.subr.mxu0 0.0
        %1138 = vmatpush1.xpose.msra.mxu0 0.0
        %1139 = vmatprep.subr.mxu0 0.0
        %1140 = vmatpush1.xpose.msra.mxu0 0.0
        %1141 = vmatprep.subr.mxu0 0.0
        %1142 = vmatpush1.xpose.msra.mxu0 0.0
        %1143 = vmatprep.subr.mxu0 0.0
        %1144 = vmatpush1.xpose.msra.mxu0 0.0
        %1145 = vmatprep.subr.mxu0 0.0
        %1146 = vmatpush1.xpose.msra.mxu0 0.0
        %1147 = vmatprep.subr.mxu0 0.0
        %1148 = vmatpush1.xpose.msra.mxu0 0.0
        %1149 = vmatprep.subr.mxu0 0.0
        %1150 = vmatpush1.xpose.msra.mxu0 0.0
        %1151 = vmatprep.subr.mxu0 0.0
        %1152 = vmatpush1.xpose.msra.mxu0 0.0
        %1153 = vmatprep.subr.mxu0 0.0
        %1154 = vmatpush1.xpose.msra.mxu0 0.0
        %1155 = vmatprep.subr.mxu0 0.0
        %1156 = vmatpush1.xpose.msra.mxu0 0.0
        %1157 = vmatprep.subr.mxu0 0.0
        %1158 = vmatpush1.xpose.msra.mxu0 0.0
        %1159 = vmatprep.subr.mxu0 0.0
        %1160 = vmatpush1.xpose.msra.mxu0 0.0
        %1161 = vmatprep.subr.mxu0 0.0
        %1162 = vmatpush1.xpose.msra.mxu0 0.0
        %1163 = vmatprep.subr.mxu0 0.0
        %1164 = vmatpush1.xpose.msra.mxu0 0.0
        %1165 = vmatprep.subr.mxu0 0.0
        %1166 = vmatpush1.xpose.msra.mxu0 0.0
        %1167 = vmatprep.subr.mxu0 0.0
        %1168 = vmatpush1.xpose.msra.mxu0 0.0
        %1169 = vmatprep.subr.mxu0 0.0
        %1170 = vmatpush1.xpose.msra.mxu0 0.0
        %1171 = vmatprep.subr.mxu0 0.0
        %1172 = vmatpush1.xpose.msra.mxu0 0.0
        %1173 = vmatprep.subr.mxu0 0.0
        %1174 = vmatpush1.xpose.msra.mxu0 0.0
        %1175 = vmatprep.subr.mxu0 0.0
        %1176 = vmatpush1.xpose.msra.mxu0 0.0
        %1177 = vmatprep.subr.mxu0 0.0
        %1178 = vmatpush1.xpose.msra.mxu0 0.0
        %1179 = vmatprep.subr.mxu0 0.0
        %1180 = vmatpush1.xpose.msra.mxu0 0.0
        %1181 = vmatprep.mubr.f32.mxu0 0.0
        %1182 = vmatmul.mubr.f32.gmra.mrb[0].mxu0 %v1113
        %v1183 = vpop.f32.mrb[0].mxu0
        %v1184 = vadd.f32 0.0, %v1183
        %v1185 = vpop.f32.mrb[0].mxu0
        %1186 = vdwg.mxu0
        %1188 = vrot.lane.b32.xlu0 %v865, 64
        %v1189 = vpop.permute.xlu0 %1188
        %v1190 = vsel %vm881, %v865, 0
        %v1192 = vsel %vm881, %v1189, 0
        %1194 = vmatprep.subr.mxu0 0.0
        %1195 = vmatpush1.xpose.msra.mxu0 %v1192
        %1196 = vmatprep.subr.mxu0 0.0
        %1197 = vmatpush1.xpose.msra.mxu0 0.0
        %1198 = vmatprep.subr.mxu0 0.0
        %1199 = vmatpush1.xpose.msra.mxu0 0.0
        %1200 = vmatprep.subr.mxu0 0.0
        %1201 = vmatpush1.xpose.msra.mxu0 0.0
        %1202 = vmatprep.subr.mxu0 0.0
        %1203 = vmatpush1.xpose.msra.mxu0 0.0
        %1204 = vmatprep.subr.mxu0 0.0
        %1205 = vmatpush1.xpose.msra.mxu0 0.0
        %1206 = vmatprep.subr.mxu0 0.0
        %1207 = vmatpush1.xpose.msra.mxu0 0.0
        %1208 = vmatprep.subr.mxu0 0.0
        %1209 = vmatpush1.xpose.msra.mxu0 0.0
        %1210 = vmatprep.subr.mxu0 0.0
        %1211 = vmatpush1.xpose.msra.mxu0 0.0
        %1212 = vmatprep.subr.mxu0 0.0
        %1213 = vmatpush1.xpose.msra.mxu0 0.0
        %1214 = vmatprep.subr.mxu0 0.0
        %1215 = vmatpush1.xpose.msra.mxu0 0.0
        %1216 = vmatprep.subr.mxu0 0.0
        %1217 = vmatpush1.xpose.msra.mxu0 0.0
        %1218 = vmatprep.subr.mxu0 0.0
        %1219 = vmatpush1.xpose.msra.mxu0 0.0
        %1220 = vmatprep.subr.mxu0 0.0
        %1221 = vmatpush1.xpose.msra.mxu0 0.0
        %1222 = vmatprep.subr.mxu0 0.0
        %1223 = vmatpush1.xpose.msra.mxu0 0.0
        %1224 = vmatprep.subr.mxu0 0.0
        %1225 = vmatpush1.xpose.msra.mxu0 0.0
        %1226 = vmatprep.subr.mxu0 0.0
        %1227 = vmatpush1.xpose.msra.mxu0 0.0
        %1228 = vmatprep.subr.mxu0 0.0
        %1229 = vmatpush1.xpose.msra.mxu0 0.0
        %1230 = vmatprep.subr.mxu0 0.0
        %1231 = vmatpush1.xpose.msra.mxu0 0.0
        %1232 = vmatprep.subr.mxu0 0.0
        %1233 = vmatpush1.xpose.msra.mxu0 0.0
        %1234 = vmatprep.subr.mxu0 0.0
        %1235 = vmatpush1.xpose.msra.mxu0 0.0
        %1236 = vmatprep.subr.mxu0 0.0
        %1237 = vmatpush1.xpose.msra.mxu0 0.0
        %1238 = vmatprep.subr.mxu0 0.0
        %1239 = vmatpush1.xpose.msra.mxu0 0.0
        %1240 = vmatprep.subr.mxu0 0.0
        %1241 = vmatpush1.xpose.msra.mxu0 0.0
        %1242 = vmatprep.subr.mxu0 0.0
        %1243 = vmatpush1.xpose.msra.mxu0 0.0
        %1244 = vmatprep.subr.mxu0 0.0
        %1245 = vmatpush1.xpose.msra.mxu0 0.0
        %1246 = vmatprep.subr.mxu0 0.0
        %1247 = vmatpush1.xpose.msra.mxu0 0.0
        %1248 = vmatprep.subr.mxu0 0.0
        %1249 = vmatpush1.xpose.msra.mxu0 0.0
        %1250 = vmatprep.subr.mxu0 0.0
        %1251 = vmatpush1.xpose.msra.mxu0 0.0
        %1252 = vmatprep.subr.mxu0 0.0
        %1253 = vmatpush1.xpose.msra.mxu0 0.0
        %1254 = vmatprep.subr.mxu0 0.0
        %1255 = vmatpush1.xpose.msra.mxu0 0.0
        %1256 = vmatprep.subr.mxu0 0.0
        %1257 = vmatpush1.xpose.msra.mxu0 0.0
        %1258 = vmatprep.mubr.f32.mxu0 0.0
        %1259 = vmatmul.mubr.f32.gmra.mrb[0].mxu0 %v1190
        %v1260 = vpop.f32.mrb[0].mxu0
        %v1261 = vadd.f32 0.0, %v1260
        %v1262 = vpop.f32.mrb[0].mxu0
        %1263 = vdwg.mxu0
        %1265 = vrot.lane.b32.xlu0 %v869, 64
        %v1266 = vpop.permute.xlu0 %1265
        %v1267 = vsel %vm881, %v869, 0
        %v1269 = vsel %vm881, %v1266, 0
        %1271 = vmatprep.subr.mxu0 0.0
        %1272 = vmatpush1.xpose.msra.mxu0 %v1269
        %1273 = vmatprep.subr.mxu0 0.0
        %1274 = vmatpush1.xpose.msra.mxu0 0.0
        %1275 = vmatprep.subr.mxu0 0.0
        %1276 = vmatpush1.xpose.msra.mxu0 0.0
        %1277 = vmatprep.subr.mxu0 0.0
        %1278 = vmatpush1.xpose.msra.mxu0 0.0
        %1279 = vmatprep.subr.mxu0 0.0
        %1280 = vmatpush1.xpose.msra.mxu0 0.0
        %1281 = vmatprep.subr.mxu0 0.0
        %1282 = vmatpush1.xpose.msra.mxu0 0.0
        %1283 = vmatprep.subr.mxu0 0.0
        %1284 = vmatpush1.xpose.msra.mxu0 0.0
        %1285 = vmatprep.subr.mxu0 0.0
        %1286 = vmatpush1.xpose.msra.mxu0 0.0
        %1287 = vmatprep.subr.mxu0 0.0
        %1288 = vmatpush1.xpose.msra.mxu0 0.0
        %1289 = vmatprep.subr.mxu0 0.0
        %1290 = vmatpush1.xpose.msra.mxu0 0.0
        %1291 = vmatprep.subr.mxu0 0.0
        %1292 = vmatpush1.xpose.msra.mxu0 0.0
        %1293 = vmatprep.subr.mxu0 0.0
        %1294 = vmatpush1.xpose.msra.mxu0 0.0
        %1295 = vmatprep.subr.mxu0 0.0
        %1296 = vmatpush1.xpose.msra.mxu0 0.0
        %1297 = vmatprep.subr.mxu0 0.0
        %1298 = vmatpush1.xpose.msra.mxu0 0.0
        %1299 = vmatprep.subr.mxu0 0.0
        %1300 = vmatpush1.xpose.msra.mxu0 0.0
        %1301 = vmatprep.subr.mxu0 0.0
        %1302 = vmatpush1.xpose.msra.mxu0 0.0
        %1303 = vmatprep.subr.mxu0 0.0
        %1304 = vmatpush1.xpose.msra.mxu0 0.0
        %1305 = vmatprep.subr.mxu0 0.0
        %1306 = vmatpush1.xpose.msra.mxu0 0.0
        %1307 = vmatprep.subr.mxu0 0.0
        %1308 = vmatpush1.xpose.msra.mxu0 0.0
        %1309 = vmatprep.subr.mxu0 0.0
        %1310 = vmatpush1.xpose.msra.mxu0 0.0
        %1311 = vmatprep.subr.mxu0 0.0
        %1312 = vmatpush1.xpose.msra.mxu0 0.0
        %1313 = vmatprep.subr.mxu0 0.0
        %1314 = vmatpush1.xpose.msra.mxu0 0.0
        %1315 = vmatprep.subr.mxu0 0.0
        %1316 = vmatpush1.xpose.msra.mxu0 0.0
        %1317 = vmatprep.subr.mxu0 0.0
        %1318 = vmatpush1.xpose.msra.mxu0 0.0
        %1319 = vmatprep.subr.mxu0 0.0
        %1320 = vmatpush1.xpose.msra.mxu0 0.0
        %1321 = vmatprep.subr.mxu0 0.0
        %1322 = vmatpush1.xpose.msra.mxu0 0.0
        %1323 = vmatprep.subr.mxu0 0.0
        %1324 = vmatpush1.xpose.msra.mxu0 0.0
        %1325 = vmatprep.subr.mxu0 0.0
        %1326 = vmatpush1.xpose.msra.mxu0 0.0
        %1327 = vmatprep.subr.mxu0 0.0
        %1328 = vmatpush1.xpose.msra.mxu0 0.0
        %1329 = vmatprep.subr.mxu0 0.0
        %1330 = vmatpush1.xpose.msra.mxu0 0.0
        %1331 = vmatprep.subr.mxu0 0.0
        %1332 = vmatpush1.xpose.msra.mxu0 0.0
        %1333 = vmatprep.subr.mxu0 0.0
        %1334 = vmatpush1.xpose.msra.mxu0 0.0
        %1335 = vmatprep.mubr.f32.mxu0 0.0
        %1336 = vmatmul.mubr.f32.gmra.mrb[0].mxu0 %v1267
        %v1337 = vpop.f32.mrb[0].mxu0
        %v1338 = vadd.f32 0.0, %v1337
        %v1339 = vpop.f32.mrb[0].mxu0
        %1340 = vdwg.mxu0
        %v1341 = vmul.f32 %v953, 0.25
        %v1342 = vmul.f32 %v1030, 0.25
        %v1343 = vmul.f32 %v1107, 0.25
        %v1344 = vmul.f32 %v1184, 0.25
        %v1345 = vmul.f32 %v1261, 0.25
        %v1346 = vmul.f32 %v1338, 0.25
        %v1347 = vsel %vm877, 1, 0
        %vm1348 = vcmp.eq.s32.totalorder %v1347, 1
        %v1349 = vsel %vm1348, %v1341, -1e+09
        %v1350 = vsel %vm1348, %v1342, -1e+09
        %v1351 = vsel %vm1348, %v1343, -1e+09
        %v1352 = vsel %vm1348, %v1344, -1e+09
        %v1353 = vsel %vm1348, %v1345, -1e+09
        %v1354 = vsel %vm1348, %v1346, -1e+09
        %vm1355 = vcmask 64512
        %v1356 = vsel %vm1355, %v1349, -inf
        %1357 = vmax.xlane.f32.xlu0 %v1356
        %v1358 = vpop.xlane.xlu0 %1357
        %v1359 = vsel %vm1355, %v1350, -inf
        %1360 = vmax.xlane.f32.xlu0 %v1359
        %v1361 = vpop.xlane.xlu0 %1360
        %v1362 = vsel %vm1355, %v1351, -inf
        %1363 = vmax.xlane.f32.xlu0 %v1362
        %v1364 = vpop.xlane.xlu0 %1363
        %v1365 = vsel %vm1355, %v1352, -inf
        %1366 = vmax.xlane.f32.xlu0 %v1365
        %v1367 = vpop.xlane.xlu0 %1366
        %v1368 = vsel %vm1355, %v1353, -inf
        %1369 = vmax.xlane.f32.xlu0 %v1368
        %v1370 = vpop.xlane.xlu0 %1369
        %v1371 = vsel %vm1355, %v1354, -inf
        %1372 = vmax.xlane.f32.xlu0 %v1371
        %v1373 = vpop.xlane.xlu0 %1372
        %v1374 = vsub.f32 %v1349, %v1358
        %v1375 = vsub.f32 %v1350, %v1361
        %v1376 = vsub.f32 %v1351, %v1364
        %v1377 = vsub.f32 %v1352, %v1367
        %v1378 = vsub.f32 %v1353, %v1370
        %v1379 = vsub.f32 %v1354, %v1373
        %v1380 = vmul.f32 %v1374, 1.442695
        %v1381 = vpow.pop %v1380
        %v1382 = vmul.f32 %v1375, 1.442695
        %v1383 = vpow.pop %v1382
        %v1384 = vmul.f32 %v1376, 1.442695
        %v1385 = vpow.pop %v1384
        %v1386 = vmul.f32 %v1377, 1.442695
        %v1387 = vpow.pop %v1386
        %v1388 = vmul.f32 %v1378, 1.442695
        %v1389 = vpow.pop %v1388
        %v1390 = vmul.f32 %v1379, 1.442695
        %v1391 = vpow.pop %v1390
        %v1392 = vsel %vm1355, %v1381, 0.0
        %1393 = vadd.xlane.f32.xlu0 %v1392
        %v1394 = vpop.xlane.xlu0 %1393
        %v1395 = vsel %vm1355, %v1383, 0.0
        %1396 = vadd.xlane.f32.xlu0 %v1395
        %v1397 = vpop.xlane.xlu0 %1396
        %v1398 = vsel %vm1355, %v1385, 0.0
        %1399 = vadd.xlane.f32.xlu0 %v1398
        %v1400 = vpop.xlane.xlu0 %1399
        %v1401 = vsel %vm1355, %v1387, 0.0
        %1402 = vadd.xlane.f32.xlu0 %v1401
        %v1403 = vpop.xlane.xlu0 %1402
        %v1404 = vsel %vm1355, %v1389, 0.0
        %1405 = vadd.xlane.f32.xlu0 %v1404
        %v1406 = vpop.xlane.xlu0 %1405
        %v1407 = vsel %vm1355, %v1391, 0.0
        %1408 = vadd.xlane.f32.xlu0 %v1407
        %v1409 = vpop.xlane.xlu0 %1408
        %v1410 = vrcp.pop %v1394
        %v1411 = vrcp.pop %v1397
        %v1412 = vrcp.pop %v1400
        %v1413 = vrcp.pop %v1403
        %v1414 = vrcp.pop %v1406
        %v1415 = vrcp.pop %v1409
        %v1416 = vmul.f32 %v1381, %v1410
        %v1417 = vmul.f32 %v1383, %v1411
        %v1418 = vmul.f32 %v1385, %v1412
        %v1419 = vmul.f32 %v1387, %v1413
        %v1420 = vmul.f32 %v1389, %v1414
        %v1421 = vmul.f32 %v1391, %v1415
        %v1422 = vpack.c.bf16 %v1416, %v1416
        %v1423 = vpack.c.bf16 %v1417, %v1417
        %v1424 = vpack.c.bf16 %v1418, %v1418
        %v1425 = vpack.c.bf16 %v1419, %v1419
        %v1426 = vpack.c.bf16 %v1420, %v1420
        %v1427 = vpack.c.bf16 %v1421, %v1421
        %v1428 = vpack.c.bf16 %v847, %v847
        %v1429 = vpack.c.bf16 %v851, %v851
        %v1430 = vpack.c.bf16 %v857, %v857
        %v1431 = vpack.c.bf16 %v861, %v861
        %v1432 = vpack.c.bf16 %v867, %v867
        %v1433 = vpack.c.bf16 %v871, %v871
        %v1435 = vsel %vm1355, %v1422, 0
        %vm1437 = vcmask 1043456
        %v1439 = vsel %vm1437, %v1428, 0
        %1441 = vmatprep.subr.bf16.mxu0 0
        %1442 = vmatpush1.bf16.msra.mxu0 %v1439
        %1443 = vmatprep.subr.bf16.mxu0 0
        %1444 = vmatpush1.bf16.msra.mxu0 0
        %1445 = vmatprep.subr.bf16.mxu0 0
        %1446 = vmatpush1.bf16.msra.mxu0 0
        %1447 = vmatprep.subr.bf16.mxu0 0
        %1448 = vmatpush1.bf16.msra.mxu0 0
        %1449 = vmatprep.subr.bf16.mxu0 0
        %1450 = vmatpush1.bf16.msra.mxu0 0
        %1451 = vmatprep.subr.bf16.mxu0 0
        %1452 = vmatpush1.bf16.msra.mxu0 0
        %1453 = vmatprep.subr.bf16.mxu0 0
        %1454 = vmatpush1.bf16.msra.mxu0 0
        %1455 = vmatprep.subr.bf16.mxu0 0
        %1456 = vmatpush1.bf16.msra.mxu0 0
        %1457 = vmatprep.subr.bf16.mxu0 0
        %1458 = vmatpush1.bf16.msra.mxu0 0
        %1459 = vmatprep.subr.bf16.mxu0 0
        %1460 = vmatpush1.bf16.msra.mxu0 0
        %1461 = vmatprep.subr.bf16.mxu0 0
        %1462 = vmatpush1.bf16.msra.mxu0 0
        %1463 = vmatprep.subr.bf16.mxu0 0
        %1464 = vmatpush1.bf16.msra.mxu0 0
        %1465 = vmatprep.subr.bf16.mxu0 0
        %1466 = vmatpush1.bf16.msra.mxu0 0
        %1467 = vmatprep.subr.bf16.mxu0 0
        %1468 = vmatpush1.bf16.msra.mxu0 0
        %1469 = vmatprep.subr.bf16.mxu0 0
        %1470 = vmatpush1.bf16.msra.mxu0 0
        %1471 = vmatprep.subr.bf16.mxu0 0
        %1472 = vmatpush1.bf16.msra.mxu0 0
        %1473 = vmatprep.mubr.bf16.mxu0 0
        %1474 = vmatmul.mubr.bf16.gmra.mrb[0].mxu0 %v1435
        %v1475 = vpop.f32.mrb[0].mxu0
        %v1476 = vadd.f32 0.0, %v1475
        %v1477 = vpop.f32.mrb[0].mxu0
        %v1478 = vpop.f32.mrb[0].mxu0
        %v1479 = vpop.f32.mrb[0].mxu0
        %1480 = vdwg.mxu0
        %v1482 = vsel %vm1355, %v1423, 0
        %v1485 = vsel %vm1437, %v1429, 0
        %1487 = vmatprep.subr.bf16.mxu0 0
        %1488 = vmatpush1.bf16.msra.mxu0 %v1485
        %1489 = vmatprep.subr.bf16.mxu0 0
        %1490 = vmatpush1.bf16.msra.mxu0 0
        %1491 = vmatprep.subr.bf16.mxu0 0
        %1492 = vmatpush1.bf16.msra.mxu0 0
        %1493 = vmatprep.subr.bf16.mxu0 0
        %1494 = vmatpush1.bf16.msra.mxu0 0
        %1495 = vmatprep.subr.bf16.mxu0 0
        %1496 = vmatpush1.bf16.msra.mxu0 0
        %1497 = vmatprep.subr.bf16.mxu0 0
        %1498 = vmatpush1.bf16.msra.mxu0 0
        %1499 = vmatprep.subr.bf16.mxu0 0
        %1500 = vmatpush1.bf16.msra.mxu0 0
        %1501 = vmatprep.subr.bf16.mxu0 0
        %1502 = vmatpush1.bf16.msra.mxu0 0
        %1503 = vmatprep.subr.bf16.mxu0 0
        %1504 = vmatpush1.bf16.msra.mxu0 0
        %1505 = vmatprep.subr.bf16.mxu0 0
        %1506 = vmatpush1.bf16.msra.mxu0 0
        %1507 = vmatprep.subr.bf16.mxu0 0
        %1508 = vmatpush1.bf16.msra.mxu0 0
        %1509 = vmatprep.subr.bf16.mxu0 0
        %1510 = vmatpush1.bf16.msra.mxu0 0
        %1511 = vmatprep.subr.bf16.mxu0 0
        %1512 = vmatpush1.bf16.msra.mxu0 0
        %1513 = vmatprep.subr.bf16.mxu0 0
        %1514 = vmatpush1.bf16.msra.mxu0 0
        %1515 = vmatprep.subr.bf16.mxu0 0
        %1516 = vmatpush1.bf16.msra.mxu0 0
        %1517 = vmatprep.subr.bf16.mxu0 0
        %1518 = vmatpush1.bf16.msra.mxu0 0
        %1519 = vmatprep.mubr.bf16.mxu0 0
        %1520 = vmatmul.mubr.bf16.gmra.mrb[0].mxu0 %v1482
        %v1521 = vpop.f32.mrb[0].mxu0
        %v1522 = vadd.f32 0.0, %v1521
        %v1523 = vpop.f32.mrb[0].mxu0
        %v1524 = vpop.f32.mrb[0].mxu0
        %v1525 = vpop.f32.mrb[0].mxu0
        %1526 = vdwg.mxu0
        %v1528 = vsel %vm1355, %v1424, 0
        %v1531 = vsel %vm1437, %v1430, 0
        %1533 = vmatprep.subr.bf16.mxu0 0
        %1534 = vmatpush1.bf16.msra.mxu0 %v1531
        %1535 = vmatprep.subr.bf16.mxu0 0
        %1536 = vmatpush1.bf16.msra.mxu0 0
        %1537 = vmatprep.subr.bf16.mxu0 0
        %1538 = vmatpush1.bf16.msra.mxu0 0
        %1539 = vmatprep.subr.bf16.mxu0 0
        %1540 = vmatpush1.bf16.msra.mxu0 0
        %1541 = vmatprep.subr.bf16.mxu0 0
        %1542 = vmatpush1.bf16.msra.mxu0 0
        %1543 = vmatprep.subr.bf16.mxu0 0
        %1544 = vmatpush1.bf16.msra.mxu0 0
        %1545 = vmatprep.subr.bf16.mxu0 0
        %1546 = vmatpush1.bf16.msra.mxu0 0
        %1547 = vmatprep.subr.bf16.mxu0 0
        %1548 = vmatpush1.bf16.msra.mxu0 0
        %1549 = vmatprep.subr.bf16.mxu0 0
        %1550 = vmatpush1.bf16.msra.mxu0 0
        %1551 = vmatprep.subr.bf16.mxu0 0
        %1552 = vmatpush1.bf16.msra.mxu0 0
        %1553 = vmatprep.subr.bf16.mxu0 0
        %1554 = vmatpush1.bf16.msra.mxu0 0
        %1555 = vmatprep.subr.bf16.mxu0 0
        %1556 = vmatpush1.bf16.msra.mxu0 0
        %1557 = vmatprep.subr.bf16.mxu0 0
        %1558 = vmatpush1.bf16.msra.mxu0 0
        %1559 = vmatprep.subr.bf16.mxu0 0
        %1560 = vmatpush1.bf16.msra.mxu0 0
        %1561 = vmatprep.subr.bf16.mxu0 0
        %1562 = vmatpush1.bf16.msra.mxu0 0
        %1563 = vmatprep.subr.bf16.mxu0 0
        %1564 = vmatpush1.bf16.msra.mxu0 0
        %1565 = vmatprep.mubr.bf16.mxu0 0
        %1566 = vmatmul.mubr.bf16.gmra.mrb[0].mxu0 %v1528
        %v1567 = vpop.f32.mrb[0].mxu0
        %v1568 = vadd.f32 0.0, %v1567
        %v1569 = vpop.f32.mrb[0].mxu0
        %v1570 = vpop.f32.mrb[0].mxu0
        %v1571 = vpop.f32.mrb[0].mxu0
        %1572 = vdwg.mxu0
        %v1574 = vsel %vm1355, %v1425, 0
        %v1577 = vsel %vm1437, %v1431, 0
        %1579 = vmatprep.subr.bf16.mxu0 0
        %1580 = vmatpush1.bf16.msra.mxu0 %v1577
        %1581 = vmatprep.subr.bf16.mxu0 0
        %1582 = vmatpush1.bf16.msra.mxu0 0
        %1583 = vmatprep.subr.bf16.mxu0 0
        %1584 = vmatpush1.bf16.msra.mxu0 0
        %1585 = vmatprep.subr.bf16.mxu0 0
        %1586 = vmatpush1.bf16.msra.mxu0 0
        %1587 = vmatprep.subr.bf16.mxu0 0
        %1588 = vmatpush1.bf16.msra.mxu0 0
        %1589 = vmatprep.subr.bf16.mxu0 0
        %1590 = vmatpush1.bf16.msra.mxu0 0
        %1591 = vmatprep.subr.bf16.mxu0 0
        %1592 = vmatpush1.bf16.msra.mxu0 0
        %1593 = vmatprep.subr.bf16.mxu0 0
        %1594 = vmatpush1.bf16.msra.mxu0 0
        %1595 = vmatprep.subr.bf16.mxu0 0
        %1596 = vmatpush1.bf16.msra.mxu0 0
        %1597 = vmatprep.subr.bf16.mxu0 0
        %1598 = vmatpush1.bf16.msra.mxu0 0
        %1599 = vmatprep.subr.bf16.mxu0 0
        %1600 = vmatpush1.bf16.msra.mxu0 0
        %1601 = vmatprep.subr.bf16.mxu0 0
        %1602 = vmatpush1.bf16.msra.mxu0 0
        %1603 = vmatprep.subr.bf16.mxu0 0
        %1604 = vmatpush1.bf16.msra.mxu0 0
        %1605 = vmatprep.subr.bf16.mxu0 0
        %1606 = vmatpush1.bf16.msra.mxu0 0
        %1607 = vmatprep.subr.bf16.mxu0 0
        %1608 = vmatpush1.bf16.msra.mxu0 0
        %1609 = vmatprep.subr.bf16.mxu0 0
        %1610 = vmatpush1.bf16.msra.mxu0 0
        %1611 = vmatprep.mubr.bf16.mxu0 0
        %1612 = vmatmul.mubr.bf16.gmra.mrb[0].mxu0 %v1574
        %v1613 = vpop.f32.mrb[0].mxu0
        %v1614 = vadd.f32 0.0, %v1613
        %v1615 = vpop.f32.mrb[0].mxu0
        %v1616 = vpop.f32.mrb[0].mxu0
        %v1617 = vpop.f32.mrb[0].mxu0
        %1618 = vdwg.mxu0
        %v1620 = vsel %vm1355, %v1426, 0
        %v1623 = vsel %vm1437, %v1432, 0
        %1625 = vmatprep.subr.bf16.mxu0 0
        %1626 = vmatpush1.bf16.msra.mxu0 %v1623
        %1627 = vmatprep.subr.bf16.mxu0 0
        %1628 = vmatpush1.bf16.msra.mxu0 0
        %1629 = vmatprep.subr.bf16.mxu0 0
        %1630 = vmatpush1.bf16.msra.mxu0 0
        %1631 = vmatprep.subr.bf16.mxu0 0
        %1632 = vmatpush1.bf16.msra.mxu0 0
        %1633 = vmatprep.subr.bf16.mxu0 0
        %1634 = vmatpush1.bf16.msra.mxu0 0
        %1635 = vmatprep.subr.bf16.mxu0 0
        %1636 = vmatpush1.bf16.msra.mxu0 0
        %1637 = vmatprep.subr.bf16.mxu0 0
        %1638 = vmatpush1.bf16.msra.mxu0 0
        %1639 = vmatprep.subr.bf16.mxu0 0
        %1640 = vmatpush1.bf16.msra.mxu0 0
        %1641 = vmatprep.subr.bf16.mxu0 0
        %1642 = vmatpush1.bf16.msra.mxu0 0
        %1643 = vmatprep.subr.bf16.mxu0 0
        %1644 = vmatpush1.bf16.msra.mxu0 0
        %1645 = vmatprep.subr.bf16.mxu0 0
        %1646 = vmatpush1.bf16.msra.mxu0 0
        %1647 = vmatprep.subr.bf16.mxu0 0
        %1648 = vmatpush1.bf16.msra.mxu0 0
        %1649 = vmatprep.subr.bf16.mxu0 0
        %1650 = vmatpush1.bf16.msra.mxu0 0
        %1651 = vmatprep.subr.bf16.mxu0 0
        %1652 = vmatpush1.bf16.msra.mxu0 0
        %1653 = vmatprep.subr.bf16.mxu0 0
        %1654 = vmatpush1.bf16.msra.mxu0 0
        %1655 = vmatprep.subr.bf16.mxu0 0
        %1656 = vmatpush1.bf16.msra.mxu0 0
        %1657 = vmatprep.mubr.bf16.mxu0 0
        %1658 = vmatmul.mubr.bf16.gmra.mrb[0].mxu0 %v1620
        %v1659 = vpop.f32.mrb[0].mxu0
        %v1660 = vadd.f32 0.0, %v1659
        %v1661 = vpop.f32.mrb[0].mxu0
        %v1662 = vpop.f32.mrb[0].mxu0
        %v1663 = vpop.f32.mrb[0].mxu0
        %1664 = vdwg.mxu0
        %v1666 = vsel %vm1355, %v1427, 0
        %v1669 = vsel %vm1437, %v1433, 0
        %1671 = vmatprep.subr.bf16.mxu0 0
        %1672 = vmatpush1.bf16.msra.mxu0 %v1669
        %1673 = vmatprep.subr.bf16.mxu0 0
        %1674 = vmatpush1.bf16.msra.mxu0 0
        %1675 = vmatprep.subr.bf16.mxu0 0
        %1676 = vmatpush1.bf16.msra.mxu0 0
        %1677 = vmatprep.subr.bf16.mxu0 0
        %1678 = vmatpush1.bf16.msra.mxu0 0
        %1679 = vmatprep.subr.bf16.mxu0 0
        %1680 = vmatpush1.bf16.msra.mxu0 0
        %1681 = vmatprep.subr.bf16.mxu0 0
        %1682 = vmatpush1.bf16.msra.mxu0 0
        %1683 = vmatprep.subr.bf16.mxu0 0
        %1684 = vmatpush1.bf16.msra.mxu0 0
        %1685 = vmatprep.subr.bf16.mxu0 0
        %1686 = vmatpush1.bf16.msra.mxu0 0
        %1687 = vmatprep.subr.bf16.mxu0 0
        %1688 = vmatpush1.bf16.msra.mxu0 0
        %1689 = vmatprep.subr.bf16.mxu0 0
        %1690 = vmatpush1.bf16.msra.mxu0 0
        %1691 = vmatprep.subr.bf16.mxu0 0
        %1692 = vmatpush1.bf16.msra.mxu0 0
        %1693 = vmatprep.subr.bf16.mxu0 0
        %1694 = vmatpush1.bf16.msra.mxu0 0
        %1695 = vmatprep.subr.bf16.mxu0 0
        %1696 = vmatpush1.bf16.msra.mxu0 0
        %1697 = vmatprep.subr.bf16.mxu0 0
        %1698 = vmatpush1.bf16.msra.mxu0 0
        %1699 = vmatprep.subr.bf16.mxu0 0
        %1700 = vmatpush1.bf16.msra.mxu0 0
        %1701 = vmatprep.subr.bf16.mxu0 0
        %1702 = vmatpush1.bf16.msra.mxu0 0
        %1703 = vmatprep.mubr.bf16.mxu0 0
        %1704 = vmatmul.mubr.bf16.gmra.mrb[0].mxu0 %v1666
        %v1705 = vpop.f32.mrb[0].mxu0
        %v1706 = vadd.f32 0.0, %v1705
        %v1707 = vpop.f32.mrb[0].mxu0
        %v1708 = vpop.f32.mrb[0].mxu0
        %v1709 = vpop.f32.mrb[0].mxu0
        %1710 = vdwg.mxu0
        %1711 = vst.msk [vmem:[#allocation2] sm:$0xff] %vm881, %v1476
        %1712 = vst.msk [vmem:[#allocation2 + $0x8] sm:$0xff] %vm881, %v1522
        %1713 = vst.msk [vmem:[#allocation2 + $0x10] sm:$0xff] %vm881, %v1568
        %1714 = vst.msk [vmem:[#allocation2 + $0x18] sm:$0xff] %vm881, %v1614
        %1715 = vst.msk [vmem:[#allocation2 + $0x20] sm:$0xff] %vm881, %v1660
        %1716 = vst.msk [vmem:[#allocation2 + $0x28] sm:$0xff] %vm881, %v1706
        %1717 = vrot.lane.b32.xlu0 %v845, 112
        %v1718 = vpop.permute.xlu0 %1717
        %1719 = vrot.lane.b32.xlu0 %v845, 48
        %v1720 = vpop.permute.xlu0 %1719
        %v1721 = vsel %vm881, %v1718, 0
        %v1723 = vsel %vm881, %v1720, 0
        %1725 = vmatprep.subr.mxu0 0.0
        %1726 = vmatpush1.xpose.msra.mxu0 %v1723
        %1727 = vmatprep.subr.mxu0 0.0
        %1728 = vmatpush1.xpose.msra.mxu0 0.0
        %1729 = vmatprep.subr.mxu0 0.0
        %1730 = vmatpush1.xpose.msra.mxu0 0.0
        %1731 = vmatprep.subr.mxu0 0.0
        %1732 = vmatpush1.xpose.msra.mxu0 0.0
        %1733 = vmatprep.subr.mxu0 0.0
        %1734 = vmatpush1.xpose.msra.mxu0 0.0
        %1735 = vmatprep.subr.mxu0 0.0
        %1736 = vmatpush1.xpose.msra.mxu0 0.0
        %1737 = vmatprep.subr.mxu0 0.0
        %1738 = vmatpush1.xpose.msra.mxu0 0.0
        %1739 = vmatprep.subr.mxu0 0.0
        %1740 = vmatpush1.xpose.msra.mxu0 0.0
        %1741 = vmatprep.subr.mxu0 0.0
        %1742 = vmatpush1.xpose.msra.mxu0 0.0
        %1743 = vmatprep.subr.mxu0 0.0
        %1744 = vmatpush1.xpose.msra.mxu0 0.0
        %1745 = vmatprep.subr.mxu0 0.0
        %1746 = vmatpush1.xpose.msra.mxu0 0.0
        %1747 = vmatprep.subr.mxu0 0.0
        %1748 = vmatpush1.xpose.msra.mxu0 0.0
        %1749 = vmatprep.subr.mxu0 0.0
        %1750 = vmatpush1.xpose.msra.mxu0 0.0
        %1751 = vmatprep.subr.mxu0 0.0
        %1752 = vmatpush1.xpose.msra.mxu0 0.0
        %1753 = vmatprep.subr.mxu0 0.0
        %1754 = vmatpush1.xpose.msra.mxu0 0.0
        %1755 = vmatprep.subr.mxu0 0.0
        %1756 = vmatpush1.xpose.msra.mxu0 0.0
        %1757 = vmatprep.subr.mxu0 0.0
        %1758 = vmatpush1.xpose.msra.mxu0 0.0
        %1759 = vmatprep.subr.mxu0 0.0
        %1760 = vmatpush1.xpose.msra.mxu0 0.0
        %1761 = vmatprep.subr.mxu0 0.0
        %1762 = vmatpush1.xpose.msra.mxu0 0.0
        %1763 = vmatprep.subr.mxu0 0.0
        %1764 = vmatpush1.xpose.msra.mxu0 0.0
        %1765 = vmatprep.subr.mxu0 0.0
        %1766 = vmatpush1.xpose.msra.mxu0 0.0
        %1767 = vmatprep.subr.mxu0 0.0
        %1768 = vmatpush1.xpose.msra.mxu0 0.0
        %1769 = vmatprep.subr.mxu0 0.0
        %1770 = vmatpush1.xpose.msra.mxu0 0.0
        %1771 = vmatprep.subr.mxu0 0.0
        %1772 = vmatpush1.xpose.msra.mxu0 0.0
        %1773 = vmatprep.subr.mxu0 0.0
        %1774 = vmatpush1.xpose.msra.mxu0 0.0
        %1775 = vmatprep.subr.mxu0 0.0
        %1776 = vmatpush1.xpose.msra.mxu0 0.0
        %1777 = vmatprep.subr.mxu0 0.0
        %1778 = vmatpush1.xpose.msra.mxu0 0.0
        %1779 = vmatprep.subr.mxu0 0.0
        %1780 = vmatpush1.xpose.msra.mxu0 0.0
        %1781 = vmatprep.subr.mxu0 0.0
        %1782 = vmatpush1.xpose.msra.mxu0 0.0
        %1783 = vmatprep.subr.mxu0 0.0
        %1784 = vmatpush1.xpose.msra.mxu0 0.0
        %1785 = vmatprep.subr.mxu0 0.0
        %1786 = vmatpush1.xpose.msra.mxu0 0.0
        %1787 = vmatprep.subr.mxu0 0.0
        %1788 = vmatpush1.xpose.msra.mxu0 0.0
        %1789 = vmatprep.mubr.f32.mxu0 0.0
        %1790 = vmatmul.mubr.f32.gmra.mrb[0].mxu0 %v1721
        %v1791 = vpop.f32.mrb[0].mxu0
        %v1792 = vadd.f32 0.0, %v1791
        %v1793 = vpop.f32.mrb[0].mxu0
        %1794 = vdwg.mxu0
        %1795 = vrot.lane.b32.xlu0 %v849, 112
        %v1796 = vpop.permute.xlu0 %1795
        %1797 = vrot.lane.b32.xlu0 %v849, 48
        %v1798 = vpop.permute.xlu0 %1797
        %v1799 = vsel %vm881, %v1796, 0
        %v1801 = vsel %vm881, %v1798, 0
        %1803 = vmatprep.subr.mxu0 0.0
        %1804 = vmatpush1.xpose.msra.mxu0 %v1801
        %1805 = vmatprep.subr.mxu0 0.0
        %1806 = vmatpush1.xpose.msra.mxu0 0.0
        %1807 = vmatprep.subr.mxu0 0.0
        %1808 = vmatpush1.xpose.msra.mxu0 0.0
        %1809 = vmatprep.subr.mxu0 0.0
        %1810 = vmatpush1.xpose.msra.mxu0 0.0
        %1811 = vmatprep.subr.mxu0 0.0
        %1812 = vmatpush1.xpose.msra.mxu0 0.0
        %1813 = vmatprep.subr.mxu0 0.0
        %1814 = vmatpush1.xpose.msra.mxu0 0.0
        %1815 = vmatprep.subr.mxu0 0.0
        %1816 = vmatpush1.xpose.msra.mxu0 0.0
        %1817 = vmatprep.subr.mxu0 0.0
        %1818 = vmatpush1.xpose.msra.mxu0 0.0
        %1819 = vmatprep.subr.mxu0 0.0
        %1820 = vmatpush1.xpose.msra.mxu0 0.0
        %1821 = vmatprep.subr.mxu0 0.0
        %1822 = vmatpush1.xpose.msra.mxu0 0.0
        %1823 = vmatprep.subr.mxu0 0.0
        %1824 = vmatpush1.xpose.msra.mxu0 0.0
        %1825 = vmatprep.subr.mxu0 0.0
        %1826 = vmatpush1.xpose.msra.mxu0 0.0
        %1827 = vmatprep.subr.mxu0 0.0
        %1828 = vmatpush1.xpose.msra.mxu0 0.0
        %1829 = vmatprep.subr.mxu0 0.0
        %1830 = vmatpush1.xpose.msra.mxu0 0.0
        %1831 = vmatprep.subr.mxu0 0.0
        %1832 = vmatpush1.xpose.msra.mxu0 0.0
        %1833 = vmatprep.subr.mxu0 0.0
        %1834 = vmatpush1.xpose.msra.mxu0 0.0
        %1835 = vmatprep.subr.mxu0 0.0
        %1836 = vmatpush1.xpose.msra.mxu0 0.0
        %1837 = vmatprep.subr.mxu0 0.0
        %1838 = vmatpush1.xpose.msra.mxu0 0.0
        %1839 = vmatprep.subr.mxu0 0.0
        %1840 = vmatpush1.xpose.msra.mxu0 0.0
        %1841 = vmatprep.subr.mxu0 0.0
        %1842 = vmatpush1.xpose.msra.mxu0 0.0
        %1843 = vmatprep.subr.mxu0 0.0
        %1844 = vmatpush1.xpose.msra.mxu0 0.0
        %1845 = vmatprep.subr.mxu0 0.0
        %1846 = vmatpush1.xpose.msra.mxu0 0.0
        %1847 = vmatprep.subr.mxu0 0.0
        %1848 = vmatpush1.xpose.msra.mxu0 0.0
        %1849 = vmatprep.subr.mxu0 0.0
        %1850 = vmatpush1.xpose.msra.mxu0 0.0
        %1851 = vmatprep.subr.mxu0 0.0
        %1852 = vmatpush1.xpose.msra.mxu0 0.0
        %1853 = vmatprep.subr.mxu0 0.0
        %1854 = vmatpush1.xpose.msra.mxu0 0.0
        %1855 = vmatprep.subr.mxu0 0.0
        %1856 = vmatpush1.xpose.msra.mxu0 0.0
        %1857 = vmatprep.subr.mxu0 0.0
        %1858 = vmatpush1.xpose.msra.mxu0 0.0
        %1859 = vmatprep.subr.mxu0 0.0
        %1860 = vmatpush1.xpose.msra.mxu0 0.0
        %1861 = vmatprep.subr.mxu0 0.0
        %1862 = vmatpush1.xpose.msra.mxu0 0.0
        %1863 = vmatprep.subr.mxu0 0.0
        %1864 = vmatpush1.xpose.msra.mxu0 0.0
        %1865 = vmatprep.subr.mxu0 0.0
        %1866 = vmatpush1.xpose.msra.mxu0 0.0
        %1867 = vmatprep.mubr.f32.mxu0 0.0
        %1868 = vmatmul.mubr.f32.gmra.mrb[0].mxu0 %v1799
        %v1869 = vpop.f32.mrb[0].mxu0
        %v1870 = vadd.f32 0.0, %v1869
        %v1871 = vpop.f32.mrb[0].mxu0
        %1872 = vdwg.mxu0
        %1873 = vrot.lane.b32.xlu0 %v855, 112
        %v1874 = vpop.permute.xlu0 %1873
        %1875 = vrot.lane.b32.xlu0 %v855, 48
        %v1876 = vpop.permute.xlu0 %1875
        %v1877 = vsel %vm881, %v1874, 0
        %v1879 = vsel %vm881, %v1876, 0
        %1881 = vmatprep.subr.mxu0 0.0
        %1882 = vmatpush1.xpose.msra.mxu0 %v1879
        %1883 = vmatprep.subr.mxu0 0.0
        %1884 = vmatpush1.xpose.msra.mxu0 0.0
        %1885 = vmatprep.subr.mxu0 0.0
        %1886 = vmatpush1.xpose.msra.mxu0 0.0
        %1887 = vmatprep.subr.mxu0 0.0
        %1888 = vmatpush1.xpose.msra.mxu0 0.0
        %1889 = vmatprep.subr.mxu0 0.0
        %1890 = vmatpush1.xpose.msra.mxu0 0.0
        %1891 = vmatprep.subr.mxu0 0.0
        %1892 = vmatpush1.xpose.msra.mxu0 0.0
        %1893 = vmatprep.subr.mxu0 0.0
        %1894 = vmatpush1.xpose.msra.mxu0 0.0
        %1895 = vmatprep.subr.mxu0 0.0
        %1896 = vmatpush1.xpose.msra.mxu0 0.0
        %1897 = vmatprep.subr.mxu0 0.0
        %1898 = vmatpush1.xpose.msra.mxu0 0.0
        %1899 = vmatprep.subr.mxu0 0.0
        %1900 = vmatpush1.xpose.msra.mxu0 0.0
        %1901 = vmatprep.subr.mxu0 0.0
        %1902 = vmatpush1.xpose.msra.mxu0 0.0
        %1903 = vmatprep.subr.mxu0 0.0
        %1904 = vmatpush1.xpose.msra.mxu0 0.0
        %1905 = vmatprep.subr.mxu0 0.0
        %1906 = vmatpush1.xpose.msra.mxu0 0.0
        %1907 = vmatprep.subr.mxu0 0.0
        %1908 = vmatpush1.xpose.msra.mxu0 0.0
        %1909 = vmatprep.subr.mxu0 0.0
        %1910 = vmatpush1.xpose.msra.mxu0 0.0
        %1911 = vmatprep.subr.mxu0 0.0
        %1912 = vmatpush1.xpose.msra.mxu0 0.0
        %1913 = vmatprep.subr.mxu0 0.0
        %1914 = vmatpush1.xpose.msra.mxu0 0.0
        %1915 = vmatprep.subr.mxu0 0.0
        %1916 = vmatpush1.xpose.msra.mxu0 0.0
        %1917 = vmatprep.subr.mxu0 0.0
        %1918 = vmatpush1.xpose.msra.mxu0 0.0
        %1919 = vmatprep.subr.mxu0 0.0
        %1920 = vmatpush1.xpose.msra.mxu0 0.0
        %1921 = vmatprep.subr.mxu0 0.0
        %1922 = vmatpush1.xpose.msra.mxu0 0.0
        %1923 = vmatprep.subr.mxu0 0.0
        %1924 = vmatpush1.xpose.msra.mxu0 0.0
        %1925 = vmatprep.subr.mxu0 0.0
        %1926 = vmatpush1.xpose.msra.mxu0 0.0
        %1927 = vmatprep.subr.mxu0 0.0
        %1928 = vmatpush1.xpose.msra.mxu0 0.0
        %1929 = vmatprep.subr.mxu0 0.0
        %1930 = vmatpush1.xpose.msra.mxu0 0.0
        %1931 = vmatprep.subr.mxu0 0.0
        %1932 = vmatpush1.xpose.msra.mxu0 0.0
        %1933 = vmatprep.subr.mxu0 0.0
        %1934 = vmatpush1.xpose.msra.mxu0 0.0
        %1935 = vmatprep.subr.mxu0 0.0
        %1936 = vmatpush1.xpose.msra.mxu0 0.0
        %1937 = vmatprep.subr.mxu0 0.0
        %1938 = vmatpush1.xpose.msra.mxu0 0.0
        %1939 = vmatprep.subr.mxu0 0.0
        %1940 = vmatpush1.xpose.msra.mxu0 0.0
        %1941 = vmatprep.subr.mxu0 0.0
        %1942 = vmatpush1.xpose.msra.mxu0 0.0
        %1943 = vmatprep.subr.mxu0 0.0
        %1944 = vmatpush1.xpose.msra.mxu0 0.0
        %1945 = vmatprep.mubr.f32.mxu0 0.0
        %1946 = vmatmul.mubr.f32.gmra.mrb[0].mxu0 %v1877
        %v1947 = vpop.f32.mrb[0].mxu0
        %v1948 = vadd.f32 0.0, %v1947
        %v1949 = vpop.f32.mrb[0].mxu0
        %1950 = vdwg.mxu0
        %1951 = vrot.lane.b32.xlu0 %v859, 112
        %v1952 = vpop.permute.xlu0 %1951
        %1953 = vrot.lane.b32.xlu0 %v859, 48
        %v1954 = vpop.permute.xlu0 %1953
        %v1955 = vsel %vm881, %v1952, 0
        %v1957 = vsel %vm881, %v1954, 0
        %1959 = vmatprep.subr.mxu0 0.0
        %1960 = vmatpush1.xpose.msra.mxu0 %v1957
        %1961 = vmatprep.subr.mxu0 0.0
        %1962 = vmatpush1.xpose.msra.mxu0 0.0
        %1963 = vmatprep.subr.mxu0 0.0
        %1964 = vmatpush1.xpose.msra.mxu0 0.0
        %1965 = vmatprep.subr.mxu0 0.0
        %1966 = vmatpush1.xpose.msra.mxu0 0.0
        %1967 = vmatprep.subr.mxu0 0.0
        %1968 = vmatpush1.xpose.msra.mxu0 0.0
        %1969 = vmatprep.subr.mxu0 0.0
        %1970 = vmatpush1.xpose.msra.mxu0 0.0
        %1971 = vmatprep.subr.mxu0 0.0
        %1972 = vmatpush1.xpose.msra.mxu0 0.0
        %1973 = vmatprep.subr.mxu0 0.0
        %1974 = vmatpush1.xpose.msra.mxu0 0.0
        %1975 = vmatprep.subr.mxu0 0.0
        %1976 = vmatpush1.xpose.msra.mxu0 0.0
        %1977 = vmatprep.subr.mxu0 0.0
        %1978 = vmatpush1.xpose.msra.mxu0 0.0
        %1979 = vmatprep.subr.mxu0 0.0
        %1980 = vmatpush1.xpose.msra.mxu0 0.0
        %1981 = vmatprep.subr.mxu0 0.0
        %1982 = vmatpush1.xpose.msra.mxu0 0.0
        %1983 = vmatprep.subr.mxu0 0.0
        %1984 = vmatpush1.xpose.msra.mxu0 0.0
        %1985 = vmatprep.subr.mxu0 0.0
        %1986 = vmatpush1.xpose.msra.mxu0 0.0
        %1987 = vmatprep.subr.mxu0 0.0
        %1988 = vmatpush1.xpose.msra.mxu0 0.0
        %1989 = vmatprep.subr.mxu0 0.0
        %1990 = vmatpush1.xpose.msra.mxu0 0.0
        %1991 = vmatprep.subr.mxu0 0.0
        %1992 = vmatpush1.xpose.msra.mxu0 0.0
        %1993 = vmatprep.subr.mxu0 0.0
        %1994 = vmatpush1.xpose.msra.mxu0 0.0
        %1995 = vmatprep.subr.mxu0 0.0
        %1996 = vmatpush1.xpose.msra.mxu0 0.0
        %1997 = vmatprep.subr.mxu0 0.0
        %1998 = vmatpush1.xpose.msra.mxu0 0.0
        %1999 = vmatprep.subr.mxu0 0.0
        %2000 = vmatpush1.xpose.msra.mxu0 0.0
        %2001 = vmatprep.subr.mxu0 0.0
        %2002 = vmatpush1.xpose.msra.mxu0 0.0
        %2003 = vmatprep.subr.mxu0 0.0
        %2004 = vmatpush1.xpose.msra.mxu0 0.0
        %2005 = vmatprep.subr.mxu0 0.0
        %2006 = vmatpush1.xpose.msra.mxu0 0.0
        %2007 = vmatprep.subr.mxu0 0.0
        %2008 = vmatpush1.xpose.msra.mxu0 0.0
        %2009 = vmatprep.subr.mxu0 0.0
        %2010 = vmatpush1.xpose.msra.mxu0 0.0
        %2011 = vmatprep.subr.mxu0 0.0
        %2012 = vmatpush1.xpose.msra.mxu0 0.0
        %2013 = vmatprep.subr.mxu0 0.0
        %2014 = vmatpush1.xpose.msra.mxu0 0.0
        %2015 = vmatprep.subr.mxu0 0.0
        %2016 = vmatpush1.xpose.msra.mxu0 0.0
        %2017 = vmatprep.subr.mxu0 0.0
        %2018 = vmatpush1.xpose.msra.mxu0 0.0
        %2019 = vmatprep.subr.mxu0 0.0
        %2020 = vmatpush1.xpose.msra.mxu0 0.0
        %2021 = vmatprep.subr.mxu0 0.0
        %2022 = vmatpush1.xpose.msra.mxu0 0.0
        %2023 = vmatprep.mubr.f32.mxu0 0.0
        %2024 = vmatmul.mubr.f32.gmra.mrb[0].mxu0 %v1955
        %v2025 = vpop.f32.mrb[0].mxu0
        %v2026 = vadd.f32 0.0, %v2025
        %v2027 = vpop.f32.mrb[0].mxu0
        %2028 = vdwg.mxu0
        %2029 = vrot.lane.b32.xlu0 %v865, 112
        %v2030 = vpop.permute.xlu0 %2029
        %2031 = vrot.lane.b32.xlu0 %v865, 48
        %v2032 = vpop.permute.xlu0 %2031
        %v2033 = vsel %vm881, %v2030, 0
        %v2035 = vsel %vm881, %v2032, 0
        %2037 = vmatprep.subr.mxu0 0.0
        %2038 = vmatpush1.xpose.msra.mxu0 %v2035
        %2039 = vmatprep.subr.mxu0 0.0
        %2040 = vmatpush1.xpose.msra.mxu0 0.0
        %2041 = vmatprep.subr.mxu0 0.0
        %2042 = vmatpush1.xpose.msra.mxu0 0.0
        %2043 = vmatprep.subr.mxu0 0.0
        %2044 = vmatpush1.xpose.msra.mxu0 0.0
        %2045 = vmatprep.subr.mxu0 0.0
        %2046 = vmatpush1.xpose.msra.mxu0 0.0
        %2047 = vmatprep.subr.mxu0 0.0
        %2048 = vmatpush1.xpose.msra.mxu0 0.0
        %2049 = vmatprep.subr.mxu0 0.0
        %2050 = vmatpush1.xpose.msra.mxu0 0.0
        %2051 = vmatprep.subr.mxu0 0.0
        %2052 = vmatpush1.xpose.msra.mxu0 0.0
        %2053 = vmatprep.subr.mxu0 0.0
        %2054 = vmatpush1.xpose.msra.mxu0 0.0
        %2055 = vmatprep.subr.mxu0 0.0
        %2056 = vmatpush1.xpose.msra.mxu0 0.0
        %2057 = vmatprep.subr.mxu0 0.0
        %2058 = vmatpush1.xpose.msra.mxu0 0.0
        %2059 = vmatprep.subr.mxu0 0.0
        %2060 = vmatpush1.xpose.msra.mxu0 0.0
        %2061 = vmatprep.subr.mxu0 0.0
        %2062 = vmatpush1.xpose.msra.mxu0 0.0
        %2063 = vmatprep.subr.mxu0 0.0
        %2064 = vmatpush1.xpose.msra.mxu0 0.0
        %2065 = vmatprep.subr.mxu0 0.0
        %2066 = vmatpush1.xpose.msra.mxu0 0.0
        %2067 = vmatprep.subr.mxu0 0.0
        %2068 = vmatpush1.xpose.msra.mxu0 0.0
        %2069 = vmatprep.subr.mxu0 0.0
        %2070 = vmatpush1.xpose.msra.mxu0 0.0
        %2071 = vmatprep.subr.mxu0 0.0
        %2072 = vmatpush1.xpose.msra.mxu0 0.0
        %2073 = vmatprep.subr.mxu0 0.0
        %2074 = vmatpush1.xpose.msra.mxu0 0.0
        %2075 = vmatprep.subr.mxu0 0.0
        %2076 = vmatpush1.xpose.msra.mxu0 0.0
        %2077 = vmatprep.subr.mxu0 0.0
        %2078 = vmatpush1.xpose.msra.mxu0 0.0
        %2079 = vmatprep.subr.mxu0 0.0
        %2080 = vmatpush1.xpose.msra.mxu0 0.0
        %2081 = vmatprep.subr.mxu0 0.0
        %2082 = vmatpush1.xpose.msra.mxu0 0.0
        %2083 = vmatprep.subr.mxu0 0.0
        %2084 = vmatpush1.xpose.msra.mxu0 0.0
        %2085 = vmatprep.subr.mxu0 0.0
        %2086 = vmatpush1.xpose.msra.mxu0 0.0
        %2087 = vmatprep.subr.mxu0 0.0
        %2088 = vmatpush1.xpose.msra.mxu0 0.0
        %2089 = vmatprep.subr.mxu0 0.0
        %2090 = vmatpush1.xpose.msra.mxu0 0.0
        %2091 = vmatprep.subr.mxu0 0.0
        %2092 = vmatpush1.xpose.msra.mxu0 0.0
        %2093 = vmatprep.subr.mxu0 0.0
        %2094 = vmatpush1.xpose.msra.mxu0 0.0
        %2095 = vmatprep.subr.mxu0 0.0
        %2096 = vmatpush1.xpose.msra.mxu0 0.0
        %2097 = vmatprep.subr.mxu0 0.0
        %2098 = vmatpush1.xpose.msra.mxu0 0.0
        %2099 = vmatprep.subr.mxu0 0.0
        %2100 = vmatpush1.xpose.msra.mxu0 0.0
        %2101 = vmatprep.mubr.f32.mxu0 0.0
        %2102 = vmatmul.mubr.f32.gmra.mrb[0].mxu0 %v2033
        %v2103 = vpop.f32.mrb[0].mxu0
        %v2104 = vadd.f32 0.0, %v2103
        %v2105 = vpop.f32.mrb[0].mxu0
        %2106 = vdwg.mxu0
        %2107 = vrot.lane.b32.xlu0 %v869, 112
        %v2108 = vpop.permute.xlu0 %2107
        %2109 = vrot.lane.b32.xlu0 %v869, 48
        %v2110 = vpop.permute.xlu0 %2109
        %v2111 = vsel %vm881, %v2108, 0
        %v2113 = vsel %vm881, %v2110, 0
        %2115 = vmatprep.subr.mxu0 0.0
        %2116 = vmatpush1.xpose.msra.mxu0 %v2113
        %2117 = vmatprep.subr.mxu0 0.0
        %2118 = vmatpush1.xpose.msra.mxu0 0.0
        %2119 = vmatprep.subr.mxu0 0.0
        %2120 = vmatpush1.xpose.msra.mxu0 0.0
        %2121 = vmatprep.subr.mxu0 0.0
        %2122 = vmatpush1.xpose.msra.mxu0 0.0
        %2123 = vmatprep.subr.mxu0 0.0
        %2124 = vmatpush1.xpose.msra.mxu0 0.0
        %2125 = vmatprep.subr.mxu0 0.0
        %2126 = vmatpush1.xpose.msra.mxu0 0.0
        %2127 = vmatprep.subr.mxu0 0.0
        %2128 = vmatpush1.xpose.msra.mxu0 0.0
        %2129 = vmatprep.subr.mxu0 0.0
        %2130 = vmatpush1.xpose.msra.mxu0 0.0
        %2131 = vmatprep.subr.mxu0 0.0
        %2132 = vmatpush1.xpose.msra.mxu0 0.0
        %2133 = vmatprep.subr.mxu0 0.0
        %2134 = vmatpush1.xpose.msra.mxu0 0.0
        %2135 = vmatprep.subr.mxu0 0.0
        %2136 = vmatpush1.xpose.msra.mxu0 0.0
        %2137 = vmatprep.subr.mxu0 0.0
        %2138 = vmatpush1.xpose.msra.mxu0 0.0
        %2139 = vmatprep.subr.mxu0 0.0
        %2140 = vmatpush1.xpose.msra.mxu0 0.0
        %2141 = vmatprep.subr.mxu0 0.0
        %2142 = vmatpush1.xpose.msra.mxu0 0.0
        %2143 = vmatprep.subr.mxu0 0.0
        %2144 = vmatpush1.xpose.msra.mxu0 0.0
        %2145 = vmatprep.subr.mxu0 0.0
        %2146 = vmatpush1.xpose.msra.mxu0 0.0
        %2147 = vmatprep.subr.mxu0 0.0
        %2148 = vmatpush1.xpose.msra.mxu0 0.0
        %2149 = vmatprep.subr.mxu0 0.0
        %2150 = vmatpush1.xpose.msra.mxu0 0.0
        %2151 = vmatprep.subr.mxu0 0.0
        %2152 = vmatpush1.xpose.msra.mxu0 0.0
        %2153 = vmatprep.subr.mxu0 0.0
        %2154 = vmatpush1.xpose.msra.mxu0 0.0
        %2155 = vmatprep.subr.mxu0 0.0
        %2156 = vmatpush1.xpose.msra.mxu0 0.0
        %2157 = vmatprep.subr.mxu0 0.0
        %2158 = vmatpush1.xpose.msra.mxu0 0.0
        %2159 = vmatprep.subr.mxu0 0.0
        %2160 = vmatpush1.xpose.msra.mxu0 0.0
        %2161 = vmatprep.subr.mxu0 0.0
        %2162 = vmatpush1.xpose.msra.mxu0 0.0
        %2163 = vmatprep.subr.mxu0 0.0
        %2164 = vmatpush1.xpose.msra.mxu0 0.0
        %2165 = vmatprep.subr.mxu0 0.0
        %2166 = vmatpush1.xpose.msra.mxu0 0.0
        %2167 = vmatprep.subr.mxu0 0.0
        %2168 = vmatpush1.xpose.msra.mxu0 0.0
        %2169 = vmatprep.subr.mxu0 0.0
        %2170 = vmatpush1.xpose.msra.mxu0 0.0
        %2171 = vmatprep.subr.mxu0 0.0
        %2172 = vmatpush1.xpose.msra.mxu0 0.0
        %2173 = vmatprep.subr.mxu0 0.0
        %2174 = vmatpush1.xpose.msra.mxu0 0.0
        %2175 = vmatprep.subr.mxu0 0.0
        %2176 = vmatpush1.xpose.msra.mxu0 0.0
        %2177 = vmatprep.subr.mxu0 0.0
        %2178 = vmatpush1.xpose.msra.mxu0 0.0
        %2179 = vmatprep.mubr.f32.mxu0 0.0
        %2180 = vmatmul.mubr.f32.gmra.mrb[0].mxu0 %v2111
        %v2181 = vpop.f32.mrb[0].mxu0
        %v2182 = vadd.f32 0.0, %v2181
        %v2183 = vpop.f32.mrb[0].mxu0
        %2184 = vdwg.mxu0
        %v2185 = vmul.f32 %v1792, 0.25
        %v2186 = vmul.f32 %v1870, 0.25
        %v2187 = vmul.f32 %v1948, 0.25
        %v2188 = vmul.f32 %v2026, 0.25
        %v2189 = vmul.f32 %v2104, 0.25
        %v2190 = vmul.f32 %v2182, 0.25
        %v2191 = vsel %vm1348, %v2185, -1e+09
        %v2192 = vsel %vm1348, %v2186, -1e+09
        %v2193 = vsel %vm1348, %v2187, -1e+09
        %v2194 = vsel %vm1348, %v2188, -1e+09
        %v2195 = vsel %vm1348, %v2189, -1e+09
        %v2196 = vsel %vm1348, %v2190, -1e+09
        %v2197 = vsel %vm1355, %v2191, -inf
        %2198 = vmax.xlane.f32.xlu0 %v2197
        %v2199 = vpop.xlane.xlu0 %2198
        %v2200 = vsel %vm1355, %v2192, -inf
        %2201 = vmax.xlane.f32.xlu0 %v2200
        %v2202 = vpop.xlane.xlu0 %2201
        %v2203 = vsel %vm1355, %v2193, -inf
        %2204 = vmax.xlane.f32.xlu0 %v2203
        %v2205 = vpop.xlane.xlu0 %2204
        %v2206 = vsel %vm1355, %v2194, -inf
        %2207 = vmax.xlane.f32.xlu0 %v2206
        %v2208 = vpop.xlane.xlu0 %2207
        %v2209 = vsel %vm1355, %v2195, -inf
        %2210 = vmax.xlane.f32.xlu0 %v2209
        %v2211 = vpop.xlane.xlu0 %2210
        %v2212 = vsel %vm1355, %v2196, -inf
        %2213 = vmax.xlane.f32.xlu0 %v2212
        %v2214 = vpop.xlane.xlu0 %2213
        %v2215 = vsub.f32 %v2191, %v2199
        %v2216 = vsub.f32 %v2192, %v2202
        %v2217 = vsub.f32 %v2193, %v2205
        %v2218 = vsub.f32 %v2194, %v2208
        %v2219 = vsub.f32 %v2195, %v2211
        %v2220 = vsub.f32 %v2196, %v2214
        %v2221 = vmul.f32 %v2215, 1.442695
        %v2222 = vpow.pop %v2221
        %v2223 = vmul.f32 %v2216, 1.442695
        %v2224 = vpow.pop %v2223
        %v2225 = vmul.f32 %v2217, 1.442695
        %v2226 = vpow.pop %v2225
        %v2227 = vmul.f32 %v2218, 1.442695
        %v2228 = vpow.pop %v2227
        %v2229 = vmul.f32 %v2219, 1.442695
        %v2230 = vpow.pop %v2229
        %v2231 = vmul.f32 %v2220, 1.442695
        %v2232 = vpow.pop %v2231
        %v2233 = vsel %vm1355, %v2222, 0.0
        %2234 = vadd.xlane.f32.xlu0 %v2233
        %v2235 = vpop.xlane.xlu0 %2234
        %v2236 = vsel %vm1355, %v2224, 0.0
        %2237 = vadd.xlane.f32.xlu0 %v2236
        %v2238 = vpop.xlane.xlu0 %2237
        %v2239 = vsel %vm1355, %v2226, 0.0
        %2240 = vadd.xlane.f32.xlu0 %v2239
        %v2241 = vpop.xlane.xlu0 %2240
        %v2242 = vsel %vm1355, %v2228, 0.0
        %2243 = vadd.xlane.f32.xlu0 %v2242
        %v2244 = vpop.xlane.xlu0 %2243
        %v2245 = vsel %vm1355, %v2230, 0.0
        %2246 = vadd.xlane.f32.xlu0 %v2245
        %v2247 = vpop.xlane.xlu0 %2246
        %v2248 = vsel %vm1355, %v2232, 0.0
        %2249 = vadd.xlane.f32.xlu0 %v2248
        %v2250 = vpop.xlane.xlu0 %2249
        %v2251 = vrcp.pop %v2235
        %v2252 = vrcp.pop %v2238
        %v2253 = vrcp.pop %v2241
        %v2254 = vrcp.pop %v2244
        %v2255 = vrcp.pop %v2247
        %v2256 = vrcp.pop %v2250
        %v2257 = vmul.f32 %v2222, %v2251
        %v2258 = vmul.f32 %v2224, %v2252
        %v2259 = vmul.f32 %v2226, %v2253
        %v2260 = vmul.f32 %v2228, %v2254
        %v2261 = vmul.f32 %v2230, %v2255
        %v2262 = vmul.f32 %v2232, %v2256
        %v2263 = vpack.c.bf16 %v2257, %v2257
        %v2264 = vpack.c.bf16 %v2258, %v2258
        %v2265 = vpack.c.bf16 %v2259, %v2259
        %v2266 = vpack.c.bf16 %v2260, %v2260
        %v2267 = vpack.c.bf16 %v2261, %v2261
        %v2268 = vpack.c.bf16 %v2262, %v2262
        %2270 = vrot.lane.b32.xlu0 %v1428, 112
        %v2271 = vpop.permute.xlu0 %2270
        %v2273 = vsel %vm1355, %v2263, 0
        %v2276 = vsel %vm1437, %v2271, 0
        %2278 = vmatprep.subr.bf16.mxu0 0
        %2279 = vmatpush1.bf16.msra.mxu0 %v2276
        %2280 = vmatprep.subr.bf16.mxu0 0
        %2281 = vmatpush1.bf16.msra.mxu0 0
        %2282 = vmatprep.subr.bf16.mxu0 0
        %2283 = vmatpush1.bf16.msra.mxu0 0
        %2284 = vmatprep.subr.bf16.mxu0 0
        %2285 = vmatpush1.bf16.msra.mxu0 0
        %2286 = vmatprep.subr.bf16.mxu0 0
        %2287 = vmatpush1.bf16.msra.mxu0 0
        %2288 = vmatprep.subr.bf16.mxu0 0
        %2289 = vmatpush1.bf16.msra.mxu0 0
        %2290 = vmatprep.subr.bf16.mxu0 0
        %2291 = vmatpush1.bf16.msra.mxu0 0
        %2292 = vmatprep.subr.bf16.mxu0 0
        %2293 = vmatpush1.bf16.msra.mxu0 0
        %2294 = vmatprep.subr.bf16.mxu0 0
        %2295 = vmatpush1.bf16.msra.mxu0 0
        %2296 = vmatprep.subr.bf16.mxu0 0
        %2297 = vmatpush1.bf16.msra.mxu0 0
        %2298 = vmatprep.subr.bf16.mxu0 0
        %2299 = vmatpush1.bf16.msra.mxu0 0
        %2300 = vmatprep.subr.bf16.mxu0 0
        %2301 = vmatpush1.bf16.msra.mxu0 0
        %2302 = vmatprep.subr.bf16.mxu0 0
        %2303 = vmatpush1.bf16.msra.mxu0 0
        %2304 = vmatprep.subr.bf16.mxu0 0
        %2305 = vmatpush1.bf16.msra.mxu0 0
        %2306 = vmatprep.subr.bf16.mxu0 0
        %2307 = vmatpush1.bf16.msra.mxu0 0
        %2308 = vmatprep.subr.bf16.mxu0 0
        %2309 = vmatpush1.bf16.msra.mxu0 0
        %2310 = vmatprep.mubr.bf16.mxu0 0
        %2311 = vmatmul.mubr.bf16.gmra.mrb[0].mxu0 %v2273
        %v2312 = vpop.f32.mrb[0].mxu0
        %v2313 = vadd.f32 0.0, %v2312
        %v2314 = vpop.f32.mrb[0].mxu0
        %v2315 = vpop.f32.mrb[0].mxu0
        %v2316 = vpop.f32.mrb[0].mxu0
        %2317 = vdwg.mxu0
        %2319 = vrot.lane.b32.xlu0 %v1429, 112
        %v2320 = vpop.permute.xlu0 %2319
        %v2322 = vsel %vm1355, %v2264, 0
        %v2325 = vsel %vm1437, %v2320, 0
        %2327 = vmatprep.subr.bf16.mxu0 0
        %2328 = vmatpush1.bf16.msra.mxu0 %v2325
        %2329 = vmatprep.subr.bf16.mxu0 0
        %2330 = vmatpush1.bf16.msra.mxu0 0
        %2331 = vmatprep.subr.bf16.mxu0 0
        %2332 = vmatpush1.bf16.msra.mxu0 0
        %2333 = vmatprep.subr.bf16.mxu0 0
        %2334 = vmatpush1.bf16.msra.mxu0 0
        %2335 = vmatprep.subr.bf16.mxu0 0
        %2336 = vmatpush1.bf16.msra.mxu0 0
        %2337 = vmatprep.subr.bf16.mxu0 0
        %2338 = vmatpush1.bf16.msra.mxu0 0
        %2339 = vmatprep.subr.bf16.mxu0 0
        %2340 = vmatpush1.bf16.msra.mxu0 0
        %2341 = vmatprep.subr.bf16.mxu0 0
        %2342 = vmatpush1.bf16.msra.mxu0 0
        %2343 = vmatprep.subr.bf16.mxu0 0
        %2344 = vmatpush1.bf16.msra.mxu0 0
        %2345 = vmatprep.subr.bf16.mxu0 0
        %2346 = vmatpush1.bf16.msra.mxu0 0
        %2347 = vmatprep.subr.bf16.mxu0 0
        %2348 = vmatpush1.bf16.msra.mxu0 0
        %2349 = vmatprep.subr.bf16.mxu0 0
        %2350 = vmatpush1.bf16.msra.mxu0 0
        %2351 = vmatprep.subr.bf16.mxu0 0
        %2352 = vmatpush1.bf16.msra.mxu0 0
        %2353 = vmatprep.subr.bf16.mxu0 0
        %2354 = vmatpush1.bf16.msra.mxu0 0
        %2355 = vmatprep.subr.bf16.mxu0 0
        %2356 = vmatpush1.bf16.msra.mxu0 0
        %2357 = vmatprep.subr.bf16.mxu0 0
        %2358 = vmatpush1.bf16.msra.mxu0 0
        %2359 = vmatprep.mubr.bf16.mxu0 0
        %2360 = vmatmul.mubr.bf16.gmra.mrb[0].mxu0 %v2322
        %v2361 = vpop.f32.mrb[0].mxu0
        %v2362 = vadd.f32 0.0, %v2361
        %v2363 = vpop.f32.mrb[0].mxu0
        %v2364 = vpop.f32.mrb[0].mxu0
        %v2365 = vpop.f32.mrb[0].mxu0
        %2366 = vdwg.mxu0
        %2368 = vrot.lane.b32.xlu0 %v1430, 112
        %v2369 = vpop.permute.xlu0 %2368
        %v2371 = vsel %vm1355, %v2265, 0
        %v2374 = vsel %vm1437, %v2369, 0
        %2376 = vmatprep.subr.bf16.mxu0 0
        %2377 = vmatpush1.bf16.msra.mxu0 %v2374
        %2378 = vmatprep.subr.bf16.mxu0 0
        %2379 = vmatpush1.bf16.msra.mxu0 0
        %2380 = vmatprep.subr.bf16.mxu0 0
        %2381 = vmatpush1.bf16.msra.mxu0 0
        %2382 = vmatprep.subr.bf16.mxu0 0
        %2383 = vmatpush1.bf16.msra.mxu0 0
        %2384 = vmatprep.subr.bf16.mxu0 0
        %2385 = vmatpush1.bf16.msra.mxu0 0
        %2386 = vmatprep.subr.bf16.mxu0 0
        %2387 = vmatpush1.bf16.msra.mxu0 0
        %2388 = vmatprep.subr.bf16.mxu0 0
        %2389 = vmatpush1.bf16.msra.mxu0 0
        %2390 = vmatprep.subr.bf16.mxu0 0
        %2391 = vmatpush1.bf16.msra.mxu0 0
        %2392 = vmatprep.subr.bf16.mxu0 0
        %2393 = vmatpush1.bf16.msra.mxu0 0
        %2394 = vmatprep.subr.bf16.mxu0 0
        %2395 = vmatpush1.bf16.msra.mxu0 0
        %2396 = vmatprep.subr.bf16.mxu0 0
        %2397 = vmatpush1.bf16.msra.mxu0 0
        %2398 = vmatprep.subr.bf16.mxu0 0
        %2399 = vmatpush1.bf16.msra.mxu0 0
        %2400 = vmatprep.subr.bf16.mxu0 0
        %2401 = vmatpush1.bf16.msra.mxu0 0
        %2402 = vmatprep.subr.bf16.mxu0 0
        %2403 = vmatpush1.bf16.msra.mxu0 0
        %2404 = vmatprep.subr.bf16.mxu0 0
        %2405 = vmatpush1.bf16.msra.mxu0 0
        %2406 = vmatprep.subr.bf16.mxu0 0
        %2407 = vmatpush1.bf16.msra.mxu0 0
        %2408 = vmatprep.mubr.bf16.mxu0 0
        %2409 = vmatmul.mubr.bf16.gmra.mrb[0].mxu0 %v2371
        %v2410 = vpop.f32.mrb[0].mxu0
        %v2411 = vadd.f32 0.0, %v2410
        %v2412 = vpop.f32.mrb[0].mxu0
        %v2413 = vpop.f32.mrb[0].mxu0
        %v2414 = vpop.f32.mrb[0].mxu0
        %2415 = vdwg.mxu0
        %2417 = vrot.lane.b32.xlu0 %v1431, 112
        %v2418 = vpop.permute.xlu0 %2417
        %v2420 = vsel %vm1355, %v2266, 0
        %v2423 = vsel %vm1437, %v2418, 0
        %2425 = vmatprep.subr.bf16.mxu0 0
        %2426 = vmatpush1.bf16.msra.mxu0 %v2423
        %2427 = vmatprep.subr.bf16.mxu0 0
        %2428 = vmatpush1.bf16.msra.mxu0 0
        %2429 = vmatprep.subr.bf16.mxu0 0
        %2430 = vmatpush1.bf16.msra.mxu0 0
        %2431 = vmatprep.subr.bf16.mxu0 0
        %2432 = vmatpush1.bf16.msra.mxu0 0
        %2433 = vmatprep.subr.bf16.mxu0 0
        %2434 = vmatpush1.bf16.msra.mxu0 0
        %2435 = vmatprep.subr.bf16.mxu0 0
        %2436 = vmatpush1.bf16.msra.mxu0 0
        %2437 = vmatprep.subr.bf16.mxu0 0
        %2438 = vmatpush1.bf16.msra.mxu0 0
        %2439 = vmatprep.subr.bf16.mxu0 0
        %2440 = vmatpush1.bf16.msra.mxu0 0
        %2441 = vmatprep.subr.bf16.mxu0 0
        %2442 = vmatpush1.bf16.msra.mxu0 0
        %2443 = vmatprep.subr.bf16.mxu0 0
        %2444 = vmatpush1.bf16.msra.mxu0 0
        %2445 = vmatprep.subr.bf16.mxu0 0
        %2446 = vmatpush1.bf16.msra.mxu0 0
        %2447 = vmatprep.subr.bf16.mxu0 0
        %2448 = vmatpush1.bf16.msra.mxu0 0
        %2449 = vmatprep.subr.bf16.mxu0 0
        %2450 = vmatpush1.bf16.msra.mxu0 0
        %2451 = vmatprep.subr.bf16.mxu0 0
        %2452 = vmatpush1.bf16.msra.mxu0 0
        %2453 = vmatprep.subr.bf16.mxu0 0
        %2454 = vmatpush1.bf16.msra.mxu0 0
        %2455 = vmatprep.subr.bf16.mxu0 0
        %2456 = vmatpush1.bf16.msra.mxu0 0
        %2457 = vmatprep.mubr.bf16.mxu0 0
        %2458 = vmatmul.mubr.bf16.gmra.mrb[0].mxu0 %v2420
        %v2459 = vpop.f32.mrb[0].mxu0
        %v2460 = vadd.f32 0.0, %v2459
        %v2461 = vpop.f32.mrb[0].mxu0
        %v2462 = vpop.f32.mrb[0].mxu0
        %v2463 = vpop.f32.mrb[0].mxu0
        %2464 = vdwg.mxu0
        %2466 = vrot.lane.b32.xlu0 %v1432, 112
        %v2467 = vpop.permute.xlu0 %2466
        %v2469 = vsel %vm1355, %v2267, 0
        %v2472 = vsel %vm1437, %v2467, 0
        %2474 = vmatprep.subr.bf16.mxu0 0
        %2475 = vmatpush1.bf16.msra.mxu0 %v2472
        %2476 = vmatprep.subr.bf16.mxu0 0
        %2477 = vmatpush1.bf16.msra.mxu0 0
        %2478 = vmatprep.subr.bf16.mxu0 0
        %2479 = vmatpush1.bf16.msra.mxu0 0
        %2480 = vmatprep.subr.bf16.mxu0 0
        %2481 = vmatpush1.bf16.msra.mxu0 0
        %2482 = vmatprep.subr.bf16.mxu0 0
        %2483 = vmatpush1.bf16.msra.mxu0 0
        %2484 = vmatprep.subr.bf16.mxu0 0
        %2485 = vmatpush1.bf16.msra.mxu0 0
        %2486 = vmatprep.subr.bf16.mxu0 0
        %2487 = vmatpush1.bf16.msra.mxu0 0
        %2488 = vmatprep.subr.bf16.mxu0 0
        %2489 = vmatpush1.bf16.msra.mxu0 0
        %2490 = vmatprep.subr.bf16.mxu0 0
        %2491 = vmatpush1.bf16.msra.mxu0 0
        %2492 = vmatprep.subr.bf16.mxu0 0
        %2493 = vmatpush1.bf16.msra.mxu0 0
        %2494 = vmatprep.subr.bf16.mxu0 0
        %2495 = vmatpush1.bf16.msra.mxu0 0
        %2496 = vmatprep.subr.bf16.mxu0 0
        %2497 = vmatpush1.bf16.msra.mxu0 0
        %2498 = vmatprep.subr.bf16.mxu0 0
        %2499 = vmatpush1.bf16.msra.mxu0 0
        %2500 = vmatprep.subr.bf16.mxu0 0
        %2501 = vmatpush1.bf16.msra.mxu0 0
        %2502 = vmatprep.subr.bf16.mxu0 0
        %2503 = vmatpush1.bf16.msra.mxu0 0
        %2504 = vmatprep.subr.bf16.mxu0 0
        %2505 = vmatpush1.bf16.msra.mxu0 0
        %2506 = vmatprep.mubr.bf16.mxu0 0
        %2507 = vmatmul.mubr.bf16.gmra.mrb[0].mxu0 %v2469
        %v2508 = vpop.f32.mrb[0].mxu0
        %v2509 = vadd.f32 0.0, %v2508
        %v2510 = vpop.f32.mrb[0].mxu0
        %v2511 = vpop.f32.mrb[0].mxu0
        %v2512 = vpop.f32.mrb[0].mxu0
        %2513 = vdwg.mxu0
        %2515 = vrot.lane.b32.xlu0 %v1433, 112
        %v2516 = vpop.permute.xlu0 %2515
        %v2518 = vsel %vm1355, %v2268, 0
        %v2521 = vsel %vm1437, %v2516, 0
        %2523 = vmatprep.subr.bf16.mxu0 0
        %2524 = vmatpush1.bf16.msra.mxu0 %v2521
        %2525 = vmatprep.subr.bf16.mxu0 0
        %2526 = vmatpush1.bf16.msra.mxu0 0
        %2527 = vmatprep.subr.bf16.mxu0 0
        %2528 = vmatpush1.bf16.msra.mxu0 0
        %2529 = vmatprep.subr.bf16.mxu0 0
        %2530 = vmatpush1.bf16.msra.mxu0 0
        %2531 = vmatprep.subr.bf16.mxu0 0
        %2532 = vmatpush1.bf16.msra.mxu0 0
        %2533 = vmatprep.subr.bf16.mxu0 0
        %2534 = vmatpush1.bf16.msra.mxu0 0
        %2535 = vmatprep.subr.bf16.mxu0 0
        %2536 = vmatpush1.bf16.msra.mxu0 0
        %2537 = vmatprep.subr.bf16.mxu0 0
        %2538 = vmatpush1.bf16.msra.mxu0 0
        %2539 = vmatprep.subr.bf16.mxu0 0
        %2540 = vmatpush1.bf16.msra.mxu0 0
        %2541 = vmatprep.subr.bf16.mxu0 0
        %2542 = vmatpush1.bf16.msra.mxu0 0
        %2543 = vmatprep.subr.bf16.mxu0 0
        %2544 = vmatpush1.bf16.msra.mxu0 0
        %2545 = vmatprep.subr.bf16.mxu0 0
        %2546 = vmatpush1.bf16.msra.mxu0 0
        %2547 = vmatprep.subr.bf16.mxu0 0
        %2548 = vmatpush1.bf16.msra.mxu0 0
        %2549 = vmatprep.subr.bf16.mxu0 0
        %2550 = vmatpush1.bf16.msra.mxu0 0
        %2551 = vmatprep.subr.bf16.mxu0 0
        %2552 = vmatpush1.bf16.msra.mxu0 0
        %2553 = vmatprep.subr.bf16.mxu0 0
        %2554 = vmatpush1.bf16.msra.mxu0 0
        %2555 = vmatprep.mubr.bf16.mxu0 0
        %2556 = vmatmul.mubr.bf16.gmra.mrb[0].mxu0 %v2518
        %v2557 = vpop.f32.mrb[0].mxu0
        %v2558 = vadd.f32 0.0, %v2557
        %v2559 = vpop.f32.mrb[0].mxu0
        %v2560 = vpop.f32.mrb[0].mxu0
        %v2561 = vpop.f32.mrb[0].mxu0
        %2562 = vdwg.mxu0
        %2569 = vrot.lane.b32.xlu0 %v2313, 16
        %v2570 = vpop.permute.xlu0 %2569
        %2571 = vrot.lane.b32.xlu0 %v2362, 16
        %v2572 = vpop.permute.xlu0 %2571
        %2573 = vrot.lane.b32.xlu0 %v2411, 16
        %v2574 = vpop.permute.xlu0 %2573
        %2575 = vrot.lane.b32.xlu0 %v2460, 16
        %v2576 = vpop.permute.xlu0 %2575
        %2577 = vrot.lane.b32.xlu0 %v2509, 16
        %v2578 = vpop.permute.xlu0 %2577
        %2579 = vrot.lane.b32.xlu0 %v2558, 16
        %v2580 = vpop.permute.xlu0 %2579
        %vm2587 = vcmask 261248
        %2588 = vst.msk [vmem:[#allocation2] sm:$0xff] %vm2587, %v2570
        %2589 = vst.msk [vmem:[#allocation2 + $0x8] sm:$0xff] %vm2587, %v2572
        %2590 = vst.msk [vmem:[#allocation2 + $0x10] sm:$0xff] %vm2587, %v2574
        %2591 = vst.msk [vmem:[#allocation2 + $0x18] sm:$0xff] %vm2587, %v2576
        %2592 = vst.msk [vmem:[#allocation2 + $0x20] sm:$0xff] %vm2587, %v2578
        %2593 = vst.msk [vmem:[#allocation2 + $0x28] sm:$0xff] %vm2587, %v2580
        %2594 = vrot.lane.b32.xlu0 %v845, 96
        %v2595 = vpop.permute.xlu0 %2594
        %2596 = vrot.lane.b32.xlu0 %v845, 32
        %v2597 = vpop.permute.xlu0 %2596
        %v2598 = vsel %vm881, %v2595, 0
        %v2600 = vsel %vm881, %v2597, 0
        %2602 = vmatprep.subr.mxu0 0.0
        %2603 = vmatpush1.xpose.msra.mxu0 %v2600
        %2604 = vmatprep.subr.mxu0 0.0
        %2605 = vmatpush1.xpose.msra.mxu0 0.0
        %2606 = vmatprep.subr.mxu0 0.0
        %2607 = vmatpush1.xpose.msra.mxu0 0.0
        %2608 = vmatprep.subr.mxu0 0.0
        %2609 = vmatpush1.xpose.msra.mxu0 0.0
        %2610 = vmatprep.subr.mxu0 0.0
        %2611 = vmatpush1.xpose.msra.mxu0 0.0
        %2612 = vmatprep.subr.mxu0 0.0
        %2613 = vmatpush1.xpose.msra.mxu0 0.0
        %2614 = vmatprep.subr.mxu0 0.0
        %2615 = vmatpush1.xpose.msra.mxu0 0.0
        %2616 = vmatprep.subr.mxu0 0.0
        %2617 = vmatpush1.xpose.msra.mxu0 0.0
        %2618 = vmatprep.subr.mxu0 0.0
        %2619 = vmatpush1.xpose.msra.mxu0 0.0
        %2620 = vmatprep.subr.mxu0 0.0
        %2621 = vmatpush1.xpose.msra.mxu0 0.0
        %2622 = vmatprep.subr.mxu0 0.0
        %2623 = vmatpush1.xpose.msra.mxu0 0.0
        %2624 = vmatprep.subr.mxu0 0.0
        %2625 = vmatpush1.xpose.msra.mxu0 0.0
        %2626 = vmatprep.subr.mxu0 0.0
        %2627 = vmatpush1.xpose.msra.mxu0 0.0
        %2628 = vmatprep.subr.mxu0 0.0
        %2629 = vmatpush1.xpose.msra.mxu0 0.0
        %2630 = vmatprep.subr.mxu0 0.0
        %2631 = vmatpush1.xpose.msra.mxu0 0.0
        %2632 = vmatprep.subr.mxu0 0.0
        %2633 = vmatpush1.xpose.msra.mxu0 0.0
        %2634 = vmatprep.subr.mxu0 0.0
        %2635 = vmatpush1.xpose.msra.mxu0 0.0
        %2636 = vmatprep.subr.mxu0 0.0
        %2637 = vmatpush1.xpose.msra.mxu0 0.0
        %2638 = vmatprep.subr.mxu0 0.0
        %2639 = vmatpush1.xpose.msra.mxu0 0.0
        %2640 = vmatprep.subr.mxu0 0.0
        %2641 = vmatpush1.xpose.msra.mxu0 0.0
        %2642 = vmatprep.subr.mxu0 0.0
        %2643 = vmatpush1.xpose.msra.mxu0 0.0
        %2644 = vmatprep.subr.mxu0 0.0
        %2645 = vmatpush1.xpose.msra.mxu0 0.0
        %2646 = vmatprep.subr.mxu0 0.0
        %2647 = vmatpush1.xpose.msra.mxu0 0.0
        %2648 = vmatprep.subr.mxu0 0.0
        %2649 = vmatpush1.xpose.msra.mxu0 0.0
        %2650 = vmatprep.subr.mxu0 0.0
        %2651 = vmatpush1.xpose.msra.mxu0 0.0
        %2652 = vmatprep.subr.mxu0 0.0
        %2653 = vmatpush1.xpose.msra.mxu0 0.0
        %2654 = vmatprep.subr.mxu0 0.0
        %2655 = vmatpush1.xpose.msra.mxu0 0.0
        %2656 = vmatprep.subr.mxu0 0.0
        %2657 = vmatpush1.xpose.msra.mxu0 0.0
        %2658 = vmatprep.subr.mxu0 0.0
        %2659 = vmatpush1.xpose.msra.mxu0 0.0
        %2660 = vmatprep.subr.mxu0 0.0
        %2661 = vmatpush1.xpose.msra.mxu0 0.0
        %2662 = vmatprep.subr.mxu0 0.0
        %2663 = vmatpush1.xpose.msra.mxu0 0.0
        %2664 = vmatprep.subr.mxu0 0.0
        %2665 = vmatpush1.xpose.msra.mxu0 0.0
        %2666 = vmatprep.mubr.f32.mxu0 0.0
        %2667 = vmatmul.mubr.f32.gmra.mrb[0].mxu0 %v2598
        %v2668 = vpop.f32.mrb[0].mxu0
        %v2669 = vadd.f32 0.0, %v2668
        %v2670 = vpop.f32.mrb[0].mxu0
        %2671 = vdwg.mxu0
        %2672 = vrot.lane.b32.xlu0 %v849, 96
        %v2673 = vpop.permute.xlu0 %2672
        %2674 = vrot.lane.b32.xlu0 %v849, 32
        %v2675 = vpop.permute.xlu0 %2674
        %v2676 = vsel %vm881, %v2673, 0
        %v2678 = vsel %vm881, %v2675, 0
        %2680 = vmatprep.subr.mxu0 0.0
        %2681 = vmatpush1.xpose.msra.mxu0 %v2678
        %2682 = vmatprep.subr.mxu0 0.0
        %2683 = vmatpush1.xpose.msra.mxu0 0.0
        %2684 = vmatprep.subr.mxu0 0.0
        %2685 = vmatpush1.xpose.msra.mxu0 0.0
        %2686 = vmatprep.subr.mxu0 0.0
        %2687 = vmatpush1.xpose.msra.mxu0 0.0
        %2688 = vmatprep.subr.mxu0 0.0
        %2689 = vmatpush1.xpose.msra.mxu0 0.0
        %2690 = vmatprep.subr.mxu0 0.0
        %2691 = vmatpush1.xpose.msra.mxu0 0.0
        %2692 = vmatprep.subr.mxu0 0.0
        %2693 = vmatpush1.xpose.msra.mxu0 0.0
        %2694 = vmatprep.subr.mxu0 0.0
        %2695 = vmatpush1.xpose.msra.mxu0 0.0
        %2696 = vmatprep.subr.mxu0 0.0
        %2697 = vmatpush1.xpose.msra.mxu0 0.0
        %2698 = vmatprep.subr.mxu0 0.0
        %2699 = vmatpush1.xpose.msra.mxu0 0.0
        %2700 = vmatprep.subr.mxu0 0.0
        %2701 = vmatpush1.xpose.msra.mxu0 0.0
        %2702 = vmatprep.subr.mxu0 0.0
        %2703 = vmatpush1.xpose.msra.mxu0 0.0
        %2704 = vmatprep.subr.mxu0 0.0
        %2705 = vmatpush1.xpose.msra.mxu0 0.0
        %2706 = vmatprep.subr.mxu0 0.0
        %2707 = vmatpush1.xpose.msra.mxu0 0.0
        %2708 = vmatprep.subr.mxu0 0.0
        %2709 = vmatpush1.xpose.msra.mxu0 0.0
        %2710 = vmatprep.subr.mxu0 0.0
        %2711 = vmatpush1.xpose.msra.mxu0 0.0
        %2712 = vmatprep.subr.mxu0 0.0
        %2713 = vmatpush1.xpose.msra.mxu0 0.0
        %2714 = vmatprep.subr.mxu0 0.0
        %2715 = vmatpush1.xpose.msra.mxu0 0.0
        %2716 = vmatprep.subr.mxu0 0.0
        %2717 = vmatpush1.xpose.msra.mxu0 0.0
        %2718 = vmatprep.subr.mxu0 0.0
        %2719 = vmatpush1.xpose.msra.mxu0 0.0
        %2720 = vmatprep.subr.mxu0 0.0
        %2721 = vmatpush1.xpose.msra.mxu0 0.0
        %2722 = vmatprep.subr.mxu0 0.0
        %2723 = vmatpush1.xpose.msra.mxu0 0.0
        %2724 = vmatprep.subr.mxu0 0.0
        %2725 = vmatpush1.xpose.msra.mxu0 0.0
        %2726 = vmatprep.subr.mxu0 0.0
        %2727 = vmatpush1.xpose.msra.mxu0 0.0
        %2728 = vmatprep.subr.mxu0 0.0
        %2729 = vmatpush1.xpose.msra.mxu0 0.0
        %2730 = vmatprep.subr.mxu0 0.0
        %2731 = vmatpush1.xpose.msra.mxu0 0.0
        %2732 = vmatprep.subr.mxu0 0.0
        %2733 = vmatpush1.xpose.msra.mxu0 0.0
        %2734 = vmatprep.subr.mxu0 0.0
        %2735 = vmatpush1.xpose.msra.mxu0 0.0
        %2736 = vmatprep.subr.mxu0 0.0
        %2737 = vmatpush1.xpose.msra.mxu0 0.0
        %2738 = vmatprep.subr.mxu0 0.0
        %2739 = vmatpush1.xpose.msra.mxu0 0.0
        %2740 = vmatprep.subr.mxu0 0.0
        %2741 = vmatpush1.xpose.msra.mxu0 0.0
        %2742 = vmatprep.subr.mxu0 0.0
        %2743 = vmatpush1.xpose.msra.mxu0 0.0
        %2744 = vmatprep.mubr.f32.mxu0 0.0
        %2745 = vmatmul.mubr.f32.gmra.mrb[0].mxu0 %v2676
        %v2746 = vpop.f32.mrb[0].mxu0
        %v2747 = vadd.f32 0.0, %v2746
        %v2748 = vpop.f32.mrb[0].mxu0
        %2749 = vdwg.mxu0
        %2750 = vrot.lane.b32.xlu0 %v855, 96
        %v2751 = vpop.permute.xlu0 %2750
        %2752 = vrot.lane.b32.xlu0 %v855, 32
        %v2753 = vpop.permute.xlu0 %2752
        %v2754 = vsel %vm881, %v2751, 0
        %v2756 = vsel %vm881, %v2753, 0
        %2758 = vmatprep.subr.mxu0 0.0
        %2759 = vmatpush1.xpose.msra.mxu0 %v2756
        %2760 = vmatprep.subr.mxu0 0.0
        %2761 = vmatpush1.xpose.msra.mxu0 0.0
        %2762 = vmatprep.subr.mxu0 0.0
        %2763 = vmatpush1.xpose.msra.mxu0 0.0
        %2764 = vmatprep.subr.mxu0 0.0
        %2765 = vmatpush1.xpose.msra.mxu0 0.0
        %2766 = vmatprep.subr.mxu0 0.0
        %2767 = vmatpush1.xpose.msra.mxu0 0.0
        %2768 = vmatprep.subr.mxu0 0.0
        %2769 = vmatpush1.xpose.msra.mxu0 0.0
        %2770 = vmatprep.subr.mxu0 0.0
        %2771 = vmatpush1.xpose.msra.mxu0 0.0
        %2772 = vmatprep.subr.mxu0 0.0
        %2773 = vmatpush1.xpose.msra.mxu0 0.0
        %2774 = vmatprep.subr.mxu0 0.0
        %2775 = vmatpush1.xpose.msra.mxu0 0.0
        %2776 = vmatprep.subr.mxu0 0.0
        %2777 = vmatpush1.xpose.msra.mxu0 0.0
        %2778 = vmatprep.subr.mxu0 0.0
        %2779 = vmatpush1.xpose.msra.mxu0 0.0
        %2780 = vmatprep.subr.mxu0 0.0
        %2781 = vmatpush1.xpose.msra.mxu0 0.0
        %2782 = vmatprep.subr.mxu0 0.0
        %2783 = vmatpush1.xpose.msra.mxu0 0.0
        %2784 = vmatprep.subr.mxu0 0.0
        %2785 = vmatpush1.xpose.msra.mxu0 0.0
        %2786 = vmatprep.subr.mxu0 0.0
        %2787 = vmatpush1.xpose.msra.mxu0 0.0
        %2788 = vmatprep.subr.mxu0 0.0
        %2789 = vmatpush1.xpose.msra.mxu0 0.0
        %2790 = vmatprep.subr.mxu0 0.0
        %2791 = vmatpush1.xpose.msra.mxu0 0.0
        %2792 = vmatprep.subr.mxu0 0.0
        %2793 = vmatpush1.xpose.msra.mxu0 0.0
        %2794 = vmatprep.subr.mxu0 0.0
        %2795 = vmatpush1.xpose.msra.mxu0 0.0
        %2796 = vmatprep.subr.mxu0 0.0
        %2797 = vmatpush1.xpose.msra.mxu0 0.0
        %2798 = vmatprep.subr.mxu0 0.0
        %2799 = vmatpush1.xpose.msra.mxu0 0.0
        %2800 = vmatprep.subr.mxu0 0.0
        %2801 = vmatpush1.xpose.msra.mxu0 0.0
        %2802 = vmatprep.subr.mxu0 0.0
        %2803 = vmatpush1.xpose.msra.mxu0 0.0
        %2804 = vmatprep.subr.mxu0 0.0
        %2805 = vmatpush1.xpose.msra.mxu0 0.0
        %2806 = vmatprep.subr.mxu0 0.0
        %2807 = vmatpush1.xpose.msra.mxu0 0.0
        %2808 = vmatprep.subr.mxu0 0.0
        %2809 = vmatpush1.xpose.msra.mxu0 0.0
        %2810 = vmatprep.subr.mxu0 0.0
        %2811 = vmatpush1.xpose.msra.mxu0 0.0
        %2812 = vmatprep.subr.mxu0 0.0
        %2813 = vmatpush1.xpose.msra.mxu0 0.0
        %2814 = vmatprep.subr.mxu0 0.0
        %2815 = vmatpush1.xpose.msra.mxu0 0.0
        %2816 = vmatprep.subr.mxu0 0.0
        %2817 = vmatpush1.xpose.msra.mxu0 0.0
        %2818 = vmatprep.subr.mxu0 0.0
        %2819 = vmatpush1.xpose.msra.mxu0 0.0
        %2820 = vmatprep.subr.mxu0 0.0
        %2821 = vmatpush1.xpose.msra.mxu0 0.0
        %2822 = vmatprep.mubr.f32.mxu0 0.0
        %2823 = vmatmul.mubr.f32.gmra.mrb[0].mxu0 %v2754
        %v2824 = vpop.f32.mrb[0].mxu0
        %v2825 = vadd.f32 0.0, %v2824
        %v2826 = vpop.f32.mrb[0].mxu0
        %2827 = vdwg.mxu0
        %2828 = vrot.lane.b32.xlu0 %v859, 96
        %v2829 = vpop.permute.xlu0 %2828
        %2830 = vrot.lane.b32.xlu0 %v859, 32
        %v2831 = vpop.permute.xlu0 %2830
        %v2832 = vsel %vm881, %v2829, 0
        %v2834 = vsel %vm881, %v2831, 0
        %2836 = vmatprep.subr.mxu0 0.0
        %2837 = vmatpush1.xpose.msra.mxu0 %v2834
        %2838 = vmatprep.subr.mxu0 0.0
        %2839 = vmatpush1.xpose.msra.mxu0 0.0
        %2840 = vmatprep.subr.mxu0 0.0
        %2841 = vmatpush1.xpose.msra.mxu0 0.0
        %2842 = vmatprep.subr.mxu0 0.0
        %2843 = vmatpush1.xpose.msra.mxu0 0.0
        %2844 = vmatprep.subr.mxu0 0.0
        %2845 = vmatpush1.xpose.msra.mxu0 0.0
        %2846 = vmatprep.subr.mxu0 0.0
        %2847 = vmatpush1.xpose.msra.mxu0 0.0
        %2848 = vmatprep.subr.mxu0 0.0
        %2849 = vmatpush1.xpose.msra.mxu0 0.0
        %2850 = vmatprep.subr.mxu0 0.0
        %2851 = vmatpush1.xpose.msra.mxu0 0.0
        %2852 = vmatprep.subr.mxu0 0.0
        %2853 = vmatpush1.xpose.msra.mxu0 0.0
        %2854 = vmatprep.subr.mxu0 0.0
        %2855 = vmatpush1.xpose.msra.mxu0 0.0
        %2856 = vmatprep.subr.mxu0 0.0
        %2857 = vmatpush1.xpose.msra.mxu0 0.0
        %2858 = vmatprep.subr.mxu0 0.0
        %2859 = vmatpush1.xpose.msra.mxu0 0.0
        %2860 = vmatprep.subr.mxu0 0.0
        %2861 = vmatpush1.xpose.msra.mxu0 0.0
        %2862 = vmatprep.subr.mxu0 0.0
        %2863 = vmatpush1.xpose.msra.mxu0 0.0
        %2864 = vmatprep.subr.mxu0 0.0
        %2865 = vmatpush1.xpose.msra.mxu0 0.0
        %2866 = vmatprep.subr.mxu0 0.0
        %2867 = vmatpush1.xpose.msra.mxu0 0.0
        %2868 = vmatprep.subr.mxu0 0.0
        %2869 = vmatpush1.xpose.msra.mxu0 0.0
        %2870 = vmatprep.subr.mxu0 0.0
        %2871 = vmatpush1.xpose.msra.mxu0 0.0
        %2872 = vmatprep.subr.mxu0 0.0
        %2873 = vmatpush1.xpose.msra.mxu0 0.0
        %2874 = vmatprep.subr.mxu0 0.0
        %2875 = vmatpush1.xpose.msra.mxu0 0.0
        %2876 = vmatprep.subr.mxu0 0.0
        %2877 = vmatpush1.xpose.msra.mxu0 0.0
        %2878 = vmatprep.subr.mxu0 0.0
        %2879 = vmatpush1.xpose.msra.mxu0 0.0
        %2880 = vmatprep.subr.mxu0 0.0
        %2881 = vmatpush1.xpose.msra.mxu0 0.0
        %2882 = vmatprep.subr.mxu0 0.0
        %2883 = vmatpush1.xpose.msra.mxu0 0.0
        %2884 = vmatprep.subr.mxu0 0.0
        %2885 = vmatpush1.xpose.msra.mxu0 0.0
        %2886 = vmatprep.subr.mxu0 0.0
        %2887 = vmatpush1.xpose.msra.mxu0 0.0
        %2888 = vmatprep.subr.mxu0 0.0
        %2889 = vmatpush1.xpose.msra.mxu0 0.0
        %2890 = vmatprep.subr.mxu0 0.0
        %2891 = vmatpush1.xpose.msra.mxu0 0.0
        %2892 = vmatprep.subr.mxu0 0.0
        %2893 = vmatpush1.xpose.msra.mxu0 0.0
        %2894 = vmatprep.subr.mxu0 0.0
        %2895 = vmatpush1.xpose.msra.mxu0 0.0
        %2896 = vmatprep.subr.mxu0 0.0
        %2897 = vmatpush1.xpose.msra.mxu0 0.0
        %2898 = vmatprep.subr.mxu0 0.0
        %2899 = vmatpush1.xpose.msra.mxu0 0.0
        %2900 = vmatprep.mubr.f32.mxu0 0.0
        %2901 = vmatmul.mubr.f32.gmra.mrb[0].mxu0 %v2832
        %v2902 = vpop.f32.mrb[0].mxu0
        %v2903 = vadd.f32 0.0, %v2902
        %v2904 = vpop.f32.mrb[0].mxu0
        %2905 = vdwg.mxu0
        %2906 = vrot.lane.b32.xlu0 %v865, 96
        %v2907 = vpop.permute.xlu0 %2906
        %2908 = vrot.lane.b32.xlu0 %v865, 32
        %v2909 = vpop.permute.xlu0 %2908
        %v2910 = vsel %vm881, %v2907, 0
        %v2912 = vsel %vm881, %v2909, 0
        %2914 = vmatprep.subr.mxu0 0.0
        %2915 = vmatpush1.xpose.msra.mxu0 %v2912
        %2916 = vmatprep.subr.mxu0 0.0
        %2917 = vmatpush1.xpose.msra.mxu0 0.0
        %2918 = vmatprep.subr.mxu0 0.0
        %2919 = vmatpush1.xpose.msra.mxu0 0.0
        %2920 = vmatprep.subr.mxu0 0.0
        %2921 = vmatpush1.xpose.msra.mxu0 0.0
        %2922 = vmatprep.subr.mxu0 0.0
        %2923 = vmatpush1.xpose.msra.mxu0 0.0
        %2924 = vmatprep.subr.mxu0 0.0
        %2925 = vmatpush1.xpose.msra.mxu0 0.0
        %2926 = vmatprep.subr.mxu0 0.0
        %2927 = vmatpush1.xpose.msra.mxu0 0.0
        %2928 = vmatprep.subr.mxu0 0.0
        %2929 = vmatpush1.xpose.msra.mxu0 0.0
        %2930 = vmatprep.subr.mxu0 0.0
        %2931 = vmatpush1.xpose.msra.mxu0 0.0
        %2932 = vmatprep.subr.mxu0 0.0
        %2933 = vmatpush1.xpose.msra.mxu0 0.0
        %2934 = vmatprep.subr.mxu0 0.0
        %2935 = vmatpush1.xpose.msra.mxu0 0.0
        %2936 = vmatprep.subr.mxu0 0.0
        %2937 = vmatpush1.xpose.msra.mxu0 0.0
        %2938 = vmatprep.subr.mxu0 0.0
        %2939 = vmatpush1.xpose.msra.mxu0 0.0
        %2940 = vmatprep.subr.mxu0 0.0
        %2941 = vmatpush1.xpose.msra.mxu0 0.0
        %2942 = vmatprep.subr.mxu0 0.0
        %2943 = vmatpush1.xpose.msra.mxu0 0.0
        %2944 = vmatprep.subr.mxu0 0.0
        %2945 = vmatpush1.xpose.msra.mxu0 0.0
        %2946 = vmatprep.subr.mxu0 0.0
        %2947 = vmatpush1.xpose.msra.mxu0 0.0
        %2948 = vmatprep.subr.mxu0 0.0
        %2949 = vmatpush1.xpose.msra.mxu0 0.0
        %2950 = vmatprep.subr.mxu0 0.0
        %2951 = vmatpush1.xpose.msra.mxu0 0.0
        %2952 = vmatprep.subr.mxu0 0.0
        %2953 = vmatpush1.xpose.msra.mxu0 0.0
        %2954 = vmatprep.subr.mxu0 0.0
        %2955 = vmatpush1.xpose.msra.mxu0 0.0
        %2956 = vmatprep.subr.mxu0 0.0
        %2957 = vmatpush1.xpose.msra.mxu0 0.0
        %2958 = vmatprep.subr.mxu0 0.0
        %2959 = vmatpush1.xpose.msra.mxu0 0.0
        %2960 = vmatprep.subr.mxu0 0.0
        %2961 = vmatpush1.xpose.msra.mxu0 0.0
        %2962 = vmatprep.subr.mxu0 0.0
        %2963 = vmatpush1.xpose.msra.mxu0 0.0
        %2964 = vmatprep.subr.mxu0 0.0
        %2965 = vmatpush1.xpose.msra.mxu0 0.0
        %2966 = vmatprep.subr.mxu0 0.0
        %2967 = vmatpush1.xpose.msra.mxu0 0.0
        %2968 = vmatprep.subr.mxu0 0.0
        %2969 = vmatpush1.xpose.msra.mxu0 0.0
        %2970 = vmatprep.subr.mxu0 0.0
        %2971 = vmatpush1.xpose.msra.mxu0 0.0
        %2972 = vmatprep.subr.mxu0 0.0
        %2973 = vmatpush1.xpose.msra.mxu0 0.0
        %2974 = vmatprep.subr.mxu0 0.0
        %2975 = vmatpush1.xpose.msra.mxu0 0.0
        %2976 = vmatprep.subr.mxu0 0.0
        %2977 = vmatpush1.xpose.msra.mxu0 0.0
        %2978 = vmatprep.mubr.f32.mxu0 0.0
        %2979 = vmatmul.mubr.f32.gmra.mrb[0].mxu0 %v2910
        %v2980 = vpop.f32.mrb[0].mxu0
        %v2981 = vadd.f32 0.0, %v2980
        %v2982 = vpop.f32.mrb[0].mxu0
        %2983 = vdwg.mxu0
        %2984 = vrot.lane.b32.xlu0 %v869, 96
        %v2985 = vpop.permute.xlu0 %2984
        %2986 = vrot.lane.b32.xlu0 %v869, 32
        %v2987 = vpop.permute.xlu0 %2986
        %v2988 = vsel %vm881, %v2985, 0
        %v2990 = vsel %vm881, %v2987, 0
        %2992 = vmatprep.subr.mxu0 0.0
        %2993 = vmatpush1.xpose.msra.mxu0 %v2990
        %2994 = vmatprep.subr.mxu0 0.0
        %2995 = vmatpush1.xpose.msra.mxu0 0.0
        %2996 = vmatprep.subr.mxu0 0.0
        %2997 = vmatpush1.xpose.msra.mxu0 0.0
        %2998 = vmatprep.subr.mxu0 0.0
        %2999 = vmatpush1.xpose.msra.mxu0 0.0
        %3000 = vmatprep.subr.mxu0 0.0
        %3001 = vmatpush1.xpose.msra.mxu0 0.0
        %3002 = vmatprep.subr.mxu0 0.0
        %3003 = vmatpush1.xpose.msra.mxu0 0.0
        %3004 = vmatprep.subr.mxu0 0.0
        %3005 = vmatpush1.xpose.msra.mxu0 0.0
        %3006 = vmatprep.subr.mxu0 0.0
        %3007 = vmatpush1.xpose.msra.mxu0 0.0
        %3008 = vmatprep.subr.mxu0 0.0
        %3009 = vmatpush1.xpose.msra.mxu0 0.0
        %3010 = vmatprep.subr.mxu0 0.0
        %3011 = vmatpush1.xpose.msra.mxu0 0.0
        %3012 = vmatprep.subr.mxu0 0.0
        %3013 = vmatpush1.xpose.msra.mxu0 0.0
        %3014 = vmatprep.subr.mxu0 0.0
        %3015 = vmatpush1.xpose.msra.mxu0 0.0
        %3016 = vmatprep.subr.mxu0 0.0
        %3017 = vmatpush1.xpose.msra.mxu0 0.0
        %3018 = vmatprep.subr.mxu0 0.0
        %3019 = vmatpush1.xpose.msra.mxu0 0.0
        %3020 = vmatprep.subr.mxu0 0.0
        %3021 = vmatpush1.xpose.msra.mxu0 0.0
        %3022 = vmatprep.subr.mxu0 0.0
        %3023 = vmatpush1.xpose.msra.mxu0 0.0
        %3024 = vmatprep.subr.mxu0 0.0
        %3025 = vmatpush1.xpose.msra.mxu0 0.0
        %3026 = vmatprep.subr.mxu0 0.0
        %3027 = vmatpush1.xpose.msra.mxu0 0.0
        %3028 = vmatprep.subr.mxu0 0.0
        %3029 = vmatpush1.xpose.msra.mxu0 0.0
        %3030 = vmatprep.subr.mxu0 0.0
        %3031 = vmatpush1.xpose.msra.mxu0 0.0
        %3032 = vmatprep.subr.mxu0 0.0
        %3033 = vmatpush1.xpose.msra.mxu0 0.0
        %3034 = vmatprep.subr.mxu0 0.0
        %3035 = vmatpush1.xpose.msra.mxu0 0.0
        %3036 = vmatprep.subr.mxu0 0.0
        %3037 = vmatpush1.xpose.msra.mxu0 0.0
        %3038 = vmatprep.subr.mxu0 0.0
        %3039 = vmatpush1.xpose.msra.mxu0 0.0
        %3040 = vmatprep.subr.mxu0 0.0
        %3041 = vmatpush1.xpose.msra.mxu0 0.0
        %3042 = vmatprep.subr.mxu0 0.0
        %3043 = vmatpush1.xpose.msra.mxu0 0.0
        %3044 = vmatprep.subr.mxu0 0.0
        %3045 = vmatpush1.xpose.msra.mxu0 0.0
        %3046 = vmatprep.subr.mxu0 0.0
        %3047 = vmatpush1.xpose.msra.mxu0 0.0
        %3048 = vmatprep.subr.mxu0 0.0
        %3049 = vmatpush1.xpose.msra.mxu0 0.0
        %3050 = vmatprep.subr.mxu0 0.0
        %3051 = vmatpush1.xpose.msra.mxu0 0.0
        %3052 = vmatprep.subr.mxu0 0.0
        %3053 = vmatpush1.xpose.msra.mxu0 0.0
        %3054 = vmatprep.subr.mxu0 0.0
        %3055 = vmatpush1.xpose.msra.mxu0 0.0
        %3056 = vmatprep.mubr.f32.mxu0 0.0
        %3057 = vmatmul.mubr.f32.gmra.mrb[0].mxu0 %v2988
        %v3058 = vpop.f32.mrb[0].mxu0
        %v3059 = vadd.f32 0.0, %v3058
        %v3060 = vpop.f32.mrb[0].mxu0
        %3061 = vdwg.mxu0
        %v3062 = vmul.f32 %v2669, 0.25
        %v3063 = vmul.f32 %v2747, 0.25
        %v3064 = vmul.f32 %v2825, 0.25
        %v3065 = vmul.f32 %v2903, 0.25
        %v3066 = vmul.f32 %v2981, 0.25
        %v3067 = vmul.f32 %v3059, 0.25
        %v3068 = vsel %vm1348, %v3062, -1e+09
        %v3069 = vsel %vm1348, %v3063, -1e+09
        %v3070 = vsel %vm1348, %v3064, -1e+09
        %v3071 = vsel %vm1348, %v3065, -1e+09
        %v3072 = vsel %vm1348, %v3066, -1e+09
        %v3073 = vsel %vm1348, %v3067, -1e+09
        %v3074 = vsel %vm1355, %v3068, -inf
        %3075 = vmax.xlane.f32.xlu0 %v3074
        %v3076 = vpop.xlane.xlu0 %3075
        %v3077 = vsel %vm1355, %v3069, -inf
        %3078 = vmax.xlane.f32.xlu0 %v3077
        %v3079 = vpop.xlane.xlu0 %3078
        %v3080 = vsel %vm1355, %v3070, -inf
        %3081 = vmax.xlane.f32.xlu0 %v3080
        %v3082 = vpop.xlane.xlu0 %3081
        %v3083 = vsel %vm1355, %v3071, -inf
        %3084 = vmax.xlane.f32.xlu0 %v3083
        %v3085 = vpop.xlane.xlu0 %3084
        %v3086 = vsel %vm1355, %v3072, -inf
        %3087 = vmax.xlane.f32.xlu0 %v3086
        %v3088 = vpop.xlane.xlu0 %3087
        %v3089 = vsel %vm1355, %v3073, -inf
        %3090 = vmax.xlane.f32.xlu0 %v3089
        %v3091 = vpop.xlane.xlu0 %3090
        %v3092 = vsub.f32 %v3068, %v3076
        %v3093 = vsub.f32 %v3069, %v3079
        %v3094 = vsub.f32 %v3070, %v3082
        %v3095 = vsub.f32 %v3071, %v3085
        %v3096 = vsub.f32 %v3072, %v3088
        %v3097 = vsub.f32 %v3073, %v3091
        %v3098 = vmul.f32 %v3092, 1.442695
        %v3099 = vpow.pop %v3098
        %v3100 = vmul.f32 %v3093, 1.442695
        %v3101 = vpow.pop %v3100
        %v3102 = vmul.f32 %v3094, 1.442695
        %v3103 = vpow.pop %v3102
        %v3104 = vmul.f32 %v3095, 1.442695
        %v3105 = vpow.pop %v3104
        %v3106 = vmul.f32 %v3096, 1.442695
        %v3107 = vpow.pop %v3106
        %v3108 = vmul.f32 %v3097, 1.442695
        %v3109 = vpow.pop %v3108
        %v3110 = vsel %vm1355, %v3099, 0.0
        %3111 = vadd.xlane.f32.xlu0 %v3110
        %v3112 = vpop.xlane.xlu0 %3111
        %v3113 = vsel %vm1355, %v3101, 0.0
        %3114 = vadd.xlane.f32.xlu0 %v3113
        %v3115 = vpop.xlane.xlu0 %3114
        %v3116 = vsel %vm1355, %v3103, 0.0
        %3117 = vadd.xlane.f32.xlu0 %v3116
        %v3118 = vpop.xlane.xlu0 %3117
        %v3119 = vsel %vm1355, %v3105, 0.0
        %3120 = vadd.xlane.f32.xlu0 %v3119
        %v3121 = vpop.xlane.xlu0 %3120
        %v3122 = vsel %vm1355, %v3107, 0.0
        %3123 = vadd.xlane.f32.xlu0 %v3122
        %v3124 = vpop.xlane.xlu0 %3123
        %v3125 = vsel %vm1355, %v3109, 0.0
        %3126 = vadd.xlane.f32.xlu0 %v3125
        %v3127 = vpop.xlane.xlu0 %3126
        %v3128 = vrcp.pop %v3112
        %v3129 = vrcp.pop %v3115
        %v3130 = vrcp.pop %v3118
        %v3131 = vrcp.pop %v3121
        %v3132 = vrcp.pop %v3124
        %v3133 = vrcp.pop %v3127
        %v3134 = vmul.f32 %v3099, %v3128
        %v3135 = vmul.f32 %v3101, %v3129
        %v3136 = vmul.f32 %v3103, %v3130
        %v3137 = vmul.f32 %v3105, %v3131
        %v3138 = vmul.f32 %v3107, %v3132
        %v3139 = vmul.f32 %v3109, %v3133
        %v3140 = vpack.c.bf16 %v3134, %v3134
        %v3141 = vpack.c.bf16 %v3135, %v3135
        %v3142 = vpack.c.bf16 %v3136, %v3136
        %v3143 = vpack.c.bf16 %v3137, %v3137
        %v3144 = vpack.c.bf16 %v3138, %v3138
        %v3145 = vpack.c.bf16 %v3139, %v3139
        %3146 = vrot.lane.b32.xlu0 %v1428, 96
        %v3147 = vpop.permute.xlu0 %3146
        %v3149 = vsel %vm1355, %v3140, 0
        %v3152 = vsel %vm1437, %v3147, 0
        %3154 = vmatprep.subr.bf16.mxu0 0
        %3155 = vmatpush1.bf16.msra.mxu0 %v3152
        %3156 = vmatprep.subr.bf16.mxu0 0
        %3157 = vmatpush1.bf16.msra.mxu0 0
        %3158 = vmatprep.subr.bf16.mxu0 0
        %3159 = vmatpush1.bf16.msra.mxu0 0
        %3160 = vmatprep.subr.bf16.mxu0 0
        %3161 = vmatpush1.bf16.msra.mxu0 0
        %3162 = vmatprep.subr.bf16.mxu0 0
        %3163 = vmatpush1.bf16.msra.mxu0 0
        %3164 = vmatprep.subr.bf16.mxu0 0
        %3165 = vmatpush1.bf16.msra.mxu0 0
        %3166 = vmatprep.subr.bf16.mxu0 0
        %3167 = vmatpush1.bf16.msra.mxu0 0
        %3168 = vmatprep.subr.bf16.mxu0 0
        %3169 = vmatpush1.bf16.msra.mxu0 0
        %3170 = vmatprep.subr.bf16.mxu0 0
        %3171 = vmatpush1.bf16.msra.mxu0 0
        %3172 = vmatprep.subr.bf16.mxu0 0
        %3173 = vmatpush1.bf16.msra.mxu0 0
        %3174 = vmatprep.subr.bf16.mxu0 0
        %3175 = vmatpush1.bf16.msra.mxu0 0
        %3176 = vmatprep.subr.bf16.mxu0 0
        %3177 = vmatpush1.bf16.msra.mxu0 0
        %3178 = vmatprep.subr.bf16.mxu0 0
        %3179 = vmatpush1.bf16.msra.mxu0 0
        %3180 = vmatprep.subr.bf16.mxu0 0
        %3181 = vmatpush1.bf16.msra.mxu0 0
        %3182 = vmatprep.subr.bf16.mxu0 0
        %3183 = vmatpush1.bf16.msra.mxu0 0
        %3184 = vmatprep.subr.bf16.mxu0 0
        %3185 = vmatpush1.bf16.msra.mxu0 0
        %3186 = vmatprep.mubr.bf16.mxu0 0
        %3187 = vmatmul.mubr.bf16.gmra.mrb[0].mxu0 %v3149
        %v3188 = vpop.f32.mrb[0].mxu0
        %v3189 = vadd.f32 0.0, %v3188
        %v3190 = vpop.f32.mrb[0].mxu0
        %v3191 = vpop.f32.mrb[0].mxu0
        %v3192 = vpop.f32.mrb[0].mxu0
        %3193 = vdwg.mxu0
        %3194 = vrot.lane.b32.xlu0 %v1429, 96
        %v3195 = vpop.permute.xlu0 %3194
        %v3197 = vsel %vm1355, %v3141, 0
        %v3200 = vsel %vm1437, %v3195, 0
        %3202 = vmatprep.subr.bf16.mxu0 0
        %3203 = vmatpush1.bf16.msra.mxu0 %v3200
        %3204 = vmatprep.subr.bf16.mxu0 0
        %3205 = vmatpush1.bf16.msra.mxu0 0
        %3206 = vmatprep.subr.bf16.mxu0 0
        %3207 = vmatpush1.bf16.msra.mxu0 0
        %3208 = vmatprep.subr.bf16.mxu0 0
        %3209 = vmatpush1.bf16.msra.mxu0 0
        %3210 = vmatprep.subr.bf16.mxu0 0
        %3211 = vmatpush1.bf16.msra.mxu0 0
        %3212 = vmatprep.subr.bf16.mxu0 0
        %3213 = vmatpush1.bf16.msra.mxu0 0
        %3214 = vmatprep.subr.bf16.mxu0 0
        %3215 = vmatpush1.bf16.msra.mxu0 0
        %3216 = vmatprep.subr.bf16.mxu0 0
        %3217 = vmatpush1.bf16.msra.mxu0 0
        %3218 = vmatprep.subr.bf16.mxu0 0
        %3219 = vmatpush1.bf16.msra.mxu0 0
        %3220 = vmatprep.subr.bf16.mxu0 0
        %3221 = vmatpush1.bf16.msra.mxu0 0
        %3222 = vmatprep.subr.bf16.mxu0 0
        %3223 = vmatpush1.bf16.msra.mxu0 0
        %3224 = vmatprep.subr.bf16.mxu0 0
        %3225 = vmatpush1.bf16.msra.mxu0 0
        %3226 = vmatprep.subr.bf16.mxu0 0
        %3227 = vmatpush1.bf16.msra.mxu0 0
        %3228 = vmatprep.subr.bf16.mxu0 0
        %3229 = vmatpush1.bf16.msra.mxu0 0
        %3230 = vmatprep.subr.bf16.mxu0 0
        %3231 = vmatpush1.bf16.msra.mxu0 0
        %3232 = vmatprep.subr.bf16.mxu0 0
        %3233 = vmatpush1.bf16.msra.mxu0 0
        %3234 = vmatprep.mubr.bf16.mxu0 0
        %3235 = vmatmul.mubr.bf16.gmra.mrb[0].mxu0 %v3197
        %v3236 = vpop.f32.mrb[0].mxu0
        %v3237 = vadd.f32 0.0, %v3236
        %v3238 = vpop.f32.mrb[0].mxu0
        %v3239 = vpop.f32.mrb[0].mxu0
        %v3240 = vpop.f32.mrb[0].mxu0
        %3241 = vdwg.mxu0
        %3242 = vrot.lane.b32.xlu0 %v1430, 96
        %v3243 = vpop.permute.xlu0 %3242
        %v3245 = vsel %vm1355, %v3142, 0
        %v3248 = vsel %vm1437, %v3243, 0
        %3250 = vmatprep.subr.bf16.mxu0 0
        %3251 = vmatpush1.bf16.msra.mxu0 %v3248
        %3252 = vmatprep.subr.bf16.mxu0 0
        %3253 = vmatpush1.bf16.msra.mxu0 0
        %3254 = vmatprep.subr.bf16.mxu0 0
        %3255 = vmatpush1.bf16.msra.mxu0 0
        %3256 = vmatprep.subr.bf16.mxu0 0
        %3257 = vmatpush1.bf16.msra.mxu0 0
        %3258 = vmatprep.subr.bf16.mxu0 0
        %3259 = vmatpush1.bf16.msra.mxu0 0
        %3260 = vmatprep.subr.bf16.mxu0 0
        %3261 = vmatpush1.bf16.msra.mxu0 0
        %3262 = vmatprep.subr.bf16.mxu0 0
        %3263 = vmatpush1.bf16.msra.mxu0 0
        %3264 = vmatprep.subr.bf16.mxu0 0
        %3265 = vmatpush1.bf16.msra.mxu0 0
        %3266 = vmatprep.subr.bf16.mxu0 0
        %3267 = vmatpush1.bf16.msra.mxu0 0
        %3268 = vmatprep.subr.bf16.mxu0 0
        %3269 = vmatpush1.bf16.msra.mxu0 0
        %3270 = vmatprep.subr.bf16.mxu0 0
        %3271 = vmatpush1.bf16.msra.mxu0 0
        %3272 = vmatprep.subr.bf16.mxu0 0
        %3273 = vmatpush1.bf16.msra.mxu0 0
        %3274 = vmatprep.subr.bf16.mxu0 0
        %3275 = vmatpush1.bf16.msra.mxu0 0
        %3276 = vmatprep.subr.bf16.mxu0 0
        %3277 = vmatpush1.bf16.msra.mxu0 0
        %3278 = vmatprep.subr.bf16.mxu0 0
        %3279 = vmatpush1.bf16.msra.mxu0 0
        %3280 = vmatprep.subr.bf16.mxu0 0
        %3281 = vmatpush1.bf16.msra.mxu0 0
        %3282 = vmatprep.mubr.bf16.mxu0 0
        %3283 = vmatmul.mubr.bf16.gmra.mrb[0].mxu0 %v3245
        %v3284 = vpop.f32.mrb[0].mxu0
        %v3285 = vadd.f32 0.0, %v3284
        %v3286 = vpop.f32.mrb[0].mxu0
        %v3287 = vpop.f32.mrb[0].mxu0
        %v3288 = vpop.f32.mrb[0].mxu0
        %3289 = vdwg.mxu0
        %3290 = vrot.lane.b32.xlu0 %v1431, 96
        %v3291 = vpop.permute.xlu0 %3290
        %v3293 = vsel %vm1355, %v3143, 0
        %v3296 = vsel %vm1437, %v3291, 0
        %3298 = vmatprep.subr.bf16.mxu0 0
        %3299 = vmatpush1.bf16.msra.mxu0 %v3296
        %3300 = vmatprep.subr.bf16.mxu0 0
        %3301 = vmatpush1.bf16.msra.mxu0 0
        %3302 = vmatprep.subr.bf16.mxu0 0
        %3303 = vmatpush1.bf16.msra.mxu0 0
        %3304 = vmatprep.subr.bf16.mxu0 0
        %3305 = vmatpush1.bf16.msra.mxu0 0
        %3306 = vmatprep.subr.bf16.mxu0 0
        %3307 = vmatpush1.bf16.msra.mxu0 0
        %3308 = vmatprep.subr.bf16.mxu0 0
        %3309 = vmatpush1.bf16.msra.mxu0 0
        %3310 = vmatprep.subr.bf16.mxu0 0
        %3311 = vmatpush1.bf16.msra.mxu0 0
        %3312 = vmatprep.subr.bf16.mxu0 0
        %3313 = vmatpush1.bf16.msra.mxu0 0
        %3314 = vmatprep.subr.bf16.mxu0 0
        %3315 = vmatpush1.bf16.msra.mxu0 0
        %3316 = vmatprep.subr.bf16.mxu0 0
        %3317 = vmatpush1.bf16.msra.mxu0 0
        %3318 = vmatprep.subr.bf16.mxu0 0
        %3319 = vmatpush1.bf16.msra.mxu0 0
        %3320 = vmatprep.subr.bf16.mxu0 0
        %3321 = vmatpush1.bf16.msra.mxu0 0
        %3322 = vmatprep.subr.bf16.mxu0 0
        %3323 = vmatpush1.bf16.msra.mxu0 0
        %3324 = vmatprep.subr.bf16.mxu0 0
        %3325 = vmatpush1.bf16.msra.mxu0 0
        %3326 = vmatprep.subr.bf16.mxu0 0
        %3327 = vmatpush1.bf16.msra.mxu0 0
        %3328 = vmatprep.subr.bf16.mxu0 0
        %3329 = vmatpush1.bf16.msra.mxu0 0
        %3330 = vmatprep.mubr.bf16.mxu0 0
        %3331 = vmatmul.mubr.bf16.gmra.mrb[0].mxu0 %v3293
        %v3332 = vpop.f32.mrb[0].mxu0
        %v3333 = vadd.f32 0.0, %v3332
        %v3334 = vpop.f32.mrb[0].mxu0
        %v3335 = vpop.f32.mrb[0].mxu0
        %v3336 = vpop.f32.mrb[0].mxu0
        %3337 = vdwg.mxu0
        %3338 = vrot.lane.b32.xlu0 %v1432, 96
        %v3339 = vpop.permute.xlu0 %3338
        %v3341 = vsel %vm1355, %v3144, 0
        %v3344 = vsel %vm1437, %v3339, 0
        %3346 = vmatprep.subr.bf16.mxu0 0
        %3347 = vmatpush1.bf16.msra.mxu0 %v3344
        %3348 = vmatprep.subr.bf16.mxu0 0
        %3349 = vmatpush1.bf16.msra.mxu0 0
        %3350 = vmatprep.subr.bf16.mxu0 0
        %3351 = vmatpush1.bf16.msra.mxu0 0
        %3352 = vmatprep.subr.bf16.mxu0 0
        %3353 = vmatpush1.bf16.msra.mxu0 0
        %3354 = vmatprep.subr.bf16.mxu0 0
        %3355 = vmatpush1.bf16.msra.mxu0 0
        %3356 = vmatprep.subr.bf16.mxu0 0
        %3357 = vmatpush1.bf16.msra.mxu0 0
        %3358 = vmatprep.subr.bf16.mxu0 0
        %3359 = vmatpush1.bf16.msra.mxu0 0
        %3360 = vmatprep.subr.bf16.mxu0 0
        %3361 = vmatpush1.bf16.msra.mxu0 0
        %3362 = vmatprep.subr.bf16.mxu0 0
        %3363 = vmatpush1.bf16.msra.mxu0 0
        %3364 = vmatprep.subr.bf16.mxu0 0
        %3365 = vmatpush1.bf16.msra.mxu0 0
        %3366 = vmatprep.subr.bf16.mxu0 0
        %3367 = vmatpush1.bf16.msra.mxu0 0
        %3368 = vmatprep.subr.bf16.mxu0 0
        %3369 = vmatpush1.bf16.msra.mxu0 0
        %3370 = vmatprep.subr.bf16.mxu0 0
        %3371 = vmatpush1.bf16.msra.mxu0 0
        %3372 = vmatprep.subr.bf16.mxu0 0
        %3373 = vmatpush1.bf16.msra.mxu0 0
        %3374 = vmatprep.subr.bf16.mxu0 0
        %3375 = vmatpush1.bf16.msra.mxu0 0
        %3376 = vmatprep.subr.bf16.mxu0 0
        %3377 = vmatpush1.bf16.msra.mxu0 0
        %3378 = vmatprep.mubr.bf16.mxu0 0
        %3379 = vmatmul.mubr.bf16.gmra.mrb[0].mxu0 %v3341
        %v3380 = vpop.f32.mrb[0].mxu0
        %v3381 = vadd.f32 0.0, %v3380
        %v3382 = vpop.f32.mrb[0].mxu0
        %v3383 = vpop.f32.mrb[0].mxu0
        %v3384 = vpop.f32.mrb[0].mxu0
        %3385 = vdwg.mxu0
        %3386 = vrot.lane.b32.xlu0 %v1433, 96
        %v3387 = vpop.permute.xlu0 %3386
        %v3389 = vsel %vm1355, %v3145, 0
        %v3392 = vsel %vm1437, %v3387, 0
        %3394 = vmatprep.subr.bf16.mxu0 0
        %3395 = vmatpush1.bf16.msra.mxu0 %v3392
        %3396 = vmatprep.subr.bf16.mxu0 0
        %3397 = vmatpush1.bf16.msra.mxu0 0
        %3398 = vmatprep.subr.bf16.mxu0 0
        %3399 = vmatpush1.bf16.msra.mxu0 0
        %3400 = vmatprep.subr.bf16.mxu0 0
        %3401 = vmatpush1.bf16.msra.mxu0 0
        %3402 = vmatprep.subr.bf16.mxu0 0
        %3403 = vmatpush1.bf16.msra.mxu0 0
        %3404 = vmatprep.subr.bf16.mxu0 0
        %3405 = vmatpush1.bf16.msra.mxu0 0
        %3406 = vmatprep.subr.bf16.mxu0 0
        %3407 = vmatpush1.bf16.msra.mxu0 0
        %3408 = vmatprep.subr.bf16.mxu0 0
        %3409 = vmatpush1.bf16.msra.mxu0 0
        %3410 = vmatprep.subr.bf16.mxu0 0
        %3411 = vmatpush1.bf16.msra.mxu0 0
        %3412 = vmatprep.subr.bf16.mxu0 0
        %3413 = vmatpush1.bf16.msra.mxu0 0
        %3414 = vmatprep.subr.bf16.mxu0 0
        %3415 = vmatpush1.bf16.msra.mxu0 0
        %3416 = vmatprep.subr.bf16.mxu0 0
        %3417 = vmatpush1.bf16.msra.mxu0 0
        %3418 = vmatprep.subr.bf16.mxu0 0
        %3419 = vmatpush1.bf16.msra.mxu0 0
        %3420 = vmatprep.subr.bf16.mxu0 0
        %3421 = vmatpush1.bf16.msra.mxu0 0
        %3422 = vmatprep.subr.bf16.mxu0 0
        %3423 = vmatpush1.bf16.msra.mxu0 0
        %3424 = vmatprep.subr.bf16.mxu0 0
        %3425 = vmatpush1.bf16.msra.mxu0 0
        %3426 = vmatprep.mubr.bf16.mxu0 0
        %3427 = vmatmul.mubr.bf16.gmra.mrb[0].mxu0 %v3389
        %v3428 = vpop.f32.mrb[0].mxu0
        %v3429 = vadd.f32 0.0, %v3428
        %v3430 = vpop.f32.mrb[0].mxu0
        %v3431 = vpop.f32.mrb[0].mxu0
        %v3432 = vpop.f32.mrb[0].mxu0
        %3433 = vdwg.mxu0
        %3440 = vrot.lane.b32.xlu0 %v3189, 32
        %v3441 = vpop.permute.xlu0 %3440
        %3442 = vrot.lane.b32.xlu0 %v3237, 32
        %v3443 = vpop.permute.xlu0 %3442
        %3444 = vrot.lane.b32.xlu0 %v3285, 32
        %v3445 = vpop.permute.xlu0 %3444
        %3446 = vrot.lane.b32.xlu0 %v3333, 32
        %v3447 = vpop.permute.xlu0 %3446
        %3448 = vrot.lane.b32.xlu0 %v3381, 32
        %v3449 = vpop.permute.xlu0 %3448
        %3450 = vrot.lane.b32.xlu0 %v3429, 32
        %v3451 = vpop.permute.xlu0 %3450
        %vm3458 = vcmask 392448
        %3459 = vst.msk [vmem:[#allocation2] sm:$0xff] %vm3458, %v3441
        %3460 = vst.msk [vmem:[#allocation2 + $0x8] sm:$0xff] %vm3458, %v3443
        %3461 = vst.msk [vmem:[#allocation2 + $0x10] sm:$0xff] %vm3458, %v3445
        %3462 = vst.msk [vmem:[#allocation2 + $0x18] sm:$0xff] %vm3458, %v3447
        %3463 = vst.msk [vmem:[#allocation2 + $0x20] sm:$0xff] %vm3458, %v3449
        %3464 = vst.msk [vmem:[#allocation2 + $0x28] sm:$0xff] %vm3458, %v3451
        %3465 = vrot.lane.b32.xlu0 %v845, 80
        %v3466 = vpop.permute.xlu0 %3465
        %3467 = vrot.lane.b32.xlu0 %v845, 16
        %v3468 = vpop.permute.xlu0 %3467
        %v3469 = vsel %vm881, %v3466, 0
        %v3471 = vsel %vm881, %v3468, 0
        %3473 = vmatprep.subr.mxu0 0.0
        %3474 = vmatpush1.xpose.msra.mxu0 %v3471
        %3475 = vmatprep.subr.mxu0 0.0
        %3476 = vmatpush1.xpose.msra.mxu0 0.0
        %3477 = vmatprep.subr.mxu0 0.0
        %3478 = vmatpush1.xpose.msra.mxu0 0.0
        %3479 = vmatprep.subr.mxu0 0.0
        %3480 = vmatpush1.xpose.msra.mxu0 0.0
        %3481 = vmatprep.subr.mxu0 0.0
        %3482 = vmatpush1.xpose.msra.mxu0 0.0
        %3483 = vmatprep.subr.mxu0 0.0
        %3484 = vmatpush1.xpose.msra.mxu0 0.0
        %3485 = vmatprep.subr.mxu0 0.0
        %3486 = vmatpush1.xpose.msra.mxu0 0.0
        %3487 = vmatprep.subr.mxu0 0.0
        %3488 = vmatpush1.xpose.msra.mxu0 0.0
        %3489 = vmatprep.subr.mxu0 0.0
        %3490 = vmatpush1.xpose.msra.mxu0 0.0
        %3491 = vmatprep.subr.mxu0 0.0
        %3492 = vmatpush1.xpose.msra.mxu0 0.0
        %3493 = vmatprep.subr.mxu0 0.0
        %3494 = vmatpush1.xpose.msra.mxu0 0.0
        %3495 = vmatprep.subr.mxu0 0.0
        %3496 = vmatpush1.xpose.msra.mxu0 0.0
        %3497 = vmatprep.subr.mxu0 0.0
        %3498 = vmatpush1.xpose.msra.mxu0 0.0
        %3499 = vmatprep.subr.mxu0 0.0
        %3500 = vmatpush1.xpose.msra.mxu0 0.0
        %3501 = vmatprep.subr.mxu0 0.0
        %3502 = vmatpush1.xpose.msra.mxu0 0.0
        %3503 = vmatprep.subr.mxu0 0.0
        %3504 = vmatpush1.xpose.msra.mxu0 0.0
        %3505 = vmatprep.subr.mxu0 0.0
        %3506 = vmatpush1.xpose.msra.mxu0 0.0
        %3507 = vmatprep.subr.mxu0 0.0
        %3508 = vmatpush1.xpose.msra.mxu0 0.0
        %3509 = vmatprep.subr.mxu0 0.0
        %3510 = vmatpush1.xpose.msra.mxu0 0.0
        %3511 = vmatprep.subr.mxu0 0.0
        %3512 = vmatpush1.xpose.msra.mxu0 0.0
        %3513 = vmatprep.subr.mxu0 0.0
        %3514 = vmatpush1.xpose.msra.mxu0 0.0
        %3515 = vmatprep.subr.mxu0 0.0
        %3516 = vmatpush1.xpose.msra.mxu0 0.0
        %3517 = vmatprep.subr.mxu0 0.0
        %3518 = vmatpush1.xpose.msra.mxu0 0.0
        %3519 = vmatprep.subr.mxu0 0.0
        %3520 = vmatpush1.xpose.msra.mxu0 0.0
        %3521 = vmatprep.subr.mxu0 0.0
        %3522 = vmatpush1.xpose.msra.mxu0 0.0
        %3523 = vmatprep.subr.mxu0 0.0
        %3524 = vmatpush1.xpose.msra.mxu0 0.0
        %3525 = vmatprep.subr.mxu0 0.0
        %3526 = vmatpush1.xpose.msra.mxu0 0.0
        %3527 = vmatprep.subr.mxu0 0.0
        %3528 = vmatpush1.xpose.msra.mxu0 0.0
        %3529 = vmatprep.subr.mxu0 0.0
        %3530 = vmatpush1.xpose.msra.mxu0 0.0
        %3531 = vmatprep.subr.mxu0 0.0
        %3532 = vmatpush1.xpose.msra.mxu0 0.0
        %3533 = vmatprep.subr.mxu0 0.0
        %3534 = vmatpush1.xpose.msra.mxu0 0.0
        %3535 = vmatprep.subr.mxu0 0.0
        %3536 = vmatpush1.xpose.msra.mxu0 0.0
        %3537 = vmatprep.mubr.f32.mxu0 0.0
        %3538 = vmatmul.mubr.f32.gmra.mrb[0].mxu0 %v3469
        %v3539 = vpop.f32.mrb[0].mxu0
        %v3540 = vadd.f32 0.0, %v3539
        %v3541 = vpop.f32.mrb[0].mxu0
        %3542 = vdwg.mxu0
        %3543 = vrot.lane.b32.xlu0 %v849, 80
        %v3544 = vpop.permute.xlu0 %3543
        %3545 = vrot.lane.b32.xlu0 %v849, 16
        %v3546 = vpop.permute.xlu0 %3545
        %v3547 = vsel %vm881, %v3544, 0
        %v3549 = vsel %vm881, %v3546, 0
        %3551 = vmatprep.subr.mxu0 0.0
        %3552 = vmatpush1.xpose.msra.mxu0 %v3549
        %3553 = vmatprep.subr.mxu0 0.0
        %3554 = vmatpush1.xpose.msra.mxu0 0.0
        %3555 = vmatprep.subr.mxu0 0.0
        %3556 = vmatpush1.xpose.msra.mxu0 0.0
        %3557 = vmatprep.subr.mxu0 0.0
        %3558 = vmatpush1.xpose.msra.mxu0 0.0
        %3559 = vmatprep.subr.mxu0 0.0
        %3560 = vmatpush1.xpose.msra.mxu0 0.0
        %3561 = vmatprep.subr.mxu0 0.0
        %3562 = vmatpush1.xpose.msra.mxu0 0.0
        %3563 = vmatprep.subr.mxu0 0.0
        %3564 = vmatpush1.xpose.msra.mxu0 0.0
        %3565 = vmatprep.subr.mxu0 0.0
        %3566 = vmatpush1.xpose.msra.mxu0 0.0
        %3567 = vmatprep.subr.mxu0 0.0
        %3568 = vmatpush1.xpose.msra.mxu0 0.0
        %3569 = vmatprep.subr.mxu0 0.0
        %3570 = vmatpush1.xpose.msra.mxu0 0.0
        %3571 = vmatprep.subr.mxu0 0.0
        %3572 = vmatpush1.xpose.msra.mxu0 0.0
        %3573 = vmatprep.subr.mxu0 0.0
        %3574 = vmatpush1.xpose.msra.mxu0 0.0
        %3575 = vmatprep.subr.mxu0 0.0
        %3576 = vmatpush1.xpose.msra.mxu0 0.0
        %3577 = vmatprep.subr.mxu0 0.0
        %3578 = vmatpush1.xpose.msra.mxu0 0.0
        %3579 = vmatprep.subr.mxu0 0.0
        %3580 = vmatpush1.xpose.msra.mxu0 0.0
        %3581 = vmatprep.subr.mxu0 0.0
        %3582 = vmatpush1.xpose.msra.mxu0 0.0
        %3583 = vmatprep.subr.mxu0 0.0
        %3584 = vmatpush1.xpose.msra.mxu0 0.0
        %3585 = vmatprep.subr.mxu0 0.0
        %3586 = vmatpush1.xpose.msra.mxu0 0.0
        %3587 = vmatprep.subr.mxu0 0.0
        %3588 = vmatpush1.xpose.msra.mxu0 0.0
        %3589 = vmatprep.subr.mxu0 0.0
        %3590 = vmatpush1.xpose.msra.mxu0 0.0
        %3591 = vmatprep.subr.mxu0 0.0
        %3592 = vmatpush1.xpose.msra.mxu0 0.0
        %3593 = vmatprep.subr.mxu0 0.0
        %3594 = vmatpush1.xpose.msra.mxu0 0.0
        %3595 = vmatprep.subr.mxu0 0.0
        %3596 = vmatpush1.xpose.msra.mxu0 0.0
        %3597 = vmatprep.subr.mxu0 0.0
        %3598 = vmatpush1.xpose.msra.mxu0 0.0
        %3599 = vmatprep.subr.mxu0 0.0
        %3600 = vmatpush1.xpose.msra.mxu0 0.0
        %3601 = vmatprep.subr.mxu0 0.0
        %3602 = vmatpush1.xpose.msra.mxu0 0.0
        %3603 = vmatprep.subr.mxu0 0.0
        %3604 = vmatpush1.xpose.msra.mxu0 0.0
        %3605 = vmatprep.subr.mxu0 0.0
        %3606 = vmatpush1.xpose.msra.mxu0 0.0
        %3607 = vmatprep.subr.mxu0 0.0
        %3608 = vmatpush1.xpose.msra.mxu0 0.0
        %3609 = vmatprep.subr.mxu0 0.0
        %3610 = vmatpush1.xpose.msra.mxu0 0.0
        %3611 = vmatprep.subr.mxu0 0.0
        %3612 = vmatpush1.xpose.msra.mxu0 0.0
        %3613 = vmatprep.subr.mxu0 0.0
        %3614 = vmatpush1.xpose.msra.mxu0 0.0
        %3615 = vmatprep.mubr.f32.mxu0 0.0
        %3616 = vmatmul.mubr.f32.gmra.mrb[0].mxu0 %v3547
        %v3617 = vpop.f32.mrb[0].mxu0
        %v3618 = vadd.f32 0.0, %v3617
        %v3619 = vpop.f32.mrb[0].mxu0
        %3620 = vdwg.mxu0
        %3621 = vrot.lane.b32.xlu0 %v855, 80
        %v3622 = vpop.permute.xlu0 %3621
        %3623 = vrot.lane.b32.xlu0 %v855, 16
        %v3624 = vpop.permute.xlu0 %3623
        %v3625 = vsel %vm881, %v3622, 0
        %v3627 = vsel %vm881, %v3624, 0
        %3629 = vmatprep.subr.mxu0 0.0
        %3630 = vmatpush1.xpose.msra.mxu0 %v3627
        %3631 = vmatprep.subr.mxu0 0.0
        %3632 = vmatpush1.xpose.msra.mxu0 0.0
        %3633 = vmatprep.subr.mxu0 0.0
        %3634 = vmatpush1.xpose.msra.mxu0 0.0
        %3635 = vmatprep.subr.mxu0 0.0
        %3636 = vmatpush1.xpose.msra.mxu0 0.0
        %3637 = vmatprep.subr.mxu0 0.0
        %3638 = vmatpush1.xpose.msra.mxu0 0.0
        %3639 = vmatprep.subr.mxu0 0.0
        %3640 = vmatpush1.xpose.msra.mxu0 0.0
        %3641 = vmatprep.subr.mxu0 0.0
        %3642 = vmatpush1.xpose.msra.mxu0 0.0
        %3643 = vmatprep.subr.mxu0 0.0
        %3644 = vmatpush1.xpose.msra.mxu0 0.0
        %3645 = vmatprep.subr.mxu0 0.0
        %3646 = vmatpush1.xpose.msra.mxu0 0.0
        %3647 = vmatprep.subr.mxu0 0.0
        %3648 = vmatpush1.xpose.msra.mxu0 0.0
        %3649 = vmatprep.subr.mxu0 0.0
        %3650 = vmatpush1.xpose.msra.mxu0 0.0
        %3651 = vmatprep.subr.mxu0 0.0
        %3652 = vmatpush1.xpose.msra.mxu0 0.0
        %3653 = vmatprep.subr.mxu0 0.0
        %3654 = vmatpush1.xpose.msra.mxu0 0.0
        %3655 = vmatprep.subr.mxu0 0.0
        %3656 = vmatpush1.xpose.msra.mxu0 0.0
        %3657 = vmatprep.subr.mxu0 0.0
        %3658 = vmatpush1.xpose.msra.mxu0 0.0
        %3659 = vmatprep.subr.mxu0 0.0
        %3660 = vmatpush1.xpose.msra.mxu0 0.0
        %3661 = vmatprep.subr.mxu0 0.0
        %3662 = vmatpush1.xpose.msra.mxu0 0.0
        %3663 = vmatprep.subr.mxu0 0.0
        %3664 = vmatpush1.xpose.msra.mxu0 0.0
        %3665 = vmatprep.subr.mxu0 0.0
        %3666 = vmatpush1.xpose.msra.mxu0 0.0
        %3667 = vmatprep.subr.mxu0 0.0
        %3668 = vmatpush1.xpose.msra.mxu0 0.0
        %3669 = vmatprep.subr.mxu0 0.0
        %3670 = vmatpush1.xpose.msra.mxu0 0.0
        %3671 = vmatprep.subr.mxu0 0.0
        %3672 = vmatpush1.xpose.msra.mxu0 0.0
        %3673 = vmatprep.subr.mxu0 0.0
        %3674 = vmatpush1.xpose.msra.mxu0 0.0
        %3675 = vmatprep.subr.mxu0 0.0
        %3676 = vmatpush1.xpose.msra.mxu0 0.0
        %3677 = vmatprep.subr.mxu0 0.0
        %3678 = vmatpush1.xpose.msra.mxu0 0.0
        %3679 = vmatprep.subr.mxu0 0.0
        %3680 = vmatpush1.xpose.msra.mxu0 0.0
        %3681 = vmatprep.subr.mxu0 0.0
        %3682 = vmatpush1.xpose.msra.mxu0 0.0
        %3683 = vmatprep.subr.mxu0 0.0
        %3684 = vmatpush1.xpose.msra.mxu0 0.0
        %3685 = vmatprep.subr.mxu0 0.0
        %3686 = vmatpush1.xpose.msra.mxu0 0.0
        %3687 = vmatprep.subr.mxu0 0.0
        %3688 = vmatpush1.xpose.msra.mxu0 0.0
        %3689 = vmatprep.subr.mxu0 0.0
        %3690 = vmatpush1.xpose.msra.mxu0 0.0
        %3691 = vmatprep.subr.mxu0 0.0
        %3692 = vmatpush1.xpose.msra.mxu0 0.0
        %3693 = vmatprep.mubr.f32.mxu0 0.0
        %3694 = vmatmul.mubr.f32.gmra.mrb[0].mxu0 %v3625
        %v3695 = vpop.f32.mrb[0].mxu0
        %v3696 = vadd.f32 0.0, %v3695
        %v3697 = vpop.f32.mrb[0].mxu0
        %3698 = vdwg.mxu0
        %3699 = vrot.lane.b32.xlu0 %v859, 80
        %v3700 = vpop.permute.xlu0 %3699
        %3701 = vrot.lane.b32.xlu0 %v859, 16
        %v3702 = vpop.permute.xlu0 %3701
        %v3703 = vsel %vm881, %v3700, 0
        %v3705 = vsel %vm881, %v3702, 0
        %3707 = vmatprep.subr.mxu0 0.0
        %3708 = vmatpush1.xpose.msra.mxu0 %v3705
        %3709 = vmatprep.subr.mxu0 0.0
        %3710 = vmatpush1.xpose.msra.mxu0 0.0
        %3711 = vmatprep.subr.mxu0 0.0
        %3712 = vmatpush1.xpose.msra.mxu0 0.0
        %3713 = vmatprep.subr.mxu0 0.0
        %3714 = vmatpush1.xpose.msra.mxu0 0.0
        %3715 = vmatprep.subr.mxu0 0.0
        %3716 = vmatpush1.xpose.msra.mxu0 0.0
        %3717 = vmatprep.subr.mxu0 0.0
        %3718 = vmatpush1.xpose.msra.mxu0 0.0
        %3719 = vmatprep.subr.mxu0 0.0
        %3720 = vmatpush1.xpose.msra.mxu0 0.0
        %3721 = vmatprep.subr.mxu0 0.0
        %3722 = vmatpush1.xpose.msra.mxu0 0.0
        %3723 = vmatprep.subr.mxu0 0.0
        %3724 = vmatpush1.xpose.msra.mxu0 0.0
        %3725 = vmatprep.subr.mxu0 0.0
        %3726 = vmatpush1.xpose.msra.mxu0 0.0
        %3727 = vmatprep.subr.mxu0 0.0
        %3728 = vmatpush1.xpose.msra.mxu0 0.0
        %3729 = vmatprep.subr.mxu0 0.0
        %3730 = vmatpush1.xpose.msra.mxu0 0.0
        %3731 = vmatprep.subr.mxu0 0.0
        %3732 = vmatpush1.xpose.msra.mxu0 0.0
        %3733 = vmatprep.subr.mxu0 0.0
        %3734 = vmatpush1.xpose.msra.mxu0 0.0
        %3735 = vmatprep.subr.mxu0 0.0
        %3736 = vmatpush1.xpose.msra.mxu0 0.0
        %3737 = vmatprep.subr.mxu0 0.0
        %3738 = vmatpush1.xpose.msra.mxu0 0.0
        %3739 = vmatprep.subr.mxu0 0.0
        %3740 = vmatpush1.xpose.msra.mxu0 0.0
        %3741 = vmatprep.subr.mxu0 0.0
        %3742 = vmatpush1.xpose.msra.mxu0 0.0
        %3743 = vmatprep.subr.mxu0 0.0
        %3744 = vmatpush1.xpose.msra.mxu0 0.0
        %3745 = vmatprep.subr.mxu0 0.0
        %3746 = vmatpush1.xpose.msra.mxu0 0.0
        %3747 = vmatprep.subr.mxu0 0.0
        %3748 = vmatpush1.xpose.msra.mxu0 0.0
        %3749 = vmatprep.subr.mxu0 0.0
        %3750 = vmatpush1.xpose.msra.mxu0 0.0
        %3751 = vmatprep.subr.mxu0 0.0
        %3752 = vmatpush1.xpose.msra.mxu0 0.0
        %3753 = vmatprep.subr.mxu0 0.0
        %3754 = vmatpush1.xpose.msra.mxu0 0.0
        %3755 = vmatprep.subr.mxu0 0.0
        %3756 = vmatpush1.xpose.msra.mxu0 0.0
        %3757 = vmatprep.subr.mxu0 0.0
        %3758 = vmatpush1.xpose.msra.mxu0 0.0
        %3759 = vmatprep.subr.mxu0 0.0
        %3760 = vmatpush1.xpose.msra.mxu0 0.0
        %3761 = vmatprep.subr.mxu0 0.0
        %3762 = vmatpush1.xpose.msra.mxu0 0.0
        %3763 = vmatprep.subr.mxu0 0.0
        %3764 = vmatpush1.xpose.msra.mxu0 0.0
        %3765 = vmatprep.subr.mxu0 0.0
        %3766 = vmatpush1.xpose.msra.mxu0 0.0
        %3767 = vmatprep.subr.mxu0 0.0
        %3768 = vmatpush1.xpose.msra.mxu0 0.0
        %3769 = vmatprep.subr.mxu0 0.0
        %3770 = vmatpush1.xpose.msra.mxu0 0.0
        %3771 = vmatprep.mubr.f32.mxu0 0.0
        %3772 = vmatmul.mubr.f32.gmra.mrb[0].mxu0 %v3703
        %v3773 = vpop.f32.mrb[0].mxu0
        %v3774 = vadd.f32 0.0, %v3773
        %v3775 = vpop.f32.mrb[0].mxu0
        %3776 = vdwg.mxu0
        %3777 = vrot.lane.b32.xlu0 %v865, 80
        %v3778 = vpop.permute.xlu0 %3777
        %3779 = vrot.lane.b32.xlu0 %v865, 16
        %v3780 = vpop.permute.xlu0 %3779
        %v3781 = vsel %vm881, %v3778, 0
        %v3783 = vsel %vm881, %v3780, 0
        %3785 = vmatprep.subr.mxu0 0.0
        %3786 = vmatpush1.xpose.msra.mxu0 %v3783
        %3787 = vmatprep.subr.mxu0 0.0
        %3788 = vmatpush1.xpose.msra.mxu0 0.0
        %3789 = vmatprep.subr.mxu0 0.0
        %3790 = vmatpush1.xpose.msra.mxu0 0.0
        %3791 = vmatprep.subr.mxu0 0.0
        %3792 = vmatpush1.xpose.msra.mxu0 0.0
        %3793 = vmatprep.subr.mxu0 0.0
        %3794 = vmatpush1.xpose.msra.mxu0 0.0
        %3795 = vmatprep.subr.mxu0 0.0
        %3796 = vmatpush1.xpose.msra.mxu0 0.0
        %3797 = vmatprep.subr.mxu0 0.0
        %3798 = vmatpush1.xpose.msra.mxu0 0.0
        %3799 = vmatprep.subr.mxu0 0.0
        %3800 = vmatpush1.xpose.msra.mxu0 0.0
        %3801 = vmatprep.subr.mxu0 0.0
        %3802 = vmatpush1.xpose.msra.mxu0 0.0
        %3803 = vmatprep.subr.mxu0 0.0
        %3804 = vmatpush1.xpose.msra.mxu0 0.0
        %3805 = vmatprep.subr.mxu0 0.0
        %3806 = vmatpush1.xpose.msra.mxu0 0.0
        %3807 = vmatprep.subr.mxu0 0.0
        %3808 = vmatpush1.xpose.msra.mxu0 0.0
        %3809 = vmatprep.subr.mxu0 0.0
        %3810 = vmatpush1.xpose.msra.mxu0 0.0
        %3811 = vmatprep.subr.mxu0 0.0
        %3812 = vmatpush1.xpose.msra.mxu0 0.0
        %3813 = vmatprep.subr.mxu0 0.0
        %3814 = vmatpush1.xpose.msra.mxu0 0.0
        %3815 = vmatprep.subr.mxu0 0.0
        %3816 = vmatpush1.xpose.msra.mxu0 0.0
        %3817 = vmatprep.subr.mxu0 0.0
        %3818 = vmatpush1.xpose.msra.mxu0 0.0
        %3819 = vmatprep.subr.mxu0 0.0
        %3820 = vmatpush1.xpose.msra.mxu0 0.0
        %3821 = vmatprep.subr.mxu0 0.0
        %3822 = vmatpush1.xpose.msra.mxu0 0.0
        %3823 = vmatprep.subr.mxu0 0.0
        %3824 = vmatpush1.xpose.msra.mxu0 0.0
        %3825 = vmatprep.subr.mxu0 0.0
        %3826 = vmatpush1.xpose.msra.mxu0 0.0
        %3827 = vmatprep.subr.mxu0 0.0
        %3828 = vmatpush1.xpose.msra.mxu0 0.0
        %3829 = vmatprep.subr.mxu0 0.0
        %3830 = vmatpush1.xpose.msra.mxu0 0.0
        %3831 = vmatprep.subr.mxu0 0.0
        %3832 = vmatpush1.xpose.msra.mxu0 0.0
        %3833 = vmatprep.subr.mxu0 0.0
        %3834 = vmatpush1.xpose.msra.mxu0 0.0
        %3835 = vmatprep.subr.mxu0 0.0
        %3836 = vmatpush1.xpose.msra.mxu0 0.0
        %3837 = vmatprep.subr.mxu0 0.0
        %3838 = vmatpush1.xpose.msra.mxu0 0.0
        %3839 = vmatprep.subr.mxu0 0.0
        %3840 = vmatpush1.xpose.msra.mxu0 0.0
        %3841 = vmatprep.subr.mxu0 0.0
        %3842 = vmatpush1.xpose.msra.mxu0 0.0
        %3843 = vmatprep.subr.mxu0 0.0
        %3844 = vmatpush1.xpose.msra.mxu0 0.0
        %3845 = vmatprep.subr.mxu0 0.0
        %3846 = vmatpush1.xpose.msra.mxu0 0.0
        %3847 = vmatprep.subr.mxu0 0.0
        %3848 = vmatpush1.xpose.msra.mxu0 0.0
        %3849 = vmatprep.mubr.f32.mxu0 0.0
        %3850 = vmatmul.mubr.f32.gmra.mrb[0].mxu0 %v3781
        %v3851 = vpop.f32.mrb[0].mxu0
        %v3852 = vadd.f32 0.0, %v3851
        %v3853 = vpop.f32.mrb[0].mxu0
        %3854 = vdwg.mxu0
        %3855 = vrot.lane.b32.xlu0 %v869, 80
        %v3856 = vpop.permute.xlu0 %3855
        %3857 = vrot.lane.b32.xlu0 %v869, 16
        %v3858 = vpop.permute.xlu0 %3857
        %v3859 = vsel %vm881, %v3856, 0
        %v3861 = vsel %vm881, %v3858, 0
        %3863 = vmatprep.subr.mxu0 0.0
        %3864 = vmatpush1.xpose.msra.mxu0 %v3861
        %3865 = vmatprep.subr.mxu0 0.0
        %3866 = vmatpush1.xpose.msra.mxu0 0.0
        %3867 = vmatprep.subr.mxu0 0.0
        %3868 = vmatpush1.xpose.msra.mxu0 0.0
        %3869 = vmatprep.subr.mxu0 0.0
        %3870 = vmatpush1.xpose.msra.mxu0 0.0
        %3871 = vmatprep.subr.mxu0 0.0
        %3872 = vmatpush1.xpose.msra.mxu0 0.0
        %3873 = vmatprep.subr.mxu0 0.0
        %3874 = vmatpush1.xpose.msra.mxu0 0.0
        %3875 = vmatprep.subr.mxu0 0.0
        %3876 = vmatpush1.xpose.msra.mxu0 0.0
        %3877 = vmatprep.subr.mxu0 0.0
        %3878 = vmatpush1.xpose.msra.mxu0 0.0
        %3879 = vmatprep.subr.mxu0 0.0
        %3880 = vmatpush1.xpose.msra.mxu0 0.0
        %3881 = vmatprep.subr.mxu0 0.0
        %3882 = vmatpush1.xpose.msra.mxu0 0.0
        %3883 = vmatprep.subr.mxu0 0.0
        %3884 = vmatpush1.xpose.msra.mxu0 0.0
        %3885 = vmatprep.subr.mxu0 0.0
        %3886 = vmatpush1.xpose.msra.mxu0 0.0
        %3887 = vmatprep.subr.mxu0 0.0
        %3888 = vmatpush1.xpose.msra.mxu0 0.0
        %3889 = vmatprep.subr.mxu0 0.0
        %3890 = vmatpush1.xpose.msra.mxu0 0.0
        %3891 = vmatprep.subr.mxu0 0.0
        %3892 = vmatpush1.xpose.msra.mxu0 0.0
        %3893 = vmatprep.subr.mxu0 0.0
        %3894 = vmatpush1.xpose.msra.mxu0 0.0
        %3895 = vmatprep.subr.mxu0 0.0
        %3896 = vmatpush1.xpose.msra.mxu0 0.0
        %3897 = vmatprep.subr.mxu0 0.0
        %3898 = vmatpush1.xpose.msra.mxu0 0.0
        %3899 = vmatprep.subr.mxu0 0.0
        %3900 = vmatpush1.xpose.msra.mxu0 0.0
        %3901 = vmatprep.subr.mxu0 0.0
        %3902 = vmatpush1.xpose.msra.mxu0 0.0
        %3903 = vmatprep.subr.mxu0 0.0
        %3904 = vmatpush1.xpose.msra.mxu0 0.0
        %3905 = vmatprep.subr.mxu0 0.0
        %3906 = vmatpush1.xpose.msra.mxu0 0.0
        %3907 = vmatprep.subr.mxu0 0.0
        %3908 = vmatpush1.xpose.msra.mxu0 0.0
        %3909 = vmatprep.subr.mxu0 0.0
        %3910 = vmatpush1.xpose.msra.mxu0 0.0
        %3911 = vmatprep.subr.mxu0 0.0
        %3912 = vmatpush1.xpose.msra.mxu0 0.0
        %3913 = vmatprep.subr.mxu0 0.0
        %3914 = vmatpush1.xpose.msra.mxu0 0.0
        %3915 = vmatprep.subr.mxu0 0.0
        %3916 = vmatpush1.xpose.msra.mxu0 0.0
        %3917 = vmatprep.subr.mxu0 0.0
        %3918 = vmatpush1.xpose.msra.mxu0 0.0
        %3919 = vmatprep.subr.mxu0 0.0
        %3920 = vmatpush1.xpose.msra.mxu0 0.0
        %3921 = vmatprep.subr.mxu0 0.0
        %3922 = vmatpush1.xpose.msra.mxu0 0.0
        %3923 = vmatprep.subr.mxu0 0.0
        %3924 = vmatpush1.xpose.msra.mxu0 0.0
        %3925 = vmatprep.subr.mxu0 0.0
        %3926 = vmatpush1.xpose.msra.mxu0 0.0
        %3927 = vmatprep.mubr.f32.mxu0 0.0
        %3928 = vmatmul.mubr.f32.gmra.mrb[0].mxu0 %v3859
        %v3929 = vpop.f32.mrb[0].mxu0
        %v3930 = vadd.f32 0.0, %v3929
        %v3931 = vpop.f32.mrb[0].mxu0
        %3932 = vdwg.mxu0
        %v3933 = vmul.f32 %v3540, 0.25
        %v3934 = vmul.f32 %v3618, 0.25
        %v3935 = vmul.f32 %v3696, 0.25
        %v3936 = vmul.f32 %v3774, 0.25
        %v3937 = vmul.f32 %v3852, 0.25
        %v3938 = vmul.f32 %v3930, 0.25
        %v3939 = vsel %vm1348, %v3933, -1e+09
        %v3940 = vsel %vm1348, %v3934, -1e+09
        %v3941 = vsel %vm1348, %v3935, -1e+09
        %v3942 = vsel %vm1348, %v3936, -1e+09
        %v3943 = vsel %vm1348, %v3937, -1e+09
        %v3944 = vsel %vm1348, %v3938, -1e+09
        %v3945 = vsel %vm1355, %v3939, -inf
        %3946 = vmax.xlane.f32.xlu0 %v3945
        %v3947 = vpop.xlane.xlu0 %3946
        %v3948 = vsel %vm1355, %v3940, -inf
        %3949 = vmax.xlane.f32.xlu0 %v3948
        %v3950 = vpop.xlane.xlu0 %3949
        %v3951 = vsel %vm1355, %v3941, -inf
        %3952 = vmax.xlane.f32.xlu0 %v3951
        %v3953 = vpop.xlane.xlu0 %3952
        %v3954 = vsel %vm1355, %v3942, -inf
        %3955 = vmax.xlane.f32.xlu0 %v3954
        %v3956 = vpop.xlane.xlu0 %3955
        %v3957 = vsel %vm1355, %v3943, -inf
        %3958 = vmax.xlane.f32.xlu0 %v3957
        %v3959 = vpop.xlane.xlu0 %3958
        %v3960 = vsel %vm1355, %v3944, -inf
        %3961 = vmax.xlane.f32.xlu0 %v3960
        %v3962 = vpop.xlane.xlu0 %3961
        %v3963 = vsub.f32 %v3939, %v3947
        %v3964 = vsub.f32 %v3940, %v3950
        %v3965 = vsub.f32 %v3941, %v3953
        %v3966 = vsub.f32 %v3942, %v3956
        %v3967 = vsub.f32 %v3943, %v3959
        %v3968 = vsub.f32 %v3944, %v3962
        %v3969 = vmul.f32 %v3963, 1.442695
        %v3970 = vpow.pop %v3969
        %v3971 = vmul.f32 %v3964, 1.442695
        %v3972 = vpow.pop %v3971
        %v3973 = vmul.f32 %v3965, 1.442695
        %v3974 = vpow.pop %v3973
        %v3975 = vmul.f32 %v3966, 1.442695
        %v3976 = vpow.pop %v3975
        %v3977 = vmul.f32 %v3967, 1.442695
        %v3978 = vpow.pop %v3977
        %v3979 = vmul.f32 %v3968, 1.442695
        %v3980 = vpow.pop %v3979
        %v3981 = vsel %vm1355, %v3970, 0.0
        %3982 = vadd.xlane.f32.xlu0 %v3981
        %v3983 = vpop.xlane.xlu0 %3982
        %v3984 = vsel %vm1355, %v3972, 0.0
        %3985 = vadd.xlane.f32.xlu0 %v3984
        %v3986 = vpop.xlane.xlu0 %3985
        %v3987 = vsel %vm1355, %v3974, 0.0
        %3988 = vadd.xlane.f32.xlu0 %v3987
        %v3989 = vpop.xlane.xlu0 %3988
        %v3990 = vsel %vm1355, %v3976, 0.0
        %3991 = vadd.xlane.f32.xlu0 %v3990
        %v3992 = vpop.xlane.xlu0 %3991
        %v3993 = vsel %vm1355, %v3978, 0.0
        %3994 = vadd.xlane.f32.xlu0 %v3993
        %v3995 = vpop.xlane.xlu0 %3994
        %v3996 = vsel %vm1355, %v3980, 0.0
        %3997 = vadd.xlane.f32.xlu0 %v3996
        %v3998 = vpop.xlane.xlu0 %3997
        %v3999 = vrcp.pop %v3983
        %v4000 = vrcp.pop %v3986
        %v4001 = vrcp.pop %v3989
        %v4002 = vrcp.pop %v3992
        %v4003 = vrcp.pop %v3995
        %v4004 = vrcp.pop %v3998
        %v4005 = vmul.f32 %v3970, %v3999
        %v4006 = vmul.f32 %v3972, %v4000
        %v4007 = vmul.f32 %v3974, %v4001
        %v4008 = vmul.f32 %v3976, %v4002
        %v4009 = vmul.f32 %v3978, %v4003
        %v4010 = vmul.f32 %v3980, %v4004
        %v4011 = vpack.c.bf16 %v4005, %v4005
        %v4012 = vpack.c.bf16 %v4006, %v4006
        %v4013 = vpack.c.bf16 %v4007, %v4007
        %v4014 = vpack.c.bf16 %v4008, %v4008
        %v4015 = vpack.c.bf16 %v4009, %v4009
        %v4016 = vpack.c.bf16 %v4010, %v4010
        %4017 = vrot.lane.b32.xlu0 %v1428, 80
        %v4018 = vpop.permute.xlu0 %4017
        %v4020 = vsel %vm1355, %v4011, 0
        %v4023 = vsel %vm1437, %v4018, 0
        %4025 = vmatprep.subr.bf16.mxu0 0
        %4026 = vmatpush1.bf16.msra.mxu0 %v4023
        %4027 = vmatprep.subr.bf16.mxu0 0
        %4028 = vmatpush1.bf16.msra.mxu0 0
        %4029 = vmatprep.subr.bf16.mxu0 0
        %4030 = vmatpush1.bf16.msra.mxu0 0
        %4031 = vmatprep.subr.bf16.mxu0 0
        %4032 = vmatpush1.bf16.msra.mxu0 0
        %4033 = vmatprep.subr.bf16.mxu0 0
        %4034 = vmatpush1.bf16.msra.mxu0 0
        %4035 = vmatprep.subr.bf16.mxu0 0
        %4036 = vmatpush1.bf16.msra.mxu0 0
        %4037 = vmatprep.subr.bf16.mxu0 0
        %4038 = vmatpush1.bf16.msra.mxu0 0
        %4039 = vmatprep.subr.bf16.mxu0 0
        %4040 = vmatpush1.bf16.msra.mxu0 0
        %4041 = vmatprep.subr.bf16.mxu0 0
        %4042 = vmatpush1.bf16.msra.mxu0 0
        %4043 = vmatprep.subr.bf16.mxu0 0
        %4044 = vmatpush1.bf16.msra.mxu0 0
        %4045 = vmatprep.subr.bf16.mxu0 0
        %4046 = vmatpush1.bf16.msra.mxu0 0
        %4047 = vmatprep.subr.bf16.mxu0 0
        %4048 = vmatpush1.bf16.msra.mxu0 0
        %4049 = vmatprep.subr.bf16.mxu0 0
        %4050 = vmatpush1.bf16.msra.mxu0 0
        %4051 = vmatprep.subr.bf16.mxu0 0
        %4052 = vmatpush1.bf16.msra.mxu0 0
        %4053 = vmatprep.subr.bf16.mxu0 0
        %4054 = vmatpush1.bf16.msra.mxu0 0
        %4055 = vmatprep.subr.bf16.mxu0 0
        %4056 = vmatpush1.bf16.msra.mxu0 0
        %4057 = vmatprep.mubr.bf16.mxu0 0
        %4058 = vmatmul.mubr.bf16.gmra.mrb[0].mxu0 %v4020
        %v4059 = vpop.f32.mrb[0].mxu0
        %v4060 = vadd.f32 0.0, %v4059
        %v4061 = vpop.f32.mrb[0].mxu0
        %v4062 = vpop.f32.mrb[0].mxu0
        %v4063 = vpop.f32.mrb[0].mxu0
        %4064 = vdwg.mxu0
        %4065 = vrot.lane.b32.xlu0 %v1429, 80
        %v4066 = vpop.permute.xlu0 %4065
        %v4068 = vsel %vm1355, %v4012, 0
        %v4071 = vsel %vm1437, %v4066, 0
        %4073 = vmatprep.subr.bf16.mxu0 0
        %4074 = vmatpush1.bf16.msra.mxu0 %v4071
        %4075 = vmatprep.subr.bf16.mxu0 0
        %4076 = vmatpush1.bf16.msra.mxu0 0
        %4077 = vmatprep.subr.bf16.mxu0 0
        %4078 = vmatpush1.bf16.msra.mxu0 0
        %4079 = vmatprep.subr.bf16.mxu0 0
        %4080 = vmatpush1.bf16.msra.mxu0 0
        %4081 = vmatprep.subr.bf16.mxu0 0
        %4082 = vmatpush1.bf16.msra.mxu0 0
        %4083 = vmatprep.subr.bf16.mxu0 0
        %4084 = vmatpush1.bf16.msra.mxu0 0
        %4085 = vmatprep.subr.bf16.mxu0 0
        %4086 = vmatpush1.bf16.msra.mxu0 0
        %4087 = vmatprep.subr.bf16.mxu0 0
        %4088 = vmatpush1.bf16.msra.mxu0 0
        %4089 = vmatprep.subr.bf16.mxu0 0
        %4090 = vmatpush1.bf16.msra.mxu0 0
        %4091 = vmatprep.subr.bf16.mxu0 0
        %4092 = vmatpush1.bf16.msra.mxu0 0
        %4093 = vmatprep.subr.bf16.mxu0 0
        %4094 = vmatpush1.bf16.msra.mxu0 0
        %4095 = vmatprep.subr.bf16.mxu0 0
        %4096 = vmatpush1.bf16.msra.mxu0 0
        %4097 = vmatprep.subr.bf16.mxu0 0
        %4098 = vmatpush1.bf16.msra.mxu0 0
        %4099 = vmatprep.subr.bf16.mxu0 0
        %4100 = vmatpush1.bf16.msra.mxu0 0
        %4101 = vmatprep.subr.bf16.mxu0 0
        %4102 = vmatpush1.bf16.msra.mxu0 0
        %4103 = vmatprep.subr.bf16.mxu0 0
        %4104 = vmatpush1.bf16.msra.mxu0 0
        %4105 = vmatprep.mubr.bf16.mxu0 0
        %4106 = vmatmul.mubr.bf16.gmra.mrb[0].mxu0 %v4068
        %v4107 = vpop.f32.mrb[0].mxu0
        %v4108 = vadd.f32 0.0, %v4107
        %v4109 = vpop.f32.mrb[0].mxu0
        %v4110 = vpop.f32.mrb[0].mxu0
        %v4111 = vpop.f32.mrb[0].mxu0
        %4112 = vdwg.mxu0
        %4113 = vrot.lane.b32.xlu0 %v1430, 80
        %v4114 = vpop.permute.xlu0 %4113
        %v4116 = vsel %vm1355, %v4013, 0
        %v4119 = vsel %vm1437, %v4114, 0
        %4121 = vmatprep.subr.bf16.mxu0 0
        %4122 = vmatpush1.bf16.msra.mxu0 %v4119
        %4123 = vmatprep.subr.bf16.mxu0 0
        %4124 = vmatpush1.bf16.msra.mxu0 0
        %4125 = vmatprep.subr.bf16.mxu0 0
        %4126 = vmatpush1.bf16.msra.mxu0 0
        %4127 = vmatprep.subr.bf16.mxu0 0
        %4128 = vmatpush1.bf16.msra.mxu0 0
        %4129 = vmatprep.subr.bf16.mxu0 0
        %4130 = vmatpush1.bf16.msra.mxu0 0
        %4131 = vmatprep.subr.bf16.mxu0 0
        %4132 = vmatpush1.bf16.msra.mxu0 0
        %4133 = vmatprep.subr.bf16.mxu0 0
        %4134 = vmatpush1.bf16.msra.mxu0 0
        %4135 = vmatprep.subr.bf16.mxu0 0
        %4136 = vmatpush1.bf16.msra.mxu0 0
        %4137 = vmatprep.subr.bf16.mxu0 0
        %4138 = vmatpush1.bf16.msra.mxu0 0
        %4139 = vmatprep.subr.bf16.mxu0 0
        %4140 = vmatpush1.bf16.msra.mxu0 0
        %4141 = vmatprep.subr.bf16.mxu0 0
        %4142 = vmatpush1.bf16.msra.mxu0 0
        %4143 = vmatprep.subr.bf16.mxu0 0
        %4144 = vmatpush1.bf16.msra.mxu0 0
        %4145 = vmatprep.subr.bf16.mxu0 0
        %4146 = vmatpush1.bf16.msra.mxu0 0
        %4147 = vmatprep.subr.bf16.mxu0 0
        %4148 = vmatpush1.bf16.msra.mxu0 0
        %4149 = vmatprep.subr.bf16.mxu0 0
        %4150 = vmatpush1.bf16.msra.mxu0 0
        %4151 = vmatprep.subr.bf16.mxu0 0
        %4152 = vmatpush1.bf16.msra.mxu0 0
        %4153 = vmatprep.mubr.bf16.mxu0 0
        %4154 = vmatmul.mubr.bf16.gmra.mrb[0].mxu0 %v4116
        %v4155 = vpop.f32.mrb[0].mxu0
        %v4156 = vadd.f32 0.0, %v4155
        %v4157 = vpop.f32.mrb[0].mxu0
        %v4158 = vpop.f32.mrb[0].mxu0
        %v4159 = vpop.f32.mrb[0].mxu0
        %4160 = vdwg.mxu0
        %4161 = vrot.lane.b32.xlu0 %v1431, 80
        %v4162 = vpop.permute.xlu0 %4161
        %v4164 = vsel %vm1355, %v4014, 0
        %v4167 = vsel %vm1437, %v4162, 0
        %4169 = vmatprep.subr.bf16.mxu0 0
        %4170 = vmatpush1.bf16.msra.mxu0 %v4167
        %4171 = vmatprep.subr.bf16.mxu0 0
        %4172 = vmatpush1.bf16.msra.mxu0 0
        %4173 = vmatprep.subr.bf16.mxu0 0
        %4174 = vmatpush1.bf16.msra.mxu0 0
        %4175 = vmatprep.subr.bf16.mxu0 0
        %4176 = vmatpush1.bf16.msra.mxu0 0
        %4177 = vmatprep.subr.bf16.mxu0 0
        %4178 = vmatpush1.bf16.msra.mxu0 0
        %4179 = vmatprep.subr.bf16.mxu0 0
        %4180 = vmatpush1.bf16.msra.mxu0 0
        %4181 = vmatprep.subr.bf16.mxu0 0
        %4182 = vmatpush1.bf16.msra.mxu0 0
        %4183 = vmatprep.subr.bf16.mxu0 0
        %4184 = vmatpush1.bf16.msra.mxu0 0
        %4185 = vmatprep.subr.bf16.mxu0 0
        %4186 = vmatpush1.bf16.msra.mxu0 0
        %4187 = vmatprep.subr.bf16.mxu0 0
        %4188 = vmatpush1.bf16.msra.mxu0 0
        %4189 = vmatprep.subr.bf16.mxu0 0
        %4190 = vmatpush1.bf16.msra.mxu0 0
        %4191 = vmatprep.subr.bf16.mxu0 0
        %4192 = vmatpush1.bf16.msra.mxu0 0
        %4193 = vmatprep.subr.bf16.mxu0 0
        %4194 = vmatpush1.bf16.msra.mxu0 0
        %4195 = vmatprep.subr.bf16.mxu0 0
        %4196 = vmatpush1.bf16.msra.mxu0 0
        %4197 = vmatprep.subr.bf16.mxu0 0
        %4198 = vmatpush1.bf16.msra.mxu0 0
        %4199 = vmatprep.subr.bf16.mxu0 0
        %4200 = vmatpush1.bf16.msra.mxu0 0
        %4201 = vmatprep.mubr.bf16.mxu0 0
        %4202 = vmatmul.mubr.bf16.gmra.mrb[0].mxu0 %v4164
        %v4203 = vpop.f32.mrb[0].mxu0
        %v4204 = vadd.f32 0.0, %v4203
        %v4205 = vpop.f32.mrb[0].mxu0
        %v4206 = vpop.f32.mrb[0].mxu0
        %v4207 = vpop.f32.mrb[0].mxu0
        %4208 = vdwg.mxu0
        %4209 = vrot.lane.b32.xlu0 %v1432, 80
        %v4210 = vpop.permute.xlu0 %4209
        %v4212 = vsel %vm1355, %v4015, 0
        %v4215 = vsel %vm1437, %v4210, 0
        %4217 = vmatprep.subr.bf16.mxu0 0
        %4218 = vmatpush1.bf16.msra.mxu0 %v4215
        %4219 = vmatprep.subr.bf16.mxu0 0
        %4220 = vmatpush1.bf16.msra.mxu0 0
        %4221 = vmatprep.subr.bf16.mxu0 0
        %4222 = vmatpush1.bf16.msra.mxu0 0
        %4223 = vmatprep.subr.bf16.mxu0 0
        %4224 = vmatpush1.bf16.msra.mxu0 0
        %4225 = vmatprep.subr.bf16.mxu0 0
        %4226 = vmatpush1.bf16.msra.mxu0 0
        %4227 = vmatprep.subr.bf16.mxu0 0
        %4228 = vmatpush1.bf16.msra.mxu0 0
        %4229 = vmatprep.subr.bf16.mxu0 0
        %4230 = vmatpush1.bf16.msra.mxu0 0
        %4231 = vmatprep.subr.bf16.mxu0 0
        %4232 = vmatpush1.bf16.msra.mxu0 0
        %4233 = vmatprep.subr.bf16.mxu0 0
        %4234 = vmatpush1.bf16.msra.mxu0 0
        %4235 = vmatprep.subr.bf16.mxu0 0
        %4236 = vmatpush1.bf16.msra.mxu0 0
        %4237 = vmatprep.subr.bf16.mxu0 0
        %4238 = vmatpush1.bf16.msra.mxu0 0
        %4239 = vmatprep.subr.bf16.mxu0 0
        %4240 = vmatpush1.bf16.msra.mxu0 0
        %4241 = vmatprep.subr.bf16.mxu0 0
        %4242 = vmatpush1.bf16.msra.mxu0 0
        %4243 = vmatprep.subr.bf16.mxu0 0
        %4244 = vmatpush1.bf16.msra.mxu0 0
        %4245 = vmatprep.subr.bf16.mxu0 0
        %4246 = vmatpush1.bf16.msra.mxu0 0
        %4247 = vmatprep.subr.bf16.mxu0 0
        %4248 = vmatpush1.bf16.msra.mxu0 0
        %4249 = vmatprep.mubr.bf16.mxu0 0
        %4250 = vmatmul.mubr.bf16.gmra.mrb[0].mxu0 %v4212
        %v4251 = vpop.f32.mrb[0].mxu0
        %v4252 = vadd.f32 0.0, %v4251
        %v4253 = vpop.f32.mrb[0].mxu0
        %v4254 = vpop.f32.mrb[0].mxu0
        %v4255 = vpop.f32.mrb[0].mxu0
        %4256 = vdwg.mxu0
        %4257 = vrot.lane.b32.xlu0 %v1433, 80
        %v4258 = vpop.permute.xlu0 %4257
        %v4260 = vsel %vm1355, %v4016, 0
        %v4263 = vsel %vm1437, %v4258, 0
        %4265 = vmatprep.subr.bf16.mxu0 0
        %4266 = vmatpush1.bf16.msra.mxu0 %v4263
        %4267 = vmatprep.subr.bf16.mxu0 0
        %4268 = vmatpush1.bf16.msra.mxu0 0
        %4269 = vmatprep.subr.bf16.mxu0 0
        %4270 = vmatpush1.bf16.msra.mxu0 0
        %4271 = vmatprep.subr.bf16.mxu0 0
        %4272 = vmatpush1.bf16.msra.mxu0 0
        %4273 = vmatprep.subr.bf16.mxu0 0
        %4274 = vmatpush1.bf16.msra.mxu0 0
        %4275 = vmatprep.subr.bf16.mxu0 0
        %4276 = vmatpush1.bf16.msra.mxu0 0
        %4277 = vmatprep.subr.bf16.mxu0 0
        %4278 = vmatpush1.bf16.msra.mxu0 0
        %4279 = vmatprep.subr.bf16.mxu0 0
        %4280 = vmatpush1.bf16.msra.mxu0 0
        %4281 = vmatprep.subr.bf16.mxu0 0
        %4282 = vmatpush1.bf16.msra.mxu0 0
        %4283 = vmatprep.subr.bf16.mxu0 0
        %4284 = vmatpush1.bf16.msra.mxu0 0
        %4285 = vmatprep.subr.bf16.mxu0 0
        %4286 = vmatpush1.bf16.msra.mxu0 0
        %4287 = vmatprep.subr.bf16.mxu0 0
        %4288 = vmatpush1.bf16.msra.mxu0 0
        %4289 = vmatprep.subr.bf16.mxu0 0
        %4290 = vmatpush1.bf16.msra.mxu0 0
        %4291 = vmatprep.subr.bf16.mxu0 0
        %4292 = vmatpush1.bf16.msra.mxu0 0
        %4293 = vmatprep.subr.bf16.mxu0 0
        %4294 = vmatpush1.bf16.msra.mxu0 0
        %4295 = vmatprep.subr.bf16.mxu0 0
        %4296 = vmatpush1.bf16.msra.mxu0 0
        %4297 = vmatprep.mubr.bf16.mxu0 0
        %4298 = vmatmul.mubr.bf16.gmra.mrb[0].mxu0 %v4260
        %v4299 = vpop.f32.mrb[0].mxu0
        %v4300 = vadd.f32 0.0, %v4299
        %v4301 = vpop.f32.mrb[0].mxu0
        %v4302 = vpop.f32.mrb[0].mxu0
        %v4303 = vpop.f32.mrb[0].mxu0
        %4304 = vdwg.mxu0
        %4311 = vrot.lane.b32.xlu0 %v4060, 48
        %v4312 = vpop.permute.xlu0 %4311
        %4313 = vrot.lane.b32.xlu0 %v4108, 48
        %v4314 = vpop.permute.xlu0 %4313
        %4315 = vrot.lane.b32.xlu0 %v4156, 48
        %v4316 = vpop.permute.xlu0 %4315
        %4317 = vrot.lane.b32.xlu0 %v4204, 48
        %v4318 = vpop.permute.xlu0 %4317
        %4319 = vrot.lane.b32.xlu0 %v4252, 48
        %v4320 = vpop.permute.xlu0 %4319
        %4321 = vrot.lane.b32.xlu0 %v4300, 48
        %v4322 = vpop.permute.xlu0 %4321
        %vm4329 = vcmask 523648
        %4330 = vst.msk [vmem:[#allocation2] sm:$0xff] %vm4329, %v4312
        %4331 = vst.msk [vmem:[#allocation2 + $0x8] sm:$0xff] %vm4329, %v4314
        %4332 = vst.msk [vmem:[#allocation2 + $0x10] sm:$0xff] %vm4329, %v4316
        %4333 = vst.msk [vmem:[#allocation2 + $0x18] sm:$0xff] %vm4329, %v4318
        %4334 = vst.msk [vmem:[#allocation2 + $0x20] sm:$0xff] %vm4329, %v4320
        %4335 = vst.msk [vmem:[#allocation2 + $0x28] sm:$0xff] %vm4329, %v4322
        %v4336 = vld [vmem:[#allocation2] sm:$0xff]
        %v4337 = vld [vmem:[#allocation2 + $0x8] sm:$0xff]
        %v4338 = vld [vmem:[#allocation2 + $0x10] sm:$0xff]
        %v4339 = vld [vmem:[#allocation2 + $0x18] sm:$0xff]
        %v4340 = vld [vmem:[#allocation2 + $0x20] sm:$0xff]
        %v4341 = vld [vmem:[#allocation2 + $0x28] sm:$0xff]
        %v4342 = vpack.c.bf16 %v4337, %v4336
        %v4343 = vpack.c.bf16 %v4339, %v4338
        %v4344 = vpack.c.bf16 %v4341, %v4340
        %v4345 = vld [vmem:[#allocation12] sm:$0xf]
        %v4346 = vld [vmem:[#allocation12 + $0x4] sm:$0xf]
        %v4347 = vld [vmem:[#allocation12 + $0x8] sm:$0xf]
        %v4348 = vld [vmem:[#allocation12 + $0xc] sm:$0xf]
        %v4349 = vld [vmem:[#allocation12 + $0x10] sm:$0xf]
        %v4350 = vld [vmem:[#allocation12 + $0x14] sm:$0xf]
        %v4351 = vld [vmem:[#allocation12 + $0x18] sm:$0xf]
        %v4352 = vld [vmem:[#allocation12 + $0x1c] sm:$0xf]
        %v4353 = vld [vmem:[#allocation14] sm:$0x1]
        %v4355 = vlaneseq
        %v4356 = vshrl.u32 %v4355, 7
        %v4357 = vsub.s32 0, %v4356
        %v4358 = vrot.slane %v4353, %v4357
        %v4368 = vunpack.c.l.b16 %v4345
        %v4369 = vunpack.c.l.b16 %v4346
        %v4370 = vunpack.c.l.b16 %v4347
        %v4371 = vunpack.c.l.b16 %v4348
        %v4372 = vunpack.c.l.b16 %v4349
        %v4373 = vunpack.c.l.b16 %v4350
        %v4374 = vunpack.c.l.b16 %v4351
        %v4375 = vunpack.c.l.b16 %v4352
        %v4376 = vpack.c.b16 %v4369, %v4368
        %v4377 = vpack.c.b16 %v4371, %v4370
        %v4378 = vpack.c.b16 %v4373, %v4372
        %v4379 = vpack.c.b16 %v4375, %v4374
        %v4385 = vsel %vm634, %v4342, 0
        %v4388 = vsel %vm634, %v4343, 0
        %v4391 = vsel %vm634, %v4344, 0
        %4393 = vmatprep.subr.bf16.mxu0 0
        %4394 = vmatpush1.bf16.msra.mxu0 %v4376
        %4395 = vmatprep.subr.bf16.mxu0 0
        %4396 = vmatpush1.bf16.msra.mxu0 %v4377
        %4397 = vmatprep.subr.bf16.mxu0 0
        %4398 = vmatpush1.bf16.msra.mxu0 %v4378
        %4399 = vmatprep.subr.bf16.mxu0 0
        %4400 = vmatpush1.bf16.msra.mxu0 %v4379
        %4401 = vmatprep.subr.bf16.mxu0 0
        %4402 = vmatpush1.bf16.msra.mxu0 0
        %4403 = vmatprep.subr.bf16.mxu0 0
        %4404 = vmatpush1.bf16.msra.mxu0 0
        %4405 = vmatprep.subr.bf16.mxu0 0
        %4406 = vmatpush1.bf16.msra.mxu0 0
        %4407 = vmatprep.subr.bf16.mxu0 0
        %4408 = vmatpush1.bf16.msra.mxu0 0
        %4409 = vmatprep.subr.bf16.mxu0 0
        %4410 = vmatpush1.bf16.msra.mxu0 0
        %4411 = vmatprep.subr.bf16.mxu0 0
        %4412 = vmatpush1.bf16.msra.mxu0 0
        %4413 = vmatprep.subr.bf16.mxu0 0
        %4414 = vmatpush1.bf16.msra.mxu0 0
        %4415 = vmatprep.subr.bf16.mxu0 0
        %4416 = vmatpush1.bf16.msra.mxu0 0
        %4417 = vmatprep.subr.bf16.mxu0 0
        %4418 = vmatpush1.bf16.msra.mxu0 0
        %4419 = vmatprep.subr.bf16.mxu0 0
        %4420 = vmatpush1.bf16.msra.mxu0 0
        %4421 = vmatprep.subr.bf16.mxu0 0
        %4422 = vmatpush1.bf16.msra.mxu0 0
        %4423 = vmatprep.subr.bf16.mxu0 0
        %4424 = vmatpush1.bf16.msra.mxu0 0
        %4425 = vmatprep.mubr.bf16.mxu0 0
        %4426 = vmatmul.mubr.bf16.gmra.mrb[0].mxu0 %v4385
        %v4427 = vpop.f32.mrb[0].mxu0
        %v4428 = vadd.f32 %v4358, %v4427
        %v4429 = vpop.f32.mrb[0].mxu0
        %v4430 = vpop.f32.mrb[0].mxu0
        %v4431 = vadd.f32 %v4358, %v4430
        %v4432 = vpop.f32.mrb[0].mxu0
        %4433 = vmatprep.mubr.bf16.mxu0 0
        %4434 = vmatmul.mubr.bf16.gmra.mrb[0].mxu0 %v4388
        %v4435 = vpop.f32.mrb[0].mxu0
        %v4436 = vadd.f32 %v4358, %v4435
        %v4437 = vpop.f32.mrb[0].mxu0
        %v4438 = vpop.f32.mrb[0].mxu0
        %v4439 = vadd.f32 %v4358, %v4438
        %v4440 = vpop.f32.mrb[0].mxu0
        %4441 = vmatprep.mubr.bf16.mxu0 0
        %4442 = vmatmul.mubr.bf16.gmra.mrb[0].mxu0 %v4391
        %v4443 = vpop.f32.mrb[0].mxu0
        %v4444 = vadd.f32 %v4358, %v4443
        %v4445 = vpop.f32.mrb[0].mxu0
        %v4446 = vpop.f32.mrb[0].mxu0
        %v4447 = vadd.f32 %v4358, %v4446
        %v4448 = vpop.f32.mrb[0].mxu0
        %4449 = vdwg.mxu0
        %v4450 = vadd.f32 %v626, %v4428
        %v4451 = vadd.f32 %v627, %v4431
        %v4452 = vadd.f32 %v628, %v4436
        %v4453 = vadd.f32 %v629, %v4439
        %v4454 = vadd.f32 %v630, %v4444
        %v4455 = vadd.f32 %v631, %v4447
        %v4456 = vld [vmem:[#allocation15] sm:$0x1]
        %v4457 = vld [vmem:[#allocation17] sm:$0x1]
        %v4458 = vsel %vm634, %v4450, 0.0
        %4459 = vadd.xlane.f32.xlu0 %v4458
        %v4460 = vpop.xlane.xlu0 %4459
        %v4461 = vsel %vm634, %v4451, 0.0
        %4462 = vadd.xlane.f32.xlu0 %v4461
        %v4463 = vpop.xlane.xlu0 %4462
        %v4464 = vsel %vm634, %v4452, 0.0
        %4465 = vadd.xlane.f32.xlu0 %v4464
        %v4466 = vpop.xlane.xlu0 %4465
        %v4467 = vsel %vm634, %v4453, 0.0
        %4468 = vadd.xlane.f32.xlu0 %v4467
        %v4469 = vpop.xlane.xlu0 %4468
        %v4470 = vsel %vm634, %v4454, 0.0
        %4471 = vadd.xlane.f32.xlu0 %v4470
        %v4472 = vpop.xlane.xlu0 %4471
        %v4473 = vsel %vm634, %v4455, 0.0
        %4474 = vadd.xlane.f32.xlu0 %v4473
        %v4475 = vpop.xlane.xlu0 %4474
        %v4476 = vmul.f32 %v4460, %v653
        %v4477 = vmul.f32 %v4463, %v653
        %v4478 = vmul.f32 %v4466, %v653
        %v4479 = vmul.f32 %v4469, %v653
        %v4480 = vmul.f32 %v4472, %v653
        %v4481 = vmul.f32 %v4475, %v653
        %v4482 = vsub.f32 %v4450, %v4476
        %v4483 = vsub.f32 %v4451, %v4477
        %v4484 = vsub.f32 %v4452, %v4478
        %v4485 = vsub.f32 %v4453, %v4479
        %v4486 = vsub.f32 %v4454, %v4480
        %v4487 = vsub.f32 %v4455, %v4481
        %v4488 = vmul.f32 %v4482, %v4482
        %v4489 = vmul.f32 %v4483, %v4483
        %v4490 = vmul.f32 %v4484, %v4484
        %v4491 = vmul.f32 %v4485, %v4485
        %v4492 = vmul.f32 %v4486, %v4486
        %v4493 = vmul.f32 %v4487, %v4487
        %v4494 = vsel %vm634, %v4488, 0.0
        %4495 = vadd.xlane.f32.xlu0 %v4494
        %v4496 = vpop.xlane.xlu0 %4495
        %v4497 = vsel %vm634, %v4489, 0.0
        %4498 = vadd.xlane.f32.xlu0 %v4497
        %v4499 = vpop.xlane.xlu0 %4498
        %v4500 = vsel %vm634, %v4490, 0.0
        %4501 = vadd.xlane.f32.xlu0 %v4500
        %v4502 = vpop.xlane.xlu0 %4501
        %v4503 = vsel %vm634, %v4491, 0.0
        %4504 = vadd.xlane.f32.xlu0 %v4503
        %v4505 = vpop.xlane.xlu0 %4504
        %v4506 = vsel %vm634, %v4492, 0.0
        %4507 = vadd.xlane.f32.xlu0 %v4506
        %v4508 = vpop.xlane.xlu0 %4507
        %v4509 = vsel %vm634, %v4493, 0.0
        %4510 = vadd.xlane.f32.xlu0 %v4509
        %v4511 = vpop.xlane.xlu0 %4510
        %v4512 = vmul.f32 %v4496, %v653
        %v4513 = vmul.f32 %v4499, %v653
        %v4514 = vmul.f32 %v4502, %v653
        %v4515 = vmul.f32 %v4505, %v653
        %v4516 = vmul.f32 %v4508, %v653
        %v4517 = vmul.f32 %v4511, %v653
        %v4518 = vadd.f32 %v4512, 1e-05
        %v4519 = vadd.f32 %v4513, 1e-05
        %v4520 = vadd.f32 %v4514, 1e-05
        %v4521 = vadd.f32 %v4515, 1e-05
        %v4522 = vadd.f32 %v4516, 1e-05
        %v4523 = vadd.f32 %v4517, 1e-05
        %v4524 = vrsqrt.pop %v4518
        %v4525 = vrsqrt.pop %v4519
        %v4526 = vrsqrt.pop %v4520
        %v4527 = vrsqrt.pop %v4521
        %v4528 = vrsqrt.pop %v4522
        %v4529 = vrsqrt.pop %v4523
        %v4530 = vmul.f32 %v4482, %v4524
        %v4531 = vmul.f32 %v4483, %v4525
        %v4532 = vmul.f32 %v4484, %v4526
        %v4533 = vmul.f32 %v4485, %v4527
        %v4534 = vmul.f32 %v4486, %v4528
        %v4535 = vmul.f32 %v4487, %v4529
        %v4537 = vlaneseq
        %v4538 = vshrl.u32 %v4537, 7
        %v4539 = vsub.s32 0, %v4538
        %v4540 = vrot.slane %v4456, %v4539
        %v4542 = vmul.f32 %v4530, %v4540
        %v4543 = vmul.f32 %v4531, %v4540
        %v4544 = vmul.f32 %v4532, %v4540
        %v4545 = vmul.f32 %v4533, %v4540
        %v4546 = vmul.f32 %v4534, %v4540
        %v4547 = vmul.f32 %v4535, %v4540
        %v4549 = vlaneseq
        %v4550 = vshrl.u32 %v4549, 7
        %v4551 = vsub.s32 0, %v4550
        %v4552 = vrot.slane %v4457, %v4551
        %v4554 = vadd.f32 %v4542, %v4552
        %v4555 = vadd.f32 %v4543, %v4552
        %v4556 = vadd.f32 %v4544, %v4552
        %v4557 = vadd.f32 %v4545, %v4552
        %v4558 = vadd.f32 %v4546, %v4552
        %v4559 = vadd.f32 %v4547, %v4552
        %v4560 = vpack.c.bf16 %v4555, %v4554
        %v4561 = vpack.c.bf16 %v4557, %v4556
        %v4562 = vpack.c.bf16 %v4559, %v4558
        %v4563 = vld [vmem:[#allocation18] sm:$0xff]
        %v4564 = vld [vmem:[#allocation18 + $0x8] sm:$0xff]
        %v4565 = vld [vmem:[#allocation18 + $0x10] sm:$0xff]
        %v4566 = vld [vmem:[#allocation18 + $0x18] sm:$0xff]
        %v4567 = vld [vmem:[#allocation18 + $0x20] sm:$0xff]
        %v4568 = vld [vmem:[#allocation18 + $0x28] sm:$0xff]
        %v4569 = vld [vmem:[#allocation18 + $0x30] sm:$0xff]
        %v4570 = vld [vmem:[#allocation18 + $0x38] sm:$0xff]
        %v4571 = vld [vmem:[#allocation20] sm:$0x3]
        %v4573 = vlaneseq
        %v4574 = vshrl.u32 %v4573, 7
        %v4575 = vsub.s32 0, %v4574
        %v4576 = vrot.slane %v4571, %v4575
        %v4577 = vlaneseq
        %v4578 = vshrl.u32 %v4577, 7
        %v4579 = vsub.s32 1, %v4578
        %v4580 = vrot.slane %v4571, %v4579
        %v4591 = vunpack.c.l.b16 %v4563
        %v4592 = vunpack.c.h.b16 %v4563
        %v4593 = vunpack.c.l.b16 %v4564
        %v4594 = vunpack.c.h.b16 %v4564
        %v4595 = vunpack.c.l.b16 %v4565
        %v4596 = vunpack.c.h.b16 %v4565
        %v4597 = vunpack.c.l.b16 %v4566
        %v4598 = vunpack.c.h.b16 %v4566
        %v4599 = vunpack.c.l.b16 %v4567
        %v4600 = vunpack.c.h.b16 %v4567
        %v4601 = vunpack.c.l.b16 %v4568
        %v4602 = vunpack.c.h.b16 %v4568
        %v4603 = vunpack.c.l.b16 %v4569
        %v4604 = vunpack.c.h.b16 %v4569
        %v4605 = vunpack.c.l.b16 %v4570
        %v4606 = vunpack.c.h.b16 %v4570
        %v4607 = vpack.c.b16 %v4593, %v4591
        %v4608 = vpack.c.b16 %v4594, %v4592
        %v4609 = vpack.c.b16 %v4597, %v4595
        %v4610 = vpack.c.b16 %v4598, %v4596
        %v4611 = vpack.c.b16 %v4601, %v4599
        %v4612 = vpack.c.b16 %v4602, %v4600
        %v4613 = vpack.c.b16 %v4605, %v4603
        %v4614 = vpack.c.b16 %v4606, %v4604
        %v4624 = vsel %vm634, %v4560, 0
        %v4627 = vsel %vm634, %v4561, 0
        %v4630 = vsel %vm634, %v4562, 0
        %4632 = vmatprep.subr.bf16.mxu0 %v4608
        %4633 = vmatpush1.bf16.msra.mxu0 %v4607
        %4634 = vmatprep.subr.bf16.mxu0 %v4610
        %4635 = vmatpush1.bf16.msra.mxu0 %v4609
        %4636 = vmatprep.subr.bf16.mxu0 %v4612
        %4637 = vmatpush1.bf16.msra.mxu0 %v4611
        %4638 = vmatprep.subr.bf16.mxu0 %v4614
        %4639 = vmatpush1.bf16.msra.mxu0 %v4613
        %4640 = vmatprep.subr.bf16.mxu0 0
        %4641 = vmatpush1.bf16.msra.mxu0 0
        %4642 = vmatprep.subr.bf16.mxu0 0
        %4643 = vmatpush1.bf16.msra.mxu0 0
        %4644 = vmatprep.subr.bf16.mxu0 0
        %4645 = vmatpush1.bf16.msra.mxu0 0
        %4646 = vmatprep.subr.bf16.mxu0 0
        %4647 = vmatpush1.bf16.msra.mxu0 0
        %4648 = vmatprep.subr.bf16.mxu0 0
        %4649 = vmatpush1.bf16.msra.mxu0 0
        %4650 = vmatprep.subr.bf16.mxu0 0
        %4651 = vmatpush1.bf16.msra.mxu0 0
        %4652 = vmatprep.subr.bf16.mxu0 0
        %4653 = vmatpush1.bf16.msra.mxu0 0
        %4654 = vmatprep.subr.bf16.mxu0 0
        %4655 = vmatpush1.bf16.msra.mxu0 0
        %4656 = vmatprep.subr.bf16.mxu0 0
        %4657 = vmatpush1.bf16.msra.mxu0 0
        %4658 = vmatprep.subr.bf16.mxu0 0
        %4659 = vmatpush1.bf16.msra.mxu0 0
        %4660 = vmatprep.subr.bf16.mxu0 0
        %4661 = vmatpush1.bf16.msra.mxu0 0
        %4662 = vmatprep.subr.bf16.mxu0 0
        %4663 = vmatpush1.bf16.msra.mxu0 0
        %4664 = vmatprep.mubr.bf16.mxu0 0
        %4665 = vmatmul.mubr.bf16.gmra.mrb[0].mxu0 %v4624
        %v4666 = vpop.f32.mrb[0].mxu0
        %v4667 = vadd.f32 %v4576, %v4666
        %v4668 = vpop.f32.mrb[0].mxu0
        %v4669 = vadd.f32 %v4580, %v4668
        %v4670 = vpop.f32.mrb[0].mxu0
        %v4671 = vadd.f32 %v4576, %v4670
        %v4672 = vpop.f32.mrb[0].mxu0
        %v4673 = vadd.f32 %v4580, %v4672
        %4674 = vmatprep.mubr.bf16.mxu0 0
        %4675 = vmatmul.mubr.bf16.gmra.mrb[0].mxu0 %v4627
        %v4676 = vpop.f32.mrb[0].mxu0
        %v4677 = vadd.f32 %v4576, %v4676
        %v4678 = vpop.f32.mrb[0].mxu0
        %v4679 = vadd.f32 %v4580, %v4678
        %v4680 = vpop.f32.mrb[0].mxu0
        %v4681 = vadd.f32 %v4576, %v4680
        %v4682 = vpop.f32.mrb[0].mxu0
        %v4683 = vadd.f32 %v4580, %v4682
        %4684 = vmatprep.mubr.bf16.mxu0 0
        %4685 = vmatmul.mubr.bf16.gmra.mrb[0].mxu0 %v4630
        %v4686 = vpop.f32.mrb[0].mxu0
        %v4687 = vadd.f32 %v4576, %v4686
        %v4688 = vpop.f32.mrb[0].mxu0
        %v4689 = vadd.f32 %v4580, %v4688
        %v4690 = vpop.f32.mrb[0].mxu0
        %v4691 = vadd.f32 %v4576, %v4690
        %v4692 = vpop.f32.mrb[0].mxu0
        %v4693 = vadd.f32 %v4580, %v4692
        %4694 = vdwg.mxu0
        %v4695 = vmul.f32 %v4667, 1.702
        %v4696 = vmul.f32 %v4669, 1.702
        %v4697 = vmul.f32 %v4671, 1.702
        %v4698 = vmul.f32 %v4673, 1.702
        %v4699 = vmul.f32 %v4677, 1.702
        %v4700 = vmul.f32 %v4679, 1.702
        %v4701 = vmul.f32 %v4681, 1.702
        %v4702 = vmul.f32 %v4683, 1.702
        %v4703 = vmul.f32 %v4687, 1.702
        %v4704 = vmul.f32 %v4689, 1.702
        %v4705 = vmul.f32 %v4691, 1.702
        %v4706 = vmul.f32 %v4693, 1.702
        %v4707 = vxor.u32 %v4695, 2147483648
        %v4708 = vxor.u32 %v4696, 2147483648
        %v4709 = vxor.u32 %v4697, 2147483648
        %v4710 = vxor.u32 %v4698, 2147483648
        %v4711 = vxor.u32 %v4699, 2147483648
        %v4712 = vxor.u32 %v4700, 2147483648
        %v4713 = vxor.u32 %v4701, 2147483648
        %v4714 = vxor.u32 %v4702, 2147483648
        %v4715 = vxor.u32 %v4703, 2147483648
        %v4716 = vxor.u32 %v4704, 2147483648
        %v4717 = vxor.u32 %v4705, 2147483648
        %v4718 = vxor.u32 %v4706, 2147483648
        %v4719 = vmul.f32 %v4707, 1.442695
        %v4720 = vpow.pop %v4719
        %v4721 = vmul.f32 %v4708, 1.442695
        %v4722 = vpow.pop %v4721
        %v4723 = vmul.f32 %v4709, 1.442695
        %v4724 = vpow.pop %v4723
        %v4725 = vmul.f32 %v4710, 1.442695
        %v4726 = vpow.pop %v4725
        %v4727 = vmul.f32 %v4711, 1.442695
        %v4728 = vpow.pop %v4727
        %v4729 = vmul.f32 %v4712, 1.442695
        %v4730 = vpow.pop %v4729
        %v4731 = vmul.f32 %v4713, 1.442695
        %v4732 = vpow.pop %v4731
        %v4733 = vmul.f32 %v4714, 1.442695
        %v4734 = vpow.pop %v4733
        %v4735 = vmul.f32 %v4715, 1.442695
        %v4736 = vpow.pop %v4735
        %v4737 = vmul.f32 %v4716, 1.442695
        %v4738 = vpow.pop %v4737
        %v4739 = vmul.f32 %v4717, 1.442695
        %v4740 = vpow.pop %v4739
        %v4741 = vmul.f32 %v4718, 1.442695
        %v4742 = vpow.pop %v4741
        %v4743 = vadd.f32 %v4720, 1.0
        %v4744 = vadd.f32 %v4722, 1.0
        %v4745 = vadd.f32 %v4724, 1.0
        %v4746 = vadd.f32 %v4726, 1.0
        %v4747 = vadd.f32 %v4728, 1.0
        %v4748 = vadd.f32 %v4730, 1.0
        %v4749 = vadd.f32 %v4732, 1.0
        %v4750 = vadd.f32 %v4734, 1.0
        %v4751 = vadd.f32 %v4736, 1.0
        %v4752 = vadd.f32 %v4738, 1.0
        %v4753 = vadd.f32 %v4740, 1.0
        %v4754 = vadd.f32 %v4742, 1.0
        %v4755 = vrcp.pop %v4743
        %v4756 = vmul.f32 1.0, %v4755
        %v4757 = vrcp.pop %v4744
        %v4758 = vmul.f32 1.0, %v4757
        %v4759 = vrcp.pop %v4745
        %v4760 = vmul.f32 1.0, %v4759
        %v4761 = vrcp.pop %v4746
        %v4762 = vmul.f32 1.0, %v4761
        %v4763 = vrcp.pop %v4747
        %v4764 = vmul.f32 1.0, %v4763
        %v4765 = vrcp.pop %v4748
        %v4766 = vmul.f32 1.0, %v4765
        %v4767 = vrcp.pop %v4749
        %v4768 = vmul.f32 1.0, %v4767
        %v4769 = vrcp.pop %v4750
        %v4770 = vmul.f32 1.0, %v4769
        %v4771 = vrcp.pop %v4751
        %v4772 = vmul.f32 1.0, %v4771
        %v4773 = vrcp.pop %v4752
        %v4774 = vmul.f32 1.0, %v4773
        %v4775 = vrcp.pop %v4753
        %v4776 = vmul.f32 1.0, %v4775
        %v4777 = vrcp.pop %v4754
        %v4778 = vmul.f32 1.0, %v4777
        %v4779 = vmul.f32 %v4667, %v4756
        %v4780 = vmul.f32 %v4669, %v4758
        %v4781 = vmul.f32 %v4671, %v4760
        %v4782 = vmul.f32 %v4673, %v4762
        %v4783 = vmul.f32 %v4677, %v4764
        %v4784 = vmul.f32 %v4679, %v4766
        %v4785 = vmul.f32 %v4681, %v4768
        %v4786 = vmul.f32 %v4683, %v4770
        %v4787 = vmul.f32 %v4687, %v4772
        %v4788 = vmul.f32 %v4689, %v4774
        %v4789 = vmul.f32 %v4691, %v4776
        %v4790 = vmul.f32 %v4693, %v4778
        %v4791 = vpack.c.bf16 %v4781, %v4779
        %v4792 = vpack.c.bf16 %v4782, %v4780
        %v4793 = vpack.c.bf16 %v4785, %v4783
        %v4794 = vpack.c.bf16 %v4786, %v4784
        %v4795 = vpack.c.bf16 %v4789, %v4787
        %v4796 = vpack.c.bf16 %v4790, %v4788
        %v4797 = vld [vmem:[#allocation21] sm:$0xf]
        %v4798 = vld [vmem:[#allocation21 + $0x4] sm:$0xf]
        %v4799 = vld [vmem:[#allocation21 + $0x8] sm:$0xf]
        %v4800 = vld [vmem:[#allocation21 + $0xc] sm:$0xf]
        %v4801 = vld [vmem:[#allocation21 + $0x10] sm:$0xf]
        %v4802 = vld [vmem:[#allocation21 + $0x14] sm:$0xf]
        %v4803 = vld [vmem:[#allocation21 + $0x18] sm:$0xf]
        %v4804 = vld [vmem:[#allocation21 + $0x1c] sm:$0xf]
        %v4805 = vld [vmem:[#allocation21 + $0x20] sm:$0xf]
        %v4806 = vld [vmem:[#allocation21 + $0x24] sm:$0xf]
        %v4807 = vld [vmem:[#allocation21 + $0x28] sm:$0xf]
        %v4808 = vld [vmem:[#allocation21 + $0x2c] sm:$0xf]
        %v4809 = vld [vmem:[#allocation21 + $0x30] sm:$0xf]
        %v4810 = vld [vmem:[#allocation21 + $0x34] sm:$0xf]
        %v4811 = vld [vmem:[#allocation21 + $0x38] sm:$0xf]
        %v4812 = vld [vmem:[#allocation21 + $0x3c] sm:$0xf]
        %v4813 = vld [vmem:[#allocation21 + $0x40] sm:$0xf]
        %v4814 = vld [vmem:[#allocation21 + $0x44] sm:$0xf]
        %v4815 = vld [vmem:[#allocation21 + $0x48] sm:$0xf]
        %v4816 = vld [vmem:[#allocation21 + $0x4c] sm:$0xf]
        %v4817 = vld [vmem:[#allocation21 + $0x50] sm:$0xf]
        %v4818 = vld [vmem:[#allocation21 + $0x54] sm:$0xf]
        %v4819 = vld [vmem:[#allocation21 + $0x58] sm:$0xf]
        %v4820 = vld [vmem:[#allocation21 + $0x5c] sm:$0xf]
        %v4821 = vld [vmem:[#allocation21 + $0x60] sm:$0xf]
        %v4822 = vld [vmem:[#allocation21 + $0x64] sm:$0xf]
        %v4823 = vld [vmem:[#allocation21 + $0x68] sm:$0xf]
        %v4824 = vld [vmem:[#allocation21 + $0x6c] sm:$0xf]
        %v4825 = vld [vmem:[#allocation21 + $0x70] sm:$0xf]
        %v4826 = vld [vmem:[#allocation21 + $0x74] sm:$0xf]
        %v4827 = vld [vmem:[#allocation21 + $0x78] sm:$0xf]
        %v4828 = vld [vmem:[#allocation21 + $0x7c] sm:$0xf]
        %v4829 = vld [vmem:[#allocation23] sm:$0x1]
        %v4831 = vlaneseq
        %v4832 = vshrl.u32 %v4831, 7
        %v4833 = vsub.s32 0, %v4832
        %v4834 = vrot.slane %v4829, %v4833
        %v4868 = vunpack.c.l.b16 %v4797
        %v4869 = vunpack.c.l.b16 %v4798
        %v4870 = vunpack.c.l.b16 %v4799
        %v4871 = vunpack.c.l.b16 %v4800
        %v4872 = vunpack.c.l.b16 %v4801
        %v4873 = vunpack.c.l.b16 %v4802
        %v4874 = vunpack.c.l.b16 %v4803
        %v4875 = vunpack.c.l.b16 %v4804
        %v4876 = vunpack.c.l.b16 %v4805
        %v4877 = vunpack.c.l.b16 %v4806
        %v4878 = vunpack.c.l.b16 %v4807
        %v4879 = vunpack.c.l.b16 %v4808
        %v4880 = vunpack.c.l.b16 %v4809
        %v4881 = vunpack.c.l.b16 %v4810
        %v4882 = vunpack.c.l.b16 %v4811
        %v4883 = vunpack.c.l.b16 %v4812
        %v4884 = vunpack.c.l.b16 %v4813
        %v4885 = vunpack.c.l.b16 %v4814
        %v4886 = vunpack.c.l.b16 %v4815
        %v4887 = vunpack.c.l.b16 %v4816
        %v4888 = vunpack.c.l.b16 %v4817
        %v4889 = vunpack.c.l.b16 %v4818
        %v4890 = vunpack.c.l.b16 %v4819
        %v4891 = vunpack.c.l.b16 %v4820
        %v4892 = vunpack.c.l.b16 %v4821
        %v4893 = vunpack.c.l.b16 %v4822
        %v4894 = vunpack.c.l.b16 %v4823
        %v4895 = vunpack.c.l.b16 %v4824
        %v4896 = vunpack.c.l.b16 %v4825
        %v4897 = vunpack.c.l.b16 %v4826
        %v4898 = vunpack.c.l.b16 %v4827
        %v4899 = vunpack.c.l.b16 %v4828
        %v4900 = vpack.c.b16 %v4869, %v4868
        %v4901 = vpack.c.b16 %v4871, %v4870
        %v4902 = vpack.c.b16 %v4873, %v4872
        %v4903 = vpack.c.b16 %v4875, %v4874
        %v4904 = vpack.c.b16 %v4877, %v4876
        %v4905 = vpack.c.b16 %v4879, %v4878
        %v4906 = vpack.c.b16 %v4881, %v4880
        %v4907 = vpack.c.b16 %v4883, %v4882
        %v4908 = vpack.c.b16 %v4885, %v4884
        %v4909 = vpack.c.b16 %v4887, %v4886
        %v4910 = vpack.c.b16 %v4889, %v4888
        %v4911 = vpack.c.b16 %v4891, %v4890
        %v4912 = vpack.c.b16 %v4893, %v4892
        %v4913 = vpack.c.b16 %v4895, %v4894
        %v4914 = vpack.c.b16 %v4897, %v4896
        %v4915 = vpack.c.b16 %v4899, %v4898
        %4932 = vmatprep.subr.bf16.mxu0 0
        %4933 = vmatpush1.bf16.msra.mxu0 %v4900
        %4934 = vmatprep.subr.bf16.mxu0 0
        %4935 = vmatpush1.bf16.msra.mxu0 %v4901
        %4936 = vmatprep.subr.bf16.mxu0 0
        %4937 = vmatpush1.bf16.msra.mxu0 %v4902
        %4938 = vmatprep.subr.bf16.mxu0 0
        %4939 = vmatpush1.bf16.msra.mxu0 %v4903
        %4940 = vmatprep.subr.bf16.mxu0 0
        %4941 = vmatpush1.bf16.msra.mxu0 %v4904
        %4942 = vmatprep.subr.bf16.mxu0 0
        %4943 = vmatpush1.bf16.msra.mxu0 %v4905
        %4944 = vmatprep.subr.bf16.mxu0 0
        %4945 = vmatpush1.bf16.msra.mxu0 %v4906
        %4946 = vmatprep.subr.bf16.mxu0 0
        %4947 = vmatpush1.bf16.msra.mxu0 %v4907
        %4948 = vmatprep.subr.bf16.mxu0 0
        %4949 = vmatpush1.bf16.msra.mxu0 %v4908
        %4950 = vmatprep.subr.bf16.mxu0 0
        %4951 = vmatpush1.bf16.msra.mxu0 %v4909
        %4952 = vmatprep.subr.bf16.mxu0 0
        %4953 = vmatpush1.bf16.msra.mxu0 %v4910
        %4954 = vmatprep.subr.bf16.mxu0 0
        %4955 = vmatpush1.bf16.msra.mxu0 %v4911
        %4956 = vmatprep.subr.bf16.mxu0 0
        %4957 = vmatpush1.bf16.msra.mxu0 %v4912
        %4958 = vmatprep.subr.bf16.mxu0 0
        %4959 = vmatpush1.bf16.msra.mxu0 %v4913
        %4960 = vmatprep.subr.bf16.mxu0 0
        %4961 = vmatpush1.bf16.msra.mxu0 %v4914
        %4962 = vmatprep.subr.bf16.mxu0 0
        %4963 = vmatpush1.bf16.msra.mxu0 %v4915
        %4964 = vmatprep.mubr.bf16.mxu0 %v4792
        %4965 = vmatmul.mubr.bf16.gmra.mrb[0].mxu0 %v4791
        %v4966 = vpop.f32.mrb[0].mxu0
        %v4967 = vadd.f32 %v4834, %v4966
        %v4968 = vpop.f32.mrb[0].mxu0
        %v4969 = vpop.f32.mrb[0].mxu0
        %v4970 = vadd.f32 %v4834, %v4969
        %v4971 = vpop.f32.mrb[0].mxu0
        %4972 = vmatprep.mubr.bf16.mxu0 %v4794
        %4973 = vmatmul.mubr.bf16.gmra.mrb[0].mxu0 %v4793
        %v4974 = vpop.f32.mrb[0].mxu0
        %v4975 = vadd.f32 %v4834, %v4974
        %v4976 = vpop.f32.mrb[0].mxu0
        %v4977 = vpop.f32.mrb[0].mxu0
        %v4978 = vadd.f32 %v4834, %v4977
        %v4979 = vpop.f32.mrb[0].mxu0
        %4980 = vmatprep.mubr.bf16.mxu0 %v4796
        %4981 = vmatmul.mubr.bf16.gmra.mrb[0].mxu0 %v4795
        %v4982 = vpop.f32.mrb[0].mxu0
        %v4983 = vadd.f32 %v4834, %v4982
        %v4984 = vpop.f32.mrb[0].mxu0
        %v4985 = vpop.f32.mrb[0].mxu0
        %v4986 = vadd.f32 %v4834, %v4985
        %v4987 = vpop.f32.mrb[0].mxu0
        %4988 = vdwg.mxu0
        %v4989 = vadd.f32 %v4450, %v4967
        %v4990 = vadd.f32 %v4451, %v4970
        %v4991 = vadd.f32 %v4452, %v4975
        %v4992 = vadd.f32 %v4453, %v4978
        %v4993 = vadd.f32 %v4454, %v4983
        %v4994 = vadd.f32 %v4455, %v4986
        %v4995 = vpack.c.bf16 %v4989, %v4989
        %v4996 = vpack.c.bf16 %v4990, %v4990
        %v4997 = vpack.c.bf16 %v4991, %v4991
        %v4998 = vpack.c.bf16 %v4992, %v4992
        %v4999 = vpack.c.bf16 %v4993, %v4993
        %v5000 = vpack.c.bf16 %v4994, %v4994
        %vm5001 = vcmask 519168
        %5002 = vst.msk [vmem:[%s616] sm:$0xf] %vm5001, %v4995
        %5003 = vst.msk [vmem:[%s616 + $0x4] sm:$0xf] %vm5001, %v4996
        %5004 = vst.msk [vmem:[%s616 + $0x8] sm:$0xf] %vm5001, %v4997
        %5005 = vst.msk [vmem:[%s616 + $0xc] sm:$0xf] %vm5001, %v4998
        %5006 = vst.msk [vmem:[%s616 + $0x10] sm:$0xf] %vm5001, %v4999
        %5007 = vst.msk [vmem:[%s616 + $0x14] sm:$0xf] %vm5001, %v5000
        %s5008 = sand.u32 %s322, 1
        %s5009 = scalar_lea.sflag [#allocation5], %s5008
        %s5010 = sand.u32 %s322, 1
        %s5011 = smul.addr %s5010, 24
        %s5012 = scalar_lea.vmem [#allocation24], %s5011
        // Predicated region
        $region125: #{custom_clip_forward.14} parent=71 // pred_check
          %p5013 = pneg %p332
        $region126: #{custom_clip_forward.14} parent=71 // pred_check_branch
          %5015 = sbr.rel (%p5013) target = $region128
        $region127: #{custom_clip_forward.14} parent=71 // pred_region
          %s5016 = smul.u32 6, %s36
          %s5018 = ssub.s32 384, 384
          %5019 = vsyncadd %s5009, %s5018
          %s5020 = smul.addr %s5016, 64
          %s5021 = scalar_lea.hbm %s13, %s5020
          %s5022 = sshll.u32 %s5012, 4
          %s5023 = int_to_ptr.vmem [resolvable:$true] %s5022
          %5028 = dma.vmem_to_hbm [thread:$0]  %s5023, 384, %s5021, %s5009, 64, 64, 4
        $region128: #{custom_clip_forward.14} parent=71 // pred_fallthru
          _
      $region72: #{custom_clip_forward.14} parent=5 // pred_fallthru
        _
      %p5029 = scmp.le.s32.totalorder 2, %s31
      // Predicated region
      $region129: #{custom_clip_forward.14} parent=5 // pred_check
        %p5030 = pneg %p5029
      $region130: #{custom_clip_forward.14} parent=5 // pred_check_branch
        %5032 = sbr.rel (%p5030) target = $region132
      $region131: #{custom_clip_forward.14} parent=5 // pred_region
        %s5033 = ssub.s32 %s31, 2
        // Predicated region
        $region133: #{custom_clip_forward.14} parent=131 // pred_check
          %p5034 = pneg %p338
        $region134: #{custom_clip_forward.14} parent=131 // pred_check_branch
          %5036 = sbr.rel (%p5034) target = $region136
        $region135: #{custom_clip_forward.14} parent=131 // pred_region
          %s5037 = sand.u32 %s323, 1
          %s5038 = scalar_lea.sflag [#allocation5], %s5037
          %s5039 = sand.u32 %s323, 1
          %s5040 = smul.addr %s5039, 24
          %s5041 = scalar_lea.vmem [#allocation24], %s5040
          %5042 = dma.done %s5038, 384
        $region136: #{custom_clip_forward.14} parent=131 // pred_fallthru
          _
      $region132: #{custom_clip_forward.14} parent=5 // pred_fallthru
        _
    $region6: #{custom_clip_forward.14} parent=1 // loop_footer
      %s35 = sadd.s32 1, %s31
    $region7: #{custom_clip_forward.14} parent=1 // loop_footer_branch
      %30 = sbr.rel target = $region3
    $region8: #{custom_clip_forward.14} parent=1 // loop_exit
      _
    %5043 = vsyncpa [#allocation4], 1
    %s5044 = scalar_lea.sflag [#allocation4], 1
    %5045 = vsyncpa %s5044, 1
    %5046 = vsyncpa [#allocation7], 1
    %5047 = vsyncpa [#allocation10], 1
    %5048 = vsyncpa [#allocation13], 1
    %5049 = vsyncpa [#allocation16], 1
    %5050 = vsyncpa [#allocation19], 1
    %5051 = vsyncpa [#allocation22], 1
    %5052 = vsyncpa [#allocation5], 1
    %s5053 = scalar_lea.sflag [#allocation5], 1
    %5054 = vsyncpa %s5053, 1

</llo_original>
